<compile_context>
chip_gen: v6e
topology: v6e:2x2x1
jax: 0.10.0
libtpu: 0.0.40
codegen_flags: <defaults>
</compile_context>

<pallas_src>
import functools

import jax
import jax.numpy as jnp
from jax import lax
from jax.experimental import pallas as pl
from jax.experimental.pallas import tpu as pltpu


def _full_spec(shape):
    nd = len(shape)
    return pl.BlockSpec(shape, lambda i, _nd=nd: (0,) * _nd)


# ------------------------------ fused forward kernel ------------------------------
def mpnn_pro_kernel(
    x_ref, eattr_ref, src_ref, dst_ref, batch_ref,
    lin0_w_ref, lin0_b_ref,
    nn1_w_ref, nn1_b_ref, nn2_w_ref, nn2_b_ref,
    tile_ref, sum_ref,
    root_w_ref, conv_b_ref,
    gru_wi_ref, gru_wh_ref, gru_bi_ref, gru_bh_ref,
    lstm_wi_ref, lstm_wh_ref, lstm_bi_ref, lstm_bh_ref,
    lin1_w_ref, lin1_b_ref, lin2_w_ref, lin2_b_ref,
    out_ref,
    *, dim, num_graphs, conv_iters, s2s_steps,
):
    f32 = jnp.float32
    x = x_ref[...]                                   # (N, node_dim)
    N = x.shape[0]
    E = src_ref.shape[0]
    G = num_graphs

    # ---- lin0 + ReLU -> initial node state (also the initial GRU hidden) ----
    node_h = jnp.maximum(
        jnp.dot(x, lin0_w_ref[...], preferred_element_type=f32) + lin0_b_ref[...], 0.0)

    # ---- gather/scatter operators built in VMEM from int32 edge indices ----
    src_col = src_ref[...]                           # (E, 1) int32, source node of each edge
    dst_row = dst_ref[...]                           # (1, E) int32, target node of each edge
    gather_src = (lax.broadcasted_iota(jnp.int32, (E, N), 1) == src_col).astype(f32)   # (E, N)
    scatter_dst = (lax.broadcasted_iota(jnp.int32, (N, E), 0) == dst_row).astype(f32)  # (N, E)

    # ---- edge network: per-edge Theta, computed once (depends only on edge_attr) ----
    # nn = Linear(1,128) -> ReLU -> Dropout(identity in eval) -> Linear(128, dim*dim)
    # theta[e, o*dim + i] = W_e[i, o]  (o-major layout, bias folded in; set up in wrapper)
    h1 = jnp.maximum(eattr_ref[...] * nn1_w_ref[...] + nn1_b_ref[...], 0.0)            # (E, 128)
    theta = (jnp.dot(h1, nn2_w_ref[...], preferred_element_type=f32)
             + nn2_b_ref[...])                                                          # (E, dim*dim)

    tile_mat = tile_ref[...]                         # (dim, dim*dim): x @ T tiles x `dim` times
    sum_mat = sum_ref[...]                           # (dim*dim, dim): block-sum of `dim` lanes
    root_w = root_w_ref[...]
    conv_b = conv_b_ref[...]
    gru_wi = gru_wi_ref[...]
    gru_wh = gru_wh_ref[...]
    gru_bi = gru_bi_ref[...]
    gru_bh = gru_bh_ref[...]

    # ---- 3 x ( NNConv(aggr='add') + ReLU + GRU cell ) ----
    for _ in range(conv_iters):
        x_src = jnp.dot(gather_src, node_h, preferred_element_type=f32)     # (E, dim) = x_j
        # m_e = x_j @ Theta_e   as   ((x_src @ T) * theta) @ S   — all MXU / one VPU mul
        x_tile = jnp.dot(x_src, tile_mat, preferred_element_type=f32)       # (E, dim*dim)
        msgs = jnp.dot(x_tile * theta, sum_mat, preferred_element_type=f32) # (E, dim)
        agg = jnp.dot(scatter_dst, msgs, preferred_element_type=f32)        # (N, dim), add-aggr
        m = jnp.maximum(
            agg + jnp.dot(node_h, root_w, preferred_element_type=f32) + conv_b, 0.0)

        # GRU cell (seq_len = 1): input m, hidden node_h; gates stacked in one matmul each
        gi = jnp.dot(m, gru_wi, preferred_element_type=f32) + gru_bi        # (N, 3*dim)
        gh = jnp.dot(node_h, gru_wh, preferred_element_type=f32) + gru_bh   # (N, 3*dim)
        r = jax.nn.sigmoid(gi[:, 0:dim] + gh[:, 0:dim])
        z = jax.nn.sigmoid(gi[:, dim:2 * dim] + gh[:, dim:2 * dim])
        cand = jnp.tanh(gi[:, 2 * dim:3 * dim] + r * gh[:, 2 * dim:3 * dim])
        node_h = (1.0 - z) * cand + z * node_h

    # ---- Set2Set pooling (processing_steps, LSTM with input 2*dim, hidden dim) ----
    batch_row = batch_ref[...]                        # (1, N) int32
    member = lax.broadcasted_iota(jnp.int32, (G, N), 0) == batch_row        # (G, N) bool

    lstm_wi = lstm_wi_ref[...]
    lstm_wh = lstm_wh_ref[...]
    lstm_b = lstm_bi_ref[...] + lstm_bh_ref[...]      # hoisted: combined once

    q_star = jnp.zeros((G, 2 * dim), f32)
    hs = jnp.zeros((G, dim), f32)
    cs = jnp.zeros((G, dim), f32)
    neg = jnp.float32(-1e30)
    for _ in range(s2s_steps):
        gates = (jnp.dot(q_star, lstm_wi, preferred_element_type=f32)
                 + jnp.dot(hs, lstm_wh, preferred_element_type=f32) + lstm_b)   # (G, 4*dim)
        i_g = jax.nn.sigmoid(gates[:, 0:dim])
        f_g = jax.nn.sigmoid(gates[:, dim:2 * dim])
        g_g = jnp.tanh(gates[:, 2 * dim:3 * dim])
        o_g = jax.nn.sigmoid(gates[:, 3 * dim:4 * dim])
        cs = f_g * cs + i_g * g_g
        hs = o_g * jnp.tanh(cs)
        q = hs                                                                # (G, dim)

        # attention scores e_n = <x_n, q_{batch[n]}> as a (G, N) NT matmul + per-graph softmax
        scores = lax.dot_general(q, node_h, dimension_numbers=(((1,), (1,)), ((), ())),
                                 preferred_element_type=f32)                  # (G, N)
        scores = jnp.where(member, scores, neg)
        s_max = jnp.max(scores, axis=1, keepdims=True)                        # (G, 1)
        p = jnp.where(member, jnp.exp(scores - s_max), 0.0)
        denom = jnp.sum(p, axis=1, keepdims=True) + 1e-16
        a = p * pl.reciprocal(denom, approx=True)                             # (G, N)
        r_g = jnp.dot(a, node_h, preferred_element_type=f32)                  # (G, dim)
        q_star = jnp.concatenate([q, r_g], axis=1)                            # (G, 2*dim)

    # ---- MLP head: lin1 + ReLU, lin2 ----
    hd = jnp.maximum(
        jnp.dot(q_star, lin1_w_ref[...], preferred_element_type=f32) + lin1_b_ref[...], 0.0)
    out_ref[...] = jnp.dot(hd, lin2_w_ref[...], preferred_element_type=f32) + lin2_b_ref[...]


# ------------------------------------ wrapper -------------------------------------
def mpnn_pro_forward(params, x, edge_index, edge_attr, batch, num_graphs,
                     *, conv_iters=3, s2s_steps=3):
    N, _ = x.shape
    E = edge_index.shape[1]
    dim = params["lin0_w"].shape[1]
    out_dim = params["lin2_w"].shape[1]
    edge_hidden = params["nn1_w"].shape[1]            # 128

    src_col = edge_index[0].reshape(E, 1).astype(jnp.int32)
    dst_row = edge_index[1].reshape(1, E).astype(jnp.int32)
    batch_row = batch.reshape(1, N).astype(jnp.int32)

    # edge-MLP second layer permuted to o-major layout: theta[e, o*dim+i] = W_e[i, o]
    nn2_w_perm = (params["nn2_w"].reshape(edge_hidden, dim, dim)
                  .transpose(0, 2, 1).reshape(edge_hidden, dim * dim))
    nn2_b_perm = params["nn2_b"].reshape(dim, dim).T.reshape(1, dim * dim)

    # loop-invariant constant operators for the bilinear message (built host-side)
    eye = jnp.eye(dim, dtype=jnp.float32)
    tile_mat = jnp.tile(eye, (1, dim))                # (dim, dim*dim): T[i, o*dim+j] = (i == j)
    sum_mat = jnp.repeat(eye, dim, axis=0)            # (dim*dim, dim): S[o*dim+i, o2] = (o == o2)

    inputs = [
        x, edge_attr, src_col, dst_row, batch_row,
        params["lin0_w"], params["lin0_b"],
        params["nn1_w"], params["nn1_b"], nn2_w_perm, nn2_b_perm,
        tile_mat, sum_mat,
        params["root_w"], params["conv_b"],
        params["gru_wi"], params["gru_wh"], params["gru_bi"], params["gru_bh"],
        params["lstm_wi"], params["lstm_wh"], params["lstm_bi"], params["lstm_bh"],
        params["lin1_w"], params["lin1_b"], params["lin2_w"], params["lin2_b"],
    ]

    kernel = functools.partial(
        mpnn_pro_kernel, dim=dim, num_graphs=num_graphs,
        conv_iters=conv_iters, s2s_steps=s2s_steps)

    return pl.pallas_call(
        kernel,
        out_shape=jax.ShapeDtypeStruct((num_graphs, out_dim), jnp.float32),
        grid=(1,),
        in_specs=[_full_spec(a.shape) for a in inputs],
        out_specs=_full_spec((num_graphs, out_dim)),
        compiler_params=pltpu.CompilerParams(
            dimension_semantics=("arbitrary",),
            vmem_limit_bytes=32 * 1024 * 1024,
        ),
    )(*inputs)


# ------------------------------ deterministic params ------------------------------
def init_params(key, node_dim, dim, output_dim, edge_hidden=128):
    def dense(k, shape, fan_in):
        return jax.random.normal(k, shape, jnp.float32) / jnp.sqrt(jnp.float32(fan_in))

    ks = jax.random.split(key, 12)
    return {
        "lin0_w": dense(ks[0], (node_dim, dim), node_dim),
        "lin0_b": jnp.zeros((1, dim), jnp.float32),
        # edge MLP: Linear(1, 128) -> ReLU -> Dropout -> Linear(128, dim*dim)
        "nn1_w": dense(ks[1], (1, edge_hidden), 1),
        "nn1_b": jnp.zeros((1, edge_hidden), jnp.float32),
        "nn2_w": dense(ks[2], (edge_hidden, dim * dim), edge_hidden),
        "nn2_b": jnp.zeros((dim * dim,), jnp.float32),
        # NNConv root weight + bias
        "root_w": dense(ks[3], (dim, dim), dim),
        "conv_b": jnp.zeros((1, dim), jnp.float32),
        # GRU(dim, dim): stacked gates (r, z, n), weights pre-transposed to (in, 3*dim)
        "gru_wi": dense(ks[4], (dim, 3 * dim), dim),
        "gru_wh": dense(ks[5], (dim, 3 * dim), dim),
        "gru_bi": jnp.zeros((1, 3 * dim), jnp.float32),
        "gru_bh": jnp.zeros((1, 3 * dim), jnp.float32),
        # Set2Set LSTM(2*dim -> dim): stacked gates (i, f, g, o), pre-transposed
        "lstm_wi": dense(ks[6], (2 * dim, 4 * dim), 2 * dim),
        "lstm_wh": dense(ks[7], (dim, 4 * dim), dim),
        "lstm_bi": jnp.zeros((1, 4 * dim), jnp.float32),
        "lstm_bh": jnp.zeros((1, 4 * dim), jnp.float32),
        # head: Linear(2*dim, dim), Linear(dim, output_dim); pre-transposed to (in, out)
        "lin1_w": dense(ks[8], (2 * dim, dim), 2 * dim),
        "lin1_b": jnp.zeros((1, dim), jnp.float32),
        "lin2_w": dense(ks[9], (dim, output_dim), dim),
        "lin2_b": jnp.zeros((1, output_dim), jnp.float32),
    }


if __name__ == "__main__":
    node_dim, dim, output_dim = 16, 32, 8
    nodes_per_graph, num_graphs = 8, 2
    N = nodes_per_graph * num_graphs

    key = jax.random.PRNGKey(0)
    k_x, k_e, k_p = jax.random.split(key, 3)

    x = jax.random.normal(k_x, (N, node_dim), jnp.float32)

    # two ring graphs with edges in both directions
    edges = []
    for g in range(num_graphs):
        base = g * nodes_per_graph
        for i in range(nodes_per_graph):
            j = (i + 1) % nodes_per_graph
            edges.append((base + i, base + j))
            edges.append((base + j, base + i))
    edge_index = jnp.array(edges, jnp.int32).T                 # (2, E)
    E = edge_index.shape[1]
    edge_attr = jax.random.normal(k_e, (E, 1), jnp.float32)    # scalar edge feature
    batch = jnp.repeat(jnp.arange(num_graphs, dtype=jnp.int32), nodes_per_graph)

    params = init_params(k_p, node_dim, dim, output_dim)

    out = mpnn_pro_forward(params, x, edge_index, edge_attr, batch, num_graphs)
    out = jax.block_until_ready(out)
    assert out.shape == (num_graphs, output_dim)
    print("KERNEL_OK")
</pallas_src>

<mosaic_0001>
module attributes {stable_mosaic.version = 11 : i64} {
  func.func @mpnn_pro_kernel(%arg0: i32, %arg1: memref<16x16xf32, #tpu.memory_space<vmem>>, %arg2: memref<32x1xf32, #tpu.memory_space<vmem>>, %arg3: memref<32x1xi32, #tpu.memory_space<vmem>>, %arg4: memref<1x32xi32, #tpu.memory_space<vmem>>, %arg5: memref<1x16xi32, #tpu.memory_space<vmem>>, %arg6: memref<16x32xf32, #tpu.memory_space<vmem>>, %arg7: memref<1x32xf32, #tpu.memory_space<vmem>>, %arg8: memref<1x128xf32, #tpu.memory_space<vmem>>, %arg9: memref<1x128xf32, #tpu.memory_space<vmem>>, %arg10: memref<128x1024xf32, #tpu.memory_space<vmem>>, %arg11: memref<1x1024xf32, #tpu.memory_space<vmem>>, %arg12: memref<32x1024xf32, #tpu.memory_space<vmem>>, %arg13: memref<1024x32xf32, #tpu.memory_space<vmem>>, %arg14: memref<32x32xf32, #tpu.memory_space<vmem>>, %arg15: memref<1x32xf32, #tpu.memory_space<vmem>>, %arg16: memref<32x96xf32, #tpu.memory_space<vmem>>, %arg17: memref<32x96xf32, #tpu.memory_space<vmem>>, %arg18: memref<1x96xf32, #tpu.memory_space<vmem>>, %arg19: memref<1x96xf32, #tpu.memory_space<vmem>>, %arg20: memref<64x128xf32, #tpu.memory_space<vmem>>, %arg21: memref<32x128xf32, #tpu.memory_space<vmem>>, %arg22: memref<1x128xf32, #tpu.memory_space<vmem>>, %arg23: memref<1x128xf32, #tpu.memory_space<vmem>>, %arg24: memref<64x32xf32, #tpu.memory_space<vmem>>, %arg25: memref<1x32xf32, #tpu.memory_space<vmem>>, %arg26: memref<32x8xf32, #tpu.memory_space<vmem>>, %arg27: memref<1x8xf32, #tpu.memory_space<vmem>>, %arg28: memref<2x8xf32, #tpu.memory_space<vmem>>) attributes {dimension_semantics = [#tpu.dimension_semantics<arbitrary>], iteration_bounds = array<i64: 1>, scalar_prefetch = 0 : i64, scratch_operands = 0 : i64, tpu.core_type = #tpu.core_type<tc>, window_params = [{pipeline_mode = #tpu.pipeline_mode<synchronous>, transform_indices = @transform_0, window_bounds = array<i64: 16, 16>}, {pipeline_mode = #tpu.pipeline_mode<synchronous>, transform_indices = @transform_1, window_bounds = array<i64: 32, 1>}, {pipeline_mode = #tpu.pipeline_mode<synchronous>, transform_indices = @transform_2, window_bounds = array<i64: 32, 1>}, {pipeline_mode = #tpu.pipeline_mode<synchronous>, transform_indices = @transform_3, window_bounds = array<i64: 1, 32>}, {pipeline_mode = #tpu.pipeline_mode<synchronous>, transform_indices = @transform_4, window_bounds = array<i64: 1, 16>}, {pipeline_mode = #tpu.pipeline_mode<synchronous>, transform_indices = @transform_5, window_bounds = array<i64: 16, 32>}, {pipeline_mode = #tpu.pipeline_mode<synchronous>, transform_indices = @transform_6, window_bounds = array<i64: 1, 32>}, {pipeline_mode = #tpu.pipeline_mode<synchronous>, transform_indices = @transform_7, window_bounds = array<i64: 1, 128>}, {pipeline_mode = #tpu.pipeline_mode<synchronous>, transform_indices = @transform_8, window_bounds = array<i64: 1, 128>}, {pipeline_mode = #tpu.pipeline_mode<synchronous>, transform_indices = @transform_9, window_bounds = array<i64: 128, 1024>}, {pipeline_mode = #tpu.pipeline_mode<synchronous>, transform_indices = @transform_10, window_bounds = array<i64: 1, 1024>}, {pipeline_mode = #tpu.pipeline_mode<synchronous>, transform_indices = @transform_11, window_bounds = array<i64: 32, 1024>}, {pipeline_mode = #tpu.pipeline_mode<synchronous>, transform_indices = @transform_12, window_bounds = array<i64: 1024, 32>}, {pipeline_mode = #tpu.pipeline_mode<synchronous>, transform_indices = @transform_13, window_bounds = array<i64: 32, 32>}, {pipeline_mode = #tpu.pipeline_mode<synchronous>, transform_indices = @transform_14, window_bounds = array<i64: 1, 32>}, {pipeline_mode = #tpu.pipeline_mode<synchronous>, transform_indices = @transform_15, window_bounds = array<i64: 32, 96>}, {pipeline_mode = #tpu.pipeline_mode<synchronous>, transform_indices = @transform_16, window_bounds = array<i64: 32, 96>}, {pipeline_mode = #tpu.pipeline_mode<synchronous>, transform_indices = @transform_17, window_bounds = array<i64: 1, 96>}, {pipeline_mode = #tpu.pipeline_mode<synchronous>, transform_indices = @transform_18, window_bounds = array<i64: 1, 96>}, {pipeline_mode = #tpu.pipeline_mode<synchronous>, transform_indices = @transform_19, window_bounds = array<i64: 64, 128>}, {pipeline_mode = #tpu.pipeline_mode<synchronous>, transform_indices = @transform_20, window_bounds = array<i64: 32, 128>}, {pipeline_mode = #tpu.pipeline_mode<synchronous>, transform_indices = @transform_21, window_bounds = array<i64: 1, 128>}, {pipeline_mode = #tpu.pipeline_mode<synchronous>, transform_indices = @transform_22, window_bounds = array<i64: 1, 128>}, {pipeline_mode = #tpu.pipeline_mode<synchronous>, transform_indices = @transform_23, window_bounds = array<i64: 64, 32>}, {pipeline_mode = #tpu.pipeline_mode<synchronous>, transform_indices = @transform_24, window_bounds = array<i64: 1, 32>}, {pipeline_mode = #tpu.pipeline_mode<synchronous>, transform_indices = @transform_25, window_bounds = array<i64: 32, 8>}, {pipeline_mode = #tpu.pipeline_mode<synchronous>, transform_indices = @transform_26, window_bounds = array<i64: 1, 8>}, {pipeline_mode = #tpu.pipeline_mode<synchronous>, transform_indices = @transform_27, window_bounds = array<i64: 2, 8>}]} {
    %c0 = arith.constant 0 : index
    %c0_0 = arith.constant 0 : index
    %0 = vector.load %arg1[%c0, %c0_0] : memref<16x16xf32, #tpu.memory_space<vmem>>, vector<16x16xf32>
    %c0_1 = arith.constant 0 : index
    %c0_2 = arith.constant 0 : index
    %1 = vector.load %arg6[%c0_1, %c0_2] : memref<16x32xf32, #tpu.memory_space<vmem>>, vector<16x32xf32>
    %cst = arith.constant dense<0.000000e+00> : vector<16x32xf32>
    %2 = tpu.matmul %0, %1, %cst {dimension_numbers = #tpu.dot_dimension_numbers<[1], [0], [0], [1], [0, 0, 1, 1], [], []>} : vector<16x16xf32>, vector<16x32xf32>, vector<16x32xf32> -> vector<16x32xf32>
    %c0_3 = arith.constant 0 : index
    %c0_4 = arith.constant 0 : index
    %3 = vector.load %arg7[%c0_3, %c0_4] : memref<1x32xf32, #tpu.memory_space<vmem>>, vector<1x32xf32>
    %4 = vector.broadcast %3 : vector<1x32xf32> to vector<16x32xf32>
    %5 = arith.addf %2, %4 : vector<16x32xf32>
    %cst_5 = arith.constant 0.000000e+00 : f32
    %6 = vector.broadcast %cst_5 : f32 to vector<16x32xf32>
    %7 = arith.maximumf %5, %6 : vector<16x32xf32>
    %c0_6 = arith.constant 0 : index
    %c0_7 = arith.constant 0 : index
    %8 = vector.load %arg3[%c0_6, %c0_7] : memref<32x1xi32, #tpu.memory_space<vmem>>, vector<32x1xi32>
    %c0_8 = arith.constant 0 : index
    %c0_9 = arith.constant 0 : index
    %9 = vector.load %arg4[%c0_8, %c0_9] : memref<1x32xi32, #tpu.memory_space<vmem>>, vector<1x32xi32>
    %10 = tpu.iota {dimensions = array<i32: 1>} : vector<32x16xi32>
    %11 = vector.broadcast %8 : vector<32x1xi32> to vector<32x16xi32>
    %12 = arith.cmpi eq, %10, %11 : vector<32x16xi32>
    %13 = arith.extui %12 : vector<32x16xi1> to vector<32x16xi32>
    %14 = arith.sitofp %13 : vector<32x16xi32> to vector<32x16xf32>
    %15 = tpu.iota {dimensions = array<i32: 0>} : vector<16x32xi32>
    %16 = vector.broadcast %9 : vector<1x32xi32> to vector<16x32xi32>
    %17 = arith.cmpi eq, %15, %16 : vector<16x32xi32>
    %18 = arith.extui %17 : vector<16x32xi1> to vector<16x32xi32>
    %19 = arith.sitofp %18 : vector<16x32xi32> to vector<16x32xf32>
    %c0_10 = arith.constant 0 : index
    %c0_11 = arith.constant 0 : index
    %20 = vector.load %arg2[%c0_10, %c0_11] : memref<32x1xf32, #tpu.memory_space<vmem>>, vector<32x1xf32>
    %c0_12 = arith.constant 0 : index
    %c0_13 = arith.constant 0 : index
    %21 = vector.load %arg8[%c0_12, %c0_13] : memref<1x128xf32, #tpu.memory_space<vmem>>, vector<1x128xf32>
    %22 = vector.broadcast %20 : vector<32x1xf32> to vector<32x128xf32>
    %23 = vector.broadcast %21 : vector<1x128xf32> to vector<32x128xf32>
    %24 = arith.mulf %22, %23 : vector<32x128xf32>
    %c0_14 = arith.constant 0 : index
    %c0_15 = arith.constant 0 : index
    %25 = vector.load %arg9[%c0_14, %c0_15] : memref<1x128xf32, #tpu.memory_space<vmem>>, vector<1x128xf32>
    %26 = vector.broadcast %25 : vector<1x128xf32> to vector<32x128xf32>
    %27 = arith.addf %24, %26 : vector<32x128xf32>
    %cst_16 = arith.constant 0.000000e+00 : f32
    %28 = vector.broadcast %cst_16 : f32 to vector<32x128xf32>
    %29 = arith.maximumf %27, %28 : vector<32x128xf32>
    %c0_17 = arith.constant 0 : index
    %c0_18 = arith.constant 0 : index
    %30 = vector.load %arg10[%c0_17, %c0_18] : memref<128x1024xf32, #tpu.memory_space<vmem>>, vector<128x1024xf32>
    %cst_19 = arith.constant dense<0.000000e+00> : vector<32x1024xf32>
    %31 = tpu.matmul %29, %30, %cst_19 {dimension_numbers = #tpu.dot_dimension_numbers<[1], [0], [0], [1], [0, 0, 1, 1], [], []>} : vector<32x128xf32>, vector<128x1024xf32>, vector<32x1024xf32> -> vector<32x1024xf32>
    %c0_20 = arith.constant 0 : index
    %c0_21 = arith.constant 0 : index
    %32 = vector.load %arg11[%c0_20, %c0_21] : memref<1x1024xf32, #tpu.memory_space<vmem>>, vector<1x1024xf32>
    %33 = vector.broadcast %32 : vector<1x1024xf32> to vector<32x1024xf32>
    %34 = arith.addf %31, %33 : vector<32x1024xf32>
    %c0_22 = arith.constant 0 : index
    %c0_23 = arith.constant 0 : index
    %35 = vector.load %arg12[%c0_22, %c0_23] : memref<32x1024xf32, #tpu.memory_space<vmem>>, vector<32x1024xf32>
    %c0_24 = arith.constant 0 : index
    %c0_25 = arith.constant 0 : index
    %36 = vector.load %arg13[%c0_24, %c0_25] : memref<1024x32xf32, #tpu.memory_space<vmem>>, vector<1024x32xf32>
    %c0_26 = arith.constant 0 : index
    %c0_27 = arith.constant 0 : index
    %37 = vector.load %arg14[%c0_26, %c0_27] : memref<32x32xf32, #tpu.memory_space<vmem>>, vector<32x32xf32>
    %c0_28 = arith.constant 0 : index
    %c0_29 = arith.constant 0 : index
    %38 = vector.load %arg15[%c0_28, %c0_29] : memref<1x32xf32, #tpu.memory_space<vmem>>, vector<1x32xf32>
    %c0_30 = arith.constant 0 : index
    %c0_31 = arith.constant 0 : index
    %39 = vector.load %arg16[%c0_30, %c0_31] : memref<32x96xf32, #tpu.memory_space<vmem>>, vector<32x96xf32>
    %c0_32 = arith.constant 0 : index
    %c0_33 = arith.constant 0 : index
    %40 = vector.load %arg17[%c0_32, %c0_33] : memref<32x96xf32, #tpu.memory_space<vmem>>, vector<32x96xf32>
    %c0_34 = arith.constant 0 : index
    %c0_35 = arith.constant 0 : index
    %41 = vector.load %arg18[%c0_34, %c0_35] : memref<1x96xf32, #tpu.memory_space<vmem>>, vector<1x96xf32>
    %c0_36 = arith.constant 0 : index
    %c0_37 = arith.constant 0 : index
    %42 = vector.load %arg19[%c0_36, %c0_37] : memref<1x96xf32, #tpu.memory_space<vmem>>, vector<1x96xf32>
    %cst_38 = arith.constant dense<0.000000e+00> : vector<32x32xf32>
    %43 = tpu.matmul %14, %7, %cst_38 {dimension_numbers = #tpu.dot_dimension_numbers<[1], [0], [0], [1], [0, 0, 1, 1], [], []>} : vector<32x16xf32>, vector<16x32xf32>, vector<32x32xf32> -> vector<32x32xf32>
    %cst_39 = arith.constant dense<0.000000e+00> : vector<32x1024xf32>
    %44 = tpu.matmul %43, %35, %cst_39 {dimension_numbers = #tpu.dot_dimension_numbers<[1], [0], [0], [1], [0, 0, 1, 1], [], []>} : vector<32x32xf32>, vector<32x1024xf32>, vector<32x1024xf32> -> vector<32x1024xf32>
    %45 = arith.mulf %44, %34 : vector<32x1024xf32>
    %cst_40 = arith.constant dense<0.000000e+00> : vector<32x32xf32>
    %46 = tpu.matmul %45, %36, %cst_40 {dimension_numbers = #tpu.dot_dimension_numbers<[1], [0], [0], [1], [0, 0, 1, 1], [], []>} : vector<32x1024xf32>, vector<1024x32xf32>, vector<32x32xf32> -> vector<32x32xf32>
    %cst_41 = arith.constant dense<0.000000e+00> : vector<16x32xf32>
    %47 = tpu.matmul %19, %46, %cst_41 {dimension_numbers = #tpu.dot_dimension_numbers<[1], [0], [0], [1], [0, 0, 1, 1], [], []>} : vector<16x32xf32>, vector<32x32xf32>, vector<16x32xf32> -> vector<16x32xf32>
    %cst_42 = arith.constant dense<0.000000e+00> : vector<16x32xf32>
    %48 = tpu.matmul %7, %37, %cst_42 {dimension_numbers = #tpu.dot_dimension_numbers<[1], [0], [0], [1], [0, 0, 1, 1], [], []>} : vector<16x32xf32>, vector<32x32xf32>, vector<16x32xf32> -> vector<16x32xf32>
    %49 = arith.addf %47, %48 : vector<16x32xf32>
    %50 = vector.broadcast %38 : vector<1x32xf32> to vector<16x32xf32>
    %51 = arith.addf %49, %50 : vector<16x32xf32>
    %cst_43 = arith.constant 0.000000e+00 : f32
    %52 = vector.broadcast %cst_43 : f32 to vector<16x32xf32>
    %53 = arith.maximumf %51, %52 : vector<16x32xf32>
    %cst_44 = arith.constant dense<0.000000e+00> : vector<16x96xf32>
    %54 = tpu.matmul %53, %39, %cst_44 {dimension_numbers = #tpu.dot_dimension_numbers<[1], [0], [0], [1], [0, 0, 1, 1], [], []>} : vector<16x32xf32>, vector<32x96xf32>, vector<16x96xf32> -> vector<16x96xf32>
    %55 = vector.broadcast %41 : vector<1x96xf32> to vector<16x96xf32>
    %56 = arith.addf %54, %55 : vector<16x96xf32>
    %cst_45 = arith.constant dense<0.000000e+00> : vector<16x96xf32>
    %57 = tpu.matmul %7, %40, %cst_45 {dimension_numbers = #tpu.dot_dimension_numbers<[1], [0], [0], [1], [0, 0, 1, 1], [], []>} : vector<16x32xf32>, vector<32x96xf32>, vector<16x96xf32> -> vector<16x96xf32>
    %58 = vector.broadcast %42 : vector<1x96xf32> to vector<16x96xf32>
    %59 = arith.addf %57, %58 : vector<16x96xf32>
    %60 = vector.extract_strided_slice %56 {offsets = [0, 0], sizes = [16, 32], strides = [1, 1]} : vector<16x96xf32> to vector<16x32xf32>
    %61 = vector.extract_strided_slice %59 {offsets = [0, 0], sizes = [16, 32], strides = [1, 1]} : vector<16x96xf32> to vector<16x32xf32>
    %62 = arith.addf %60, %61 : vector<16x32xf32>
    %63 = arith.negf %62 : vector<16x32xf32>
    %64 = math.exp %63 : vector<16x32xf32>
    %cst_46 = arith.constant 1.000000e+00 : f32
    %65 = vector.broadcast %cst_46 : f32 to vector<16x32xf32>
    %66 = arith.addf %65, %64 : vector<16x32xf32>
    %67 = arith.divf %65, %66 : vector<16x32xf32>
    %68 = vector.extract_strided_slice %56 {offsets = [0, 32], sizes = [16, 32], strides = [1, 1]} : vector<16x96xf32> to vector<16x32xf32>
    %69 = vector.extract_strided_slice %59 {offsets = [0, 32], sizes = [16, 32], strides = [1, 1]} : vector<16x96xf32> to vector<16x32xf32>
    %70 = arith.addf %68, %69 : vector<16x32xf32>
    %71 = arith.negf %70 : vector<16x32xf32>
    %72 = math.exp %71 : vector<16x32xf32>
    %cst_47 = arith.constant 1.000000e+00 : f32
    %73 = vector.broadcast %cst_47 : f32 to vector<16x32xf32>
    %74 = arith.addf %73, %72 : vector<16x32xf32>
    %75 = arith.divf %73, %74 : vector<16x32xf32>
    %76 = vector.extract_strided_slice %56 {offsets = [0, 64], sizes = [16, 32], strides = [1, 1]} : vector<16x96xf32> to vector<16x32xf32>
    %77 = vector.extract_strided_slice %59 {offsets = [0, 64], sizes = [16, 32], strides = [1, 1]} : vector<16x96xf32> to vector<16x32xf32>
    %78 = arith.mulf %67, %77 : vector<16x32xf32>
    %79 = arith.addf %76, %78 : vector<16x32xf32>
    %80 = math.tanh %79 : vector<16x32xf32>
    %cst_48 = arith.constant 1.000000e+00 : f32
    %81 = vector.broadcast %cst_48 : f32 to vector<16x32xf32>
    %82 = arith.subf %81, %75 : vector<16x32xf32>
    %83 = arith.mulf %82, %80 : vector<16x32xf32>
    %84 = arith.mulf %75, %7 : vector<16x32xf32>
    %85 = arith.addf %83, %84 : vector<16x32xf32>
    %cst_49 = arith.constant dense<0.000000e+00> : vector<32x32xf32>
    %86 = tpu.matmul %14, %85, %cst_49 {dimension_numbers = #tpu.dot_dimension_numbers<[1], [0], [0], [1], [0, 0, 1, 1], [], []>} : vector<32x16xf32>, vector<16x32xf32>, vector<32x32xf32> -> vector<32x32xf32>
    %cst_50 = arith.constant dense<0.000000e+00> : vector<32x1024xf32>
    %87 = tpu.matmul %86, %35, %cst_50 {dimension_numbers = #tpu.dot_dimension_numbers<[1], [0], [0], [1], [0, 0, 1, 1], [], []>} : vector<32x32xf32>, vector<32x1024xf32>, vector<32x1024xf32> -> vector<32x1024xf32>
    %88 = arith.mulf %87, %34 : vector<32x1024xf32>
    %cst_51 = arith.constant dense<0.000000e+00> : vector<32x32xf32>
    %89 = tpu.matmul %88, %36, %cst_51 {dimension_numbers = #tpu.dot_dimension_numbers<[1], [0], [0], [1], [0, 0, 1, 1], [], []>} : vector<32x1024xf32>, vector<1024x32xf32>, vector<32x32xf32> -> vector<32x32xf32>
    %cst_52 = arith.constant dense<0.000000e+00> : vector<16x32xf32>
    %90 = tpu.matmul %19, %89, %cst_52 {dimension_numbers = #tpu.dot_dimension_numbers<[1], [0], [0], [1], [0, 0, 1, 1], [], []>} : vector<16x32xf32>, vector<32x32xf32>, vector<16x32xf32> -> vector<16x32xf32>
    %cst_53 = arith.constant dense<0.000000e+00> : vector<16x32xf32>
    %91 = tpu.matmul %85, %37, %cst_53 {dimension_numbers = #tpu.dot_dimension_numbers<[1], [0], [0], [1], [0, 0, 1, 1], [], []>} : vector<16x32xf32>, vector<32x32xf32>, vector<16x32xf32> -> vector<16x32xf32>
    %92 = arith.addf %90, %91 : vector<16x32xf32>
    %93 = vector.broadcast %38 : vector<1x32xf32> to vector<16x32xf32>
    %94 = arith.addf %92, %93 : vector<16x32xf32>
    %cst_54 = arith.constant 0.000000e+00 : f32
    %95 = vector.broadcast %cst_54 : f32 to vector<16x32xf32>
    %96 = arith.maximumf %94, %95 : vector<16x32xf32>
    %cst_55 = arith.constant dense<0.000000e+00> : vector<16x96xf32>
    %97 = tpu.matmul %96, %39, %cst_55 {dimension_numbers = #tpu.dot_dimension_numbers<[1], [0], [0], [1], [0, 0, 1, 1], [], []>} : vector<16x32xf32>, vector<32x96xf32>, vector<16x96xf32> -> vector<16x96xf32>
    %98 = vector.broadcast %41 : vector<1x96xf32> to vector<16x96xf32>
    %99 = arith.addf %97, %98 : vector<16x96xf32>
    %cst_56 = arith.constant dense<0.000000e+00> : vector<16x96xf32>
    %100 = tpu.matmul %85, %40, %cst_56 {dimension_numbers = #tpu.dot_dimension_numbers<[1], [0], [0], [1], [0, 0, 1, 1], [], []>} : vector<16x32xf32>, vector<32x96xf32>, vector<16x96xf32> -> vector<16x96xf32>
    %101 = vector.broadcast %42 : vector<1x96xf32> to vector<16x96xf32>
    %102 = arith.addf %100, %101 : vector<16x96xf32>
    %103 = vector.extract_strided_slice %99 {offsets = [0, 0], sizes = [16, 32], strides = [1, 1]} : vector<16x96xf32> to vector<16x32xf32>
    %104 = vector.extract_strided_slice %102 {offsets = [0, 0], sizes = [16, 32], strides = [1, 1]} : vector<16x96xf32> to vector<16x32xf32>
    %105 = arith.addf %103, %104 : vector<16x32xf32>
    %106 = arith.negf %105 : vector<16x32xf32>
    %107 = math.exp %106 : vector<16x32xf32>
    %cst_57 = arith.constant 1.000000e+00 : f32
    %108 = vector.broadcast %cst_57 : f32 to vector<16x32xf32>
    %109 = arith.addf %108, %107 : vector<16x32xf32>
    %110 = arith.divf %108, %109 : vector<16x32xf32>
    %111 = vector.extract_strided_slice %99 {offsets = [0, 32], sizes = [16, 32], strides = [1, 1]} : vector<16x96xf32> to vector<16x32xf32>
    %112 = vector.extract_strided_slice %102 {offsets = [0, 32], sizes = [16, 32], strides = [1, 1]} : vector<16x96xf32> to vector<16x32xf32>
    %113 = arith.addf %111, %112 : vector<16x32xf32>
    %114 = arith.negf %113 : vector<16x32xf32>
    %115 = math.exp %114 : vector<16x32xf32>
    %cst_58 = arith.constant 1.000000e+00 : f32
    %116 = vector.broadcast %cst_58 : f32 to vector<16x32xf32>
    %117 = arith.addf %116, %115 : vector<16x32xf32>
    %118 = arith.divf %116, %117 : vector<16x32xf32>
    %119 = vector.extract_strided_slice %99 {offsets = [0, 64], sizes = [16, 32], strides = [1, 1]} : vector<16x96xf32> to vector<16x32xf32>
    %120 = vector.extract_strided_slice %102 {offsets = [0, 64], sizes = [16, 32], strides = [1, 1]} : vector<16x96xf32> to vector<16x32xf32>
    %121 = arith.mulf %110, %120 : vector<16x32xf32>
    %122 = arith.addf %119, %121 : vector<16x32xf32>
    %123 = math.tanh %122 : vector<16x32xf32>
    %cst_59 = arith.constant 1.000000e+00 : f32
    %124 = vector.broadcast %cst_59 : f32 to vector<16x32xf32>
    %125 = arith.subf %124, %118 : vector<16x32xf32>
    %126 = arith.mulf %125, %123 : vector<16x32xf32>
    %127 = arith.mulf %118, %85 : vector<16x32xf32>
    %128 = arith.addf %126, %127 : vector<16x32xf32>
    %cst_60 = arith.constant dense<0.000000e+00> : vector<32x32xf32>
    %129 = tpu.matmul %14, %128, %cst_60 {dimension_numbers = #tpu.dot_dimension_numbers<[1], [0], [0], [1], [0, 0, 1, 1], [], []>} : vector<32x16xf32>, vector<16x32xf32>, vector<32x32xf32> -> vector<32x32xf32>
    %cst_61 = arith.constant dense<0.000000e+00> : vector<32x1024xf32>
    %130 = tpu.matmul %129, %35, %cst_61 {dimension_numbers = #tpu.dot_dimension_numbers<[1], [0], [0], [1], [0, 0, 1, 1], [], []>} : vector<32x32xf32>, vector<32x1024xf32>, vector<32x1024xf32> -> vector<32x1024xf32>
    %131 = arith.mulf %130, %34 : vector<32x1024xf32>
    %cst_62 = arith.constant dense<0.000000e+00> : vector<32x32xf32>
    %132 = tpu.matmul %131, %36, %cst_62 {dimension_numbers = #tpu.dot_dimension_numbers<[1], [0], [0], [1], [0, 0, 1, 1], [], []>} : vector<32x1024xf32>, vector<1024x32xf32>, vector<32x32xf32> -> vector<32x32xf32>
    %cst_63 = arith.constant dense<0.000000e+00> : vector<16x32xf32>
    %133 = tpu.matmul %19, %132, %cst_63 {dimension_numbers = #tpu.dot_dimension_numbers<[1], [0], [0], [1], [0, 0, 1, 1], [], []>} : vector<16x32xf32>, vector<32x32xf32>, vector<16x32xf32> -> vector<16x32xf32>
    %cst_64 = arith.constant dense<0.000000e+00> : vector<16x32xf32>
    %134 = tpu.matmul %128, %37, %cst_64 {dimension_numbers = #tpu.dot_dimension_numbers<[1], [0], [0], [1], [0, 0, 1, 1], [], []>} : vector<16x32xf32>, vector<32x32xf32>, vector<16x32xf32> -> vector<16x32xf32>
    %135 = arith.addf %133, %134 : vector<16x32xf32>
    %136 = vector.broadcast %38 : vector<1x32xf32> to vector<16x32xf32>
    %137 = arith.addf %135, %136 : vector<16x32xf32>
    %cst_65 = arith.constant 0.000000e+00 : f32
    %138 = vector.broadcast %cst_65 : f32 to vector<16x32xf32>
    %139 = arith.maximumf %137, %138 : vector<16x32xf32>
    %cst_66 = arith.constant dense<0.000000e+00> : vector<16x96xf32>
    %140 = tpu.matmul %139, %39, %cst_66 {dimension_numbers = #tpu.dot_dimension_numbers<[1], [0], [0], [1], [0, 0, 1, 1], [], []>} : vector<16x32xf32>, vector<32x96xf32>, vector<16x96xf32> -> vector<16x96xf32>
    %141 = vector.broadcast %41 : vector<1x96xf32> to vector<16x96xf32>
    %142 = arith.addf %140, %141 : vector<16x96xf32>
    %cst_67 = arith.constant dense<0.000000e+00> : vector<16x96xf32>
    %143 = tpu.matmul %128, %40, %cst_67 {dimension_numbers = #tpu.dot_dimension_numbers<[1], [0], [0], [1], [0, 0, 1, 1], [], []>} : vector<16x32xf32>, vector<32x96xf32>, vector<16x96xf32> -> vector<16x96xf32>
    %144 = vector.broadcast %42 : vector<1x96xf32> to vector<16x96xf32>
    %145 = arith.addf %143, %144 : vector<16x96xf32>
    %146 = vector.extract_strided_slice %142 {offsets = [0, 0], sizes = [16, 32], strides = [1, 1]} : vector<16x96xf32> to vector<16x32xf32>
    %147 = vector.extract_strided_slice %145 {offsets = [0, 0], sizes = [16, 32], strides = [1, 1]} : vector<16x96xf32> to vector<16x32xf32>
    %148 = arith.addf %146, %147 : vector<16x32xf32>
    %149 = arith.negf %148 : vector<16x32xf32>
    %150 = math.exp %149 : vector<16x32xf32>
    %cst_68 = arith.constant 1.000000e+00 : f32
    %151 = vector.broadcast %cst_68 : f32 to vector<16x32xf32>
    %152 = arith.addf %151, %150 : vector<16x32xf32>
    %153 = arith.divf %151, %152 : vector<16x32xf32>
    %154 = vector.extract_strided_slice %142 {offsets = [0, 32], sizes = [16, 32], strides = [1, 1]} : vector<16x96xf32> to vector<16x32xf32>
    %155 = vector.extract_strided_slice %145 {offsets = [0, 32], sizes = [16, 32], strides = [1, 1]} : vector<16x96xf32> to vector<16x32xf32>
    %156 = arith.addf %154, %155 : vector<16x32xf32>
    %157 = arith.negf %156 : vector<16x32xf32>
    %158 = math.exp %157 : vector<16x32xf32>
    %cst_69 = arith.constant 1.000000e+00 : f32
    %159 = vector.broadcast %cst_69 : f32 to vector<16x32xf32>
    %160 = arith.addf %159, %158 : vector<16x32xf32>
    %161 = arith.divf %159, %160 : vector<16x32xf32>
    %162 = vector.extract_strided_slice %142 {offsets = [0, 64], sizes = [16, 32], strides = [1, 1]} : vector<16x96xf32> to vector<16x32xf32>
    %163 = vector.extract_strided_slice %145 {offsets = [0, 64], sizes = [16, 32], strides = [1, 1]} : vector<16x96xf32> to vector<16x32xf32>
    %164 = arith.mulf %153, %163 : vector<16x32xf32>
    %165 = arith.addf %162, %164 : vector<16x32xf32>
    %166 = math.tanh %165 : vector<16x32xf32>
    %cst_70 = arith.constant 1.000000e+00 : f32
    %167 = vector.broadcast %cst_70 : f32 to vector<16x32xf32>
    %168 = arith.subf %167, %161 : vector<16x32xf32>
    %169 = arith.mulf %168, %166 : vector<16x32xf32>
    %170 = arith.mulf %161, %128 : vector<16x32xf32>
    %171 = arith.addf %169, %170 : vector<16x32xf32>
    %c0_71 = arith.constant 0 : index
    %c0_72 = arith.constant 0 : index
    %172 = vector.load %arg5[%c0_71, %c0_72] : memref<1x16xi32, #tpu.memory_space<vmem>>, vector<1x16xi32>
    %173 = tpu.iota {dimensions = array<i32: 0>} : vector<2x16xi32>
    %174 = vector.broadcast %172 : vector<1x16xi32> to vector<2x16xi32>
    %175 = arith.cmpi eq, %173, %174 : vector<2x16xi32>
    %c0_73 = arith.constant 0 : index
    %c0_74 = arith.constant 0 : index
    %176 = vector.load %arg20[%c0_73, %c0_74] : memref<64x128xf32, #tpu.memory_space<vmem>>, vector<64x128xf32>
    %c0_75 = arith.constant 0 : index
    %c0_76 = arith.constant 0 : index
    %177 = vector.load %arg21[%c0_75, %c0_76] : memref<32x128xf32, #tpu.memory_space<vmem>>, vector<32x128xf32>
    %c0_77 = arith.constant 0 : index
    %c0_78 = arith.constant 0 : index
    %178 = vector.load %arg22[%c0_77, %c0_78] : memref<1x128xf32, #tpu.memory_space<vmem>>, vector<1x128xf32>
    %c0_79 = arith.constant 0 : index
    %c0_80 = arith.constant 0 : index
    %179 = vector.load %arg23[%c0_79, %c0_80] : memref<1x128xf32, #tpu.memory_space<vmem>>, vector<1x128xf32>
    %180 = arith.addf %178, %179 : vector<1x128xf32>
    %cst_81 = arith.constant 0.000000e+00 : f32
    %181 = vector.broadcast %cst_81 : f32 to vector<2x64xf32>
    %cst_82 = arith.constant 0.000000e+00 : f32
    %182 = vector.broadcast %cst_82 : f32 to vector<2x32xf32>
    %cst_83 = arith.constant 0.000000e+00 : f32
    %183 = vector.broadcast %cst_83 : f32 to vector<2x32xf32>
    %cst_84 = arith.constant dense<0.000000e+00> : vector<2x128xf32>
    %184 = tpu.matmul %181, %176, %cst_84 {dimension_numbers = #tpu.dot_dimension_numbers<[1], [0], [0], [1], [0, 0, 1, 1], [], []>} : vector<2x64xf32>, vector<64x128xf32>, vector<2x128xf32> -> vector<2x128xf32>
    %cst_85 = arith.constant dense<0.000000e+00> : vector<2x128xf32>
    %185 = tpu.matmul %182, %177, %cst_85 {dimension_numbers = #tpu.dot_dimension_numbers<[1], [0], [0], [1], [0, 0, 1, 1], [], []>} : vector<2x32xf32>, vector<32x128xf32>, vector<2x128xf32> -> vector<2x128xf32>
    %186 = arith.addf %184, %185 : vector<2x128xf32>
    %187 = vector.broadcast %180 : vector<1x128xf32> to vector<2x128xf32>
    %188 = arith.addf %186, %187 : vector<2x128xf32>
    %189 = vector.extract_strided_slice %188 {offsets = [0, 0], sizes = [2, 32], strides = [1, 1]} : vector<2x128xf32> to vector<2x32xf32>
    %190 = arith.negf %189 : vector<2x32xf32>
    %191 = math.exp %190 : vector<2x32xf32>
    %cst_86 = arith.constant 1.000000e+00 : f32
    %192 = vector.broadcast %cst_86 : f32 to vector<2x32xf32>
    %193 = arith.addf %192, %191 : vector<2x32xf32>
    %194 = arith.divf %192, %193 : vector<2x32xf32>
    %195 = vector.extract_strided_slice %188 {offsets = [0, 32], sizes = [2, 32], strides = [1, 1]} : vector<2x128xf32> to vector<2x32xf32>
    %196 = arith.negf %195 : vector<2x32xf32>
    %197 = math.exp %196 : vector<2x32xf32>
    %cst_87 = arith.constant 1.000000e+00 : f32
    %198 = vector.broadcast %cst_87 : f32 to vector<2x32xf32>
    %199 = arith.addf %198, %197 : vector<2x32xf32>
    %200 = arith.divf %198, %199 : vector<2x32xf32>
    %201 = vector.extract_strided_slice %188 {offsets = [0, 64], sizes = [2, 32], strides = [1, 1]} : vector<2x128xf32> to vector<2x32xf32>
    %202 = math.tanh %201 : vector<2x32xf32>
    %203 = vector.extract_strided_slice %188 {offsets = [0, 96], sizes = [2, 32], strides = [1, 1]} : vector<2x128xf32> to vector<2x32xf32>
    %204 = arith.negf %203 : vector<2x32xf32>
    %205 = math.exp %204 : vector<2x32xf32>
    %cst_88 = arith.constant 1.000000e+00 : f32
    %206 = vector.broadcast %cst_88 : f32 to vector<2x32xf32>
    %207 = arith.addf %206, %205 : vector<2x32xf32>
    %208 = arith.divf %206, %207 : vector<2x32xf32>
    %209 = arith.mulf %200, %183 : vector<2x32xf32>
    %210 = arith.mulf %194, %202 : vector<2x32xf32>
    %211 = arith.addf %209, %210 : vector<2x32xf32>
    %212 = math.tanh %211 : vector<2x32xf32>
    %213 = arith.mulf %208, %212 : vector<2x32xf32>
    %cst_89 = arith.constant dense<0.000000e+00> : vector<2x16xf32>
    %214 = tpu.matmul %213, %171, %cst_89 {dimension_numbers = #tpu.dot_dimension_numbers<[1], [1], [0], [0], [0, 0, 1, 0], [], []>} : vector<2x32xf32>, vector<16x32xf32>, vector<2x16xf32> -> vector<2x16xf32>
    %cst_90 = arith.constant -1.000000e+30 : f32
    %215 = vector.broadcast %cst_90 : f32 to vector<2x16xf32>
    %216 = arith.select %175, %214, %215 : vector<2x16xi1>, vector<2x16xf32>
    %cst_91 = arith.constant dense<0xFF800000> : vector<2xf32>
    %217 = vector.multi_reduction <maximumf>, %216, %cst_91 [1] : vector<2x16xf32> to vector<2xf32>
    %218 = vector.shape_cast %217 : vector<2xf32> to vector<2x1xf32>
    %219 = vector.broadcast %218 : vector<2x1xf32> to vector<2x16xf32>
    %220 = arith.subf %216, %219 : vector<2x16xf32>
    %221 = math.exp %220 : vector<2x16xf32>
    %cst_92 = arith.constant 0.000000e+00 : f32
    %222 = vector.broadcast %cst_92 : f32 to vector<2x16xf32>
    %223 = arith.select %175, %221, %222 : vector<2x16xi1>, vector<2x16xf32>
    %cst_93 = arith.constant dense<0.000000e+00> : vector<2xf32>
    %224 = vector.multi_reduction <add>, %223, %cst_93 [1] : vector<2x16xf32> to vector<2xf32>
    %225 = vector.shape_cast %224 : vector<2xf32> to vector<2x1xf32>
    %cst_94 = arith.constant 1.000000e-16 : f32
    %226 = vector.broadcast %cst_94 : f32 to vector<2x1xf32>
    %227 = arith.addf %225, %226 : vector<2x1xf32>
    %228 = tpu.reciprocal %227 {approx = true} : vector<2x1xf32> -> vector<2x1xf32>
    %229 = vector.broadcast %228 : vector<2x1xf32> to vector<2x16xf32>
    %230 = arith.mulf %223, %229 : vector<2x16xf32>
    %cst_95 = arith.constant dense<0.000000e+00> : vector<2x32xf32>
    %231 = tpu.matmul %230, %171, %cst_95 {dimension_numbers = #tpu.dot_dimension_numbers<[1], [0], [0], [1], [0, 0, 1, 1], [], []>} : vector<2x16xf32>, vector<16x32xf32>, vector<2x32xf32> -> vector<2x32xf32>
    %232 = tpu.concatenate %213, %231 in 1 : vector<2x32xf32>, vector<2x32xf32> -> vector<2x64xf32>
    %cst_96 = arith.constant dense<0.000000e+00> : vector<2x128xf32>
    %233 = tpu.matmul %232, %176, %cst_96 {dimension_numbers = #tpu.dot_dimension_numbers<[1], [0], [0], [1], [0, 0, 1, 1], [], []>} : vector<2x64xf32>, vector<64x128xf32>, vector<2x128xf32> -> vector<2x128xf32>
    %cst_97 = arith.constant dense<0.000000e+00> : vector<2x128xf32>
    %234 = tpu.matmul %213, %177, %cst_97 {dimension_numbers = #tpu.dot_dimension_numbers<[1], [0], [0], [1], [0, 0, 1, 1], [], []>} : vector<2x32xf32>, vector<32x128xf32>, vector<2x128xf32> -> vector<2x128xf32>
    %235 = arith.addf %233, %234 : vector<2x128xf32>
    %236 = vector.broadcast %180 : vector<1x128xf32> to vector<2x128xf32>
    %237 = arith.addf %235, %236 : vector<2x128xf32>
    %238 = vector.extract_strided_slice %237 {offsets = [0, 0], sizes = [2, 32], strides = [1, 1]} : vector<2x128xf32> to vector<2x32xf32>
    %239 = arith.negf %238 : vector<2x32xf32>
    %240 = math.exp %239 : vector<2x32xf32>
    %cst_98 = arith.constant 1.000000e+00 : f32
    %241 = vector.broadcast %cst_98 : f32 to vector<2x32xf32>
    %242 = arith.addf %241, %240 : vector<2x32xf32>
    %243 = arith.divf %241, %242 : vector<2x32xf32>
    %244 = vector.extract_strided_slice %237 {offsets = [0, 32], sizes = [2, 32], strides = [1, 1]} : vector<2x128xf32> to vector<2x32xf32>
    %245 = arith.negf %244 : vector<2x32xf32>
    %246 = math.exp %245 : vector<2x32xf32>
    %cst_99 = arith.constant 1.000000e+00 : f32
    %247 = vector.broadcast %cst_99 : f32 to vector<2x32xf32>
    %248 = arith.addf %247, %246 : vector<2x32xf32>
    %249 = arith.divf %247, %248 : vector<2x32xf32>
    %250 = vector.extract_strided_slice %237 {offsets = [0, 64], sizes = [2, 32], strides = [1, 1]} : vector<2x128xf32> to vector<2x32xf32>
    %251 = math.tanh %250 : vector<2x32xf32>
    %252 = vector.extract_strided_slice %237 {offsets = [0, 96], sizes = [2, 32], strides = [1, 1]} : vector<2x128xf32> to vector<2x32xf32>
    %253 = arith.negf %252 : vector<2x32xf32>
    %254 = math.exp %253 : vector<2x32xf32>
    %cst_100 = arith.constant 1.000000e+00 : f32
    %255 = vector.broadcast %cst_100 : f32 to vector<2x32xf32>
    %256 = arith.addf %255, %254 : vector<2x32xf32>
    %257 = arith.divf %255, %256 : vector<2x32xf32>
    %258 = arith.mulf %249, %211 : vector<2x32xf32>
    %259 = arith.mulf %243, %251 : vector<2x32xf32>
    %260 = arith.addf %258, %259 : vector<2x32xf32>
    %261 = math.tanh %260 : vector<2x32xf32>
    %262 = arith.mulf %257, %261 : vector<2x32xf32>
    %cst_101 = arith.constant dense<0.000000e+00> : vector<2x16xf32>
    %263 = tpu.matmul %262, %171, %cst_101 {dimension_numbers = #tpu.dot_dimension_numbers<[1], [1], [0], [0], [0, 0, 1, 0], [], []>} : vector<2x32xf32>, vector<16x32xf32>, vector<2x16xf32> -> vector<2x16xf32>
    %cst_102 = arith.constant -1.000000e+30 : f32
    %264 = vector.broadcast %cst_102 : f32 to vector<2x16xf32>
    %265 = arith.select %175, %263, %264 : vector<2x16xi1>, vector<2x16xf32>
    %cst_103 = arith.constant dense<0xFF800000> : vector<2xf32>
    %266 = vector.multi_reduction <maximumf>, %265, %cst_103 [1] : vector<2x16xf32> to vector<2xf32>
    %267 = vector.shape_cast %266 : vector<2xf32> to vector<2x1xf32>
    %268 = vector.broadcast %267 : vector<2x1xf32> to vector<2x16xf32>
    %269 = arith.subf %265, %268 : vector<2x16xf32>
    %270 = math.exp %269 : vector<2x16xf32>
    %cst_104 = arith.constant 0.000000e+00 : f32
    %271 = vector.broadcast %cst_104 : f32 to vector<2x16xf32>
    %272 = arith.select %175, %270, %271 : vector<2x16xi1>, vector<2x16xf32>
    %cst_105 = arith.constant dense<0.000000e+00> : vector<2xf32>
    %273 = vector.multi_reduction <add>, %272, %cst_105 [1] : vector<2x16xf32> to vector<2xf32>
    %274 = vector.shape_cast %273 : vector<2xf32> to vector<2x1xf32>
    %cst_106 = arith.constant 1.000000e-16 : f32
    %275 = vector.broadcast %cst_106 : f32 to vector<2x1xf32>
    %276 = arith.addf %274, %275 : vector<2x1xf32>
    %277 = tpu.reciprocal %276 {approx = true} : vector<2x1xf32> -> vector<2x1xf32>
    %278 = vector.broadcast %277 : vector<2x1xf32> to vector<2x16xf32>
    %279 = arith.mulf %272, %278 : vector<2x16xf32>
    %cst_107 = arith.constant dense<0.000000e+00> : vector<2x32xf32>
    %280 = tpu.matmul %279, %171, %cst_107 {dimension_numbers = #tpu.dot_dimension_numbers<[1], [0], [0], [1], [0, 0, 1, 1], [], []>} : vector<2x16xf32>, vector<16x32xf32>, vector<2x32xf32> -> vector<2x32xf32>
    %281 = tpu.concatenate %262, %280 in 1 : vector<2x32xf32>, vector<2x32xf32> -> vector<2x64xf32>
    %cst_108 = arith.constant dense<0.000000e+00> : vector<2x128xf32>
    %282 = tpu.matmul %281, %176, %cst_108 {dimension_numbers = #tpu.dot_dimension_numbers<[1], [0], [0], [1], [0, 0, 1, 1], [], []>} : vector<2x64xf32>, vector<64x128xf32>, vector<2x128xf32> -> vector<2x128xf32>
    %cst_109 = arith.constant dense<0.000000e+00> : vector<2x128xf32>
    %283 = tpu.matmul %262, %177, %cst_109 {dimension_numbers = #tpu.dot_dimension_numbers<[1], [0], [0], [1], [0, 0, 1, 1], [], []>} : vector<2x32xf32>, vector<32x128xf32>, vector<2x128xf32> -> vector<2x128xf32>
    %284 = arith.addf %282, %283 : vector<2x128xf32>
    %285 = vector.broadcast %180 : vector<1x128xf32> to vector<2x128xf32>
    %286 = arith.addf %284, %285 : vector<2x128xf32>
    %287 = vector.extract_strided_slice %286 {offsets = [0, 0], sizes = [2, 32], strides = [1, 1]} : vector<2x128xf32> to vector<2x32xf32>
    %288 = arith.negf %287 : vector<2x32xf32>
    %289 = math.exp %288 : vector<2x32xf32>
    %cst_110 = arith.constant 1.000000e+00 : f32
    %290 = vector.broadcast %cst_110 : f32 to vector<2x32xf32>
    %291 = arith.addf %290, %289 : vector<2x32xf32>
    %292 = arith.divf %290, %291 : vector<2x32xf32>
    %293 = vector.extract_strided_slice %286 {offsets = [0, 32], sizes = [2, 32], strides = [1, 1]} : vector<2x128xf32> to vector<2x32xf32>
    %294 = arith.negf %293 : vector<2x32xf32>
    %295 = math.exp %294 : vector<2x32xf32>
    %cst_111 = arith.constant 1.000000e+00 : f32
    %296 = vector.broadcast %cst_111 : f32 to vector<2x32xf32>
    %297 = arith.addf %296, %295 : vector<2x32xf32>
    %298 = arith.divf %296, %297 : vector<2x32xf32>
    %299 = vector.extract_strided_slice %286 {offsets = [0, 64], sizes = [2, 32], strides = [1, 1]} : vector<2x128xf32> to vector<2x32xf32>
    %300 = math.tanh %299 : vector<2x32xf32>
    %301 = vector.extract_strided_slice %286 {offsets = [0, 96], sizes = [2, 32], strides = [1, 1]} : vector<2x128xf32> to vector<2x32xf32>
    %302 = arith.negf %301 : vector<2x32xf32>
    %303 = math.exp %302 : vector<2x32xf32>
    %cst_112 = arith.constant 1.000000e+00 : f32
    %304 = vector.broadcast %cst_112 : f32 to vector<2x32xf32>
    %305 = arith.addf %304, %303 : vector<2x32xf32>
    %306 = arith.divf %304, %305 : vector<2x32xf32>
    %307 = arith.mulf %298, %260 : vector<2x32xf32>
    %308 = arith.mulf %292, %300 : vector<2x32xf32>
    %309 = arith.addf %307, %308 : vector<2x32xf32>
    %310 = math.tanh %309 : vector<2x32xf32>
    %311 = arith.mulf %306, %310 : vector<2x32xf32>
    %cst_113 = arith.constant dense<0.000000e+00> : vector<2x16xf32>
    %312 = tpu.matmul %311, %171, %cst_113 {dimension_numbers = #tpu.dot_dimension_numbers<[1], [1], [0], [0], [0, 0, 1, 0], [], []>} : vector<2x32xf32>, vector<16x32xf32>, vector<2x16xf32> -> vector<2x16xf32>
    %cst_114 = arith.constant -1.000000e+30 : f32
    %313 = vector.broadcast %cst_114 : f32 to vector<2x16xf32>
    %314 = arith.select %175, %312, %313 : vector<2x16xi1>, vector<2x16xf32>
    %cst_115 = arith.constant dense<0xFF800000> : vector<2xf32>
    %315 = vector.multi_reduction <maximumf>, %314, %cst_115 [1] : vector<2x16xf32> to vector<2xf32>
    %316 = vector.shape_cast %315 : vector<2xf32> to vector<2x1xf32>
    %317 = vector.broadcast %316 : vector<2x1xf32> to vector<2x16xf32>
    %318 = arith.subf %314, %317 : vector<2x16xf32>
    %319 = math.exp %318 : vector<2x16xf32>
    %cst_116 = arith.constant 0.000000e+00 : f32
    %320 = vector.broadcast %cst_116 : f32 to vector<2x16xf32>
    %321 = arith.select %175, %319, %320 : vector<2x16xi1>, vector<2x16xf32>
    %cst_117 = arith.constant dense<0.000000e+00> : vector<2xf32>
    %322 = vector.multi_reduction <add>, %321, %cst_117 [1] : vector<2x16xf32> to vector<2xf32>
    %323 = vector.shape_cast %322 : vector<2xf32> to vector<2x1xf32>
    %cst_118 = arith.constant 1.000000e-16 : f32
    %324 = vector.broadcast %cst_118 : f32 to vector<2x1xf32>
    %325 = arith.addf %323, %324 : vector<2x1xf32>
    %326 = tpu.reciprocal %325 {approx = true} : vector<2x1xf32> -> vector<2x1xf32>
    %327 = vector.broadcast %326 : vector<2x1xf32> to vector<2x16xf32>
    %328 = arith.mulf %321, %327 : vector<2x16xf32>
    %cst_119 = arith.constant dense<0.000000e+00> : vector<2x32xf32>
    %329 = tpu.matmul %328, %171, %cst_119 {dimension_numbers = #tpu.dot_dimension_numbers<[1], [0], [0], [1], [0, 0, 1, 1], [], []>} : vector<2x16xf32>, vector<16x32xf32>, vector<2x32xf32> -> vector<2x32xf32>
    %330 = tpu.concatenate %311, %329 in 1 : vector<2x32xf32>, vector<2x32xf32> -> vector<2x64xf32>
    %c0_120 = arith.constant 0 : index
    %c0_121 = arith.constant 0 : index
    %331 = vector.load %arg24[%c0_120, %c0_121] : memref<64x32xf32, #tpu.memory_space<vmem>>, vector<64x32xf32>
    %cst_122 = arith.constant dense<0.000000e+00> : vector<2x32xf32>
    %332 = tpu.matmul %330, %331, %cst_122 {dimension_numbers = #tpu.dot_dimension_numbers<[1], [0], [0], [1], [0, 0, 1, 1], [], []>} : vector<2x64xf32>, vector<64x32xf32>, vector<2x32xf32> -> vector<2x32xf32>
    %c0_123 = arith.constant 0 : index
    %c0_124 = arith.constant 0 : index
    %333 = vector.load %arg25[%c0_123, %c0_124] : memref<1x32xf32, #tpu.memory_space<vmem>>, vector<1x32xf32>
    %334 = vector.broadcast %333 : vector<1x32xf32> to vector<2x32xf32>
    %335 = arith.addf %332, %334 : vector<2x32xf32>
    %cst_125 = arith.constant 0.000000e+00 : f32
    %336 = vector.broadcast %cst_125 : f32 to vector<2x32xf32>
    %337 = arith.maximumf %335, %336 : vector<2x32xf32>
    %c0_126 = arith.constant 0 : index
    %c0_127 = arith.constant 0 : index
    %338 = vector.load %arg26[%c0_126, %c0_127] : memref<32x8xf32, #tpu.memory_space<vmem>>, vector<32x8xf32>
    %cst_128 = arith.constant dense<0.000000e+00> : vector<2x8xf32>
    %339 = tpu.matmul %337, %338, %cst_128 {dimension_numbers = #tpu.dot_dimension_numbers<[1], [0], [0], [1], [0, 0, 1, 1], [], []>} : vector<2x32xf32>, vector<32x8xf32>, vector<2x8xf32> -> vector<2x8xf32>
    %c0_129 = arith.constant 0 : index
    %c0_130 = arith.constant 0 : index
    %340 = vector.load %arg27[%c0_129, %c0_130] : memref<1x8xf32, #tpu.memory_space<vmem>>, vector<1x8xf32>
    %341 = vector.broadcast %340 : vector<1x8xf32> to vector<2x8xf32>
    %342 = arith.addf %339, %341 : vector<2x8xf32>
    %c0_131 = arith.constant 0 : index
    %c0_132 = arith.constant 0 : index
    %343 = vector.load %arg28[%c0_131, %c0_132] : memref<2x8xf32, #tpu.memory_space<vmem>>, vector<2x8xf32>
    tpu.vector_store %arg28[%c0_131, %c0_132], %342 {strides = array<i32>} : memref<2x8xf32, #tpu.memory_space<vmem>>, vector<2x8xf32>,
    return
  }
  func.func @transform_0(%arg0: i32) -> (i32, i32) {
    %c0_i32 = arith.constant 0 : i32
    %c0_i32_0 = arith.constant 0 : i32
    %c0_i32_1 = arith.constant 0 : i32
    return %c0_i32, %c0_i32_0 : i32, i32
  }
  func.func @transform_1(%arg0: i32) -> (i32, i32) {
    %c0_i32 = arith.constant 0 : i32
    %c0_i32_0 = arith.constant 0 : i32
    %c0_i32_1 = arith.constant 0 : i32
    return %c0_i32, %c0_i32_0 : i32, i32
  }
  func.func @transform_2(%arg0: i32) -> (i32, i32) {
    %c0_i32 = arith.constant 0 : i32
    %c0_i32_0 = arith.constant 0 : i32
    %c0_i32_1 = arith.constant 0 : i32
    return %c0_i32, %c0_i32_0 : i32, i32
  }
  func.func @transform_3(%arg0: i32) -> (i32, i32) {
    %c0_i32 = arith.constant 0 : i32
    %c0_i32_0 = arith.constant 0 : i32
    %c0_i32_1 = arith.constant 0 : i32
    return %c0_i32, %c0_i32_0 : i32, i32
  }
  func.func @transform_4(%arg0: i32) -> (i32, i32) {
    %c0_i32 = arith.constant 0 : i32
    %c0_i32_0 = arith.constant 0 : i32
    %c0_i32_1 = arith.constant 0 : i32
    return %c0_i32, %c0_i32_0 : i32, i32
  }
  func.func @transform_5(%arg0: i32) -> (i32, i32) {
    %c0_i32 = arith.constant 0 : i32
    %c0_i32_0 = arith.constant 0 : i32
    %c0_i32_1 = arith.constant 0 : i32
    return %c0_i32, %c0_i32_0 : i32, i32
  }
  func.func @transform_6(%arg0: i32) -> (i32, i32) {
    %c0_i32 = arith.constant 0 : i32
    %c0_i32_0 = arith.constant 0 : i32
    %c0_i32_1 = arith.constant 0 : i32
    return %c0_i32, %c0_i32_0 : i32, i32
  }
  func.func @transform_7(%arg0: i32) -> (i32, i32) {
    %c0_i32 = arith.constant 0 : i32
    %c0_i32_0 = arith.constant 0 : i32
    %c0_i32_1 = arith.constant 0 : i32
    return %c0_i32, %c0_i32_0 : i32, i32
  }
  func.func @transform_8(%arg0: i32) -> (i32, i32) {
    %c0_i32 = arith.constant 0 : i32
    %c0_i32_0 = arith.constant 0 : i32
    %c0_i32_1 = arith.constant 0 : i32
    return %c0_i32, %c0_i32_0 : i32, i32
  }
  func.func @transform_9(%arg0: i32) -> (i32, i32) {
    %c0_i32 = arith.constant 0 : i32
    %c0_i32_0 = arith.constant 0 : i32
    %c0_i32_1 = arith.constant 0 : i32
    return %c0_i32, %c0_i32_0 : i32, i32
  }
  func.func @transform_10(%arg0: i32) -> (i32, i32) {
    %c0_i32 = arith.constant 0 : i32
    %c0_i32_0 = arith.constant 0 : i32
    %c0_i32_1 = arith.constant 0 : i32
    return %c0_i32, %c0_i32_0 : i32, i32
  }
  func.func @transform_11(%arg0: i32) -> (i32, i32) {
    %c0_i32 = arith.constant 0 : i32
    %c0_i32_0 = arith.constant 0 : i32
    %c0_i32_1 = arith.constant 0 : i32
    return %c0_i32, %c0_i32_0 : i32, i32
  }
  func.func @transform_12(%arg0: i32) -> (i32, i32) {
    %c0_i32 = arith.constant 0 : i32
    %c0_i32_0 = arith.constant 0 : i32
    %c0_i32_1 = arith.constant 0 : i32
    return %c0_i32, %c0_i32_0 : i32, i32
  }
  func.func @transform_13(%arg0: i32) -> (i32, i32) {
    %c0_i32 = arith.constant 0 : i32
    %c0_i32_0 = arith.constant 0 : i32
    %c0_i32_1 = arith.constant 0 : i32
    return %c0_i32, %c0_i32_0 : i32, i32
  }
  func.func @transform_14(%arg0: i32) -> (i32, i32) {
    %c0_i32 = arith.constant 0 : i32
    %c0_i32_0 = arith.constant 0 : i32
    %c0_i32_1 = arith.constant 0 : i32
    return %c0_i32, %c0_i32_0 : i32, i32
  }
  func.func @transform_15(%arg0: i32) -> (i32, i32) {
    %c0_i32 = arith.constant 0 : i32
    %c0_i32_0 = arith.constant 0 : i32
    %c0_i32_1 = arith.constant 0 : i32
    return %c0_i32, %c0_i32_0 : i32, i32
  }
  func.func @transform_16(%arg0: i32) -> (i32, i32) {
    %c0_i32 = arith.constant 0 : i32
    %c0_i32_0 = arith.constant 0 : i32
    %c0_i32_1 = arith.constant 0 : i32
    return %c0_i32, %c0_i32_0 : i32, i32
  }
  func.func @transform_17(%arg0: i32) -> (i32, i32) {
    %c0_i32 = arith.constant 0 : i32
    %c0_i32_0 = arith.constant 0 : i32
    %c0_i32_1 = arith.constant 0 : i32
    return %c0_i32, %c0_i32_0 : i32, i32
  }
  func.func @transform_18(%arg0: i32) -> (i32, i32) {
    %c0_i32 = arith.constant 0 : i32
    %c0_i32_0 = arith.constant 0 : i32
    %c0_i32_1 = arith.constant 0 : i32
    return %c0_i32, %c0_i32_0 : i32, i32
  }
  func.func @transform_19(%arg0: i32) -> (i32, i32) {
    %c0_i32 = arith.constant 0 : i32
    %c0_i32_0 = arith.constant 0 : i32
    %c0_i32_1 = arith.constant 0 : i32
    return %c0_i32, %c0_i32_0 : i32, i32
  }
  func.func @transform_20(%arg0: i32) -> (i32, i32) {
    %c0_i32 = arith.constant 0 : i32
    %c0_i32_0 = arith.constant 0 : i32
    %c0_i32_1 = arith.constant 0 : i32
    return %c0_i32, %c0_i32_0 : i32, i32
  }
  func.func @transform_21(%arg0: i32) -> (i32, i32) {
    %c0_i32 = arith.constant 0 : i32
    %c0_i32_0 = arith.constant 0 : i32
    %c0_i32_1 = arith.constant 0 : i32
    return %c0_i32, %c0_i32_0 : i32, i32
  }
  func.func @transform_22(%arg0: i32) -> (i32, i32) {
    %c0_i32 = arith.constant 0 : i32
    %c0_i32_0 = arith.constant 0 : i32
    %c0_i32_1 = arith.constant 0 : i32
    return %c0_i32, %c0_i32_0 : i32, i32
  }
  func.func @transform_23(%arg0: i32) -> (i32, i32) {
    %c0_i32 = arith.constant 0 : i32
    %c0_i32_0 = arith.constant 0 : i32
    %c0_i32_1 = arith.constant 0 : i32
    return %c0_i32, %c0_i32_0 : i32, i32
  }
  func.func @transform_24(%arg0: i32) -> (i32, i32) {
    %c0_i32 = arith.constant 0 : i32
    %c0_i32_0 = arith.constant 0 : i32
    %c0_i32_1 = arith.constant 0 : i32
    return %c0_i32, %c0_i32_0 : i32, i32
  }
  func.func @transform_25(%arg0: i32) -> (i32, i32) {
    %c0_i32 = arith.constant 0 : i32
    %c0_i32_0 = arith.constant 0 : i32
    %c0_i32_1 = arith.constant 0 : i32
    return %c0_i32, %c0_i32_0 : i32, i32
  }
  func.func @transform_26(%arg0: i32) -> (i32, i32) {
    %c0_i32 = arith.constant 0 : i32
    %c0_i32_0 = arith.constant 0 : i32
    %c0_i32_1 = arith.constant 0 : i32
    return %c0_i32, %c0_i32_0 : i32, i32
  }
  func.func @transform_27(%arg0: i32) -> (i32, i32) {
    %c0_i32 = arith.constant 0 : i32
    %c0_i32_0 = arith.constant 0 : i32
    %c0_i32_1 = arith.constant 0 : i32
    return %c0_i32, %c0_i32_0 : i32, i32
  }
}

</mosaic_0001>

<llo_original>
// kernel: tpu_custom_call.1
$region0: #{tpu_custom_call.1}
  #allocation0 [shape = 'u32[]', space=smem, size = 0x4, offset = 0x4, fixed_abs, tag = 'smem constant byte address 0x4 - core index']
  #allocation1 [shape = 'u32[144,128]{1,0:T(1,128)}', space=vmem, size = 0x12000, scoped, tag = 'internal scratch']
  %s0 = inlined_call_operand.hbm [shape: f32[16,16], index: 0, kind: input, shape index: {}]
  %s1 = inlined_call_operand.vmem [shape: f32[32,1], index: 1, kind: input, shape index: {}]
  %s2 = inlined_call_operand.vmem [shape: s32[32,1], index: 2, kind: input, shape index: {}]
  %s3 = inlined_call_operand.vmem [shape: s32[1,32], index: 3, kind: input, shape index: {}]
  %s4 = inlined_call_operand.vmem [shape: s32[1,16], index: 4, kind: input, shape index: {}]
  %s5 = inlined_call_operand.hbm [shape: f32[16,32], index: 5, kind: input, shape index: {}]
  %s6 = inlined_call_operand.hbm [shape: f32[1,32], index: 6, kind: input, shape index: {}]
  %s7 = inlined_call_operand.hbm [shape: f32[1,128], index: 7, kind: input, shape index: {}]
  %s8 = inlined_call_operand.hbm [shape: f32[1,128], index: 8, kind: input, shape index: {}]
  %s9 = inlined_call_operand.vmem [shape: f32[128,1024], index: 9, kind: input, shape index: {}]
  %s10 = inlined_call_operand.hbm [shape: f32[1,1024], index: 10, kind: input, shape index: {}]
  %s11 = inlined_call_operand.vmem [shape: f32[32,1024], index: 11, kind: input, shape index: {}]
  %s12 = inlined_call_operand.vmem [shape: f32[1024,32], index: 12, kind: input, shape index: {}]
  %s13 = inlined_call_operand.vmem [shape: f32[32,32], index: 13, kind: input, shape index: {}]
  %s14 = inlined_call_operand.hbm [shape: f32[1,32], index: 14, kind: input, shape index: {}]
  %s15 = inlined_call_operand.vmem [shape: f32[32,96], index: 15, kind: input, shape index: {}]
  %s16 = inlined_call_operand.vmem [shape: f32[32,96], index: 16, kind: input, shape index: {}]
  %s17 = inlined_call_operand.hbm [shape: f32[1,96], index: 17, kind: input, shape index: {}]
  %s18 = inlined_call_operand.hbm [shape: f32[1,96], index: 18, kind: input, shape index: {}]
  %s19 = inlined_call_operand.vmem [shape: f32[64,128], index: 19, kind: input, shape index: {}]
  %s20 = inlined_call_operand.vmem [shape: f32[32,128], index: 20, kind: input, shape index: {}]
  %s21 = inlined_call_operand.hbm [shape: f32[1,128], index: 21, kind: input, shape index: {}]
  %s22 = inlined_call_operand.hbm [shape: f32[1,128], index: 22, kind: input, shape index: {}]
  %s23 = inlined_call_operand.vmem [shape: f32[64,32], index: 23, kind: input, shape index: {}]
  %s24 = inlined_call_operand.hbm [shape: f32[1,32], index: 24, kind: input, shape index: {}]
  %s25 = inlined_call_operand.vmem [shape: f32[32,8], index: 25, kind: input, shape index: {}]
  %s26 = inlined_call_operand.hbm [shape: f32[1,8], index: 26, kind: input, shape index: {}]
  %s27 = inlined_call_operand.hbm [shape: f32[2,8], index: 27, kind: output, shape index: {}]
  %s28 = sld [smem:[#allocation0]]
  $region170: #{tpu_custom_call.1} parent=0
    _
  %s30 = ssub.s32 1, %s28
  %s31 = scalar_select 0, %s30, %s28
  $region1: #{tpu_custom_call.1} parent=0
    #allocation2 [shape = 'u8[8192]{0}', space=vmem, size = 0x2000, scoped, tag = 'input window, operand 0, single buffered']
    #allocation3 [shape = 's32[1]{0}', space=sflag, size = 0x4, scoped, tag = 'scoped memory for tpu_custom_call.1']
    #allocation4 [shape = 's32[1]{0}', space=sflag, size = 0x4, scoped, tag = 'scoped memory for tpu_custom_call.1']
    #allocation5 [shape = 'u8[8192]{0}', space=vmem, size = 0x2000, scoped, tag = 'input window, operand 5, single buffered']
    #allocation6 [shape = 's32[1]{0}', space=sflag, size = 0x4, scoped, tag = 'scoped memory for tpu_custom_call.1']
    #allocation7 [shape = 'u8[512]{0}', space=vmem, size = 0x400, scoped, tag = 'input window, operand 6, single buffered']
    #allocation8 [shape = 'u8[512]{0}', space=vmem, size = 0x400, scoped, tag = 'input window, operand 7, single buffered']
    #allocation9 [shape = 's32[1]{0}', space=sflag, size = 0x4, scoped, tag = 'scoped memory for tpu_custom_call.1']
    #allocation10 [shape = 'u8[512]{0}', space=vmem, size = 0x400, scoped, tag = 'input window, operand 8, single buffered']
    #allocation11 [shape = 'u8[4096]{0}', space=vmem, size = 0x1000, scoped, tag = 'input window, operand 10, single buffered']
    #allocation12 [shape = 's32[1]{0}', space=sflag, size = 0x4, scoped, tag = 'scoped memory for tpu_custom_call.1']
    #allocation13 [shape = 'u8[512]{0}', space=vmem, size = 0x400, scoped, tag = 'input window, operand 14, single buffered']
    #allocation14 [shape = 'u8[512]{0}', space=vmem, size = 0x400, scoped, tag = 'input window, operand 17, single buffered']
    #allocation15 [shape = 's32[1]{0}', space=sflag, size = 0x4, scoped, tag = 'scoped memory for tpu_custom_call.1']
    #allocation16 [shape = 'u8[512]{0}', space=vmem, size = 0x400, scoped, tag = 'input window, operand 18, single buffered']
    #allocation17 [shape = 'u8[512]{0}', space=vmem, size = 0x400, scoped, tag = 'input window, operand 21, single buffered']
    #allocation18 [shape = 's32[1]{0}', space=sflag, size = 0x4, scoped, tag = 'scoped memory for tpu_custom_call.1']
    #allocation19 [shape = 'u8[512]{0}', space=vmem, size = 0x400, scoped, tag = 'input window, operand 22, single buffered']
    #allocation20 [shape = 'u8[512]{0}', space=vmem, size = 0x400, scoped, tag = 'input window, operand 24, single buffered']
    #allocation21 [shape = 's32[1]{0}', space=sflag, size = 0x4, scoped, tag = 'scoped memory for tpu_custom_call.1']
    #allocation22 [shape = 'u8[512]{0}', space=vmem, size = 0x400, scoped, tag = 'input window, operand 26, single buffered']
    #allocation23 [shape = 'u8[1024]{0}', space=vmem, size = 0x400, scoped, tag = 'output window, operand 0, single buffered']
    %32 = vsyncpa [#allocation3], 0
    %33 = vsyncpa [#allocation6], 0
    %34 = vsyncpa [#allocation9], 0
    %35 = vsyncpa [#allocation12], 0
    %36 = vsyncpa [#allocation15], 0
    %37 = vsyncpa [#allocation18], 0
    %38 = vsyncpa [#allocation21], 0
    %39 = vsyncpa [#allocation4], 0
    // Predicated region
    $region2: #{tpu_custom_call.1} parent=1 // pred_check
      _
    $region3: #{tpu_custom_call.1} parent=1 // pred_check_branch
      %41 = sbr.rel (0) target = $region5
    $region4: #{tpu_custom_call.1} parent=1 // pred_region
      %s43 = ssub.s32 256, 256
      %44 = vsyncadd [#allocation3], %s43
      %s45 = sshll.u32 [#allocation2], 4
      %s46 = int_to_ptr.vmem [resolvable:$true] %s45
      %51 = dma.hbm_to_vmem [thread:$0]  %s0, 256, %s46, [#allocation3], 128, 128, 8
    $region5: #{tpu_custom_call.1} parent=1 // pred_fallthru
      _
    // Predicated region
    $region6: #{tpu_custom_call.1} parent=1 // pred_check
      _
    $region7: #{tpu_custom_call.1} parent=1 // pred_check_branch
      %53 = sbr.rel (0) target = $region9
    $region8: #{tpu_custom_call.1} parent=1 // pred_region
      _
    $region9: #{tpu_custom_call.1} parent=1 // pred_fallthru
      _
    // Predicated region
    $region10: #{tpu_custom_call.1} parent=1 // pred_check
      _
    $region11: #{tpu_custom_call.1} parent=1 // pred_check_branch
      %55 = sbr.rel (0) target = $region13
    $region12: #{tpu_custom_call.1} parent=1 // pred_region
      _
    $region13: #{tpu_custom_call.1} parent=1 // pred_fallthru
      _
    // Predicated region
    $region14: #{tpu_custom_call.1} parent=1 // pred_check
      _
    $region15: #{tpu_custom_call.1} parent=1 // pred_check_branch
      %57 = sbr.rel (0) target = $region17
    $region16: #{tpu_custom_call.1} parent=1 // pred_region
      _
    $region17: #{tpu_custom_call.1} parent=1 // pred_fallthru
      _
    // Predicated region
    $region18: #{tpu_custom_call.1} parent=1 // pred_check
      _
    $region19: #{tpu_custom_call.1} parent=1 // pred_check_branch
      %59 = sbr.rel (0) target = $region21
    $region20: #{tpu_custom_call.1} parent=1 // pred_region
      _
    $region21: #{tpu_custom_call.1} parent=1 // pred_fallthru
      _
    // Predicated region
    $region22: #{tpu_custom_call.1} parent=1 // pred_check
      _
    $region23: #{tpu_custom_call.1} parent=1 // pred_check_branch
      %61 = sbr.rel (0) target = $region25
    $region24: #{tpu_custom_call.1} parent=1 // pred_region
      %s63 = ssub.s32 256, 256
      %64 = vsyncadd [#allocation6], %s63
      %s65 = sshll.u32 [#allocation5], 4
      %s66 = int_to_ptr.vmem [resolvable:$true] %s65
      %71 = dma.hbm_to_vmem [thread:$0]  %s5, 256, %s66, [#allocation6], 128, 128, 8
    $region25: #{tpu_custom_call.1} parent=1 // pred_fallthru
      _
    // Predicated region
    $region26: #{tpu_custom_call.1} parent=1 // pred_check
      _
    $region27: #{tpu_custom_call.1} parent=1 // pred_check_branch
      %73 = sbr.rel (0) target = $region29
    $region28: #{tpu_custom_call.1} parent=1 // pred_region
      %s75 = ssub.s32 16, 16
      %76 = vsyncadd [#allocation6], %s75
      %s78 = sshll.u32 [#allocation7], 4
      %s79 = int_to_ptr.vmem [resolvable:$true] %s78
      %81 = dma.hbm_to_vmem [thread:$0]  %s6, 16, %s79, [#allocation6]
    $region29: #{tpu_custom_call.1} parent=1 // pred_fallthru
      _
    // Predicated region
    $region30: #{tpu_custom_call.1} parent=1 // pred_check
      _
    $region31: #{tpu_custom_call.1} parent=1 // pred_check_branch
      %83 = sbr.rel (0) target = $region33
    $region32: #{tpu_custom_call.1} parent=1 // pred_region
      %s85 = ssub.s32 16, 16
      %86 = vsyncadd [#allocation9], %s85
      %s88 = sshll.u32 [#allocation8], 4
      %s89 = int_to_ptr.vmem [resolvable:$true] %s88
      %91 = dma.hbm_to_vmem [thread:$0]  %s7, 16, %s89, [#allocation9]
    $region33: #{tpu_custom_call.1} parent=1 // pred_fallthru
      _
    // Predicated region
    $region34: #{tpu_custom_call.1} parent=1 // pred_check
      _
    $region35: #{tpu_custom_call.1} parent=1 // pred_check_branch
      %93 = sbr.rel (0) target = $region37
    $region36: #{tpu_custom_call.1} parent=1 // pred_region
      %s95 = ssub.s32 16, 16
      %96 = vsyncadd [#allocation9], %s95
      %s98 = sshll.u32 [#allocation10], 4
      %s99 = int_to_ptr.vmem [resolvable:$true] %s98
      %101 = dma.hbm_to_vmem [thread:$0]  %s8, 16, %s99, [#allocation9]
    $region37: #{tpu_custom_call.1} parent=1 // pred_fallthru
      _
    // Predicated region
    $region38: #{tpu_custom_call.1} parent=1 // pred_check
      _
    $region39: #{tpu_custom_call.1} parent=1 // pred_check_branch
      %103 = sbr.rel (0) target = $region41
    $region40: #{tpu_custom_call.1} parent=1 // pred_region
      _
    $region41: #{tpu_custom_call.1} parent=1 // pred_fallthru
      _
    // Predicated region
    $region42: #{tpu_custom_call.1} parent=1 // pred_check
      _
    $region43: #{tpu_custom_call.1} parent=1 // pred_check_branch
      %105 = sbr.rel (0) target = $region45
    $region44: #{tpu_custom_call.1} parent=1 // pred_region
      %s107 = ssub.s32 128, 128
      %108 = vsyncadd [#allocation12], %s107
      %s110 = sshll.u32 [#allocation11], 4
      %s111 = int_to_ptr.vmem [resolvable:$true] %s110
      %113 = dma.hbm_to_vmem [thread:$0]  %s10, 128, %s111, [#allocation12]
    $region45: #{tpu_custom_call.1} parent=1 // pred_fallthru
      _
    // Predicated region
    $region46: #{tpu_custom_call.1} parent=1 // pred_check
      _
    $region47: #{tpu_custom_call.1} parent=1 // pred_check_branch
      %115 = sbr.rel (0) target = $region49
    $region48: #{tpu_custom_call.1} parent=1 // pred_region
      _
    $region49: #{tpu_custom_call.1} parent=1 // pred_fallthru
      _
    // Predicated region
    $region50: #{tpu_custom_call.1} parent=1 // pred_check
      _
    $region51: #{tpu_custom_call.1} parent=1 // pred_check_branch
      %117 = sbr.rel (0) target = $region53
    $region52: #{tpu_custom_call.1} parent=1 // pred_region
      _
    $region53: #{tpu_custom_call.1} parent=1 // pred_fallthru
      _
    // Predicated region
    $region54: #{tpu_custom_call.1} parent=1 // pred_check
      _
    $region55: #{tpu_custom_call.1} parent=1 // pred_check_branch
      %119 = sbr.rel (0) target = $region57
    $region56: #{tpu_custom_call.1} parent=1 // pred_region
      _
    $region57: #{tpu_custom_call.1} parent=1 // pred_fallthru
      _
    // Predicated region
    $region58: #{tpu_custom_call.1} parent=1 // pred_check
      _
    $region59: #{tpu_custom_call.1} parent=1 // pred_check_branch
      %121 = sbr.rel (0) target = $region61
    $region60: #{tpu_custom_call.1} parent=1 // pred_region
      %s123 = ssub.s32 16, 16
      %124 = vsyncadd [#allocation12], %s123
      %s126 = sshll.u32 [#allocation13], 4
      %s127 = int_to_ptr.vmem [resolvable:$true] %s126
      %129 = dma.hbm_to_vmem [thread:$0]  %s14, 16, %s127, [#allocation12]
    $region61: #{tpu_custom_call.1} parent=1 // pred_fallthru
      _
    // Predicated region
    $region62: #{tpu_custom_call.1} parent=1 // pred_check
      _
    $region63: #{tpu_custom_call.1} parent=1 // pred_check_branch
      %131 = sbr.rel (0) target = $region65
    $region64: #{tpu_custom_call.1} parent=1 // pred_region
      _
    $region65: #{tpu_custom_call.1} parent=1 // pred_fallthru
      _
    // Predicated region
    $region66: #{tpu_custom_call.1} parent=1 // pred_check
      _
    $region67: #{tpu_custom_call.1} parent=1 // pred_check_branch
      %133 = sbr.rel (0) target = $region69
    $region68: #{tpu_custom_call.1} parent=1 // pred_region
      _
    $region69: #{tpu_custom_call.1} parent=1 // pred_fallthru
      _
    // Predicated region
    $region70: #{tpu_custom_call.1} parent=1 // pred_check
      _
    $region71: #{tpu_custom_call.1} parent=1 // pred_check_branch
      %135 = sbr.rel (0) target = $region73
    $region72: #{tpu_custom_call.1} parent=1 // pred_region
      %s137 = ssub.s32 16, 16
      %138 = vsyncadd [#allocation15], %s137
      %s140 = sshll.u32 [#allocation14], 4
      %s141 = int_to_ptr.vmem [resolvable:$true] %s140
      %143 = dma.hbm_to_vmem [thread:$0]  %s17, 16, %s141, [#allocation15]
    $region73: #{tpu_custom_call.1} parent=1 // pred_fallthru
      _
    // Predicated region
    $region74: #{tpu_custom_call.1} parent=1 // pred_check
      _
    $region75: #{tpu_custom_call.1} parent=1 // pred_check_branch
      %145 = sbr.rel (0) target = $region77
    $region76: #{tpu_custom_call.1} parent=1 // pred_region
      %s147 = ssub.s32 16, 16
      %148 = vsyncadd [#allocation15], %s147
      %s150 = sshll.u32 [#allocation16], 4
      %s151 = int_to_ptr.vmem [resolvable:$true] %s150
      %153 = dma.hbm_to_vmem [thread:$0]  %s18, 16, %s151, [#allocation15]
    $region77: #{tpu_custom_call.1} parent=1 // pred_fallthru
      _
    // Predicated region
    $region78: #{tpu_custom_call.1} parent=1 // pred_check
      _
    $region79: #{tpu_custom_call.1} parent=1 // pred_check_branch
      %155 = sbr.rel (0) target = $region81
    $region80: #{tpu_custom_call.1} parent=1 // pred_region
      _
    $region81: #{tpu_custom_call.1} parent=1 // pred_fallthru
      _
    // Predicated region
    $region82: #{tpu_custom_call.1} parent=1 // pred_check
      _
    $region83: #{tpu_custom_call.1} parent=1 // pred_check_branch
      %157 = sbr.rel (0) target = $region85
    $region84: #{tpu_custom_call.1} parent=1 // pred_region
      _
    $region85: #{tpu_custom_call.1} parent=1 // pred_fallthru
      _
    // Predicated region
    $region86: #{tpu_custom_call.1} parent=1 // pred_check
      _
    $region87: #{tpu_custom_call.1} parent=1 // pred_check_branch
      %159 = sbr.rel (0) target = $region89
    $region88: #{tpu_custom_call.1} parent=1 // pred_region
      %s161 = ssub.s32 16, 16
      %162 = vsyncadd [#allocation18], %s161
      %s164 = sshll.u32 [#allocation17], 4
      %s165 = int_to_ptr.vmem [resolvable:$true] %s164
      %167 = dma.hbm_to_vmem [thread:$0]  %s21, 16, %s165, [#allocation18]
    $region89: #{tpu_custom_call.1} parent=1 // pred_fallthru
      _
    // Predicated region
    $region90: #{tpu_custom_call.1} parent=1 // pred_check
      _
    $region91: #{tpu_custom_call.1} parent=1 // pred_check_branch
      %169 = sbr.rel (0) target = $region93
    $region92: #{tpu_custom_call.1} parent=1 // pred_region
      %s171 = ssub.s32 16, 16
      %172 = vsyncadd [#allocation18], %s171
      %s174 = sshll.u32 [#allocation19], 4
      %s175 = int_to_ptr.vmem [resolvable:$true] %s174
      %177 = dma.hbm_to_vmem [thread:$0]  %s22, 16, %s175, [#allocation18]
    $region93: #{tpu_custom_call.1} parent=1 // pred_fallthru
      _
    // Predicated region
    $region94: #{tpu_custom_call.1} parent=1 // pred_check
      _
    $region95: #{tpu_custom_call.1} parent=1 // pred_check_branch
      %179 = sbr.rel (0) target = $region97
    $region96: #{tpu_custom_call.1} parent=1 // pred_region
      _
    $region97: #{tpu_custom_call.1} parent=1 // pred_fallthru
      _
    // Predicated region
    $region98: #{tpu_custom_call.1} parent=1 // pred_check
      _
    $region99: #{tpu_custom_call.1} parent=1 // pred_check_branch
      %181 = sbr.rel (0) target = $region101
    $region100: #{tpu_custom_call.1} parent=1 // pred_region
      %s183 = ssub.s32 16, 16
      %184 = vsyncadd [#allocation21], %s183
      %s186 = sshll.u32 [#allocation20], 4
      %s187 = int_to_ptr.vmem [resolvable:$true] %s186
      %189 = dma.hbm_to_vmem [thread:$0]  %s24, 16, %s187, [#allocation21]
    $region101: #{tpu_custom_call.1} parent=1 // pred_fallthru
      _
    // Predicated region
    $region102: #{tpu_custom_call.1} parent=1 // pred_check
      _
    $region103: #{tpu_custom_call.1} parent=1 // pred_check_branch
      %191 = sbr.rel (0) target = $region105
    $region104: #{tpu_custom_call.1} parent=1 // pred_region
      _
    $region105: #{tpu_custom_call.1} parent=1 // pred_fallthru
      _
    // Predicated region
    $region106: #{tpu_custom_call.1} parent=1 // pred_check
      _
    $region107: #{tpu_custom_call.1} parent=1 // pred_check_branch
      %193 = sbr.rel (0) target = $region109
    $region108: #{tpu_custom_call.1} parent=1 // pred_region
      %s195 = ssub.s32 16, 16
      %196 = vsyncadd [#allocation21], %s195
      %s198 = sshll.u32 [#allocation22], 4
      %s199 = int_to_ptr.vmem [resolvable:$true] %s198
      %201 = dma.hbm_to_vmem [thread:$0]  %s26, 16, %s199, [#allocation21]
    $region109: #{tpu_custom_call.1} parent=1 // pred_fallthru
      _
    // Predicated region
    $region110: #{tpu_custom_call.1} parent=1 // pred_check
      _
    $region111: #{tpu_custom_call.1} parent=1 // pred_check_branch
      %203 = sbr.rel (0) target = $region113
    $region112: #{tpu_custom_call.1} parent=1 // pred_region
      %204 = dma.done [#allocation3], 256
    $region113: #{tpu_custom_call.1} parent=1 // pred_fallthru
      _
    // Predicated region
    $region114: #{tpu_custom_call.1} parent=1 // pred_check
      _
    $region115: #{tpu_custom_call.1} parent=1 // pred_check_branch
      %206 = sbr.rel (0) target = $region117
    $region116: #{tpu_custom_call.1} parent=1 // pred_region
      %207 = dma.done [#allocation6], 256
    $region117: #{tpu_custom_call.1} parent=1 // pred_fallthru
      _
    // Predicated region
    $region118: #{tpu_custom_call.1} parent=1 // pred_check
      _
    $region119: #{tpu_custom_call.1} parent=1 // pred_check_branch
      %209 = sbr.rel (0) target = $region121
    $region120: #{tpu_custom_call.1} parent=1 // pred_region
      %210 = dma.done [#allocation6], 16
    $region121: #{tpu_custom_call.1} parent=1 // pred_fallthru
      _
    // Predicated region
    $region122: #{tpu_custom_call.1} parent=1 // pred_check
      _
    $region123: #{tpu_custom_call.1} parent=1 // pred_check_branch
      %212 = sbr.rel (0) target = $region125
    $region124: #{tpu_custom_call.1} parent=1 // pred_region
      %213 = dma.done [#allocation9], 16
    $region125: #{tpu_custom_call.1} parent=1 // pred_fallthru
      _
    // Predicated region
    $region126: #{tpu_custom_call.1} parent=1 // pred_check
      _
    $region127: #{tpu_custom_call.1} parent=1 // pred_check_branch
      %215 = sbr.rel (0) target = $region129
    $region128: #{tpu_custom_call.1} parent=1 // pred_region
      %216 = dma.done [#allocation9], 16
    $region129: #{tpu_custom_call.1} parent=1 // pred_fallthru
      _
    // Predicated region
    $region130: #{tpu_custom_call.1} parent=1 // pred_check
      _
    $region131: #{tpu_custom_call.1} parent=1 // pred_check_branch
      %218 = sbr.rel (0) target = $region133
    $region132: #{tpu_custom_call.1} parent=1 // pred_region
      %219 = dma.done [#allocation12], 128
    $region133: #{tpu_custom_call.1} parent=1 // pred_fallthru
      _
    // Predicated region
    $region134: #{tpu_custom_call.1} parent=1 // pred_check
      _
    $region135: #{tpu_custom_call.1} parent=1 // pred_check_branch
      %221 = sbr.rel (0) target = $region137
    $region136: #{tpu_custom_call.1} parent=1 // pred_region
      %222 = dma.done [#allocation12], 16
    $region137: #{tpu_custom_call.1} parent=1 // pred_fallthru
      _
    // Predicated region
    $region138: #{tpu_custom_call.1} parent=1 // pred_check
      _
    $region139: #{tpu_custom_call.1} parent=1 // pred_check_branch
      %224 = sbr.rel (0) target = $region141
    $region140: #{tpu_custom_call.1} parent=1 // pred_region
      %225 = dma.done [#allocation15], 16
    $region141: #{tpu_custom_call.1} parent=1 // pred_fallthru
      _
    // Predicated region
    $region142: #{tpu_custom_call.1} parent=1 // pred_check
      _
    $region143: #{tpu_custom_call.1} parent=1 // pred_check_branch
      %227 = sbr.rel (0) target = $region145
    $region144: #{tpu_custom_call.1} parent=1 // pred_region
      %228 = dma.done [#allocation15], 16
    $region145: #{tpu_custom_call.1} parent=1 // pred_fallthru
      _
    // Predicated region
    $region146: #{tpu_custom_call.1} parent=1 // pred_check
      _
    $region147: #{tpu_custom_call.1} parent=1 // pred_check_branch
      %230 = sbr.rel (0) target = $region149
    $region148: #{tpu_custom_call.1} parent=1 // pred_region
      %231 = dma.done [#allocation18], 16
    $region149: #{tpu_custom_call.1} parent=1 // pred_fallthru
      _
    // Predicated region
    $region150: #{tpu_custom_call.1} parent=1 // pred_check
      _
    $region151: #{tpu_custom_call.1} parent=1 // pred_check_branch
      %233 = sbr.rel (0) target = $region153
    $region152: #{tpu_custom_call.1} parent=1 // pred_region
      %234 = dma.done [#allocation18], 16
    $region153: #{tpu_custom_call.1} parent=1 // pred_fallthru
      _
    // Predicated region
    $region154: #{tpu_custom_call.1} parent=1 // pred_check
      _
    $region155: #{tpu_custom_call.1} parent=1 // pred_check_branch
      %236 = sbr.rel (0) target = $region157
    $region156: #{tpu_custom_call.1} parent=1 // pred_region
      %237 = dma.done [#allocation21], 16
    $region157: #{tpu_custom_call.1} parent=1 // pred_fallthru
      _
    // Predicated region
    $region158: #{tpu_custom_call.1} parent=1 // pred_check
      _
    $region159: #{tpu_custom_call.1} parent=1 // pred_check_branch
      %239 = sbr.rel (0) target = $region161
    $region160: #{tpu_custom_call.1} parent=1 // pred_region
      %240 = dma.done [#allocation21], 16
    $region161: #{tpu_custom_call.1} parent=1 // pred_fallthru
      _
    %v241 = vld [vmem:[#allocation2] sm:$0xff]
    %v242 = vld [vmem:[#allocation2 + $0x8] sm:$0xff]
    %v243 = vld [vmem:[#allocation5] sm:$0xff]
    %v244 = vld [vmem:[#allocation5 + $0x8] sm:$0xff]
    %v245 = vld [vmem:[#allocation7] sm:$0x1]
    %v247 = vlaneseq
    %v248 = vshrl.u32 %v247, 7
    %v249 = vsub.s32 0, %v248
    %v250 = vrot.slane %v245, %v249
    %vm252 = vcmask 130048
    %v254 = vsel %vm252, %v241, 0
    %v257 = vsel %vm252, %v242, 0
    %259 = vmatprep.subr.mxu0 0.0
    %260 = vmatpush1.msra.mxu0 0.0
    %261 = vmatprep.subr.mxu0 0.0
    %262 = vmatpush1.msra.mxu0 0.0
    %263 = vmatprep.subr.mxu0 0.0
    %264 = vmatpush1.msra.mxu0 0.0
    %265 = vmatprep.subr.mxu0 0.0
    %266 = vmatpush1.msra.mxu0 0.0
    %267 = vmatprep.subr.mxu0 0.0
    %268 = vmatpush1.msra.mxu0 0.0
    %269 = vmatprep.subr.mxu0 0.0
    %270 = vmatpush1.msra.mxu0 0.0
    %271 = vmatprep.subr.mxu0 0.0
    %272 = vmatpush1.msra.mxu0 0.0
    %273 = vmatprep.subr.mxu0 0.0
    %274 = vmatpush1.msra.mxu0 0.0
    %275 = vmatprep.subr.mxu0 0.0
    %276 = vmatpush1.msra.mxu0 0.0
    %277 = vmatprep.subr.mxu0 0.0
    %278 = vmatpush1.msra.mxu0 0.0
    %279 = vmatprep.subr.mxu0 0.0
    %280 = vmatpush1.msra.mxu0 0.0
    %281 = vmatprep.subr.mxu0 0.0
    %282 = vmatpush1.msra.mxu0 0.0
    %283 = vmatprep.subr.mxu0 0.0
    %284 = vmatpush1.msra.mxu0 0.0
    %285 = vmatprep.subr.mxu0 0.0
    %286 = vmatpush1.msra.mxu0 0.0
    %287 = vmatprep.subr.mxu0 0.0
    %288 = vmatpush1.msra.mxu0 %v244
    %289 = vmatprep.subr.mxu0 0.0
    %290 = vmatpush1.msra.mxu0 %v243
    %291 = vmatprep.subr.mxu0 0.0
    %292 = vmatpush2.msra.mxu0 0.0
    %293 = vmatprep.subr.mxu0 0.0
    %294 = vmatpush2.msra.mxu0 0.0
    %295 = vmatprep.subr.mxu0 0.0
    %296 = vmatpush2.msra.mxu0 0.0
    %297 = vmatprep.subr.mxu0 0.0
    %298 = vmatpush2.msra.mxu0 0.0
    %299 = vmatprep.subr.mxu0 0.0
    %300 = vmatpush2.msra.mxu0 0.0
    %301 = vmatprep.subr.mxu0 0.0
    %302 = vmatpush2.msra.mxu0 0.0
    %303 = vmatprep.subr.mxu0 0.0
    %304 = vmatpush2.msra.mxu0 0.0
    %305 = vmatprep.subr.mxu0 0.0
    %306 = vmatpush2.msra.mxu0 0.0
    %307 = vmatprep.subr.mxu0 0.0
    %308 = vmatpush2.msra.mxu0 0.0
    %309 = vmatprep.subr.mxu0 0.0
    %310 = vmatpush2.msra.mxu0 0.0
    %311 = vmatprep.subr.mxu0 0.0
    %312 = vmatpush2.msra.mxu0 0.0
    %313 = vmatprep.subr.mxu0 0.0
    %314 = vmatpush2.msra.mxu0 0.0
    %315 = vmatprep.subr.mxu0 0.0
    %316 = vmatpush2.msra.mxu0 0.0
    %317 = vmatprep.subr.mxu0 0.0
    %318 = vmatpush2.msra.mxu0 0.0
    %319 = vmatprep.subr.mxu0 0.0
    %320 = vmatpush2.msra.mxu0 0.0
    %321 = vmatprep.subr.mxu0 0.0
    %322 = vmatpush2.msra.mxu0 0.0
    %323 = vmatprep.mubr.f32.mxu0 0.0
    %324 = vmatmul.mubr.f32.gmra.mxu0 %v254
    %v325 = vpop.f32.mrf.mxu0
    %v326 = vadd.f32 %v250, %v325
    %v327 = vpop.f32.mrf.mxu0
    %328 = vmatprep.mubr.f32.mxu0 0.0
    %329 = vmatmul.mubr.f32.gmra.mxu0 %v257
    %v330 = vpop.f32.mrf.mxu0
    %v331 = vadd.f32 %v250, %v330
    %v332 = vpop.f32.mrf.mxu0
    %333 = vdwg.mxu0
    %v334 = vmax.f32 %v326, 0.0
    %v335 = vmax.f32 %v331, 0.0
    %v336 = vld [vmem:[%s2] sm:$0xff]
    %v337 = vld [vmem:[%s2 + $0x8] sm:$0xff]
    %v338 = vld [vmem:[%s2 + $0x10] sm:$0xff]
    %v339 = vld [vmem:[%s2 + $0x18] sm:$0xff]
    %v340 = vld [vmem:[%s3] sm:$0x1]
    %v341 = vlaneseq
    %v342 = vand.u32 %v341, 127
    %343 = vset.pattern.permute.xlu0 0
    %344 = vperm.xlu0 %343, %v336
    %v345 = vpop.permute.xlu0 %344
    %346 = vset.pattern.permute.xlu0 0
    %347 = vperm.xlu0 %346, %v337
    %v348 = vpop.permute.xlu0 %347
    %349 = vset.pattern.permute.xlu0 0
    %350 = vperm.xlu0 %349, %v338
    %v351 = vpop.permute.xlu0 %350
    %352 = vset.pattern.permute.xlu0 0
    %353 = vperm.xlu0 %352, %v339
    %v354 = vpop.permute.xlu0 %353
    %vm355 = vcmp.eq.s32.totalorder %v342, %v345
    %vm356 = vcmp.eq.s32.totalorder %v342, %v348
    %vm357 = vcmp.eq.s32.totalorder %v342, %v351
    %vm358 = vcmp.eq.s32.totalorder %v342, %v354
    %v359 = vsel %vm355, 1, 0
    %v360 = vsel %vm356, 1, 0
    %v361 = vsel %vm357, 1, 0
    %v362 = vsel %vm358, 1, 0
    %v363 = vcvt.s32.f32 %v359
    %v364 = vcvt.s32.f32 %v360
    %v365 = vcvt.s32.f32 %v361
    %v366 = vcvt.s32.f32 %v362
    %v367 = vlaneseq
    %v368 = vshrl.u32 %v367, 7
    %v369 = vadd.s32 %v368, 8
    %v370 = vlaneseq
    %v371 = vshrl.u32 %v370, 7
    %v372 = vsub.s32 0, %v371
    %v373 = vrot.slane %v340, %v372
    %vm374 = vcmp.eq.s32.totalorder %v368, %v373
    %vm375 = vcmp.eq.s32.totalorder %v369, %v373
    %v376 = vsel %vm374, 1, 0
    %v377 = vsel %vm375, 1, 0
    %v378 = vcvt.s32.f32 %v376
    %v379 = vcvt.s32.f32 %v377
    %v380 = vld [vmem:[%s1] sm:$0xff]
    %v381 = vld [vmem:[%s1 + $0x8] sm:$0xff]
    %v382 = vld [vmem:[%s1 + $0x10] sm:$0xff]
    %v383 = vld [vmem:[%s1 + $0x18] sm:$0xff]
    %v384 = vld [vmem:[#allocation8] sm:$0x1]
    %386 = vset.pattern.permute.xlu0 0
    %387 = vperm.xlu0 %386, %v380
    %v388 = vpop.permute.xlu0 %387
    %391 = vset.pattern.permute.xlu0 0
    %392 = vperm.xlu0 %391, %v381
    %v393 = vpop.permute.xlu0 %392
    %396 = vset.pattern.permute.xlu0 0
    %397 = vperm.xlu0 %396, %v382
    %v398 = vpop.permute.xlu0 %397
    %401 = vset.pattern.permute.xlu0 0
    %402 = vperm.xlu0 %401, %v383
    %v403 = vpop.permute.xlu0 %402
    %v406 = vlaneseq
    %v407 = vshrl.u32 %v406, 7
    %v408 = vsub.s32 0, %v407
    %v409 = vrot.slane %v384, %v408
    %v411 = vmul.f32 %v388, %v409
    %v412 = vmul.f32 %v393, %v409
    %v413 = vmul.f32 %v398, %v409
    %v414 = vmul.f32 %v403, %v409
    %v415 = vld [vmem:[#allocation10] sm:$0x1]
    %v417 = vlaneseq
    %v418 = vshrl.u32 %v417, 7
    %v419 = vsub.s32 0, %v418
    %v420 = vrot.slane %v415, %v419
    %v422 = vadd.f32 %v411, %v420
    %v423 = vadd.f32 %v412, %v420
    %v424 = vadd.f32 %v413, %v420
    %v425 = vadd.f32 %v414, %v420
    %v426 = vmax.f32 %v422, 0.0
    %v427 = vmax.f32 %v423, 0.0
    %v428 = vmax.f32 %v424, 0.0
    %v429 = vmax.f32 %v425, 0.0
    %v430 = vld [vmem:[%s9] sm:$0xff]
    %v431 = vld [vmem:[%s9 + $0x8] sm:$0xff]
    %v432 = vld [vmem:[%s9 + $0x10] sm:$0xff]
    %v433 = vld [vmem:[%s9 + $0x18] sm:$0xff]
    %v434 = vld [vmem:[%s9 + $0x20] sm:$0xff]
    %v435 = vld [vmem:[%s9 + $0x28] sm:$0xff]
    %v436 = vld [vmem:[%s9 + $0x30] sm:$0xff]
    %v437 = vld [vmem:[%s9 + $0x38] sm:$0xff]
    %v438 = vld [vmem:[%s9 + $0x40] sm:$0xff]
    %v439 = vld [vmem:[%s9 + $0x48] sm:$0xff]
    %v440 = vld [vmem:[%s9 + $0x50] sm:$0xff]
    %v441 = vld [vmem:[%s9 + $0x58] sm:$0xff]
    %v442 = vld [vmem:[%s9 + $0x60] sm:$0xff]
    %v443 = vld [vmem:[%s9 + $0x68] sm:$0xff]
    %v444 = vld [vmem:[%s9 + $0x70] sm:$0xff]
    %v445 = vld [vmem:[%s9 + $0x78] sm:$0xff]
    %v446 = vld [vmem:[%s9 + $0x80] sm:$0xff]
    %v447 = vld [vmem:[%s9 + $0x88] sm:$0xff]
    %v448 = vld [vmem:[%s9 + $0x90] sm:$0xff]
    %v449 = vld [vmem:[%s9 + $0x98] sm:$0xff]
    %v450 = vld [vmem:[%s9 + $0xa0] sm:$0xff]
    %v451 = vld [vmem:[%s9 + $0xa8] sm:$0xff]
    %v452 = vld [vmem:[%s9 + $0xb0] sm:$0xff]
    %v453 = vld [vmem:[%s9 + $0xb8] sm:$0xff]
    %v454 = vld [vmem:[%s9 + $0xc0] sm:$0xff]
    %v455 = vld [vmem:[%s9 + $0xc8] sm:$0xff]
    %v456 = vld [vmem:[%s9 + $0xd0] sm:$0xff]
    %v457 = vld [vmem:[%s9 + $0xd8] sm:$0xff]
    %v458 = vld [vmem:[%s9 + $0xe0] sm:$0xff]
    %v459 = vld [vmem:[%s9 + $0xe8] sm:$0xff]
    %v460 = vld [vmem:[%s9 + $0xf0] sm:$0xff]
    %v461 = vld [vmem:[%s9 + $0xf8] sm:$0xff]
    %v462 = vld [vmem:[%s9 + $0x100] sm:$0xff]
    %v463 = vld [vmem:[%s9 + $0x108] sm:$0xff]
    %v464 = vld [vmem:[%s9 + $0x110] sm:$0xff]
    %v465 = vld [vmem:[%s9 + $0x118] sm:$0xff]
    %v466 = vld [vmem:[%s9 + $0x120] sm:$0xff]
    %v467 = vld [vmem:[%s9 + $0x128] sm:$0xff]
    %v468 = vld [vmem:[%s9 + $0x130] sm:$0xff]
    %v469 = vld [vmem:[%s9 + $0x138] sm:$0xff]
    %v470 = vld [vmem:[%s9 + $0x140] sm:$0xff]
    %v471 = vld [vmem:[%s9 + $0x148] sm:$0xff]
    %v472 = vld [vmem:[%s9 + $0x150] sm:$0xff]
    %v473 = vld [vmem:[%s9 + $0x158] sm:$0xff]
    %v474 = vld [vmem:[%s9 + $0x160] sm:$0xff]
    %v475 = vld [vmem:[%s9 + $0x168] sm:$0xff]
    %v476 = vld [vmem:[%s9 + $0x170] sm:$0xff]
    %v477 = vld [vmem:[%s9 + $0x178] sm:$0xff]
    %v478 = vld [vmem:[%s9 + $0x180] sm:$0xff]
    %v479 = vld [vmem:[%s9 + $0x188] sm:$0xff]
    %v480 = vld [vmem:[%s9 + $0x190] sm:$0xff]
    %v481 = vld [vmem:[%s9 + $0x198] sm:$0xff]
    %v482 = vld [vmem:[%s9 + $0x1a0] sm:$0xff]
    %v483 = vld [vmem:[%s9 + $0x1a8] sm:$0xff]
    %v484 = vld [vmem:[%s9 + $0x1b0] sm:$0xff]
    %v485 = vld [vmem:[%s9 + $0x1b8] sm:$0xff]
    %v486 = vld [vmem:[%s9 + $0x1c0] sm:$0xff]
    %v487 = vld [vmem:[%s9 + $0x1c8] sm:$0xff]
    %v488 = vld [vmem:[%s9 + $0x1d0] sm:$0xff]
    %v489 = vld [vmem:[%s9 + $0x1d8] sm:$0xff]
    %v490 = vld [vmem:[%s9 + $0x1e0] sm:$0xff]
    %v491 = vld [vmem:[%s9 + $0x1e8] sm:$0xff]
    %v492 = vld [vmem:[%s9 + $0x1f0] sm:$0xff]
    %v493 = vld [vmem:[%s9 + $0x1f8] sm:$0xff]
    %v494 = vld [vmem:[%s9 + $0x200] sm:$0xff]
    %v495 = vld [vmem:[%s9 + $0x208] sm:$0xff]
    %v496 = vld [vmem:[%s9 + $0x210] sm:$0xff]
    %v497 = vld [vmem:[%s9 + $0x218] sm:$0xff]
    %v498 = vld [vmem:[%s9 + $0x220] sm:$0xff]
    %v499 = vld [vmem:[%s9 + $0x228] sm:$0xff]
    %v500 = vld [vmem:[%s9 + $0x230] sm:$0xff]
    %v501 = vld [vmem:[%s9 + $0x238] sm:$0xff]
    %v502 = vld [vmem:[%s9 + $0x240] sm:$0xff]
    %v503 = vld [vmem:[%s9 + $0x248] sm:$0xff]
    %v504 = vld [vmem:[%s9 + $0x250] sm:$0xff]
    %v505 = vld [vmem:[%s9 + $0x258] sm:$0xff]
    %v506 = vld [vmem:[%s9 + $0x260] sm:$0xff]
    %v507 = vld [vmem:[%s9 + $0x268] sm:$0xff]
    %v508 = vld [vmem:[%s9 + $0x270] sm:$0xff]
    %v509 = vld [vmem:[%s9 + $0x278] sm:$0xff]
    %v510 = vld [vmem:[%s9 + $0x280] sm:$0xff]
    %v511 = vld [vmem:[%s9 + $0x288] sm:$0xff]
    %v512 = vld [vmem:[%s9 + $0x290] sm:$0xff]
    %v513 = vld [vmem:[%s9 + $0x298] sm:$0xff]
    %v514 = vld [vmem:[%s9 + $0x2a0] sm:$0xff]
    %v515 = vld [vmem:[%s9 + $0x2a8] sm:$0xff]
    %v516 = vld [vmem:[%s9 + $0x2b0] sm:$0xff]
    %v517 = vld [vmem:[%s9 + $0x2b8] sm:$0xff]
    %v518 = vld [vmem:[%s9 + $0x2c0] sm:$0xff]
    %v519 = vld [vmem:[%s9 + $0x2c8] sm:$0xff]
    %v520 = vld [vmem:[%s9 + $0x2d0] sm:$0xff]
    %v521 = vld [vmem:[%s9 + $0x2d8] sm:$0xff]
    %v522 = vld [vmem:[%s9 + $0x2e0] sm:$0xff]
    %v523 = vld [vmem:[%s9 + $0x2e8] sm:$0xff]
    %v524 = vld [vmem:[%s9 + $0x2f0] sm:$0xff]
    %v525 = vld [vmem:[%s9 + $0x2f8] sm:$0xff]
    %v526 = vld [vmem:[%s9 + $0x300] sm:$0xff]
    %v527 = vld [vmem:[%s9 + $0x308] sm:$0xff]
    %v528 = vld [vmem:[%s9 + $0x310] sm:$0xff]
    %v529 = vld [vmem:[%s9 + $0x318] sm:$0xff]
    %v530 = vld [vmem:[%s9 + $0x320] sm:$0xff]
    %v531 = vld [vmem:[%s9 + $0x328] sm:$0xff]
    %v532 = vld [vmem:[%s9 + $0x330] sm:$0xff]
    %v533 = vld [vmem:[%s9 + $0x338] sm:$0xff]
    %v534 = vld [vmem:[%s9 + $0x340] sm:$0xff]
    %v535 = vld [vmem:[%s9 + $0x348] sm:$0xff]
    %v536 = vld [vmem:[%s9 + $0x350] sm:$0xff]
    %v537 = vld [vmem:[%s9 + $0x358] sm:$0xff]
    %v538 = vld [vmem:[%s9 + $0x360] sm:$0xff]
    %v539 = vld [vmem:[%s9 + $0x368] sm:$0xff]
    %v540 = vld [vmem:[%s9 + $0x370] sm:$0xff]
    %v541 = vld [vmem:[%s9 + $0x378] sm:$0xff]
    %v542 = vld [vmem:[%s9 + $0x380] sm:$0xff]
    %v543 = vld [vmem:[%s9 + $0x388] sm:$0xff]
    %v544 = vld [vmem:[%s9 + $0x390] sm:$0xff]
    %v545 = vld [vmem:[%s9 + $0x398] sm:$0xff]
    %v546 = vld [vmem:[%s9 + $0x3a0] sm:$0xff]
    %v547 = vld [vmem:[%s9 + $0x3a8] sm:$0xff]
    %v548 = vld [vmem:[%s9 + $0x3b0] sm:$0xff]
    %v549 = vld [vmem:[%s9 + $0x3b8] sm:$0xff]
    %v550 = vld [vmem:[%s9 + $0x3c0] sm:$0xff]
    %v551 = vld [vmem:[%s9 + $0x3c8] sm:$0xff]
    %v552 = vld [vmem:[%s9 + $0x3d0] sm:$0xff]
    %v553 = vld [vmem:[%s9 + $0x3d8] sm:$0xff]
    %v554 = vld [vmem:[%s9 + $0x3e0] sm:$0xff]
    %v555 = vld [vmem:[%s9 + $0x3e8] sm:$0xff]
    %v556 = vld [vmem:[%s9 + $0x3f0] sm:$0xff]
    %v557 = vld [vmem:[%s9 + $0x3f8] sm:$0xff]
    %v558 = vld [vmem:[#allocation11] sm:$0xff]
    %v560 = vlaneseq
    %v561 = vshrl.u32 %v560, 7
    %v562 = vsub.s32 0, %v561
    %v563 = vrot.slane %v558, %v562
    %v564 = vlaneseq
    %v565 = vshrl.u32 %v564, 7
    %v566 = vsub.s32 1, %v565
    %v567 = vrot.slane %v558, %v566
    %v568 = vlaneseq
    %v569 = vshrl.u32 %v568, 7
    %v570 = vsub.s32 2, %v569
    %v571 = vrot.slane %v558, %v570
    %v572 = vlaneseq
    %v573 = vshrl.u32 %v572, 7
    %v574 = vsub.s32 3, %v573
    %v575 = vrot.slane %v558, %v574
    %v576 = vlaneseq
    %v577 = vshrl.u32 %v576, 7
    %v578 = vsub.s32 4, %v577
    %v579 = vrot.slane %v558, %v578
    %v580 = vlaneseq
    %v581 = vshrl.u32 %v580, 7
    %v582 = vsub.s32 5, %v581
    %v583 = vrot.slane %v558, %v582
    %v584 = vlaneseq
    %v585 = vshrl.u32 %v584, 7
    %v586 = vsub.s32 6, %v585
    %v587 = vrot.slane %v558, %v586
    %v588 = vlaneseq
    %v589 = vshrl.u32 %v588, 7
    %v590 = vsub.s32 7, %v589
    %v591 = vrot.slane %v558, %v590
    %600 = vmatprep.subr.mxu0 %v551
    %601 = vmatpush1.msra.mxu0 %v550
    %602 = vmatprep.subr.mxu0 %v543
    %603 = vmatpush1.msra.mxu0 %v542
    %604 = vmatprep.subr.mxu0 %v535
    %605 = vmatpush1.msra.mxu0 %v534
    %606 = vmatprep.subr.mxu0 %v527
    %607 = vmatpush1.msra.mxu0 %v526
    %608 = vmatprep.subr.mxu0 %v519
    %609 = vmatpush1.msra.mxu0 %v518
    %610 = vmatprep.subr.mxu0 %v511
    %611 = vmatpush1.msra.mxu0 %v510
    %612 = vmatprep.subr.mxu0 %v503
    %613 = vmatpush1.msra.mxu0 %v502
    %614 = vmatprep.subr.mxu0 %v495
    %615 = vmatpush1.msra.mxu0 %v494
    %616 = vmatprep.subr.mxu0 %v487
    %617 = vmatpush1.msra.mxu0 %v486
    %618 = vmatprep.subr.mxu0 %v479
    %619 = vmatpush1.msra.mxu0 %v478
    %620 = vmatprep.subr.mxu0 %v471
    %621 = vmatpush1.msra.mxu0 %v470
    %622 = vmatprep.subr.mxu0 %v463
    %623 = vmatpush1.msra.mxu0 %v462
    %624 = vmatprep.subr.mxu0 %v455
    %625 = vmatpush1.msra.mxu0 %v454
    %626 = vmatprep.subr.mxu0 %v447
    %627 = vmatpush1.msra.mxu0 %v446
    %628 = vmatprep.subr.mxu0 %v439
    %629 = vmatpush1.msra.mxu0 %v438
    %630 = vmatprep.subr.mxu0 %v431
    %631 = vmatpush1.msra.mxu0 %v430
    %632 = vmatprep.subr.mxu0 0.0
    %633 = vmatpush2.msra.mxu0 0.0
    %634 = vmatprep.subr.mxu0 0.0
    %635 = vmatpush2.msra.mxu0 0.0
    %636 = vmatprep.subr.mxu0 0.0
    %637 = vmatpush2.msra.mxu0 0.0
    %638 = vmatprep.subr.mxu0 0.0
    %639 = vmatpush2.msra.mxu0 0.0
    %640 = vmatprep.subr.mxu0 0.0
    %641 = vmatpush2.msra.mxu0 0.0
    %642 = vmatprep.subr.mxu0 0.0
    %643 = vmatpush2.msra.mxu0 0.0
    %644 = vmatprep.subr.mxu0 0.0
    %645 = vmatpush2.msra.mxu0 0.0
    %646 = vmatprep.subr.mxu0 0.0
    %647 = vmatpush2.msra.mxu0 0.0
    %648 = vmatprep.subr.mxu0 0.0
    %649 = vmatpush2.msra.mxu0 0.0
    %650 = vmatprep.subr.mxu0 0.0
    %651 = vmatpush2.msra.mxu0 0.0
    %652 = vmatprep.subr.mxu0 0.0
    %653 = vmatpush2.msra.mxu0 0.0
    %654 = vmatprep.subr.mxu0 0.0
    %655 = vmatpush2.msra.mxu0 0.0
    %656 = vmatprep.subr.mxu0 0.0
    %657 = vmatpush2.msra.mxu0 0.0
    %658 = vmatprep.subr.mxu0 0.0
    %659 = vmatpush2.msra.mxu0 0.0
    %660 = vmatprep.subr.mxu0 0.0
    %661 = vmatpush2.msra.mxu0 0.0
    %662 = vmatprep.subr.mxu0 0.0
    %663 = vmatpush2.msra.mxu0 0.0
    %664 = vmatprep.mubr.f32.mxu0 0.0
    %665 = vmatmul.mubr.f32.gmra.mxu0 %v426
    %v666 = vpop.f32.mrf.mxu0
    %v667 = vadd.f32 %v563, %v666
    %v668 = vpop.f32.mrf.mxu0
    %v669 = vadd.f32 %v567, %v668
    %670 = vmatprep.mubr.f32.mxu0 0.0
    %671 = vmatmul.mubr.f32.gmra.mxu0 %v427
    %v672 = vpop.f32.mrf.mxu0
    %v673 = vadd.f32 %v563, %v672
    %v674 = vpop.f32.mrf.mxu0
    %v675 = vadd.f32 %v567, %v674
    %676 = vmatprep.mubr.f32.mxu0 0.0
    %677 = vmatmul.mubr.f32.gmra.mxu0 %v428
    %v678 = vpop.f32.mrf.mxu0
    %v679 = vadd.f32 %v563, %v678
    %v680 = vpop.f32.mrf.mxu0
    %v681 = vadd.f32 %v567, %v680
    %682 = vmatprep.mubr.f32.mxu0 0.0
    %683 = vmatmul.mubr.f32.gmra.mxu0 %v429
    %v684 = vpop.f32.mrf.mxu0
    %v685 = vadd.f32 %v563, %v684
    %v686 = vpop.f32.mrf.mxu0
    %v687 = vadd.f32 %v567, %v686
    %688 = vdwg.mxu0
    %689 = vmatprep.subr.mxu0 %v553
    %690 = vmatpush1.msra.mxu0 %v552
    %691 = vmatprep.subr.mxu0 %v545
    %692 = vmatpush1.msra.mxu0 %v544
    %693 = vmatprep.subr.mxu0 %v537
    %694 = vmatpush1.msra.mxu0 %v536
    %695 = vmatprep.subr.mxu0 %v529
    %696 = vmatpush1.msra.mxu0 %v528
    %697 = vmatprep.subr.mxu0 %v521
    %698 = vmatpush1.msra.mxu0 %v520
    %699 = vmatprep.subr.mxu0 %v513
    %700 = vmatpush1.msra.mxu0 %v512
    %701 = vmatprep.subr.mxu0 %v505
    %702 = vmatpush1.msra.mxu0 %v504
    %703 = vmatprep.subr.mxu0 %v497
    %704 = vmatpush1.msra.mxu0 %v496
    %705 = vmatprep.subr.mxu0 %v489
    %706 = vmatpush1.msra.mxu0 %v488
    %707 = vmatprep.subr.mxu0 %v481
    %708 = vmatpush1.msra.mxu0 %v480
    %709 = vmatprep.subr.mxu0 %v473
    %710 = vmatpush1.msra.mxu0 %v472
    %711 = vmatprep.subr.mxu0 %v465
    %712 = vmatpush1.msra.mxu0 %v464
    %713 = vmatprep.subr.mxu0 %v457
    %714 = vmatpush1.msra.mxu0 %v456
    %715 = vmatprep.subr.mxu0 %v449
    %716 = vmatpush1.msra.mxu0 %v448
    %717 = vmatprep.subr.mxu0 %v441
    %718 = vmatpush1.msra.mxu0 %v440
    %719 = vmatprep.subr.mxu0 %v433
    %720 = vmatpush1.msra.mxu0 %v432
    %721 = vmatprep.subr.mxu0 0.0
    %722 = vmatpush2.msra.mxu0 0.0
    %723 = vmatprep.subr.mxu0 0.0
    %724 = vmatpush2.msra.mxu0 0.0
    %725 = vmatprep.subr.mxu0 0.0
    %726 = vmatpush2.msra.mxu0 0.0
    %727 = vmatprep.subr.mxu0 0.0
    %728 = vmatpush2.msra.mxu0 0.0
    %729 = vmatprep.subr.mxu0 0.0
    %730 = vmatpush2.msra.mxu0 0.0
    %731 = vmatprep.subr.mxu0 0.0
    %732 = vmatpush2.msra.mxu0 0.0
    %733 = vmatprep.subr.mxu0 0.0
    %734 = vmatpush2.msra.mxu0 0.0
    %735 = vmatprep.subr.mxu0 0.0
    %736 = vmatpush2.msra.mxu0 0.0
    %737 = vmatprep.subr.mxu0 0.0
    %738 = vmatpush2.msra.mxu0 0.0
    %739 = vmatprep.subr.mxu0 0.0
    %740 = vmatpush2.msra.mxu0 0.0
    %741 = vmatprep.subr.mxu0 0.0
    %742 = vmatpush2.msra.mxu0 0.0
    %743 = vmatprep.subr.mxu0 0.0
    %744 = vmatpush2.msra.mxu0 0.0
    %745 = vmatprep.subr.mxu0 0.0
    %746 = vmatpush2.msra.mxu0 0.0
    %747 = vmatprep.subr.mxu0 0.0
    %748 = vmatpush2.msra.mxu0 0.0
    %749 = vmatprep.subr.mxu0 0.0
    %750 = vmatpush2.msra.mxu0 0.0
    %751 = vmatprep.subr.mxu0 0.0
    %752 = vmatpush2.msra.mxu0 0.0
    %753 = vmatprep.mubr.f32.mxu0 0.0
    %754 = vmatmul.mubr.f32.gmra.mxu0 %v426
    %v755 = vpop.f32.mrf.mxu0
    %v756 = vadd.f32 %v571, %v755
    %v757 = vpop.f32.mrf.mxu0
    %v758 = vadd.f32 %v575, %v757
    %759 = vmatprep.mubr.f32.mxu0 0.0
    %760 = vmatmul.mubr.f32.gmra.mxu0 %v427
    %v761 = vpop.f32.mrf.mxu0
    %v762 = vadd.f32 %v571, %v761
    %v763 = vpop.f32.mrf.mxu0
    %v764 = vadd.f32 %v575, %v763
    %765 = vmatprep.mubr.f32.mxu0 0.0
    %766 = vmatmul.mubr.f32.gmra.mxu0 %v428
    %v767 = vpop.f32.mrf.mxu0
    %v768 = vadd.f32 %v571, %v767
    %v769 = vpop.f32.mrf.mxu0
    %v770 = vadd.f32 %v575, %v769
    %771 = vmatprep.mubr.f32.mxu0 0.0
    %772 = vmatmul.mubr.f32.gmra.mxu0 %v429
    %v773 = vpop.f32.mrf.mxu0
    %v774 = vadd.f32 %v571, %v773
    %v775 = vpop.f32.mrf.mxu0
    %v776 = vadd.f32 %v575, %v775
    %777 = vdwg.mxu0
    %778 = vmatprep.subr.mxu0 %v555
    %779 = vmatpush1.msra.mxu0 %v554
    %780 = vmatprep.subr.mxu0 %v547
    %781 = vmatpush1.msra.mxu0 %v546
    %782 = vmatprep.subr.mxu0 %v539
    %783 = vmatpush1.msra.mxu0 %v538
    %784 = vmatprep.subr.mxu0 %v531
    %785 = vmatpush1.msra.mxu0 %v530
    %786 = vmatprep.subr.mxu0 %v523
    %787 = vmatpush1.msra.mxu0 %v522
    %788 = vmatprep.subr.mxu0 %v515
    %789 = vmatpush1.msra.mxu0 %v514
    %790 = vmatprep.subr.mxu0 %v507
    %791 = vmatpush1.msra.mxu0 %v506
    %792 = vmatprep.subr.mxu0 %v499
    %793 = vmatpush1.msra.mxu0 %v498
    %794 = vmatprep.subr.mxu0 %v491
    %795 = vmatpush1.msra.mxu0 %v490
    %796 = vmatprep.subr.mxu0 %v483
    %797 = vmatpush1.msra.mxu0 %v482
    %798 = vmatprep.subr.mxu0 %v475
    %799 = vmatpush1.msra.mxu0 %v474
    %800 = vmatprep.subr.mxu0 %v467
    %801 = vmatpush1.msra.mxu0 %v466
    %802 = vmatprep.subr.mxu0 %v459
    %803 = vmatpush1.msra.mxu0 %v458
    %804 = vmatprep.subr.mxu0 %v451
    %805 = vmatpush1.msra.mxu0 %v450
    %806 = vmatprep.subr.mxu0 %v443
    %807 = vmatpush1.msra.mxu0 %v442
    %808 = vmatprep.subr.mxu0 %v435
    %809 = vmatpush1.msra.mxu0 %v434
    %810 = vmatprep.subr.mxu0 0.0
    %811 = vmatpush2.msra.mxu0 0.0
    %812 = vmatprep.subr.mxu0 0.0
    %813 = vmatpush2.msra.mxu0 0.0
    %814 = vmatprep.subr.mxu0 0.0
    %815 = vmatpush2.msra.mxu0 0.0
    %816 = vmatprep.subr.mxu0 0.0
    %817 = vmatpush2.msra.mxu0 0.0
    %818 = vmatprep.subr.mxu0 0.0
    %819 = vmatpush2.msra.mxu0 0.0
    %820 = vmatprep.subr.mxu0 0.0
    %821 = vmatpush2.msra.mxu0 0.0
    %822 = vmatprep.subr.mxu0 0.0
    %823 = vmatpush2.msra.mxu0 0.0
    %824 = vmatprep.subr.mxu0 0.0
    %825 = vmatpush2.msra.mxu0 0.0
    %826 = vmatprep.subr.mxu0 0.0
    %827 = vmatpush2.msra.mxu0 0.0
    %828 = vmatprep.subr.mxu0 0.0
    %829 = vmatpush2.msra.mxu0 0.0
    %830 = vmatprep.subr.mxu0 0.0
    %831 = vmatpush2.msra.mxu0 0.0
    %832 = vmatprep.subr.mxu0 0.0
    %833 = vmatpush2.msra.mxu0 0.0
    %834 = vmatprep.subr.mxu0 0.0
    %835 = vmatpush2.msra.mxu0 0.0
    %836 = vmatprep.subr.mxu0 0.0
    %837 = vmatpush2.msra.mxu0 0.0
    %838 = vmatprep.subr.mxu0 0.0
    %839 = vmatpush2.msra.mxu0 0.0
    %840 = vmatprep.subr.mxu0 0.0
    %841 = vmatpush2.msra.mxu0 0.0
    %842 = vmatprep.mubr.f32.mxu0 0.0
    %843 = vmatmul.mubr.f32.gmra.mxu0 %v426
    %v844 = vpop.f32.mrf.mxu0
    %v845 = vadd.f32 %v579, %v844
    %v846 = vpop.f32.mrf.mxu0
    %v847 = vadd.f32 %v583, %v846
    %848 = vmatprep.mubr.f32.mxu0 0.0
    %849 = vmatmul.mubr.f32.gmra.mxu0 %v427
    %v850 = vpop.f32.mrf.mxu0
    %v851 = vadd.f32 %v579, %v850
    %v852 = vpop.f32.mrf.mxu0
    %v853 = vadd.f32 %v583, %v852
    %854 = vmatprep.mubr.f32.mxu0 0.0
    %855 = vmatmul.mubr.f32.gmra.mxu0 %v428
    %v856 = vpop.f32.mrf.mxu0
    %v857 = vadd.f32 %v579, %v856
    %v858 = vpop.f32.mrf.mxu0
    %v859 = vadd.f32 %v583, %v858
    %860 = vmatprep.mubr.f32.mxu0 0.0
    %861 = vmatmul.mubr.f32.gmra.mxu0 %v429
    %v862 = vpop.f32.mrf.mxu0
    %v863 = vadd.f32 %v579, %v862
    %v864 = vpop.f32.mrf.mxu0
    %v865 = vadd.f32 %v583, %v864
    %866 = vdwg.mxu0
    %867 = vmatprep.subr.mxu0 %v557
    %868 = vmatpush1.msra.mxu0 %v556
    %869 = vmatprep.subr.mxu0 %v549
    %870 = vmatpush1.msra.mxu0 %v548
    %871 = vmatprep.subr.mxu0 %v541
    %872 = vmatpush1.msra.mxu0 %v540
    %873 = vmatprep.subr.mxu0 %v533
    %874 = vmatpush1.msra.mxu0 %v532
    %875 = vmatprep.subr.mxu0 %v525
    %876 = vmatpush1.msra.mxu0 %v524
    %877 = vmatprep.subr.mxu0 %v517
    %878 = vmatpush1.msra.mxu0 %v516
    %879 = vmatprep.subr.mxu0 %v509
    %880 = vmatpush1.msra.mxu0 %v508
    %881 = vmatprep.subr.mxu0 %v501
    %882 = vmatpush1.msra.mxu0 %v500
    %883 = vmatprep.subr.mxu0 %v493
    %884 = vmatpush1.msra.mxu0 %v492
    %885 = vmatprep.subr.mxu0 %v485
    %886 = vmatpush1.msra.mxu0 %v484
    %887 = vmatprep.subr.mxu0 %v477
    %888 = vmatpush1.msra.mxu0 %v476
    %889 = vmatprep.subr.mxu0 %v469
    %890 = vmatpush1.msra.mxu0 %v468
    %891 = vmatprep.subr.mxu0 %v461
    %892 = vmatpush1.msra.mxu0 %v460
    %893 = vmatprep.subr.mxu0 %v453
    %894 = vmatpush1.msra.mxu0 %v452
    %895 = vmatprep.subr.mxu0 %v445
    %896 = vmatpush1.msra.mxu0 %v444
    %897 = vmatprep.subr.mxu0 %v437
    %898 = vmatpush1.msra.mxu0 %v436
    %899 = vmatprep.subr.mxu0 0.0
    %900 = vmatpush2.msra.mxu0 0.0
    %901 = vmatprep.subr.mxu0 0.0
    %902 = vmatpush2.msra.mxu0 0.0
    %903 = vmatprep.subr.mxu0 0.0
    %904 = vmatpush2.msra.mxu0 0.0
    %905 = vmatprep.subr.mxu0 0.0
    %906 = vmatpush2.msra.mxu0 0.0
    %907 = vmatprep.subr.mxu0 0.0
    %908 = vmatpush2.msra.mxu0 0.0
    %909 = vmatprep.subr.mxu0 0.0
    %910 = vmatpush2.msra.mxu0 0.0
    %911 = vmatprep.subr.mxu0 0.0
    %912 = vmatpush2.msra.mxu0 0.0
    %913 = vmatprep.subr.mxu0 0.0
    %914 = vmatpush2.msra.mxu0 0.0
    %915 = vmatprep.subr.mxu0 0.0
    %916 = vmatpush2.msra.mxu0 0.0
    %917 = vmatprep.subr.mxu0 0.0
    %918 = vmatpush2.msra.mxu0 0.0
    %919 = vmatprep.subr.mxu0 0.0
    %920 = vmatpush2.msra.mxu0 0.0
    %921 = vmatprep.subr.mxu0 0.0
    %922 = vmatpush2.msra.mxu0 0.0
    %923 = vmatprep.subr.mxu0 0.0
    %924 = vmatpush2.msra.mxu0 0.0
    %925 = vmatprep.subr.mxu0 0.0
    %926 = vmatpush2.msra.mxu0 0.0
    %927 = vmatprep.subr.mxu0 0.0
    %928 = vmatpush2.msra.mxu0 0.0
    %929 = vmatprep.subr.mxu0 0.0
    %930 = vmatpush2.msra.mxu0 0.0
    %931 = vmatprep.mubr.f32.mxu0 0.0
    %932 = vmatmul.mubr.f32.gmra.mxu0 %v426
    %v933 = vpop.f32.mrf.mxu0
    %v934 = vadd.f32 %v587, %v933
    %v935 = vpop.f32.mrf.mxu0
    %v936 = vadd.f32 %v591, %v935
    %937 = vmatprep.mubr.f32.mxu0 0.0
    %938 = vmatmul.mubr.f32.gmra.mxu0 %v427
    %v939 = vpop.f32.mrf.mxu0
    %v940 = vadd.f32 %v587, %v939
    %v941 = vpop.f32.mrf.mxu0
    %v942 = vadd.f32 %v591, %v941
    %943 = vmatprep.mubr.f32.mxu0 0.0
    %944 = vmatmul.mubr.f32.gmra.mxu0 %v428
    %v945 = vpop.f32.mrf.mxu0
    %v946 = vadd.f32 %v587, %v945
    %v947 = vpop.f32.mrf.mxu0
    %v948 = vadd.f32 %v591, %v947
    %949 = vmatprep.mubr.f32.mxu0 0.0
    %950 = vmatmul.mubr.f32.gmra.mxu0 %v429
    %v951 = vpop.f32.mrf.mxu0
    %v952 = vadd.f32 %v587, %v951
    %v953 = vpop.f32.mrf.mxu0
    %v954 = vadd.f32 %v591, %v953
    %955 = vdwg.mxu0
    %v956 = vld [vmem:[%s11] sm:$0xff]
    %v957 = vld [vmem:[%s11 + $0x8] sm:$0xff]
    %v958 = vld [vmem:[%s11 + $0x10] sm:$0xff]
    %v959 = vld [vmem:[%s11 + $0x18] sm:$0xff]
    %v960 = vld [vmem:[%s11 + $0x20] sm:$0xff]
    %v961 = vld [vmem:[%s11 + $0x28] sm:$0xff]
    %v962 = vld [vmem:[%s11 + $0x30] sm:$0xff]
    %v963 = vld [vmem:[%s11 + $0x38] sm:$0xff]
    %v964 = vld [vmem:[%s11 + $0x40] sm:$0xff]
    %v965 = vld [vmem:[%s11 + $0x48] sm:$0xff]
    %v966 = vld [vmem:[%s11 + $0x50] sm:$0xff]
    %v967 = vld [vmem:[%s11 + $0x58] sm:$0xff]
    %v968 = vld [vmem:[%s11 + $0x60] sm:$0xff]
    %v969 = vld [vmem:[%s11 + $0x68] sm:$0xff]
    %v970 = vld [vmem:[%s11 + $0x70] sm:$0xff]
    %v971 = vld [vmem:[%s11 + $0x78] sm:$0xff]
    %v972 = vld [vmem:[%s11 + $0x80] sm:$0xff]
    %v973 = vld [vmem:[%s11 + $0x88] sm:$0xff]
    %v974 = vld [vmem:[%s11 + $0x90] sm:$0xff]
    %v975 = vld [vmem:[%s11 + $0x98] sm:$0xff]
    %v976 = vld [vmem:[%s11 + $0xa0] sm:$0xff]
    %v977 = vld [vmem:[%s11 + $0xa8] sm:$0xff]
    %v978 = vld [vmem:[%s11 + $0xb0] sm:$0xff]
    %v979 = vld [vmem:[%s11 + $0xb8] sm:$0xff]
    %v980 = vld [vmem:[%s11 + $0xc0] sm:$0xff]
    %v981 = vld [vmem:[%s11 + $0xc8] sm:$0xff]
    %v982 = vld [vmem:[%s11 + $0xd0] sm:$0xff]
    %v983 = vld [vmem:[%s11 + $0xd8] sm:$0xff]
    %v984 = vld [vmem:[%s11 + $0xe0] sm:$0xff]
    %v985 = vld [vmem:[%s11 + $0xe8] sm:$0xff]
    %v986 = vld [vmem:[%s11 + $0xf0] sm:$0xff]
    %v987 = vld [vmem:[%s11 + $0xf8] sm:$0xff]
    %v988 = vld [vmem:[%s12] sm:$0xff]
    %v989 = vld [vmem:[%s12 + $0x8] sm:$0xff]
    %v990 = vld [vmem:[%s12 + $0x10] sm:$0xff]
    %v991 = vld [vmem:[%s12 + $0x18] sm:$0xff]
    %v992 = vld [vmem:[%s12 + $0x20] sm:$0xff]
    %v993 = vld [vmem:[%s12 + $0x28] sm:$0xff]
    %v994 = vld [vmem:[%s12 + $0x30] sm:$0xff]
    %v995 = vld [vmem:[%s12 + $0x38] sm:$0xff]
    %v996 = vld [vmem:[%s12 + $0x40] sm:$0xff]
    %v997 = vld [vmem:[%s12 + $0x48] sm:$0xff]
    %v998 = vld [vmem:[%s12 + $0x50] sm:$0xff]
    %v999 = vld [vmem:[%s12 + $0x58] sm:$0xff]
    %v1000 = vld [vmem:[%s12 + $0x60] sm:$0xff]
    %v1001 = vld [vmem:[%s12 + $0x68] sm:$0xff]
    %v1002 = vld [vmem:[%s12 + $0x70] sm:$0xff]
    %v1003 = vld [vmem:[%s12 + $0x78] sm:$0xff]
    %v1004 = vld [vmem:[%s12 + $0x80] sm:$0xff]
    %v1005 = vld [vmem:[%s12 + $0x88] sm:$0xff]
    %v1006 = vld [vmem:[%s12 + $0x90] sm:$0xff]
    %v1007 = vld [vmem:[%s12 + $0x98] sm:$0xff]
    %v1008 = vld [vmem:[%s12 + $0xa0] sm:$0xff]
    %v1009 = vld [vmem:[%s12 + $0xa8] sm:$0xff]
    %v1010 = vld [vmem:[%s12 + $0xb0] sm:$0xff]
    %v1011 = vld [vmem:[%s12 + $0xb8] sm:$0xff]
    %v1012 = vld [vmem:[%s12 + $0xc0] sm:$0xff]
    %v1013 = vld [vmem:[%s12 + $0xc8] sm:$0xff]
    %v1014 = vld [vmem:[%s12 + $0xd0] sm:$0xff]
    %v1015 = vld [vmem:[%s12 + $0xd8] sm:$0xff]
    %v1016 = vld [vmem:[%s12 + $0xe0] sm:$0xff]
    %v1017 = vld [vmem:[%s12 + $0xe8] sm:$0xff]
    %v1018 = vld [vmem:[%s12 + $0xf0] sm:$0xff]
    %v1019 = vld [vmem:[%s12 + $0xf8] sm:$0xff]
    %v1020 = vld [vmem:[%s12 + $0x100] sm:$0xff]
    %v1021 = vld [vmem:[%s12 + $0x108] sm:$0xff]
    %v1022 = vld [vmem:[%s12 + $0x110] sm:$0xff]
    %v1023 = vld [vmem:[%s12 + $0x118] sm:$0xff]
    %v1024 = vld [vmem:[%s12 + $0x120] sm:$0xff]
    %v1025 = vld [vmem:[%s12 + $0x128] sm:$0xff]
    %v1026 = vld [vmem:[%s12 + $0x130] sm:$0xff]
    %v1027 = vld [vmem:[%s12 + $0x138] sm:$0xff]
    %v1028 = vld [vmem:[%s12 + $0x140] sm:$0xff]
    %v1029 = vld [vmem:[%s12 + $0x148] sm:$0xff]
    %v1030 = vld [vmem:[%s12 + $0x150] sm:$0xff]
    %v1031 = vld [vmem:[%s12 + $0x158] sm:$0xff]
    %v1032 = vld [vmem:[%s12 + $0x160] sm:$0xff]
    %v1033 = vld [vmem:[%s12 + $0x168] sm:$0xff]
    %v1034 = vld [vmem:[%s12 + $0x170] sm:$0xff]
    %v1035 = vld [vmem:[%s12 + $0x178] sm:$0xff]
    %v1036 = vld [vmem:[%s12 + $0x180] sm:$0xff]
    %v1037 = vld [vmem:[%s12 + $0x188] sm:$0xff]
    %v1038 = vld [vmem:[%s12 + $0x190] sm:$0xff]
    %v1039 = vld [vmem:[%s12 + $0x198] sm:$0xff]
    %v1040 = vld [vmem:[%s12 + $0x1a0] sm:$0xff]
    %v1041 = vld [vmem:[%s12 + $0x1a8] sm:$0xff]
    %v1042 = vld [vmem:[%s12 + $0x1b0] sm:$0xff]
    %v1043 = vld [vmem:[%s12 + $0x1b8] sm:$0xff]
    %v1044 = vld [vmem:[%s12 + $0x1c0] sm:$0xff]
    %v1045 = vld [vmem:[%s12 + $0x1c8] sm:$0xff]
    %v1046 = vld [vmem:[%s12 + $0x1d0] sm:$0xff]
    %v1047 = vld [vmem:[%s12 + $0x1d8] sm:$0xff]
    %v1048 = vld [vmem:[%s12 + $0x1e0] sm:$0xff]
    %v1049 = vld [vmem:[%s12 + $0x1e8] sm:$0xff]
    %v1050 = vld [vmem:[%s12 + $0x1f0] sm:$0xff]
    %v1051 = vld [vmem:[%s12 + $0x1f8] sm:$0xff]
    %v1052 = vld [vmem:[%s12 + $0x200] sm:$0xff]
    %v1053 = vld [vmem:[%s12 + $0x208] sm:$0xff]
    %v1054 = vld [vmem:[%s12 + $0x210] sm:$0xff]
    %v1055 = vld [vmem:[%s12 + $0x218] sm:$0xff]
    %v1056 = vld [vmem:[%s12 + $0x220] sm:$0xff]
    %v1057 = vld [vmem:[%s12 + $0x228] sm:$0xff]
    %v1058 = vld [vmem:[%s12 + $0x230] sm:$0xff]
    %v1059 = vld [vmem:[%s12 + $0x238] sm:$0xff]
    %v1060 = vld [vmem:[%s12 + $0x240] sm:$0xff]
    %v1061 = vld [vmem:[%s12 + $0x248] sm:$0xff]
    %v1062 = vld [vmem:[%s12 + $0x250] sm:$0xff]
    %v1063 = vld [vmem:[%s12 + $0x258] sm:$0xff]
    %v1064 = vld [vmem:[%s12 + $0x260] sm:$0xff]
    %v1065 = vld [vmem:[%s12 + $0x268] sm:$0xff]
    %v1066 = vld [vmem:[%s12 + $0x270] sm:$0xff]
    %v1067 = vld [vmem:[%s12 + $0x278] sm:$0xff]
    %v1068 = vld [vmem:[%s12 + $0x280] sm:$0xff]
    %v1069 = vld [vmem:[%s12 + $0x288] sm:$0xff]
    %v1070 = vld [vmem:[%s12 + $0x290] sm:$0xff]
    %v1071 = vld [vmem:[%s12 + $0x298] sm:$0xff]
    %v1072 = vld [vmem:[%s12 + $0x2a0] sm:$0xff]
    %v1073 = vld [vmem:[%s12 + $0x2a8] sm:$0xff]
    %v1074 = vld [vmem:[%s12 + $0x2b0] sm:$0xff]
    %v1075 = vld [vmem:[%s12 + $0x2b8] sm:$0xff]
    %v1076 = vld [vmem:[%s12 + $0x2c0] sm:$0xff]
    %v1077 = vld [vmem:[%s12 + $0x2c8] sm:$0xff]
    %v1078 = vld [vmem:[%s12 + $0x2d0] sm:$0xff]
    %v1079 = vld [vmem:[%s12 + $0x2d8] sm:$0xff]
    %v1080 = vld [vmem:[%s12 + $0x2e0] sm:$0xff]
    %v1081 = vld [vmem:[%s12 + $0x2e8] sm:$0xff]
    %v1082 = vld [vmem:[%s12 + $0x2f0] sm:$0xff]
    %v1083 = vld [vmem:[%s12 + $0x2f8] sm:$0xff]
    %v1084 = vld [vmem:[%s12 + $0x300] sm:$0xff]
    %v1085 = vld [vmem:[%s12 + $0x308] sm:$0xff]
    %v1086 = vld [vmem:[%s12 + $0x310] sm:$0xff]
    %v1087 = vld [vmem:[%s12 + $0x318] sm:$0xff]
    %v1088 = vld [vmem:[%s12 + $0x320] sm:$0xff]
    %v1089 = vld [vmem:[%s12 + $0x328] sm:$0xff]
    %v1090 = vld [vmem:[%s12 + $0x330] sm:$0xff]
    %v1091 = vld [vmem:[%s12 + $0x338] sm:$0xff]
    %v1092 = vld [vmem:[%s12 + $0x340] sm:$0xff]
    %v1093 = vld [vmem:[%s12 + $0x348] sm:$0xff]
    %v1094 = vld [vmem:[%s12 + $0x350] sm:$0xff]
    %v1095 = vld [vmem:[%s12 + $0x358] sm:$0xff]
    %v1096 = vld [vmem:[%s12 + $0x360] sm:$0xff]
    %v1097 = vld [vmem:[%s12 + $0x368] sm:$0xff]
    %v1098 = vld [vmem:[%s12 + $0x370] sm:$0xff]
    %v1099 = vld [vmem:[%s12 + $0x378] sm:$0xff]
    %v1100 = vld [vmem:[%s12 + $0x380] sm:$0xff]
    %v1101 = vld [vmem:[%s12 + $0x388] sm:$0xff]
    %v1102 = vld [vmem:[%s12 + $0x390] sm:$0xff]
    %v1103 = vld [vmem:[%s12 + $0x398] sm:$0xff]
    %v1104 = vld [vmem:[%s12 + $0x3a0] sm:$0xff]
    %v1105 = vld [vmem:[%s12 + $0x3a8] sm:$0xff]
    %v1106 = vld [vmem:[%s12 + $0x3b0] sm:$0xff]
    %v1107 = vld [vmem:[%s12 + $0x3b8] sm:$0xff]
    %v1108 = vld [vmem:[%s12 + $0x3c0] sm:$0xff]
    %v1109 = vld [vmem:[%s12 + $0x3c8] sm:$0xff]
    %v1110 = vld [vmem:[%s12 + $0x3d0] sm:$0xff]
    %v1111 = vld [vmem:[%s12 + $0x3d8] sm:$0xff]
    %v1112 = vld [vmem:[%s12 + $0x3e0] sm:$0xff]
    %v1113 = vld [vmem:[%s12 + $0x3e8] sm:$0xff]
    %v1114 = vld [vmem:[%s12 + $0x3f0] sm:$0xff]
    %v1115 = vld [vmem:[%s12 + $0x3f8] sm:$0xff]
    %v1116 = vld [vmem:[%s13] sm:$0xff]
    %v1117 = vld [vmem:[%s13 + $0x8] sm:$0xff]
    %v1118 = vld [vmem:[%s13 + $0x10] sm:$0xff]
    %v1119 = vld [vmem:[%s13 + $0x18] sm:$0xff]
    %v1120 = vld [vmem:[#allocation13] sm:$0x1]
    %v1121 = vld [vmem:[%s15] sm:$0xff]
    %v1122 = vld [vmem:[%s15 + $0x8] sm:$0xff]
    %v1123 = vld [vmem:[%s15 + $0x10] sm:$0xff]
    %v1124 = vld [vmem:[%s15 + $0x18] sm:$0xff]
    %v1125 = vld [vmem:[%s16] sm:$0xff]
    %v1126 = vld [vmem:[%s16 + $0x8] sm:$0xff]
    %v1127 = vld [vmem:[%s16 + $0x10] sm:$0xff]
    %v1128 = vld [vmem:[%s16 + $0x18] sm:$0xff]
    %v1129 = vld [vmem:[#allocation14] sm:$0x1]
    %v1130 = vld [vmem:[#allocation16] sm:$0x1]
    %v1132 = vsel %vm252, %v363, 0
    %v1135 = vsel %vm252, %v364, 0
    %v1138 = vsel %vm252, %v365, 0
    %v1141 = vsel %vm252, %v366, 0
    %1143 = vmatprep.subr.mxu0 0.0
    %1144 = vmatpush1.msra.mxu0 0.0
    %1145 = vmatprep.subr.mxu0 0.0
    %1146 = vmatpush1.msra.mxu0 0.0
    %1147 = vmatprep.subr.mxu0 0.0
    %1148 = vmatpush1.msra.mxu0 0.0
    %1149 = vmatprep.subr.mxu0 0.0
    %1150 = vmatpush1.msra.mxu0 0.0
    %1151 = vmatprep.subr.mxu0 0.0
    %1152 = vmatpush1.msra.mxu0 0.0
    %1153 = vmatprep.subr.mxu0 0.0
    %1154 = vmatpush1.msra.mxu0 0.0
    %1155 = vmatprep.subr.mxu0 0.0
    %1156 = vmatpush1.msra.mxu0 0.0
    %1157 = vmatprep.subr.mxu0 0.0
    %1158 = vmatpush1.msra.mxu0 0.0
    %1159 = vmatprep.subr.mxu0 0.0
    %1160 = vmatpush1.msra.mxu0 0.0
    %1161 = vmatprep.subr.mxu0 0.0
    %1162 = vmatpush1.msra.mxu0 0.0
    %1163 = vmatprep.subr.mxu0 0.0
    %1164 = vmatpush1.msra.mxu0 0.0
    %1165 = vmatprep.subr.mxu0 0.0
    %1166 = vmatpush1.msra.mxu0 0.0
    %1167 = vmatprep.subr.mxu0 0.0
    %1168 = vmatpush1.msra.mxu0 0.0
    %1169 = vmatprep.subr.mxu0 0.0
    %1170 = vmatpush1.msra.mxu0 0.0
    %1171 = vmatprep.subr.mxu0 0.0
    %1172 = vmatpush1.msra.mxu0 %v335
    %1173 = vmatprep.subr.mxu0 0.0
    %1174 = vmatpush1.msra.mxu0 %v334
    %1175 = vmatprep.subr.mxu0 0.0
    %1176 = vmatpush2.msra.mxu0 0.0
    %1177 = vmatprep.subr.mxu0 0.0
    %1178 = vmatpush2.msra.mxu0 0.0
    %1179 = vmatprep.subr.mxu0 0.0
    %1180 = vmatpush2.msra.mxu0 0.0
    %1181 = vmatprep.subr.mxu0 0.0
    %1182 = vmatpush2.msra.mxu0 0.0
    %1183 = vmatprep.subr.mxu0 0.0
    %1184 = vmatpush2.msra.mxu0 0.0
    %1185 = vmatprep.subr.mxu0 0.0
    %1186 = vmatpush2.msra.mxu0 0.0
    %1187 = vmatprep.subr.mxu0 0.0
    %1188 = vmatpush2.msra.mxu0 0.0
    %1189 = vmatprep.subr.mxu0 0.0
    %1190 = vmatpush2.msra.mxu0 0.0
    %1191 = vmatprep.subr.mxu0 0.0
    %1192 = vmatpush2.msra.mxu0 0.0
    %1193 = vmatprep.subr.mxu0 0.0
    %1194 = vmatpush2.msra.mxu0 0.0
    %1195 = vmatprep.subr.mxu0 0.0
    %1196 = vmatpush2.msra.mxu0 0.0
    %1197 = vmatprep.subr.mxu0 0.0
    %1198 = vmatpush2.msra.mxu0 0.0
    %1199 = vmatprep.subr.mxu0 0.0
    %1200 = vmatpush2.msra.mxu0 0.0
    %1201 = vmatprep.subr.mxu0 0.0
    %1202 = vmatpush2.msra.mxu0 0.0
    %1203 = vmatprep.subr.mxu0 0.0
    %1204 = vmatpush2.msra.mxu0 0.0
    %1205 = vmatprep.subr.mxu0 0.0
    %1206 = vmatpush2.msra.mxu0 0.0
    %1207 = vmatprep.mubr.f32.mxu0 0.0
    %1208 = vmatmul.mubr.f32.gmra.mxu0 %v1132
    %v1209 = vpop.f32.mrf.mxu0
    %v1210 = vadd.f32 0.0, %v1209
    %v1211 = vpop.f32.mrf.mxu0
    %1212 = vmatprep.mubr.f32.mxu0 0.0
    %1213 = vmatmul.mubr.f32.gmra.mxu0 %v1135
    %v1214 = vpop.f32.mrf.mxu0
    %v1215 = vadd.f32 0.0, %v1214
    %v1216 = vpop.f32.mrf.mxu0
    %1217 = vmatprep.mubr.f32.mxu0 0.0
    %1218 = vmatmul.mubr.f32.gmra.mxu0 %v1138
    %v1219 = vpop.f32.mrf.mxu0
    %v1220 = vadd.f32 0.0, %v1219
    %v1221 = vpop.f32.mrf.mxu0
    %1222 = vmatprep.mubr.f32.mxu0 0.0
    %1223 = vmatmul.mubr.f32.gmra.mxu0 %v1141
    %v1224 = vpop.f32.mrf.mxu0
    %v1225 = vadd.f32 0.0, %v1224
    %v1226 = vpop.f32.mrf.mxu0
    %1227 = vdwg.mxu0
    %vm1228 = vcmask 261120
    %v1230 = vsel %vm1228, %v1210, 0
    %v1233 = vsel %vm1228, %v1215, 0
    %v1236 = vsel %vm1228, %v1220, 0
    %v1239 = vsel %vm1228, %v1225, 0
    %1241 = vmatprep.subr.mxu0 0.0
    %1242 = vmatpush1.msra.mxu0 0.0
    %1243 = vmatprep.subr.mxu0 0.0
    %1244 = vmatpush1.msra.mxu0 0.0
    %1245 = vmatprep.subr.mxu0 0.0
    %1246 = vmatpush1.msra.mxu0 0.0
    %1247 = vmatprep.subr.mxu0 0.0
    %1248 = vmatpush1.msra.mxu0 0.0
    %1249 = vmatprep.subr.mxu0 0.0
    %1250 = vmatpush1.msra.mxu0 0.0
    %1251 = vmatprep.subr.mxu0 0.0
    %1252 = vmatpush1.msra.mxu0 0.0
    %1253 = vmatprep.subr.mxu0 0.0
    %1254 = vmatpush1.msra.mxu0 0.0
    %1255 = vmatprep.subr.mxu0 0.0
    %1256 = vmatpush1.msra.mxu0 0.0
    %1257 = vmatprep.subr.mxu0 0.0
    %1258 = vmatpush1.msra.mxu0 0.0
    %1259 = vmatprep.subr.mxu0 0.0
    %1260 = vmatpush1.msra.mxu0 0.0
    %1261 = vmatprep.subr.mxu0 0.0
    %1262 = vmatpush1.msra.mxu0 0.0
    %1263 = vmatprep.subr.mxu0 0.0
    %1264 = vmatpush1.msra.mxu0 0.0
    %1265 = vmatprep.subr.mxu0 %v981
    %1266 = vmatpush1.msra.mxu0 %v980
    %1267 = vmatprep.subr.mxu0 %v973
    %1268 = vmatpush1.msra.mxu0 %v972
    %1269 = vmatprep.subr.mxu0 %v965
    %1270 = vmatpush1.msra.mxu0 %v964
    %1271 = vmatprep.subr.mxu0 %v957
    %1272 = vmatpush1.msra.mxu0 %v956
    %1273 = vmatprep.subr.mxu0 0.0
    %1274 = vmatpush2.msra.mxu0 0.0
    %1275 = vmatprep.subr.mxu0 0.0
    %1276 = vmatpush2.msra.mxu0 0.0
    %1277 = vmatprep.subr.mxu0 0.0
    %1278 = vmatpush2.msra.mxu0 0.0
    %1279 = vmatprep.subr.mxu0 0.0
    %1280 = vmatpush2.msra.mxu0 0.0
    %1281 = vmatprep.subr.mxu0 0.0
    %1282 = vmatpush2.msra.mxu0 0.0
    %1283 = vmatprep.subr.mxu0 0.0
    %1284 = vmatpush2.msra.mxu0 0.0
    %1285 = vmatprep.subr.mxu0 0.0
    %1286 = vmatpush2.msra.mxu0 0.0
    %1287 = vmatprep.subr.mxu0 0.0
    %1288 = vmatpush2.msra.mxu0 0.0
    %1289 = vmatprep.subr.mxu0 0.0
    %1290 = vmatpush2.msra.mxu0 0.0
    %1291 = vmatprep.subr.mxu0 0.0
    %1292 = vmatpush2.msra.mxu0 0.0
    %1293 = vmatprep.subr.mxu0 0.0
    %1294 = vmatpush2.msra.mxu0 0.0
    %1295 = vmatprep.subr.mxu0 0.0
    %1296 = vmatpush2.msra.mxu0 0.0
    %1297 = vmatprep.subr.mxu0 0.0
    %1298 = vmatpush2.msra.mxu0 0.0
    %1299 = vmatprep.subr.mxu0 0.0
    %1300 = vmatpush2.msra.mxu0 0.0
    %1301 = vmatprep.subr.mxu0 0.0
    %1302 = vmatpush2.msra.mxu0 0.0
    %1303 = vmatprep.subr.mxu0 0.0
    %1304 = vmatpush2.msra.mxu0 0.0
    %1305 = vmatprep.mubr.f32.mxu0 0.0
    %1306 = vmatmul.mubr.f32.gmra.mxu0 %v1230
    %v1307 = vpop.f32.mrf.mxu0
    %v1308 = vadd.f32 0.0, %v1307
    %v1309 = vpop.f32.mrf.mxu0
    %v1310 = vadd.f32 0.0, %v1309
    %1311 = vmatprep.mubr.f32.mxu0 0.0
    %1312 = vmatmul.mubr.f32.gmra.mxu0 %v1233
    %v1313 = vpop.f32.mrf.mxu0
    %v1314 = vadd.f32 0.0, %v1313
    %v1315 = vpop.f32.mrf.mxu0
    %v1316 = vadd.f32 0.0, %v1315
    %1317 = vmatprep.mubr.f32.mxu0 0.0
    %1318 = vmatmul.mubr.f32.gmra.mxu0 %v1236
    %v1319 = vpop.f32.mrf.mxu0
    %v1320 = vadd.f32 0.0, %v1319
    %v1321 = vpop.f32.mrf.mxu0
    %v1322 = vadd.f32 0.0, %v1321
    %1323 = vmatprep.mubr.f32.mxu0 0.0
    %1324 = vmatmul.mubr.f32.gmra.mxu0 %v1239
    %v1325 = vpop.f32.mrf.mxu0
    %v1326 = vadd.f32 0.0, %v1325
    %v1327 = vpop.f32.mrf.mxu0
    %v1328 = vadd.f32 0.0, %v1327
    %1329 = vdwg.mxu0
    %1330 = vmatprep.subr.mxu0 0.0
    %1331 = vmatpush1.msra.mxu0 0.0
    %1332 = vmatprep.subr.mxu0 0.0
    %1333 = vmatpush1.msra.mxu0 0.0
    %1334 = vmatprep.subr.mxu0 0.0
    %1335 = vmatpush1.msra.mxu0 0.0
    %1336 = vmatprep.subr.mxu0 0.0
    %1337 = vmatpush1.msra.mxu0 0.0
    %1338 = vmatprep.subr.mxu0 0.0
    %1339 = vmatpush1.msra.mxu0 0.0
    %1340 = vmatprep.subr.mxu0 0.0
    %1341 = vmatpush1.msra.mxu0 0.0
    %1342 = vmatprep.subr.mxu0 0.0
    %1343 = vmatpush1.msra.mxu0 0.0
    %1344 = vmatprep.subr.mxu0 0.0
    %1345 = vmatpush1.msra.mxu0 0.0
    %1346 = vmatprep.subr.mxu0 0.0
    %1347 = vmatpush1.msra.mxu0 0.0
    %1348 = vmatprep.subr.mxu0 0.0
    %1349 = vmatpush1.msra.mxu0 0.0
    %1350 = vmatprep.subr.mxu0 0.0
    %1351 = vmatpush1.msra.mxu0 0.0
    %1352 = vmatprep.subr.mxu0 0.0
    %1353 = vmatpush1.msra.mxu0 0.0
    %1354 = vmatprep.subr.mxu0 %v983
    %1355 = vmatpush1.msra.mxu0 %v982
    %1356 = vmatprep.subr.mxu0 %v975
    %1357 = vmatpush1.msra.mxu0 %v974
    %1358 = vmatprep.subr.mxu0 %v967
    %1359 = vmatpush1.msra.mxu0 %v966
    %1360 = vmatprep.subr.mxu0 %v959
    %1361 = vmatpush1.msra.mxu0 %v958
    %1362 = vmatprep.subr.mxu0 0.0
    %1363 = vmatpush2.msra.mxu0 0.0
    %1364 = vmatprep.subr.mxu0 0.0
    %1365 = vmatpush2.msra.mxu0 0.0
    %1366 = vmatprep.subr.mxu0 0.0
    %1367 = vmatpush2.msra.mxu0 0.0
    %1368 = vmatprep.subr.mxu0 0.0
    %1369 = vmatpush2.msra.mxu0 0.0
    %1370 = vmatprep.subr.mxu0 0.0
    %1371 = vmatpush2.msra.mxu0 0.0
    %1372 = vmatprep.subr.mxu0 0.0
    %1373 = vmatpush2.msra.mxu0 0.0
    %1374 = vmatprep.subr.mxu0 0.0
    %1375 = vmatpush2.msra.mxu0 0.0
    %1376 = vmatprep.subr.mxu0 0.0
    %1377 = vmatpush2.msra.mxu0 0.0
    %1378 = vmatprep.subr.mxu0 0.0
    %1379 = vmatpush2.msra.mxu0 0.0
    %1380 = vmatprep.subr.mxu0 0.0
    %1381 = vmatpush2.msra.mxu0 0.0
    %1382 = vmatprep.subr.mxu0 0.0
    %1383 = vmatpush2.msra.mxu0 0.0
    %1384 = vmatprep.subr.mxu0 0.0
    %1385 = vmatpush2.msra.mxu0 0.0
    %1386 = vmatprep.subr.mxu0 0.0
    %1387 = vmatpush2.msra.mxu0 0.0
    %1388 = vmatprep.subr.mxu0 0.0
    %1389 = vmatpush2.msra.mxu0 0.0
    %1390 = vmatprep.subr.mxu0 0.0
    %1391 = vmatpush2.msra.mxu0 0.0
    %1392 = vmatprep.subr.mxu0 0.0
    %1393 = vmatpush2.msra.mxu0 0.0
    %1394 = vmatprep.mubr.f32.mxu0 0.0
    %1395 = vmatmul.mubr.f32.gmra.mxu0 %v1230
    %v1396 = vpop.f32.mrf.mxu0
    %v1397 = vadd.f32 0.0, %v1396
    %v1398 = vpop.f32.mrf.mxu0
    %v1399 = vadd.f32 0.0, %v1398
    %1400 = vmatprep.mubr.f32.mxu0 0.0
    %1401 = vmatmul.mubr.f32.gmra.mxu0 %v1233
    %v1402 = vpop.f32.mrf.mxu0
    %v1403 = vadd.f32 0.0, %v1402
    %v1404 = vpop.f32.mrf.mxu0
    %v1405 = vadd.f32 0.0, %v1404
    %1406 = vmatprep.mubr.f32.mxu0 0.0
    %1407 = vmatmul.mubr.f32.gmra.mxu0 %v1236
    %v1408 = vpop.f32.mrf.mxu0
    %v1409 = vadd.f32 0.0, %v1408
    %v1410 = vpop.f32.mrf.mxu0
    %v1411 = vadd.f32 0.0, %v1410
    %1412 = vmatprep.mubr.f32.mxu0 0.0
    %1413 = vmatmul.mubr.f32.gmra.mxu0 %v1239
    %v1414 = vpop.f32.mrf.mxu0
    %v1415 = vadd.f32 0.0, %v1414
    %v1416 = vpop.f32.mrf.mxu0
    %v1417 = vadd.f32 0.0, %v1416
    %1418 = vdwg.mxu0
    %1419 = vmatprep.subr.mxu0 0.0
    %1420 = vmatpush1.msra.mxu0 0.0
    %1421 = vmatprep.subr.mxu0 0.0
    %1422 = vmatpush1.msra.mxu0 0.0
    %1423 = vmatprep.subr.mxu0 0.0
    %1424 = vmatpush1.msra.mxu0 0.0
    %1425 = vmatprep.subr.mxu0 0.0
    %1426 = vmatpush1.msra.mxu0 0.0
    %1427 = vmatprep.subr.mxu0 0.0
    %1428 = vmatpush1.msra.mxu0 0.0
    %1429 = vmatprep.subr.mxu0 0.0
    %1430 = vmatpush1.msra.mxu0 0.0
    %1431 = vmatprep.subr.mxu0 0.0
    %1432 = vmatpush1.msra.mxu0 0.0
    %1433 = vmatprep.subr.mxu0 0.0
    %1434 = vmatpush1.msra.mxu0 0.0
    %1435 = vmatprep.subr.mxu0 0.0
    %1436 = vmatpush1.msra.mxu0 0.0
    %1437 = vmatprep.subr.mxu0 0.0
    %1438 = vmatpush1.msra.mxu0 0.0
    %1439 = vmatprep.subr.mxu0 0.0
    %1440 = vmatpush1.msra.mxu0 0.0
    %1441 = vmatprep.subr.mxu0 0.0
    %1442 = vmatpush1.msra.mxu0 0.0
    %1443 = vmatprep.subr.mxu0 %v985
    %1444 = vmatpush1.msra.mxu0 %v984
    %1445 = vmatprep.subr.mxu0 %v977
    %1446 = vmatpush1.msra.mxu0 %v976
    %1447 = vmatprep.subr.mxu0 %v969
    %1448 = vmatpush1.msra.mxu0 %v968
    %1449 = vmatprep.subr.mxu0 %v961
    %1450 = vmatpush1.msra.mxu0 %v960
    %1451 = vmatprep.subr.mxu0 0.0
    %1452 = vmatpush2.msra.mxu0 0.0
    %1453 = vmatprep.subr.mxu0 0.0
    %1454 = vmatpush2.msra.mxu0 0.0
    %1455 = vmatprep.subr.mxu0 0.0
    %1456 = vmatpush2.msra.mxu0 0.0
    %1457 = vmatprep.subr.mxu0 0.0
    %1458 = vmatpush2.msra.mxu0 0.0
    %1459 = vmatprep.subr.mxu0 0.0
    %1460 = vmatpush2.msra.mxu0 0.0
    %1461 = vmatprep.subr.mxu0 0.0
    %1462 = vmatpush2.msra.mxu0 0.0
    %1463 = vmatprep.subr.mxu0 0.0
    %1464 = vmatpush2.msra.mxu0 0.0
    %1465 = vmatprep.subr.mxu0 0.0
    %1466 = vmatpush2.msra.mxu0 0.0
    %1467 = vmatprep.subr.mxu0 0.0
    %1468 = vmatpush2.msra.mxu0 0.0
    %1469 = vmatprep.subr.mxu0 0.0
    %1470 = vmatpush2.msra.mxu0 0.0
    %1471 = vmatprep.subr.mxu0 0.0
    %1472 = vmatpush2.msra.mxu0 0.0
    %1473 = vmatprep.subr.mxu0 0.0
    %1474 = vmatpush2.msra.mxu0 0.0
    %1475 = vmatprep.subr.mxu0 0.0
    %1476 = vmatpush2.msra.mxu0 0.0
    %1477 = vmatprep.subr.mxu0 0.0
    %1478 = vmatpush2.msra.mxu0 0.0
    %1479 = vmatprep.subr.mxu0 0.0
    %1480 = vmatpush2.msra.mxu0 0.0
    %1481 = vmatprep.subr.mxu0 0.0
    %1482 = vmatpush2.msra.mxu0 0.0
    %1483 = vmatprep.mubr.f32.mxu0 0.0
    %1484 = vmatmul.mubr.f32.gmra.mxu0 %v1230
    %v1485 = vpop.f32.mrf.mxu0
    %v1486 = vadd.f32 0.0, %v1485
    %v1487 = vpop.f32.mrf.mxu0
    %v1488 = vadd.f32 0.0, %v1487
    %1489 = vmatprep.mubr.f32.mxu0 0.0
    %1490 = vmatmul.mubr.f32.gmra.mxu0 %v1233
    %v1491 = vpop.f32.mrf.mxu0
    %v1492 = vadd.f32 0.0, %v1491
    %v1493 = vpop.f32.mrf.mxu0
    %v1494 = vadd.f32 0.0, %v1493
    %1495 = vmatprep.mubr.f32.mxu0 0.0
    %1496 = vmatmul.mubr.f32.gmra.mxu0 %v1236
    %v1497 = vpop.f32.mrf.mxu0
    %v1498 = vadd.f32 0.0, %v1497
    %v1499 = vpop.f32.mrf.mxu0
    %v1500 = vadd.f32 0.0, %v1499
    %1501 = vmatprep.mubr.f32.mxu0 0.0
    %1502 = vmatmul.mubr.f32.gmra.mxu0 %v1239
    %v1503 = vpop.f32.mrf.mxu0
    %v1504 = vadd.f32 0.0, %v1503
    %v1505 = vpop.f32.mrf.mxu0
    %v1506 = vadd.f32 0.0, %v1505
    %1507 = vdwg.mxu0
    %1508 = vmatprep.subr.mxu0 0.0
    %1509 = vmatpush1.msra.mxu0 0.0
    %1510 = vmatprep.subr.mxu0 0.0
    %1511 = vmatpush1.msra.mxu0 0.0
    %1512 = vmatprep.subr.mxu0 0.0
    %1513 = vmatpush1.msra.mxu0 0.0
    %1514 = vmatprep.subr.mxu0 0.0
    %1515 = vmatpush1.msra.mxu0 0.0
    %1516 = vmatprep.subr.mxu0 0.0
    %1517 = vmatpush1.msra.mxu0 0.0
    %1518 = vmatprep.subr.mxu0 0.0
    %1519 = vmatpush1.msra.mxu0 0.0
    %1520 = vmatprep.subr.mxu0 0.0
    %1521 = vmatpush1.msra.mxu0 0.0
    %1522 = vmatprep.subr.mxu0 0.0
    %1523 = vmatpush1.msra.mxu0 0.0
    %1524 = vmatprep.subr.mxu0 0.0
    %1525 = vmatpush1.msra.mxu0 0.0
    %1526 = vmatprep.subr.mxu0 0.0
    %1527 = vmatpush1.msra.mxu0 0.0
    %1528 = vmatprep.subr.mxu0 0.0
    %1529 = vmatpush1.msra.mxu0 0.0
    %1530 = vmatprep.subr.mxu0 0.0
    %1531 = vmatpush1.msra.mxu0 0.0
    %1532 = vmatprep.subr.mxu0 %v987
    %1533 = vmatpush1.msra.mxu0 %v986
    %1534 = vmatprep.subr.mxu0 %v979
    %1535 = vmatpush1.msra.mxu0 %v978
    %1536 = vmatprep.subr.mxu0 %v971
    %1537 = vmatpush1.msra.mxu0 %v970
    %1538 = vmatprep.subr.mxu0 %v963
    %1539 = vmatpush1.msra.mxu0 %v962
    %1540 = vmatprep.subr.mxu0 0.0
    %1541 = vmatpush2.msra.mxu0 0.0
    %1542 = vmatprep.subr.mxu0 0.0
    %1543 = vmatpush2.msra.mxu0 0.0
    %1544 = vmatprep.subr.mxu0 0.0
    %1545 = vmatpush2.msra.mxu0 0.0
    %1546 = vmatprep.subr.mxu0 0.0
    %1547 = vmatpush2.msra.mxu0 0.0
    %1548 = vmatprep.subr.mxu0 0.0
    %1549 = vmatpush2.msra.mxu0 0.0
    %1550 = vmatprep.subr.mxu0 0.0
    %1551 = vmatpush2.msra.mxu0 0.0
    %1552 = vmatprep.subr.mxu0 0.0
    %1553 = vmatpush2.msra.mxu0 0.0
    %1554 = vmatprep.subr.mxu0 0.0
    %1555 = vmatpush2.msra.mxu0 0.0
    %1556 = vmatprep.subr.mxu0 0.0
    %1557 = vmatpush2.msra.mxu0 0.0
    %1558 = vmatprep.subr.mxu0 0.0
    %1559 = vmatpush2.msra.mxu0 0.0
    %1560 = vmatprep.subr.mxu0 0.0
    %1561 = vmatpush2.msra.mxu0 0.0
    %1562 = vmatprep.subr.mxu0 0.0
    %1563 = vmatpush2.msra.mxu0 0.0
    %1564 = vmatprep.subr.mxu0 0.0
    %1565 = vmatpush2.msra.mxu0 0.0
    %1566 = vmatprep.subr.mxu0 0.0
    %1567 = vmatpush2.msra.mxu0 0.0
    %1568 = vmatprep.subr.mxu0 0.0
    %1569 = vmatpush2.msra.mxu0 0.0
    %1570 = vmatprep.subr.mxu0 0.0
    %1571 = vmatpush2.msra.mxu0 0.0
    %1572 = vmatprep.mubr.f32.mxu0 0.0
    %1573 = vmatmul.mubr.f32.gmra.mxu0 %v1230
    %v1574 = vpop.f32.mrf.mxu0
    %v1575 = vadd.f32 0.0, %v1574
    %v1576 = vpop.f32.mrf.mxu0
    %v1577 = vadd.f32 0.0, %v1576
    %1578 = vmatprep.mubr.f32.mxu0 0.0
    %1579 = vmatmul.mubr.f32.gmra.mxu0 %v1233
    %v1580 = vpop.f32.mrf.mxu0
    %v1581 = vadd.f32 0.0, %v1580
    %v1582 = vpop.f32.mrf.mxu0
    %v1583 = vadd.f32 0.0, %v1582
    %1584 = vmatprep.mubr.f32.mxu0 0.0
    %1585 = vmatmul.mubr.f32.gmra.mxu0 %v1236
    %v1586 = vpop.f32.mrf.mxu0
    %v1587 = vadd.f32 0.0, %v1586
    %v1588 = vpop.f32.mrf.mxu0
    %v1589 = vadd.f32 0.0, %v1588
    %1590 = vmatprep.mubr.f32.mxu0 0.0
    %1591 = vmatmul.mubr.f32.gmra.mxu0 %v1239
    %v1592 = vpop.f32.mrf.mxu0
    %v1593 = vadd.f32 0.0, %v1592
    %v1594 = vpop.f32.mrf.mxu0
    %v1595 = vadd.f32 0.0, %v1594
    %1596 = vdwg.mxu0
    %v1597 = vmul.f32 %v1308, %v667
    %v1598 = vmul.f32 %v1310, %v669
    %v1599 = vmul.f32 %v1397, %v756
    %v1600 = vmul.f32 %v1399, %v758
    %v1601 = vmul.f32 %v1486, %v845
    %v1602 = vmul.f32 %v1488, %v847
    %v1603 = vmul.f32 %v1575, %v934
    %v1604 = vmul.f32 %v1577, %v936
    %v1605 = vmul.f32 %v1314, %v673
    %v1606 = vmul.f32 %v1316, %v675
    %v1607 = vmul.f32 %v1403, %v762
    %v1608 = vmul.f32 %v1405, %v764
    %v1609 = vmul.f32 %v1492, %v851
    %v1610 = vmul.f32 %v1494, %v853
    %v1611 = vmul.f32 %v1581, %v940
    %v1612 = vmul.f32 %v1583, %v942
    %v1613 = vmul.f32 %v1320, %v679
    %v1614 = vmul.f32 %v1322, %v681
    %v1615 = vmul.f32 %v1409, %v768
    %v1616 = vmul.f32 %v1411, %v770
    %v1617 = vmul.f32 %v1498, %v857
    %v1618 = vmul.f32 %v1500, %v859
    %v1619 = vmul.f32 %v1587, %v946
    %v1620 = vmul.f32 %v1589, %v948
    %v1621 = vmul.f32 %v1326, %v685
    %v1622 = vmul.f32 %v1328, %v687
    %v1623 = vmul.f32 %v1415, %v774
    %v1624 = vmul.f32 %v1417, %v776
    %v1625 = vmul.f32 %v1504, %v863
    %v1626 = vmul.f32 %v1506, %v865
    %v1627 = vmul.f32 %v1593, %v952
    %v1628 = vmul.f32 %v1595, %v954
    %1629 = vmatprep.subr.mxu0 0.0
    %1630 = vmatpush1.msra.mxu0 %v1003
    %1631 = vmatprep.subr.mxu0 0.0
    %1632 = vmatpush1.msra.mxu0 %v1002
    %1633 = vmatprep.subr.mxu0 0.0
    %1634 = vmatpush1.msra.mxu0 %v1001
    %1635 = vmatprep.subr.mxu0 0.0
    %1636 = vmatpush1.msra.mxu0 %v1000
    %1637 = vmatprep.subr.mxu0 0.0
    %1638 = vmatpush1.msra.mxu0 %v999
    %1639 = vmatprep.subr.mxu0 0.0
    %1640 = vmatpush1.msra.mxu0 %v998
    %1641 = vmatprep.subr.mxu0 0.0
    %1642 = vmatpush1.msra.mxu0 %v997
    %1643 = vmatprep.subr.mxu0 0.0
    %1644 = vmatpush1.msra.mxu0 %v996
    %1645 = vmatprep.subr.mxu0 0.0
    %1646 = vmatpush1.msra.mxu0 %v995
    %1647 = vmatprep.subr.mxu0 0.0
    %1648 = vmatpush1.msra.mxu0 %v994
    %1649 = vmatprep.subr.mxu0 0.0
    %1650 = vmatpush1.msra.mxu0 %v993
    %1651 = vmatprep.subr.mxu0 0.0
    %1652 = vmatpush1.msra.mxu0 %v992
    %1653 = vmatprep.subr.mxu0 0.0
    %1654 = vmatpush1.msra.mxu0 %v991
    %1655 = vmatprep.subr.mxu0 0.0
    %1656 = vmatpush1.msra.mxu0 %v990
    %1657 = vmatprep.subr.mxu0 0.0
    %1658 = vmatpush1.msra.mxu0 %v989
    %1659 = vmatprep.subr.mxu0 0.0
    %1660 = vmatpush1.msra.mxu0 %v988
    %1661 = vmatprep.subr.mxu0 0.0
    %1662 = vmatpush2.msra.mxu0 %v1019
    %1663 = vmatprep.subr.mxu0 0.0
    %1664 = vmatpush2.msra.mxu0 %v1018
    %1665 = vmatprep.subr.mxu0 0.0
    %1666 = vmatpush2.msra.mxu0 %v1017
    %1667 = vmatprep.subr.mxu0 0.0
    %1668 = vmatpush2.msra.mxu0 %v1016
    %1669 = vmatprep.subr.mxu0 0.0
    %1670 = vmatpush2.msra.mxu0 %v1015
    %1671 = vmatprep.subr.mxu0 0.0
    %1672 = vmatpush2.msra.mxu0 %v1014
    %1673 = vmatprep.subr.mxu0 0.0
    %1674 = vmatpush2.msra.mxu0 %v1013
    %1675 = vmatprep.subr.mxu0 0.0
    %1676 = vmatpush2.msra.mxu0 %v1012
    %1677 = vmatprep.subr.mxu0 0.0
    %1678 = vmatpush2.msra.mxu0 %v1011
    %1679 = vmatprep.subr.mxu0 0.0
    %1680 = vmatpush2.msra.mxu0 %v1010
    %1681 = vmatprep.subr.mxu0 0.0
    %1682 = vmatpush2.msra.mxu0 %v1009
    %1683 = vmatprep.subr.mxu0 0.0
    %1684 = vmatpush2.msra.mxu0 %v1008
    %1685 = vmatprep.subr.mxu0 0.0
    %1686 = vmatpush2.msra.mxu0 %v1007
    %1687 = vmatprep.subr.mxu0 0.0
    %1688 = vmatpush2.msra.mxu0 %v1006
    %1689 = vmatprep.subr.mxu0 0.0
    %1690 = vmatpush2.msra.mxu0 %v1005
    %1691 = vmatprep.subr.mxu0 0.0
    %1692 = vmatpush2.msra.mxu0 %v1004
    %1693 = vmatprep.mubr.f32.mxu0 %v1598
    %1694 = vmatmul.mubr.f32.gmra.mxu0 %v1597
    %v1695 = vpop.f32.mrf.mxu0
    %v1696 = vadd.f32 0.0, %v1695
    %v1697 = vpop.f32.mrf.mxu0
    %1698 = vmatprep.mubr.f32.mxu0 %v1606
    %1699 = vmatmul.mubr.f32.gmra.mxu0 %v1605
    %v1700 = vpop.f32.mrf.mxu0
    %v1701 = vadd.f32 0.0, %v1700
    %v1702 = vpop.f32.mrf.mxu0
    %1703 = vmatprep.mubr.f32.mxu0 %v1614
    %1704 = vmatmul.mubr.f32.gmra.mxu0 %v1613
    %v1705 = vpop.f32.mrf.mxu0
    %v1706 = vadd.f32 0.0, %v1705
    %v1707 = vpop.f32.mrf.mxu0
    %1708 = vmatprep.mubr.f32.mxu0 %v1622
    %1709 = vmatmul.mubr.f32.gmra.mxu0 %v1621
    %v1710 = vpop.f32.mrf.mxu0
    %v1711 = vadd.f32 0.0, %v1710
    %v1712 = vpop.f32.mrf.mxu0
    %1713 = vdwg.mxu0
    %1714 = vmatprep.subr.mxu0 0.0
    %1715 = vmatpush1.msra.mxu0 %v1035
    %1716 = vmatprep.subr.mxu0 0.0
    %1717 = vmatpush1.msra.mxu0 %v1034
    %1718 = vmatprep.subr.mxu0 0.0
    %1719 = vmatpush1.msra.mxu0 %v1033
    %1720 = vmatprep.subr.mxu0 0.0
    %1721 = vmatpush1.msra.mxu0 %v1032
    %1722 = vmatprep.subr.mxu0 0.0
    %1723 = vmatpush1.msra.mxu0 %v1031
    %1724 = vmatprep.subr.mxu0 0.0
    %1725 = vmatpush1.msra.mxu0 %v1030
    %1726 = vmatprep.subr.mxu0 0.0
    %1727 = vmatpush1.msra.mxu0 %v1029
    %1728 = vmatprep.subr.mxu0 0.0
    %1729 = vmatpush1.msra.mxu0 %v1028
    %1730 = vmatprep.subr.mxu0 0.0
    %1731 = vmatpush1.msra.mxu0 %v1027
    %1732 = vmatprep.subr.mxu0 0.0
    %1733 = vmatpush1.msra.mxu0 %v1026
    %1734 = vmatprep.subr.mxu0 0.0
    %1735 = vmatpush1.msra.mxu0 %v1025
    %1736 = vmatprep.subr.mxu0 0.0
    %1737 = vmatpush1.msra.mxu0 %v1024
    %1738 = vmatprep.subr.mxu0 0.0
    %1739 = vmatpush1.msra.mxu0 %v1023
    %1740 = vmatprep.subr.mxu0 0.0
    %1741 = vmatpush1.msra.mxu0 %v1022
    %1742 = vmatprep.subr.mxu0 0.0
    %1743 = vmatpush1.msra.mxu0 %v1021
    %1744 = vmatprep.subr.mxu0 0.0
    %1745 = vmatpush1.msra.mxu0 %v1020
    %1746 = vmatprep.subr.mxu0 0.0
    %1747 = vmatpush2.msra.mxu0 %v1051
    %1748 = vmatprep.subr.mxu0 0.0
    %1749 = vmatpush2.msra.mxu0 %v1050
    %1750 = vmatprep.subr.mxu0 0.0
    %1751 = vmatpush2.msra.mxu0 %v1049
    %1752 = vmatprep.subr.mxu0 0.0
    %1753 = vmatpush2.msra.mxu0 %v1048
    %1754 = vmatprep.subr.mxu0 0.0
    %1755 = vmatpush2.msra.mxu0 %v1047
    %1756 = vmatprep.subr.mxu0 0.0
    %1757 = vmatpush2.msra.mxu0 %v1046
    %1758 = vmatprep.subr.mxu0 0.0
    %1759 = vmatpush2.msra.mxu0 %v1045
    %1760 = vmatprep.subr.mxu0 0.0
    %1761 = vmatpush2.msra.mxu0 %v1044
    %1762 = vmatprep.subr.mxu0 0.0
    %1763 = vmatpush2.msra.mxu0 %v1043
    %1764 = vmatprep.subr.mxu0 0.0
    %1765 = vmatpush2.msra.mxu0 %v1042
    %1766 = vmatprep.subr.mxu0 0.0
    %1767 = vmatpush2.msra.mxu0 %v1041
    %1768 = vmatprep.subr.mxu0 0.0
    %1769 = vmatpush2.msra.mxu0 %v1040
    %1770 = vmatprep.subr.mxu0 0.0
    %1771 = vmatpush2.msra.mxu0 %v1039
    %1772 = vmatprep.subr.mxu0 0.0
    %1773 = vmatpush2.msra.mxu0 %v1038
    %1774 = vmatprep.subr.mxu0 0.0
    %1775 = vmatpush2.msra.mxu0 %v1037
    %1776 = vmatprep.subr.mxu0 0.0
    %1777 = vmatpush2.msra.mxu0 %v1036
    %1778 = vmatprep.mubr.f32.mxu0 %v1600
    %1779 = vmatmul.mubr.f32.gmra.mxu0 %v1599
    %v1780 = vpop.f32.mrf.mxu0
    %v1781 = vadd.f32 %v1696, %v1780
    %v1782 = vpop.f32.mrf.mxu0
    %1783 = vmatprep.mubr.f32.mxu0 %v1608
    %1784 = vmatmul.mubr.f32.gmra.mxu0 %v1607
    %v1785 = vpop.f32.mrf.mxu0
    %v1786 = vadd.f32 %v1701, %v1785
    %v1787 = vpop.f32.mrf.mxu0
    %1788 = vmatprep.mubr.f32.mxu0 %v1616
    %1789 = vmatmul.mubr.f32.gmra.mxu0 %v1615
    %v1790 = vpop.f32.mrf.mxu0
    %v1791 = vadd.f32 %v1706, %v1790
    %v1792 = vpop.f32.mrf.mxu0
    %1793 = vmatprep.mubr.f32.mxu0 %v1624
    %1794 = vmatmul.mubr.f32.gmra.mxu0 %v1623
    %v1795 = vpop.f32.mrf.mxu0
    %v1796 = vadd.f32 %v1711, %v1795
    %v1797 = vpop.f32.mrf.mxu0
    %1798 = vdwg.mxu0
    %1799 = vmatprep.subr.mxu0 0.0
    %1800 = vmatpush1.msra.mxu0 %v1067
    %1801 = vmatprep.subr.mxu0 0.0
    %1802 = vmatpush1.msra.mxu0 %v1066
    %1803 = vmatprep.subr.mxu0 0.0
    %1804 = vmatpush1.msra.mxu0 %v1065
    %1805 = vmatprep.subr.mxu0 0.0
    %1806 = vmatpush1.msra.mxu0 %v1064
    %1807 = vmatprep.subr.mxu0 0.0
    %1808 = vmatpush1.msra.mxu0 %v1063
    %1809 = vmatprep.subr.mxu0 0.0
    %1810 = vmatpush1.msra.mxu0 %v1062
    %1811 = vmatprep.subr.mxu0 0.0
    %1812 = vmatpush1.msra.mxu0 %v1061
    %1813 = vmatprep.subr.mxu0 0.0
    %1814 = vmatpush1.msra.mxu0 %v1060
    %1815 = vmatprep.subr.mxu0 0.0
    %1816 = vmatpush1.msra.mxu0 %v1059
    %1817 = vmatprep.subr.mxu0 0.0
    %1818 = vmatpush1.msra.mxu0 %v1058
    %1819 = vmatprep.subr.mxu0 0.0
    %1820 = vmatpush1.msra.mxu0 %v1057
    %1821 = vmatprep.subr.mxu0 0.0
    %1822 = vmatpush1.msra.mxu0 %v1056
    %1823 = vmatprep.subr.mxu0 0.0
    %1824 = vmatpush1.msra.mxu0 %v1055
    %1825 = vmatprep.subr.mxu0 0.0
    %1826 = vmatpush1.msra.mxu0 %v1054
    %1827 = vmatprep.subr.mxu0 0.0
    %1828 = vmatpush1.msra.mxu0 %v1053
    %1829 = vmatprep.subr.mxu0 0.0
    %1830 = vmatpush1.msra.mxu0 %v1052
    %1831 = vmatprep.subr.mxu0 0.0
    %1832 = vmatpush2.msra.mxu0 %v1083
    %1833 = vmatprep.subr.mxu0 0.0
    %1834 = vmatpush2.msra.mxu0 %v1082
    %1835 = vmatprep.subr.mxu0 0.0
    %1836 = vmatpush2.msra.mxu0 %v1081
    %1837 = vmatprep.subr.mxu0 0.0
    %1838 = vmatpush2.msra.mxu0 %v1080
    %1839 = vmatprep.subr.mxu0 0.0
    %1840 = vmatpush2.msra.mxu0 %v1079
    %1841 = vmatprep.subr.mxu0 0.0
    %1842 = vmatpush2.msra.mxu0 %v1078
    %1843 = vmatprep.subr.mxu0 0.0
    %1844 = vmatpush2.msra.mxu0 %v1077
    %1845 = vmatprep.subr.mxu0 0.0
    %1846 = vmatpush2.msra.mxu0 %v1076
    %1847 = vmatprep.subr.mxu0 0.0
    %1848 = vmatpush2.msra.mxu0 %v1075
    %1849 = vmatprep.subr.mxu0 0.0
    %1850 = vmatpush2.msra.mxu0 %v1074
    %1851 = vmatprep.subr.mxu0 0.0
    %1852 = vmatpush2.msra.mxu0 %v1073
    %1853 = vmatprep.subr.mxu0 0.0
    %1854 = vmatpush2.msra.mxu0 %v1072
    %1855 = vmatprep.subr.mxu0 0.0
    %1856 = vmatpush2.msra.mxu0 %v1071
    %1857 = vmatprep.subr.mxu0 0.0
    %1858 = vmatpush2.msra.mxu0 %v1070
    %1859 = vmatprep.subr.mxu0 0.0
    %1860 = vmatpush2.msra.mxu0 %v1069
    %1861 = vmatprep.subr.mxu0 0.0
    %1862 = vmatpush2.msra.mxu0 %v1068
    %1863 = vmatprep.mubr.f32.mxu0 %v1602
    %1864 = vmatmul.mubr.f32.gmra.mxu0 %v1601
    %v1865 = vpop.f32.mrf.mxu0
    %v1866 = vadd.f32 %v1781, %v1865
    %v1867 = vpop.f32.mrf.mxu0
    %1868 = vmatprep.mubr.f32.mxu0 %v1610
    %1869 = vmatmul.mubr.f32.gmra.mxu0 %v1609
    %v1870 = vpop.f32.mrf.mxu0
    %v1871 = vadd.f32 %v1786, %v1870
    %v1872 = vpop.f32.mrf.mxu0
    %1873 = vmatprep.mubr.f32.mxu0 %v1618
    %1874 = vmatmul.mubr.f32.gmra.mxu0 %v1617
    %v1875 = vpop.f32.mrf.mxu0
    %v1876 = vadd.f32 %v1791, %v1875
    %v1877 = vpop.f32.mrf.mxu0
    %1878 = vmatprep.mubr.f32.mxu0 %v1626
    %1879 = vmatmul.mubr.f32.gmra.mxu0 %v1625
    %v1880 = vpop.f32.mrf.mxu0
    %v1881 = vadd.f32 %v1796, %v1880
    %v1882 = vpop.f32.mrf.mxu0
    %1883 = vdwg.mxu0
    %1884 = vmatprep.subr.mxu0 0.0
    %1885 = vmatpush1.msra.mxu0 %v1099
    %1886 = vmatprep.subr.mxu0 0.0
    %1887 = vmatpush1.msra.mxu0 %v1098
    %1888 = vmatprep.subr.mxu0 0.0
    %1889 = vmatpush1.msra.mxu0 %v1097
    %1890 = vmatprep.subr.mxu0 0.0
    %1891 = vmatpush1.msra.mxu0 %v1096
    %1892 = vmatprep.subr.mxu0 0.0
    %1893 = vmatpush1.msra.mxu0 %v1095
    %1894 = vmatprep.subr.mxu0 0.0
    %1895 = vmatpush1.msra.mxu0 %v1094
    %1896 = vmatprep.subr.mxu0 0.0
    %1897 = vmatpush1.msra.mxu0 %v1093
    %1898 = vmatprep.subr.mxu0 0.0
    %1899 = vmatpush1.msra.mxu0 %v1092
    %1900 = vmatprep.subr.mxu0 0.0
    %1901 = vmatpush1.msra.mxu0 %v1091
    %1902 = vmatprep.subr.mxu0 0.0
    %1903 = vmatpush1.msra.mxu0 %v1090
    %1904 = vmatprep.subr.mxu0 0.0
    %1905 = vmatpush1.msra.mxu0 %v1089
    %1906 = vmatprep.subr.mxu0 0.0
    %1907 = vmatpush1.msra.mxu0 %v1088
    %1908 = vmatprep.subr.mxu0 0.0
    %1909 = vmatpush1.msra.mxu0 %v1087
    %1910 = vmatprep.subr.mxu0 0.0
    %1911 = vmatpush1.msra.mxu0 %v1086
    %1912 = vmatprep.subr.mxu0 0.0
    %1913 = vmatpush1.msra.mxu0 %v1085
    %1914 = vmatprep.subr.mxu0 0.0
    %1915 = vmatpush1.msra.mxu0 %v1084
    %1916 = vmatprep.subr.mxu0 0.0
    %1917 = vmatpush2.msra.mxu0 %v1115
    %1918 = vmatprep.subr.mxu0 0.0
    %1919 = vmatpush2.msra.mxu0 %v1114
    %1920 = vmatprep.subr.mxu0 0.0
    %1921 = vmatpush2.msra.mxu0 %v1113
    %1922 = vmatprep.subr.mxu0 0.0
    %1923 = vmatpush2.msra.mxu0 %v1112
    %1924 = vmatprep.subr.mxu0 0.0
    %1925 = vmatpush2.msra.mxu0 %v1111
    %1926 = vmatprep.subr.mxu0 0.0
    %1927 = vmatpush2.msra.mxu0 %v1110
    %1928 = vmatprep.subr.mxu0 0.0
    %1929 = vmatpush2.msra.mxu0 %v1109
    %1930 = vmatprep.subr.mxu0 0.0
    %1931 = vmatpush2.msra.mxu0 %v1108
    %1932 = vmatprep.subr.mxu0 0.0
    %1933 = vmatpush2.msra.mxu0 %v1107
    %1934 = vmatprep.subr.mxu0 0.0
    %1935 = vmatpush2.msra.mxu0 %v1106
    %1936 = vmatprep.subr.mxu0 0.0
    %1937 = vmatpush2.msra.mxu0 %v1105
    %1938 = vmatprep.subr.mxu0 0.0
    %1939 = vmatpush2.msra.mxu0 %v1104
    %1940 = vmatprep.subr.mxu0 0.0
    %1941 = vmatpush2.msra.mxu0 %v1103
    %1942 = vmatprep.subr.mxu0 0.0
    %1943 = vmatpush2.msra.mxu0 %v1102
    %1944 = vmatprep.subr.mxu0 0.0
    %1945 = vmatpush2.msra.mxu0 %v1101
    %1946 = vmatprep.subr.mxu0 0.0
    %1947 = vmatpush2.msra.mxu0 %v1100
    %1948 = vmatprep.mubr.f32.mxu0 %v1604
    %1949 = vmatmul.mubr.f32.gmra.mxu0 %v1603
    %v1950 = vpop.f32.mrf.mxu0
    %v1951 = vadd.f32 %v1866, %v1950
    %v1952 = vpop.f32.mrf.mxu0
    %1953 = vmatprep.mubr.f32.mxu0 %v1612
    %1954 = vmatmul.mubr.f32.gmra.mxu0 %v1611
    %v1955 = vpop.f32.mrf.mxu0
    %v1956 = vadd.f32 %v1871, %v1955
    %v1957 = vpop.f32.mrf.mxu0
    %1958 = vmatprep.mubr.f32.mxu0 %v1620
    %1959 = vmatmul.mubr.f32.gmra.mxu0 %v1619
    %v1960 = vpop.f32.mrf.mxu0
    %v1961 = vadd.f32 %v1876, %v1960
    %v1962 = vpop.f32.mrf.mxu0
    %1963 = vmatprep.mubr.f32.mxu0 %v1628
    %1964 = vmatmul.mubr.f32.gmra.mxu0 %v1627
    %v1965 = vpop.f32.mrf.mxu0
    %v1966 = vadd.f32 %v1881, %v1965
    %v1967 = vpop.f32.mrf.mxu0
    %1968 = vdwg.mxu0
    %v1970 = vsel %vm1228, %v334, 0
    %v1973 = vsel %vm1228, %v335, 0
    %1975 = vmatprep.subr.mxu0 0.0
    %1976 = vmatpush1.msra.mxu0 0.0
    %1977 = vmatprep.subr.mxu0 0.0
    %1978 = vmatpush1.msra.mxu0 0.0
    %1979 = vmatprep.subr.mxu0 0.0
    %1980 = vmatpush1.msra.mxu0 0.0
    %1981 = vmatprep.subr.mxu0 0.0
    %1982 = vmatpush1.msra.mxu0 0.0
    %1983 = vmatprep.subr.mxu0 0.0
    %1984 = vmatpush1.msra.mxu0 0.0
    %1985 = vmatprep.subr.mxu0 0.0
    %1986 = vmatpush1.msra.mxu0 0.0
    %1987 = vmatprep.subr.mxu0 0.0
    %1988 = vmatpush1.msra.mxu0 0.0
    %1989 = vmatprep.subr.mxu0 0.0
    %1990 = vmatpush1.msra.mxu0 0.0
    %1991 = vmatprep.subr.mxu0 0.0
    %1992 = vmatpush1.msra.mxu0 0.0
    %1993 = vmatprep.subr.mxu0 0.0
    %1994 = vmatpush1.msra.mxu0 0.0
    %1995 = vmatprep.subr.mxu0 0.0
    %1996 = vmatpush1.msra.mxu0 0.0
    %1997 = vmatprep.subr.mxu0 0.0
    %1998 = vmatpush1.msra.mxu0 0.0
    %1999 = vmatprep.subr.mxu0 0.0
    %2000 = vmatpush1.msra.mxu0 %v1119
    %2001 = vmatprep.subr.mxu0 0.0
    %2002 = vmatpush1.msra.mxu0 %v1118
    %2003 = vmatprep.subr.mxu0 0.0
    %2004 = vmatpush1.msra.mxu0 %v1117
    %2005 = vmatprep.subr.mxu0 0.0
    %2006 = vmatpush1.msra.mxu0 %v1116
    %2007 = vmatprep.subr.mxu0 0.0
    %2008 = vmatpush2.msra.mxu0 0.0
    %2009 = vmatprep.subr.mxu0 0.0
    %2010 = vmatpush2.msra.mxu0 0.0
    %2011 = vmatprep.subr.mxu0 0.0
    %2012 = vmatpush2.msra.mxu0 0.0
    %2013 = vmatprep.subr.mxu0 0.0
    %2014 = vmatpush2.msra.mxu0 0.0
    %2015 = vmatprep.subr.mxu0 0.0
    %2016 = vmatpush2.msra.mxu0 0.0
    %2017 = vmatprep.subr.mxu0 0.0
    %2018 = vmatpush2.msra.mxu0 0.0
    %2019 = vmatprep.subr.mxu0 0.0
    %2020 = vmatpush2.msra.mxu0 0.0
    %2021 = vmatprep.subr.mxu0 0.0
    %2022 = vmatpush2.msra.mxu0 0.0
    %2023 = vmatprep.subr.mxu0 0.0
    %2024 = vmatpush2.msra.mxu0 0.0
    %2025 = vmatprep.subr.mxu0 0.0
    %2026 = vmatpush2.msra.mxu0 0.0
    %2027 = vmatprep.subr.mxu0 0.0
    %2028 = vmatpush2.msra.mxu0 0.0
    %2029 = vmatprep.subr.mxu0 0.0
    %2030 = vmatpush2.msra.mxu0 0.0
    %2031 = vmatprep.subr.mxu0 0.0
    %2032 = vmatpush2.msra.mxu0 0.0
    %2033 = vmatprep.subr.mxu0 0.0
    %2034 = vmatpush2.msra.mxu0 0.0
    %2035 = vmatprep.subr.mxu0 0.0
    %2036 = vmatpush2.msra.mxu0 0.0
    %2037 = vmatprep.subr.mxu0 0.0
    %2038 = vmatpush2.msra.mxu0 0.0
    %2039 = vmatprep.mubr.f32.mxu0 0.0
    %2040 = vmatmul.mubr.f32.gmra.mxu0 %v1970
    %v2041 = vpop.f32.mrf.mxu0
    %v2042 = vadd.f32 0.0, %v2041
    %v2043 = vpop.f32.mrf.mxu0
    %2044 = vmatprep.mubr.f32.mxu0 0.0
    %2045 = vmatmul.mubr.f32.gmra.mxu0 %v1973
    %v2046 = vpop.f32.mrf.mxu0
    %v2047 = vadd.f32 0.0, %v2046
    %v2048 = vpop.f32.mrf.mxu0
    %2049 = vdwg.mxu0
    %v2051 = vsel %vm1228, %v378, 0
    %v2054 = vsel %vm1228, %v379, 0
    %2056 = vmatprep.subr.mxu0 0.0
    %2057 = vmatpush1.msra.mxu0 0.0
    %2058 = vmatprep.subr.mxu0 0.0
    %2059 = vmatpush1.msra.mxu0 0.0
    %2060 = vmatprep.subr.mxu0 0.0
    %2061 = vmatpush1.msra.mxu0 0.0
    %2062 = vmatprep.subr.mxu0 0.0
    %2063 = vmatpush1.msra.mxu0 0.0
    %2064 = vmatprep.subr.mxu0 0.0
    %2065 = vmatpush1.msra.mxu0 0.0
    %2066 = vmatprep.subr.mxu0 0.0
    %2067 = vmatpush1.msra.mxu0 0.0
    %2068 = vmatprep.subr.mxu0 0.0
    %2069 = vmatpush1.msra.mxu0 0.0
    %2070 = vmatprep.subr.mxu0 0.0
    %2071 = vmatpush1.msra.mxu0 0.0
    %2072 = vmatprep.subr.mxu0 0.0
    %2073 = vmatpush1.msra.mxu0 0.0
    %2074 = vmatprep.subr.mxu0 0.0
    %2075 = vmatpush1.msra.mxu0 0.0
    %2076 = vmatprep.subr.mxu0 0.0
    %2077 = vmatpush1.msra.mxu0 0.0
    %2078 = vmatprep.subr.mxu0 0.0
    %2079 = vmatpush1.msra.mxu0 0.0
    %2080 = vmatprep.subr.mxu0 0.0
    %2081 = vmatpush1.msra.mxu0 %v1966
    %2082 = vmatprep.subr.mxu0 0.0
    %2083 = vmatpush1.msra.mxu0 %v1961
    %2084 = vmatprep.subr.mxu0 0.0
    %2085 = vmatpush1.msra.mxu0 %v1956
    %2086 = vmatprep.subr.mxu0 0.0
    %2087 = vmatpush1.msra.mxu0 %v1951
    %2088 = vmatprep.subr.mxu0 0.0
    %2089 = vmatpush2.msra.mxu0 0.0
    %2090 = vmatprep.subr.mxu0 0.0
    %2091 = vmatpush2.msra.mxu0 0.0
    %2092 = vmatprep.subr.mxu0 0.0
    %2093 = vmatpush2.msra.mxu0 0.0
    %2094 = vmatprep.subr.mxu0 0.0
    %2095 = vmatpush2.msra.mxu0 0.0
    %2096 = vmatprep.subr.mxu0 0.0
    %2097 = vmatpush2.msra.mxu0 0.0
    %2098 = vmatprep.subr.mxu0 0.0
    %2099 = vmatpush2.msra.mxu0 0.0
    %2100 = vmatprep.subr.mxu0 0.0
    %2101 = vmatpush2.msra.mxu0 0.0
    %2102 = vmatprep.subr.mxu0 0.0
    %2103 = vmatpush2.msra.mxu0 0.0
    %2104 = vmatprep.subr.mxu0 0.0
    %2105 = vmatpush2.msra.mxu0 0.0
    %2106 = vmatprep.subr.mxu0 0.0
    %2107 = vmatpush2.msra.mxu0 0.0
    %2108 = vmatprep.subr.mxu0 0.0
    %2109 = vmatpush2.msra.mxu0 0.0
    %2110 = vmatprep.subr.mxu0 0.0
    %2111 = vmatpush2.msra.mxu0 0.0
    %2112 = vmatprep.subr.mxu0 0.0
    %2113 = vmatpush2.msra.mxu0 0.0
    %2114 = vmatprep.subr.mxu0 0.0
    %2115 = vmatpush2.msra.mxu0 0.0
    %2116 = vmatprep.subr.mxu0 0.0
    %2117 = vmatpush2.msra.mxu0 0.0
    %2118 = vmatprep.subr.mxu0 0.0
    %2119 = vmatpush2.msra.mxu0 0.0
    %2120 = vmatprep.mubr.f32.mxu0 0.0
    %2121 = vmatmul.mubr.f32.gmra.mxu0 %v2051
    %v2122 = vpop.f32.mrf.mxu0
    %v2123 = vadd.f32 %v2042, %v2122
    %v2124 = vpop.f32.mrf.mxu0
    %2125 = vmatprep.mubr.f32.mxu0 0.0
    %2126 = vmatmul.mubr.f32.gmra.mxu0 %v2054
    %v2127 = vpop.f32.mrf.mxu0
    %v2128 = vadd.f32 %v2047, %v2127
    %v2129 = vpop.f32.mrf.mxu0
    %2130 = vdwg.mxu0
    %v2132 = vlaneseq
    %v2133 = vshrl.u32 %v2132, 7
    %v2134 = vsub.s32 0, %v2133
    %v2135 = vrot.slane %v1120, %v2134
    %v2137 = vadd.f32 %v2123, %v2135
    %v2138 = vadd.f32 %v2128, %v2135
    %v2139 = vmax.f32 %v2137, 0.0
    %v2140 = vmax.f32 %v2138, 0.0
    %v2142 = vlaneseq
    %v2143 = vshrl.u32 %v2142, 7
    %v2144 = vsub.s32 0, %v2143
    %v2145 = vrot.slane %v1129, %v2144
    %v2148 = vsel %vm1228, %v2139, 0
    %v2151 = vsel %vm1228, %v2140, 0
    %2153 = vmatprep.subr.mxu0 0.0
    %2154 = vmatpush1.msra.mxu0 0.0
    %2155 = vmatprep.subr.mxu0 0.0
    %2156 = vmatpush1.msra.mxu0 0.0
    %2157 = vmatprep.subr.mxu0 0.0
    %2158 = vmatpush1.msra.mxu0 0.0
    %2159 = vmatprep.subr.mxu0 0.0
    %2160 = vmatpush1.msra.mxu0 0.0
    %2161 = vmatprep.subr.mxu0 0.0
    %2162 = vmatpush1.msra.mxu0 0.0
    %2163 = vmatprep.subr.mxu0 0.0
    %2164 = vmatpush1.msra.mxu0 0.0
    %2165 = vmatprep.subr.mxu0 0.0
    %2166 = vmatpush1.msra.mxu0 0.0
    %2167 = vmatprep.subr.mxu0 0.0
    %2168 = vmatpush1.msra.mxu0 0.0
    %2169 = vmatprep.subr.mxu0 0.0
    %2170 = vmatpush1.msra.mxu0 0.0
    %2171 = vmatprep.subr.mxu0 0.0
    %2172 = vmatpush1.msra.mxu0 0.0
    %2173 = vmatprep.subr.mxu0 0.0
    %2174 = vmatpush1.msra.mxu0 0.0
    %2175 = vmatprep.subr.mxu0 0.0
    %2176 = vmatpush1.msra.mxu0 0.0
    %2177 = vmatprep.subr.mxu0 0.0
    %2178 = vmatpush1.msra.mxu0 %v1124
    %2179 = vmatprep.subr.mxu0 0.0
    %2180 = vmatpush1.msra.mxu0 %v1123
    %2181 = vmatprep.subr.mxu0 0.0
    %2182 = vmatpush1.msra.mxu0 %v1122
    %2183 = vmatprep.subr.mxu0 0.0
    %2184 = vmatpush1.msra.mxu0 %v1121
    %2185 = vmatprep.subr.mxu0 0.0
    %2186 = vmatpush2.msra.mxu0 0.0
    %2187 = vmatprep.subr.mxu0 0.0
    %2188 = vmatpush2.msra.mxu0 0.0
    %2189 = vmatprep.subr.mxu0 0.0
    %2190 = vmatpush2.msra.mxu0 0.0
    %2191 = vmatprep.subr.mxu0 0.0
    %2192 = vmatpush2.msra.mxu0 0.0
    %2193 = vmatprep.subr.mxu0 0.0
    %2194 = vmatpush2.msra.mxu0 0.0
    %2195 = vmatprep.subr.mxu0 0.0
    %2196 = vmatpush2.msra.mxu0 0.0
    %2197 = vmatprep.subr.mxu0 0.0
    %2198 = vmatpush2.msra.mxu0 0.0
    %2199 = vmatprep.subr.mxu0 0.0
    %2200 = vmatpush2.msra.mxu0 0.0
    %2201 = vmatprep.subr.mxu0 0.0
    %2202 = vmatpush2.msra.mxu0 0.0
    %2203 = vmatprep.subr.mxu0 0.0
    %2204 = vmatpush2.msra.mxu0 0.0
    %2205 = vmatprep.subr.mxu0 0.0
    %2206 = vmatpush2.msra.mxu0 0.0
    %2207 = vmatprep.subr.mxu0 0.0
    %2208 = vmatpush2.msra.mxu0 0.0
    %2209 = vmatprep.subr.mxu0 0.0
    %2210 = vmatpush2.msra.mxu0 0.0
    %2211 = vmatprep.subr.mxu0 0.0
    %2212 = vmatpush2.msra.mxu0 0.0
    %2213 = vmatprep.subr.mxu0 0.0
    %2214 = vmatpush2.msra.mxu0 0.0
    %2215 = vmatprep.subr.mxu0 0.0
    %2216 = vmatpush2.msra.mxu0 0.0
    %2217 = vmatprep.mubr.f32.mxu0 0.0
    %2218 = vmatmul.mubr.f32.gmra.mxu0 %v2148
    %v2219 = vpop.f32.mrf.mxu0
    %v2220 = vadd.f32 %v2145, %v2219
    %v2221 = vpop.f32.mrf.mxu0
    %2222 = vmatprep.mubr.f32.mxu0 0.0
    %2223 = vmatmul.mubr.f32.gmra.mxu0 %v2151
    %v2224 = vpop.f32.mrf.mxu0
    %v2225 = vadd.f32 %v2145, %v2224
    %v2226 = vpop.f32.mrf.mxu0
    %2227 = vdwg.mxu0
    %v2229 = vlaneseq
    %v2230 = vshrl.u32 %v2229, 7
    %v2231 = vsub.s32 0, %v2230
    %v2232 = vrot.slane %v1130, %v2231
    %2234 = vmatprep.subr.mxu0 0.0
    %2235 = vmatpush1.msra.mxu0 0.0
    %2236 = vmatprep.subr.mxu0 0.0
    %2237 = vmatpush1.msra.mxu0 0.0
    %2238 = vmatprep.subr.mxu0 0.0
    %2239 = vmatpush1.msra.mxu0 0.0
    %2240 = vmatprep.subr.mxu0 0.0
    %2241 = vmatpush1.msra.mxu0 0.0
    %2242 = vmatprep.subr.mxu0 0.0
    %2243 = vmatpush1.msra.mxu0 0.0
    %2244 = vmatprep.subr.mxu0 0.0
    %2245 = vmatpush1.msra.mxu0 0.0
    %2246 = vmatprep.subr.mxu0 0.0
    %2247 = vmatpush1.msra.mxu0 0.0
    %2248 = vmatprep.subr.mxu0 0.0
    %2249 = vmatpush1.msra.mxu0 0.0
    %2250 = vmatprep.subr.mxu0 0.0
    %2251 = vmatpush1.msra.mxu0 0.0
    %2252 = vmatprep.subr.mxu0 0.0
    %2253 = vmatpush1.msra.mxu0 0.0
    %2254 = vmatprep.subr.mxu0 0.0
    %2255 = vmatpush1.msra.mxu0 0.0
    %2256 = vmatprep.subr.mxu0 0.0
    %2257 = vmatpush1.msra.mxu0 0.0
    %2258 = vmatprep.subr.mxu0 0.0
    %2259 = vmatpush1.msra.mxu0 %v1128
    %2260 = vmatprep.subr.mxu0 0.0
    %2261 = vmatpush1.msra.mxu0 %v1127
    %2262 = vmatprep.subr.mxu0 0.0
    %2263 = vmatpush1.msra.mxu0 %v1126
    %2264 = vmatprep.subr.mxu0 0.0
    %2265 = vmatpush1.msra.mxu0 %v1125
    %2266 = vmatprep.subr.mxu0 0.0
    %2267 = vmatpush2.msra.mxu0 0.0
    %2268 = vmatprep.subr.mxu0 0.0
    %2269 = vmatpush2.msra.mxu0 0.0
    %2270 = vmatprep.subr.mxu0 0.0
    %2271 = vmatpush2.msra.mxu0 0.0
    %2272 = vmatprep.subr.mxu0 0.0
    %2273 = vmatpush2.msra.mxu0 0.0
    %2274 = vmatprep.subr.mxu0 0.0
    %2275 = vmatpush2.msra.mxu0 0.0
    %2276 = vmatprep.subr.mxu0 0.0
    %2277 = vmatpush2.msra.mxu0 0.0
    %2278 = vmatprep.subr.mxu0 0.0
    %2279 = vmatpush2.msra.mxu0 0.0
    %2280 = vmatprep.subr.mxu0 0.0
    %2281 = vmatpush2.msra.mxu0 0.0
    %2282 = vmatprep.subr.mxu0 0.0
    %2283 = vmatpush2.msra.mxu0 0.0
    %2284 = vmatprep.subr.mxu0 0.0
    %2285 = vmatpush2.msra.mxu0 0.0
    %2286 = vmatprep.subr.mxu0 0.0
    %2287 = vmatpush2.msra.mxu0 0.0
    %2288 = vmatprep.subr.mxu0 0.0
    %2289 = vmatpush2.msra.mxu0 0.0
    %2290 = vmatprep.subr.mxu0 0.0
    %2291 = vmatpush2.msra.mxu0 0.0
    %2292 = vmatprep.subr.mxu0 0.0
    %2293 = vmatpush2.msra.mxu0 0.0
    %2294 = vmatprep.subr.mxu0 0.0
    %2295 = vmatpush2.msra.mxu0 0.0
    %2296 = vmatprep.subr.mxu0 0.0
    %2297 = vmatpush2.msra.mxu0 0.0
    %2298 = vmatprep.mubr.f32.mxu0 0.0
    %2299 = vmatmul.mubr.f32.gmra.mxu0 %v1970
    %v2300 = vpop.f32.mrf.mxu0
    %v2301 = vadd.f32 %v2232, %v2300
    %v2302 = vpop.f32.mrf.mxu0
    %2303 = vmatprep.mubr.f32.mxu0 0.0
    %2304 = vmatmul.mubr.f32.gmra.mxu0 %v1973
    %v2305 = vpop.f32.mrf.mxu0
    %v2306 = vadd.f32 %v2232, %v2305
    %v2307 = vpop.f32.mrf.mxu0
    %2308 = vdwg.mxu0
    %v2309 = vadd.f32 %v2220, %v2301
    %v2310 = vadd.f32 %v2225, %v2306
    %v2311 = vxor.u32 %v2309, 2147483648
    %v2312 = vxor.u32 %v2310, 2147483648
    %v2313 = vmul.f32 %v2311, 1.442695
    %v2314 = vpow.pop %v2313
    %v2315 = vmul.f32 %v2312, 1.442695
    %v2316 = vpow.pop %v2315
    %v2317 = vadd.f32 %v2314, 1.0
    %v2318 = vadd.f32 %v2316, 1.0
    %v2319 = vrcp.pop %v2317
    %v2320 = vmul.f32 1.0, %v2319
    %v2321 = vrcp.pop %v2318
    %v2322 = vmul.f32 1.0, %v2321
    %2325 = vrot.lane.b32.xlu0 %v2301, 64
    %v2326 = vpop.permute.xlu0 %2325
    %2327 = vrot.lane.b32.xlu0 %v2306, 64
    %v2328 = vpop.permute.xlu0 %2327
    %v2331 = vmul.f32 %v2320, %v2326
    %v2332 = vmul.f32 %v2322, %v2328
    %2335 = vrot.lane.b32.xlu0 %v2331, 64
    %v2336 = vpop.permute.xlu0 %2335
    %2337 = vrot.lane.b32.xlu0 %v2332, 64
    %v2338 = vpop.permute.xlu0 %2337
    %v2341 = vadd.f32 %v2220, %v2336
    %v2342 = vadd.f32 %v2225, %v2338
    %v2343 = vtanh.pop %v2341
    %v2344 = vtanh.pop %v2342
    %v2345 = vsub.f32 1.0, %v2320
    %v2346 = vsub.f32 1.0, %v2322
    %2349 = vrot.lane.b32.xlu0 %v2343, 96
    %v2350 = vpop.permute.xlu0 %2349
    %2351 = vrot.lane.b32.xlu0 %v2344, 96
    %v2352 = vpop.permute.xlu0 %2351
    %v2355 = vmul.f32 %v2345, %v2350
    %v2356 = vmul.f32 %v2346, %v2352
    %2357 = vrot.lane.b32.xlu0 %v334, 32
    %v2358 = vpop.permute.xlu0 %2357
    %2359 = vrot.lane.b32.xlu0 %v335, 32
    %v2360 = vpop.permute.xlu0 %2359
    %v2363 = vmul.f32 %v2320, %v2358
    %v2364 = vmul.f32 %v2322, %v2360
    %v2365 = vadd.f32 %v2355, %v2363
    %v2366 = vadd.f32 %v2356, %v2364
    %2369 = vrot.lane.b32.xlu0 %v2365, 96
    %v2370 = vpop.permute.xlu0 %2369
    %2371 = vrot.lane.b32.xlu0 %v2366, 96
    %v2372 = vpop.permute.xlu0 %2371
    %2375 = vmatprep.subr.mxu0 0.0
    %2376 = vmatpush1.msra.mxu0 0.0
    %2377 = vmatprep.subr.mxu0 0.0
    %2378 = vmatpush1.msra.mxu0 0.0
    %2379 = vmatprep.subr.mxu0 0.0
    %2380 = vmatpush1.msra.mxu0 0.0
    %2381 = vmatprep.subr.mxu0 0.0
    %2382 = vmatpush1.msra.mxu0 0.0
    %2383 = vmatprep.subr.mxu0 0.0
    %2384 = vmatpush1.msra.mxu0 0.0
    %2385 = vmatprep.subr.mxu0 0.0
    %2386 = vmatpush1.msra.mxu0 0.0
    %2387 = vmatprep.subr.mxu0 0.0
    %2388 = vmatpush1.msra.mxu0 0.0
    %2389 = vmatprep.subr.mxu0 0.0
    %2390 = vmatpush1.msra.mxu0 0.0
    %2391 = vmatprep.subr.mxu0 0.0
    %2392 = vmatpush1.msra.mxu0 0.0
    %2393 = vmatprep.subr.mxu0 0.0
    %2394 = vmatpush1.msra.mxu0 0.0
    %2395 = vmatprep.subr.mxu0 0.0
    %2396 = vmatpush1.msra.mxu0 0.0
    %2397 = vmatprep.subr.mxu0 0.0
    %2398 = vmatpush1.msra.mxu0 0.0
    %2399 = vmatprep.subr.mxu0 0.0
    %2400 = vmatpush1.msra.mxu0 0.0
    %2401 = vmatprep.subr.mxu0 0.0
    %2402 = vmatpush1.msra.mxu0 0.0
    %2403 = vmatprep.subr.mxu0 0.0
    %2404 = vmatpush1.msra.mxu0 %v2372
    %2405 = vmatprep.subr.mxu0 0.0
    %2406 = vmatpush1.msra.mxu0 %v2370
    %2407 = vmatprep.subr.mxu0 0.0
    %2408 = vmatpush2.msra.mxu0 0.0
    %2409 = vmatprep.subr.mxu0 0.0
    %2410 = vmatpush2.msra.mxu0 0.0
    %2411 = vmatprep.subr.mxu0 0.0
    %2412 = vmatpush2.msra.mxu0 0.0
    %2413 = vmatprep.subr.mxu0 0.0
    %2414 = vmatpush2.msra.mxu0 0.0
    %2415 = vmatprep.subr.mxu0 0.0
    %2416 = vmatpush2.msra.mxu0 0.0
    %2417 = vmatprep.subr.mxu0 0.0
    %2418 = vmatpush2.msra.mxu0 0.0
    %2419 = vmatprep.subr.mxu0 0.0
    %2420 = vmatpush2.msra.mxu0 0.0
    %2421 = vmatprep.subr.mxu0 0.0
    %2422 = vmatpush2.msra.mxu0 0.0
    %2423 = vmatprep.subr.mxu0 0.0
    %2424 = vmatpush2.msra.mxu0 0.0
    %2425 = vmatprep.subr.mxu0 0.0
    %2426 = vmatpush2.msra.mxu0 0.0
    %2427 = vmatprep.subr.mxu0 0.0
    %2428 = vmatpush2.msra.mxu0 0.0
    %2429 = vmatprep.subr.mxu0 0.0
    %2430 = vmatpush2.msra.mxu0 0.0
    %2431 = vmatprep.subr.mxu0 0.0
    %2432 = vmatpush2.msra.mxu0 0.0
    %2433 = vmatprep.subr.mxu0 0.0
    %2434 = vmatpush2.msra.mxu0 0.0
    %2435 = vmatprep.subr.mxu0 0.0
    %2436 = vmatpush2.msra.mxu0 0.0
    %2437 = vmatprep.subr.mxu0 0.0
    %2438 = vmatpush2.msra.mxu0 0.0
    %2439 = vmatprep.mubr.f32.mxu0 0.0
    %2440 = vmatmul.mubr.f32.gmra.mxu0 %v1132
    %v2441 = vpop.f32.mrf.mxu0
    %v2442 = vadd.f32 0.0, %v2441
    %v2443 = vpop.f32.mrf.mxu0
    %2444 = vmatprep.mubr.f32.mxu0 0.0
    %2445 = vmatmul.mubr.f32.gmra.mxu0 %v1135
    %v2446 = vpop.f32.mrf.mxu0
    %v2447 = vadd.f32 0.0, %v2446
    %v2448 = vpop.f32.mrf.mxu0
    %2449 = vmatprep.mubr.f32.mxu0 0.0
    %2450 = vmatmul.mubr.f32.gmra.mxu0 %v1138
    %v2451 = vpop.f32.mrf.mxu0
    %v2452 = vadd.f32 0.0, %v2451
    %v2453 = vpop.f32.mrf.mxu0
    %2454 = vmatprep.mubr.f32.mxu0 0.0
    %2455 = vmatmul.mubr.f32.gmra.mxu0 %v1141
    %v2456 = vpop.f32.mrf.mxu0
    %v2457 = vadd.f32 0.0, %v2456
    %v2458 = vpop.f32.mrf.mxu0
    %2459 = vdwg.mxu0
    %v2461 = vsel %vm1228, %v2442, 0
    %v2464 = vsel %vm1228, %v2447, 0
    %v2467 = vsel %vm1228, %v2452, 0
    %v2470 = vsel %vm1228, %v2457, 0
    %2472 = vmatprep.subr.mxu0 0.0
    %2473 = vmatpush1.msra.mxu0 0.0
    %2474 = vmatprep.subr.mxu0 0.0
    %2475 = vmatpush1.msra.mxu0 0.0
    %2476 = vmatprep.subr.mxu0 0.0
    %2477 = vmatpush1.msra.mxu0 0.0
    %2478 = vmatprep.subr.mxu0 0.0
    %2479 = vmatpush1.msra.mxu0 0.0
    %2480 = vmatprep.subr.mxu0 0.0
    %2481 = vmatpush1.msra.mxu0 0.0
    %2482 = vmatprep.subr.mxu0 0.0
    %2483 = vmatpush1.msra.mxu0 0.0
    %2484 = vmatprep.subr.mxu0 0.0
    %2485 = vmatpush1.msra.mxu0 0.0
    %2486 = vmatprep.subr.mxu0 0.0
    %2487 = vmatpush1.msra.mxu0 0.0
    %2488 = vmatprep.subr.mxu0 0.0
    %2489 = vmatpush1.msra.mxu0 0.0
    %2490 = vmatprep.subr.mxu0 0.0
    %2491 = vmatpush1.msra.mxu0 0.0
    %2492 = vmatprep.subr.mxu0 0.0
    %2493 = vmatpush1.msra.mxu0 0.0
    %2494 = vmatprep.subr.mxu0 0.0
    %2495 = vmatpush1.msra.mxu0 0.0
    %2496 = vmatprep.subr.mxu0 %v981
    %2497 = vmatpush1.msra.mxu0 %v980
    %2498 = vmatprep.subr.mxu0 %v973
    %2499 = vmatpush1.msra.mxu0 %v972
    %2500 = vmatprep.subr.mxu0 %v965
    %2501 = vmatpush1.msra.mxu0 %v964
    %2502 = vmatprep.subr.mxu0 %v957
    %2503 = vmatpush1.msra.mxu0 %v956
    %2504 = vmatprep.subr.mxu0 0.0
    %2505 = vmatpush2.msra.mxu0 0.0
    %2506 = vmatprep.subr.mxu0 0.0
    %2507 = vmatpush2.msra.mxu0 0.0
    %2508 = vmatprep.subr.mxu0 0.0
    %2509 = vmatpush2.msra.mxu0 0.0
    %2510 = vmatprep.subr.mxu0 0.0
    %2511 = vmatpush2.msra.mxu0 0.0
    %2512 = vmatprep.subr.mxu0 0.0
    %2513 = vmatpush2.msra.mxu0 0.0
    %2514 = vmatprep.subr.mxu0 0.0
    %2515 = vmatpush2.msra.mxu0 0.0
    %2516 = vmatprep.subr.mxu0 0.0
    %2517 = vmatpush2.msra.mxu0 0.0
    %2518 = vmatprep.subr.mxu0 0.0
    %2519 = vmatpush2.msra.mxu0 0.0
    %2520 = vmatprep.subr.mxu0 0.0
    %2521 = vmatpush2.msra.mxu0 0.0
    %2522 = vmatprep.subr.mxu0 0.0
    %2523 = vmatpush2.msra.mxu0 0.0
    %2524 = vmatprep.subr.mxu0 0.0
    %2525 = vmatpush2.msra.mxu0 0.0
    %2526 = vmatprep.subr.mxu0 0.0
    %2527 = vmatpush2.msra.mxu0 0.0
    %2528 = vmatprep.subr.mxu0 0.0
    %2529 = vmatpush2.msra.mxu0 0.0
    %2530 = vmatprep.subr.mxu0 0.0
    %2531 = vmatpush2.msra.mxu0 0.0
    %2532 = vmatprep.subr.mxu0 0.0
    %2533 = vmatpush2.msra.mxu0 0.0
    %2534 = vmatprep.subr.mxu0 0.0
    %2535 = vmatpush2.msra.mxu0 0.0
    %2536 = vmatprep.mubr.f32.mxu0 0.0
    %2537 = vmatmul.mubr.f32.gmra.mxu0 %v2461
    %v2538 = vpop.f32.mrf.mxu0
    %v2539 = vadd.f32 0.0, %v2538
    %v2540 = vpop.f32.mrf.mxu0
    %v2541 = vadd.f32 0.0, %v2540
    %2542 = vmatprep.mubr.f32.mxu0 0.0
    %2543 = vmatmul.mubr.f32.gmra.mxu0 %v2464
    %v2544 = vpop.f32.mrf.mxu0
    %v2545 = vadd.f32 0.0, %v2544
    %v2546 = vpop.f32.mrf.mxu0
    %v2547 = vadd.f32 0.0, %v2546
    %2548 = vmatprep.mubr.f32.mxu0 0.0
    %2549 = vmatmul.mubr.f32.gmra.mxu0 %v2467
    %v2550 = vpop.f32.mrf.mxu0
    %v2551 = vadd.f32 0.0, %v2550
    %v2552 = vpop.f32.mrf.mxu0
    %v2553 = vadd.f32 0.0, %v2552
    %2554 = vmatprep.mubr.f32.mxu0 0.0
    %2555 = vmatmul.mubr.f32.gmra.mxu0 %v2470
    %v2556 = vpop.f32.mrf.mxu0
    %v2557 = vadd.f32 0.0, %v2556
    %v2558 = vpop.f32.mrf.mxu0
    %v2559 = vadd.f32 0.0, %v2558
    %2560 = vdwg.mxu0
    %2561 = vmatprep.subr.mxu0 0.0
    %2562 = vmatpush1.msra.mxu0 0.0
    %2563 = vmatprep.subr.mxu0 0.0
    %2564 = vmatpush1.msra.mxu0 0.0
    %2565 = vmatprep.subr.mxu0 0.0
    %2566 = vmatpush1.msra.mxu0 0.0
    %2567 = vmatprep.subr.mxu0 0.0
    %2568 = vmatpush1.msra.mxu0 0.0
    %2569 = vmatprep.subr.mxu0 0.0
    %2570 = vmatpush1.msra.mxu0 0.0
    %2571 = vmatprep.subr.mxu0 0.0
    %2572 = vmatpush1.msra.mxu0 0.0
    %2573 = vmatprep.subr.mxu0 0.0
    %2574 = vmatpush1.msra.mxu0 0.0
    %2575 = vmatprep.subr.mxu0 0.0
    %2576 = vmatpush1.msra.mxu0 0.0
    %2577 = vmatprep.subr.mxu0 0.0
    %2578 = vmatpush1.msra.mxu0 0.0
    %2579 = vmatprep.subr.mxu0 0.0
    %2580 = vmatpush1.msra.mxu0 0.0
    %2581 = vmatprep.subr.mxu0 0.0
    %2582 = vmatpush1.msra.mxu0 0.0
    %2583 = vmatprep.subr.mxu0 0.0
    %2584 = vmatpush1.msra.mxu0 0.0
    %2585 = vmatprep.subr.mxu0 %v983
    %2586 = vmatpush1.msra.mxu0 %v982
    %2587 = vmatprep.subr.mxu0 %v975
    %2588 = vmatpush1.msra.mxu0 %v974
    %2589 = vmatprep.subr.mxu0 %v967
    %2590 = vmatpush1.msra.mxu0 %v966
    %2591 = vmatprep.subr.mxu0 %v959
    %2592 = vmatpush1.msra.mxu0 %v958
    %2593 = vmatprep.subr.mxu0 0.0
    %2594 = vmatpush2.msra.mxu0 0.0
    %2595 = vmatprep.subr.mxu0 0.0
    %2596 = vmatpush2.msra.mxu0 0.0
    %2597 = vmatprep.subr.mxu0 0.0
    %2598 = vmatpush2.msra.mxu0 0.0
    %2599 = vmatprep.subr.mxu0 0.0
    %2600 = vmatpush2.msra.mxu0 0.0
    %2601 = vmatprep.subr.mxu0 0.0
    %2602 = vmatpush2.msra.mxu0 0.0
    %2603 = vmatprep.subr.mxu0 0.0
    %2604 = vmatpush2.msra.mxu0 0.0
    %2605 = vmatprep.subr.mxu0 0.0
    %2606 = vmatpush2.msra.mxu0 0.0
    %2607 = vmatprep.subr.mxu0 0.0
    %2608 = vmatpush2.msra.mxu0 0.0
    %2609 = vmatprep.subr.mxu0 0.0
    %2610 = vmatpush2.msra.mxu0 0.0
    %2611 = vmatprep.subr.mxu0 0.0
    %2612 = vmatpush2.msra.mxu0 0.0
    %2613 = vmatprep.subr.mxu0 0.0
    %2614 = vmatpush2.msra.mxu0 0.0
    %2615 = vmatprep.subr.mxu0 0.0
    %2616 = vmatpush2.msra.mxu0 0.0
    %2617 = vmatprep.subr.mxu0 0.0
    %2618 = vmatpush2.msra.mxu0 0.0
    %2619 = vmatprep.subr.mxu0 0.0
    %2620 = vmatpush2.msra.mxu0 0.0
    %2621 = vmatprep.subr.mxu0 0.0
    %2622 = vmatpush2.msra.mxu0 0.0
    %2623 = vmatprep.subr.mxu0 0.0
    %2624 = vmatpush2.msra.mxu0 0.0
    %2625 = vmatprep.mubr.f32.mxu0 0.0
    %2626 = vmatmul.mubr.f32.gmra.mxu0 %v2461
    %v2627 = vpop.f32.mrf.mxu0
    %v2628 = vadd.f32 0.0, %v2627
    %v2629 = vpop.f32.mrf.mxu0
    %v2630 = vadd.f32 0.0, %v2629
    %2631 = vmatprep.mubr.f32.mxu0 0.0
    %2632 = vmatmul.mubr.f32.gmra.mxu0 %v2464
    %v2633 = vpop.f32.mrf.mxu0
    %v2634 = vadd.f32 0.0, %v2633
    %v2635 = vpop.f32.mrf.mxu0
    %v2636 = vadd.f32 0.0, %v2635
    %2637 = vmatprep.mubr.f32.mxu0 0.0
    %2638 = vmatmul.mubr.f32.gmra.mxu0 %v2467
    %v2639 = vpop.f32.mrf.mxu0
    %v2640 = vadd.f32 0.0, %v2639
    %v2641 = vpop.f32.mrf.mxu0
    %v2642 = vadd.f32 0.0, %v2641
    %2643 = vmatprep.mubr.f32.mxu0 0.0
    %2644 = vmatmul.mubr.f32.gmra.mxu0 %v2470
    %v2645 = vpop.f32.mrf.mxu0
    %v2646 = vadd.f32 0.0, %v2645
    %v2647 = vpop.f32.mrf.mxu0
    %v2648 = vadd.f32 0.0, %v2647
    %2649 = vdwg.mxu0
    %2650 = vmatprep.subr.mxu0 0.0
    %2651 = vmatpush1.msra.mxu0 0.0
    %2652 = vmatprep.subr.mxu0 0.0
    %2653 = vmatpush1.msra.mxu0 0.0
    %2654 = vmatprep.subr.mxu0 0.0
    %2655 = vmatpush1.msra.mxu0 0.0
    %2656 = vmatprep.subr.mxu0 0.0
    %2657 = vmatpush1.msra.mxu0 0.0
    %2658 = vmatprep.subr.mxu0 0.0
    %2659 = vmatpush1.msra.mxu0 0.0
    %2660 = vmatprep.subr.mxu0 0.0
    %2661 = vmatpush1.msra.mxu0 0.0
    %2662 = vmatprep.subr.mxu0 0.0
    %2663 = vmatpush1.msra.mxu0 0.0
    %2664 = vmatprep.subr.mxu0 0.0
    %2665 = vmatpush1.msra.mxu0 0.0
    %2666 = vmatprep.subr.mxu0 0.0
    %2667 = vmatpush1.msra.mxu0 0.0
    %2668 = vmatprep.subr.mxu0 0.0
    %2669 = vmatpush1.msra.mxu0 0.0
    %2670 = vmatprep.subr.mxu0 0.0
    %2671 = vmatpush1.msra.mxu0 0.0
    %2672 = vmatprep.subr.mxu0 0.0
    %2673 = vmatpush1.msra.mxu0 0.0
    %2674 = vmatprep.subr.mxu0 %v985
    %2675 = vmatpush1.msra.mxu0 %v984
    %2676 = vmatprep.subr.mxu0 %v977
    %2677 = vmatpush1.msra.mxu0 %v976
    %2678 = vmatprep.subr.mxu0 %v969
    %2679 = vmatpush1.msra.mxu0 %v968
    %2680 = vmatprep.subr.mxu0 %v961
    %2681 = vmatpush1.msra.mxu0 %v960
    %2682 = vmatprep.subr.mxu0 0.0
    %2683 = vmatpush2.msra.mxu0 0.0
    %2684 = vmatprep.subr.mxu0 0.0
    %2685 = vmatpush2.msra.mxu0 0.0
    %2686 = vmatprep.subr.mxu0 0.0
    %2687 = vmatpush2.msra.mxu0 0.0
    %2688 = vmatprep.subr.mxu0 0.0
    %2689 = vmatpush2.msra.mxu0 0.0
    %2690 = vmatprep.subr.mxu0 0.0
    %2691 = vmatpush2.msra.mxu0 0.0
    %2692 = vmatprep.subr.mxu0 0.0
    %2693 = vmatpush2.msra.mxu0 0.0
    %2694 = vmatprep.subr.mxu0 0.0
    %2695 = vmatpush2.msra.mxu0 0.0
    %2696 = vmatprep.subr.mxu0 0.0
    %2697 = vmatpush2.msra.mxu0 0.0
    %2698 = vmatprep.subr.mxu0 0.0
    %2699 = vmatpush2.msra.mxu0 0.0
    %2700 = vmatprep.subr.mxu0 0.0
    %2701 = vmatpush2.msra.mxu0 0.0
    %2702 = vmatprep.subr.mxu0 0.0
    %2703 = vmatpush2.msra.mxu0 0.0
    %2704 = vmatprep.subr.mxu0 0.0
    %2705 = vmatpush2.msra.mxu0 0.0
    %2706 = vmatprep.subr.mxu0 0.0
    %2707 = vmatpush2.msra.mxu0 0.0
    %2708 = vmatprep.subr.mxu0 0.0
    %2709 = vmatpush2.msra.mxu0 0.0
    %2710 = vmatprep.subr.mxu0 0.0
    %2711 = vmatpush2.msra.mxu0 0.0
    %2712 = vmatprep.subr.mxu0 0.0
    %2713 = vmatpush2.msra.mxu0 0.0
    %2714 = vmatprep.mubr.f32.mxu0 0.0
    %2715 = vmatmul.mubr.f32.gmra.mxu0 %v2461
    %v2716 = vpop.f32.mrf.mxu0
    %v2717 = vadd.f32 0.0, %v2716
    %v2718 = vpop.f32.mrf.mxu0
    %v2719 = vadd.f32 0.0, %v2718
    %2720 = vmatprep.mubr.f32.mxu0 0.0
    %2721 = vmatmul.mubr.f32.gmra.mxu0 %v2464
    %v2722 = vpop.f32.mrf.mxu0
    %v2723 = vadd.f32 0.0, %v2722
    %v2724 = vpop.f32.mrf.mxu0
    %v2725 = vadd.f32 0.0, %v2724
    %2726 = vmatprep.mubr.f32.mxu0 0.0
    %2727 = vmatmul.mubr.f32.gmra.mxu0 %v2467
    %v2728 = vpop.f32.mrf.mxu0
    %v2729 = vadd.f32 0.0, %v2728
    %v2730 = vpop.f32.mrf.mxu0
    %v2731 = vadd.f32 0.0, %v2730
    %2732 = vmatprep.mubr.f32.mxu0 0.0
    %2733 = vmatmul.mubr.f32.gmra.mxu0 %v2470
    %v2734 = vpop.f32.mrf.mxu0
    %v2735 = vadd.f32 0.0, %v2734
    %v2736 = vpop.f32.mrf.mxu0
    %v2737 = vadd.f32 0.0, %v2736
    %2738 = vdwg.mxu0
    %2739 = vmatprep.subr.mxu0 0.0
    %2740 = vmatpush1.msra.mxu0 0.0
    %2741 = vmatprep.subr.mxu0 0.0
    %2742 = vmatpush1.msra.mxu0 0.0
    %2743 = vmatprep.subr.mxu0 0.0
    %2744 = vmatpush1.msra.mxu0 0.0
    %2745 = vmatprep.subr.mxu0 0.0
    %2746 = vmatpush1.msra.mxu0 0.0
    %2747 = vmatprep.subr.mxu0 0.0
    %2748 = vmatpush1.msra.mxu0 0.0
    %2749 = vmatprep.subr.mxu0 0.0
    %2750 = vmatpush1.msra.mxu0 0.0
    %2751 = vmatprep.subr.mxu0 0.0
    %2752 = vmatpush1.msra.mxu0 0.0
    %2753 = vmatprep.subr.mxu0 0.0
    %2754 = vmatpush1.msra.mxu0 0.0
    %2755 = vmatprep.subr.mxu0 0.0
    %2756 = vmatpush1.msra.mxu0 0.0
    %2757 = vmatprep.subr.mxu0 0.0
    %2758 = vmatpush1.msra.mxu0 0.0
    %2759 = vmatprep.subr.mxu0 0.0
    %2760 = vmatpush1.msra.mxu0 0.0
    %2761 = vmatprep.subr.mxu0 0.0
    %2762 = vmatpush1.msra.mxu0 0.0
    %2763 = vmatprep.subr.mxu0 %v987
    %2764 = vmatpush1.msra.mxu0 %v986
    %2765 = vmatprep.subr.mxu0 %v979
    %2766 = vmatpush1.msra.mxu0 %v978
    %2767 = vmatprep.subr.mxu0 %v971
    %2768 = vmatpush1.msra.mxu0 %v970
    %2769 = vmatprep.subr.mxu0 %v963
    %2770 = vmatpush1.msra.mxu0 %v962
    %2771 = vmatprep.subr.mxu0 0.0
    %2772 = vmatpush2.msra.mxu0 0.0
    %2773 = vmatprep.subr.mxu0 0.0
    %2774 = vmatpush2.msra.mxu0 0.0
    %2775 = vmatprep.subr.mxu0 0.0
    %2776 = vmatpush2.msra.mxu0 0.0
    %2777 = vmatprep.subr.mxu0 0.0
    %2778 = vmatpush2.msra.mxu0 0.0
    %2779 = vmatprep.subr.mxu0 0.0
    %2780 = vmatpush2.msra.mxu0 0.0
    %2781 = vmatprep.subr.mxu0 0.0
    %2782 = vmatpush2.msra.mxu0 0.0
    %2783 = vmatprep.subr.mxu0 0.0
    %2784 = vmatpush2.msra.mxu0 0.0
    %2785 = vmatprep.subr.mxu0 0.0
    %2786 = vmatpush2.msra.mxu0 0.0
    %2787 = vmatprep.subr.mxu0 0.0
    %2788 = vmatpush2.msra.mxu0 0.0
    %2789 = vmatprep.subr.mxu0 0.0
    %2790 = vmatpush2.msra.mxu0 0.0
    %2791 = vmatprep.subr.mxu0 0.0
    %2792 = vmatpush2.msra.mxu0 0.0
    %2793 = vmatprep.subr.mxu0 0.0
    %2794 = vmatpush2.msra.mxu0 0.0
    %2795 = vmatprep.subr.mxu0 0.0
    %2796 = vmatpush2.msra.mxu0 0.0
    %2797 = vmatprep.subr.mxu0 0.0
    %2798 = vmatpush2.msra.mxu0 0.0
    %2799 = vmatprep.subr.mxu0 0.0
    %2800 = vmatpush2.msra.mxu0 0.0
    %2801 = vmatprep.subr.mxu0 0.0
    %2802 = vmatpush2.msra.mxu0 0.0
    %2803 = vmatprep.mubr.f32.mxu0 0.0
    %2804 = vmatmul.mubr.f32.gmra.mxu0 %v2461
    %v2805 = vpop.f32.mrf.mxu0
    %v2806 = vadd.f32 0.0, %v2805
    %v2807 = vpop.f32.mrf.mxu0
    %v2808 = vadd.f32 0.0, %v2807
    %2809 = vmatprep.mubr.f32.mxu0 0.0
    %2810 = vmatmul.mubr.f32.gmra.mxu0 %v2464
    %v2811 = vpop.f32.mrf.mxu0
    %v2812 = vadd.f32 0.0, %v2811
    %v2813 = vpop.f32.mrf.mxu0
    %v2814 = vadd.f32 0.0, %v2813
    %2815 = vmatprep.mubr.f32.mxu0 0.0
    %2816 = vmatmul.mubr.f32.gmra.mxu0 %v2467
    %v2817 = vpop.f32.mrf.mxu0
    %v2818 = vadd.f32 0.0, %v2817
    %v2819 = vpop.f32.mrf.mxu0
    %v2820 = vadd.f32 0.0, %v2819
    %2821 = vmatprep.mubr.f32.mxu0 0.0
    %2822 = vmatmul.mubr.f32.gmra.mxu0 %v2470
    %v2823 = vpop.f32.mrf.mxu0
    %v2824 = vadd.f32 0.0, %v2823
    %v2825 = vpop.f32.mrf.mxu0
    %v2826 = vadd.f32 0.0, %v2825
    %2827 = vdwg.mxu0
    %v2828 = vmul.f32 %v2539, %v667
    %v2829 = vmul.f32 %v2541, %v669
    %v2830 = vmul.f32 %v2628, %v756
    %v2831 = vmul.f32 %v2630, %v758
    %v2832 = vmul.f32 %v2717, %v845
    %v2833 = vmul.f32 %v2719, %v847
    %v2834 = vmul.f32 %v2806, %v934
    %v2835 = vmul.f32 %v2808, %v936
    %v2836 = vmul.f32 %v2545, %v673
    %v2837 = vmul.f32 %v2547, %v675
    %v2838 = vmul.f32 %v2634, %v762
    %v2839 = vmul.f32 %v2636, %v764
    %v2840 = vmul.f32 %v2723, %v851
    %v2841 = vmul.f32 %v2725, %v853
    %v2842 = vmul.f32 %v2812, %v940
    %v2843 = vmul.f32 %v2814, %v942
    %v2844 = vmul.f32 %v2551, %v679
    %v2845 = vmul.f32 %v2553, %v681
    %v2846 = vmul.f32 %v2640, %v768
    %v2847 = vmul.f32 %v2642, %v770
    %v2848 = vmul.f32 %v2729, %v857
    %v2849 = vmul.f32 %v2731, %v859
    %v2850 = vmul.f32 %v2818, %v946
    %v2851 = vmul.f32 %v2820, %v948
    %v2852 = vmul.f32 %v2557, %v685
    %v2853 = vmul.f32 %v2559, %v687
    %v2854 = vmul.f32 %v2646, %v774
    %v2855 = vmul.f32 %v2648, %v776
    %v2856 = vmul.f32 %v2735, %v863
    %v2857 = vmul.f32 %v2737, %v865
    %v2858 = vmul.f32 %v2824, %v952
    %v2859 = vmul.f32 %v2826, %v954
    %2860 = vmatprep.subr.mxu0 0.0
    %2861 = vmatpush1.msra.mxu0 %v1003
    %2862 = vmatprep.subr.mxu0 0.0
    %2863 = vmatpush1.msra.mxu0 %v1002
    %2864 = vmatprep.subr.mxu0 0.0
    %2865 = vmatpush1.msra.mxu0 %v1001
    %2866 = vmatprep.subr.mxu0 0.0
    %2867 = vmatpush1.msra.mxu0 %v1000
    %2868 = vmatprep.subr.mxu0 0.0
    %2869 = vmatpush1.msra.mxu0 %v999
    %2870 = vmatprep.subr.mxu0 0.0
    %2871 = vmatpush1.msra.mxu0 %v998
    %2872 = vmatprep.subr.mxu0 0.0
    %2873 = vmatpush1.msra.mxu0 %v997
    %2874 = vmatprep.subr.mxu0 0.0
    %2875 = vmatpush1.msra.mxu0 %v996
    %2876 = vmatprep.subr.mxu0 0.0
    %2877 = vmatpush1.msra.mxu0 %v995
    %2878 = vmatprep.subr.mxu0 0.0
    %2879 = vmatpush1.msra.mxu0 %v994
    %2880 = vmatprep.subr.mxu0 0.0
    %2881 = vmatpush1.msra.mxu0 %v993
    %2882 = vmatprep.subr.mxu0 0.0
    %2883 = vmatpush1.msra.mxu0 %v992
    %2884 = vmatprep.subr.mxu0 0.0
    %2885 = vmatpush1.msra.mxu0 %v991
    %2886 = vmatprep.subr.mxu0 0.0
    %2887 = vmatpush1.msra.mxu0 %v990
    %2888 = vmatprep.subr.mxu0 0.0
    %2889 = vmatpush1.msra.mxu0 %v989
    %2890 = vmatprep.subr.mxu0 0.0
    %2891 = vmatpush1.msra.mxu0 %v988
    %2892 = vmatprep.subr.mxu0 0.0
    %2893 = vmatpush2.msra.mxu0 %v1019
    %2894 = vmatprep.subr.mxu0 0.0
    %2895 = vmatpush2.msra.mxu0 %v1018
    %2896 = vmatprep.subr.mxu0 0.0
    %2897 = vmatpush2.msra.mxu0 %v1017
    %2898 = vmatprep.subr.mxu0 0.0
    %2899 = vmatpush2.msra.mxu0 %v1016
    %2900 = vmatprep.subr.mxu0 0.0
    %2901 = vmatpush2.msra.mxu0 %v1015
    %2902 = vmatprep.subr.mxu0 0.0
    %2903 = vmatpush2.msra.mxu0 %v1014
    %2904 = vmatprep.subr.mxu0 0.0
    %2905 = vmatpush2.msra.mxu0 %v1013
    %2906 = vmatprep.subr.mxu0 0.0
    %2907 = vmatpush2.msra.mxu0 %v1012
    %2908 = vmatprep.subr.mxu0 0.0
    %2909 = vmatpush2.msra.mxu0 %v1011
    %2910 = vmatprep.subr.mxu0 0.0
    %2911 = vmatpush2.msra.mxu0 %v1010
    %2912 = vmatprep.subr.mxu0 0.0
    %2913 = vmatpush2.msra.mxu0 %v1009
    %2914 = vmatprep.subr.mxu0 0.0
    %2915 = vmatpush2.msra.mxu0 %v1008
    %2916 = vmatprep.subr.mxu0 0.0
    %2917 = vmatpush2.msra.mxu0 %v1007
    %2918 = vmatprep.subr.mxu0 0.0
    %2919 = vmatpush2.msra.mxu0 %v1006
    %2920 = vmatprep.subr.mxu0 0.0
    %2921 = vmatpush2.msra.mxu0 %v1005
    %2922 = vmatprep.subr.mxu0 0.0
    %2923 = vmatpush2.msra.mxu0 %v1004
    %2924 = vmatprep.mubr.f32.mxu0 %v2829
    %2925 = vmatmul.mubr.f32.gmra.mxu0 %v2828
    %v2926 = vpop.f32.mrf.mxu0
    %v2927 = vadd.f32 0.0, %v2926
    %v2928 = vpop.f32.mrf.mxu0
    %2929 = vmatprep.mubr.f32.mxu0 %v2837
    %2930 = vmatmul.mubr.f32.gmra.mxu0 %v2836
    %v2931 = vpop.f32.mrf.mxu0
    %v2932 = vadd.f32 0.0, %v2931
    %v2933 = vpop.f32.mrf.mxu0
    %2934 = vmatprep.mubr.f32.mxu0 %v2845
    %2935 = vmatmul.mubr.f32.gmra.mxu0 %v2844
    %v2936 = vpop.f32.mrf.mxu0
    %v2937 = vadd.f32 0.0, %v2936
    %v2938 = vpop.f32.mrf.mxu0
    %2939 = vmatprep.mubr.f32.mxu0 %v2853
    %2940 = vmatmul.mubr.f32.gmra.mxu0 %v2852
    %v2941 = vpop.f32.mrf.mxu0
    %v2942 = vadd.f32 0.0, %v2941
    %v2943 = vpop.f32.mrf.mxu0
    %2944 = vdwg.mxu0
    %2945 = vmatprep.subr.mxu0 0.0
    %2946 = vmatpush1.msra.mxu0 %v1035
    %2947 = vmatprep.subr.mxu0 0.0
    %2948 = vmatpush1.msra.mxu0 %v1034
    %2949 = vmatprep.subr.mxu0 0.0
    %2950 = vmatpush1.msra.mxu0 %v1033
    %2951 = vmatprep.subr.mxu0 0.0
    %2952 = vmatpush1.msra.mxu0 %v1032
    %2953 = vmatprep.subr.mxu0 0.0
    %2954 = vmatpush1.msra.mxu0 %v1031
    %2955 = vmatprep.subr.mxu0 0.0
    %2956 = vmatpush1.msra.mxu0 %v1030
    %2957 = vmatprep.subr.mxu0 0.0
    %2958 = vmatpush1.msra.mxu0 %v1029
    %2959 = vmatprep.subr.mxu0 0.0
    %2960 = vmatpush1.msra.mxu0 %v1028
    %2961 = vmatprep.subr.mxu0 0.0
    %2962 = vmatpush1.msra.mxu0 %v1027
    %2963 = vmatprep.subr.mxu0 0.0
    %2964 = vmatpush1.msra.mxu0 %v1026
    %2965 = vmatprep.subr.mxu0 0.0
    %2966 = vmatpush1.msra.mxu0 %v1025
    %2967 = vmatprep.subr.mxu0 0.0
    %2968 = vmatpush1.msra.mxu0 %v1024
    %2969 = vmatprep.subr.mxu0 0.0
    %2970 = vmatpush1.msra.mxu0 %v1023
    %2971 = vmatprep.subr.mxu0 0.0
    %2972 = vmatpush1.msra.mxu0 %v1022
    %2973 = vmatprep.subr.mxu0 0.0
    %2974 = vmatpush1.msra.mxu0 %v1021
    %2975 = vmatprep.subr.mxu0 0.0
    %2976 = vmatpush1.msra.mxu0 %v1020
    %2977 = vmatprep.subr.mxu0 0.0
    %2978 = vmatpush2.msra.mxu0 %v1051
    %2979 = vmatprep.subr.mxu0 0.0
    %2980 = vmatpush2.msra.mxu0 %v1050
    %2981 = vmatprep.subr.mxu0 0.0
    %2982 = vmatpush2.msra.mxu0 %v1049
    %2983 = vmatprep.subr.mxu0 0.0
    %2984 = vmatpush2.msra.mxu0 %v1048
    %2985 = vmatprep.subr.mxu0 0.0
    %2986 = vmatpush2.msra.mxu0 %v1047
    %2987 = vmatprep.subr.mxu0 0.0
    %2988 = vmatpush2.msra.mxu0 %v1046
    %2989 = vmatprep.subr.mxu0 0.0
    %2990 = vmatpush2.msra.mxu0 %v1045
    %2991 = vmatprep.subr.mxu0 0.0
    %2992 = vmatpush2.msra.mxu0 %v1044
    %2993 = vmatprep.subr.mxu0 0.0
    %2994 = vmatpush2.msra.mxu0 %v1043
    %2995 = vmatprep.subr.mxu0 0.0
    %2996 = vmatpush2.msra.mxu0 %v1042
    %2997 = vmatprep.subr.mxu0 0.0
    %2998 = vmatpush2.msra.mxu0 %v1041
    %2999 = vmatprep.subr.mxu0 0.0
    %3000 = vmatpush2.msra.mxu0 %v1040
    %3001 = vmatprep.subr.mxu0 0.0
    %3002 = vmatpush2.msra.mxu0 %v1039
    %3003 = vmatprep.subr.mxu0 0.0
    %3004 = vmatpush2.msra.mxu0 %v1038
    %3005 = vmatprep.subr.mxu0 0.0
    %3006 = vmatpush2.msra.mxu0 %v1037
    %3007 = vmatprep.subr.mxu0 0.0
    %3008 = vmatpush2.msra.mxu0 %v1036
    %3009 = vmatprep.mubr.f32.mxu0 %v2831
    %3010 = vmatmul.mubr.f32.gmra.mxu0 %v2830
    %v3011 = vpop.f32.mrf.mxu0
    %v3012 = vadd.f32 %v2927, %v3011
    %v3013 = vpop.f32.mrf.mxu0
    %3014 = vmatprep.mubr.f32.mxu0 %v2839
    %3015 = vmatmul.mubr.f32.gmra.mxu0 %v2838
    %v3016 = vpop.f32.mrf.mxu0
    %v3017 = vadd.f32 %v2932, %v3016
    %v3018 = vpop.f32.mrf.mxu0
    %3019 = vmatprep.mubr.f32.mxu0 %v2847
    %3020 = vmatmul.mubr.f32.gmra.mxu0 %v2846
    %v3021 = vpop.f32.mrf.mxu0
    %v3022 = vadd.f32 %v2937, %v3021
    %v3023 = vpop.f32.mrf.mxu0
    %3024 = vmatprep.mubr.f32.mxu0 %v2855
    %3025 = vmatmul.mubr.f32.gmra.mxu0 %v2854
    %v3026 = vpop.f32.mrf.mxu0
    %v3027 = vadd.f32 %v2942, %v3026
    %v3028 = vpop.f32.mrf.mxu0
    %3029 = vdwg.mxu0
    %3030 = vmatprep.subr.mxu0 0.0
    %3031 = vmatpush1.msra.mxu0 %v1067
    %3032 = vmatprep.subr.mxu0 0.0
    %3033 = vmatpush1.msra.mxu0 %v1066
    %3034 = vmatprep.subr.mxu0 0.0
    %3035 = vmatpush1.msra.mxu0 %v1065
    %3036 = vmatprep.subr.mxu0 0.0
    %3037 = vmatpush1.msra.mxu0 %v1064
    %3038 = vmatprep.subr.mxu0 0.0
    %3039 = vmatpush1.msra.mxu0 %v1063
    %3040 = vmatprep.subr.mxu0 0.0
    %3041 = vmatpush1.msra.mxu0 %v1062
    %3042 = vmatprep.subr.mxu0 0.0
    %3043 = vmatpush1.msra.mxu0 %v1061
    %3044 = vmatprep.subr.mxu0 0.0
    %3045 = vmatpush1.msra.mxu0 %v1060
    %3046 = vmatprep.subr.mxu0 0.0
    %3047 = vmatpush1.msra.mxu0 %v1059
    %3048 = vmatprep.subr.mxu0 0.0
    %3049 = vmatpush1.msra.mxu0 %v1058
    %3050 = vmatprep.subr.mxu0 0.0
    %3051 = vmatpush1.msra.mxu0 %v1057
    %3052 = vmatprep.subr.mxu0 0.0
    %3053 = vmatpush1.msra.mxu0 %v1056
    %3054 = vmatprep.subr.mxu0 0.0
    %3055 = vmatpush1.msra.mxu0 %v1055
    %3056 = vmatprep.subr.mxu0 0.0
    %3057 = vmatpush1.msra.mxu0 %v1054
    %3058 = vmatprep.subr.mxu0 0.0
    %3059 = vmatpush1.msra.mxu0 %v1053
    %3060 = vmatprep.subr.mxu0 0.0
    %3061 = vmatpush1.msra.mxu0 %v1052
    %3062 = vmatprep.subr.mxu0 0.0
    %3063 = vmatpush2.msra.mxu0 %v1083
    %3064 = vmatprep.subr.mxu0 0.0
    %3065 = vmatpush2.msra.mxu0 %v1082
    %3066 = vmatprep.subr.mxu0 0.0
    %3067 = vmatpush2.msra.mxu0 %v1081
    %3068 = vmatprep.subr.mxu0 0.0
    %3069 = vmatpush2.msra.mxu0 %v1080
    %3070 = vmatprep.subr.mxu0 0.0
    %3071 = vmatpush2.msra.mxu0 %v1079
    %3072 = vmatprep.subr.mxu0 0.0
    %3073 = vmatpush2.msra.mxu0 %v1078
    %3074 = vmatprep.subr.mxu0 0.0
    %3075 = vmatpush2.msra.mxu0 %v1077
    %3076 = vmatprep.subr.mxu0 0.0
    %3077 = vmatpush2.msra.mxu0 %v1076
    %3078 = vmatprep.subr.mxu0 0.0
    %3079 = vmatpush2.msra.mxu0 %v1075
    %3080 = vmatprep.subr.mxu0 0.0
    %3081 = vmatpush2.msra.mxu0 %v1074
    %3082 = vmatprep.subr.mxu0 0.0
    %3083 = vmatpush2.msra.mxu0 %v1073
    %3084 = vmatprep.subr.mxu0 0.0
    %3085 = vmatpush2.msra.mxu0 %v1072
    %3086 = vmatprep.subr.mxu0 0.0
    %3087 = vmatpush2.msra.mxu0 %v1071
    %3088 = vmatprep.subr.mxu0 0.0
    %3089 = vmatpush2.msra.mxu0 %v1070
    %3090 = vmatprep.subr.mxu0 0.0
    %3091 = vmatpush2.msra.mxu0 %v1069
    %3092 = vmatprep.subr.mxu0 0.0
    %3093 = vmatpush2.msra.mxu0 %v1068
    %3094 = vmatprep.mubr.f32.mxu0 %v2833
    %3095 = vmatmul.mubr.f32.gmra.mxu0 %v2832
    %v3096 = vpop.f32.mrf.mxu0
    %v3097 = vadd.f32 %v3012, %v3096
    %v3098 = vpop.f32.mrf.mxu0
    %3099 = vmatprep.mubr.f32.mxu0 %v2841
    %3100 = vmatmul.mubr.f32.gmra.mxu0 %v2840
    %v3101 = vpop.f32.mrf.mxu0
    %v3102 = vadd.f32 %v3017, %v3101
    %v3103 = vpop.f32.mrf.mxu0
    %3104 = vmatprep.mubr.f32.mxu0 %v2849
    %3105 = vmatmul.mubr.f32.gmra.mxu0 %v2848
    %v3106 = vpop.f32.mrf.mxu0
    %v3107 = vadd.f32 %v3022, %v3106
    %v3108 = vpop.f32.mrf.mxu0
    %3109 = vmatprep.mubr.f32.mxu0 %v2857
    %3110 = vmatmul.mubr.f32.gmra.mxu0 %v2856
    %v3111 = vpop.f32.mrf.mxu0
    %v3112 = vadd.f32 %v3027, %v3111
    %v3113 = vpop.f32.mrf.mxu0
    %3114 = vdwg.mxu0
    %3115 = vmatprep.subr.mxu0 0.0
    %3116 = vmatpush1.msra.mxu0 %v1099
    %3117 = vmatprep.subr.mxu0 0.0
    %3118 = vmatpush1.msra.mxu0 %v1098
    %3119 = vmatprep.subr.mxu0 0.0
    %3120 = vmatpush1.msra.mxu0 %v1097
    %3121 = vmatprep.subr.mxu0 0.0
    %3122 = vmatpush1.msra.mxu0 %v1096
    %3123 = vmatprep.subr.mxu0 0.0
    %3124 = vmatpush1.msra.mxu0 %v1095
    %3125 = vmatprep.subr.mxu0 0.0
    %3126 = vmatpush1.msra.mxu0 %v1094
    %3127 = vmatprep.subr.mxu0 0.0
    %3128 = vmatpush1.msra.mxu0 %v1093
    %3129 = vmatprep.subr.mxu0 0.0
    %3130 = vmatpush1.msra.mxu0 %v1092
    %3131 = vmatprep.subr.mxu0 0.0
    %3132 = vmatpush1.msra.mxu0 %v1091
    %3133 = vmatprep.subr.mxu0 0.0
    %3134 = vmatpush1.msra.mxu0 %v1090
    %3135 = vmatprep.subr.mxu0 0.0
    %3136 = vmatpush1.msra.mxu0 %v1089
    %3137 = vmatprep.subr.mxu0 0.0
    %3138 = vmatpush1.msra.mxu0 %v1088
    %3139 = vmatprep.subr.mxu0 0.0
    %3140 = vmatpush1.msra.mxu0 %v1087
    %3141 = vmatprep.subr.mxu0 0.0
    %3142 = vmatpush1.msra.mxu0 %v1086
    %3143 = vmatprep.subr.mxu0 0.0
    %3144 = vmatpush1.msra.mxu0 %v1085
    %3145 = vmatprep.subr.mxu0 0.0
    %3146 = vmatpush1.msra.mxu0 %v1084
    %3147 = vmatprep.subr.mxu0 0.0
    %3148 = vmatpush2.msra.mxu0 %v1115
    %3149 = vmatprep.subr.mxu0 0.0
    %3150 = vmatpush2.msra.mxu0 %v1114
    %3151 = vmatprep.subr.mxu0 0.0
    %3152 = vmatpush2.msra.mxu0 %v1113
    %3153 = vmatprep.subr.mxu0 0.0
    %3154 = vmatpush2.msra.mxu0 %v1112
    %3155 = vmatprep.subr.mxu0 0.0
    %3156 = vmatpush2.msra.mxu0 %v1111
    %3157 = vmatprep.subr.mxu0 0.0
    %3158 = vmatpush2.msra.mxu0 %v1110
    %3159 = vmatprep.subr.mxu0 0.0
    %3160 = vmatpush2.msra.mxu0 %v1109
    %3161 = vmatprep.subr.mxu0 0.0
    %3162 = vmatpush2.msra.mxu0 %v1108
    %3163 = vmatprep.subr.mxu0 0.0
    %3164 = vmatpush2.msra.mxu0 %v1107
    %3165 = vmatprep.subr.mxu0 0.0
    %3166 = vmatpush2.msra.mxu0 %v1106
    %3167 = vmatprep.subr.mxu0 0.0
    %3168 = vmatpush2.msra.mxu0 %v1105
    %3169 = vmatprep.subr.mxu0 0.0
    %3170 = vmatpush2.msra.mxu0 %v1104
    %3171 = vmatprep.subr.mxu0 0.0
    %3172 = vmatpush2.msra.mxu0 %v1103
    %3173 = vmatprep.subr.mxu0 0.0
    %3174 = vmatpush2.msra.mxu0 %v1102
    %3175 = vmatprep.subr.mxu0 0.0
    %3176 = vmatpush2.msra.mxu0 %v1101
    %3177 = vmatprep.subr.mxu0 0.0
    %3178 = vmatpush2.msra.mxu0 %v1100
    %3179 = vmatprep.mubr.f32.mxu0 %v2835
    %3180 = vmatmul.mubr.f32.gmra.mxu0 %v2834
    %v3181 = vpop.f32.mrf.mxu0
    %v3182 = vadd.f32 %v3097, %v3181
    %v3183 = vpop.f32.mrf.mxu0
    %3184 = vmatprep.mubr.f32.mxu0 %v2843
    %3185 = vmatmul.mubr.f32.gmra.mxu0 %v2842
    %v3186 = vpop.f32.mrf.mxu0
    %v3187 = vadd.f32 %v3102, %v3186
    %v3188 = vpop.f32.mrf.mxu0
    %3189 = vmatprep.mubr.f32.mxu0 %v2851
    %3190 = vmatmul.mubr.f32.gmra.mxu0 %v2850
    %v3191 = vpop.f32.mrf.mxu0
    %v3192 = vadd.f32 %v3107, %v3191
    %v3193 = vpop.f32.mrf.mxu0
    %3194 = vmatprep.mubr.f32.mxu0 %v2859
    %3195 = vmatmul.mubr.f32.gmra.mxu0 %v2858
    %v3196 = vpop.f32.mrf.mxu0
    %v3197 = vadd.f32 %v3112, %v3196
    %v3198 = vpop.f32.mrf.mxu0
    %3199 = vdwg.mxu0
    %v3200 = vsel %vm1228, %v2370, 0
    %v3202 = vsel %vm1228, %v2372, 0
    %3204 = vmatprep.subr.mxu0 0.0
    %3205 = vmatpush1.msra.mxu0 0.0
    %3206 = vmatprep.subr.mxu0 0.0
    %3207 = vmatpush1.msra.mxu0 0.0
    %3208 = vmatprep.subr.mxu0 0.0
    %3209 = vmatpush1.msra.mxu0 0.0
    %3210 = vmatprep.subr.mxu0 0.0
    %3211 = vmatpush1.msra.mxu0 0.0
    %3212 = vmatprep.subr.mxu0 0.0
    %3213 = vmatpush1.msra.mxu0 0.0
    %3214 = vmatprep.subr.mxu0 0.0
    %3215 = vmatpush1.msra.mxu0 0.0
    %3216 = vmatprep.subr.mxu0 0.0
    %3217 = vmatpush1.msra.mxu0 0.0
    %3218 = vmatprep.subr.mxu0 0.0
    %3219 = vmatpush1.msra.mxu0 0.0
    %3220 = vmatprep.subr.mxu0 0.0
    %3221 = vmatpush1.msra.mxu0 0.0
    %3222 = vmatprep.subr.mxu0 0.0
    %3223 = vmatpush1.msra.mxu0 0.0
    %3224 = vmatprep.subr.mxu0 0.0
    %3225 = vmatpush1.msra.mxu0 0.0
    %3226 = vmatprep.subr.mxu0 0.0
    %3227 = vmatpush1.msra.mxu0 0.0
    %3228 = vmatprep.subr.mxu0 0.0
    %3229 = vmatpush1.msra.mxu0 %v1119
    %3230 = vmatprep.subr.mxu0 0.0
    %3231 = vmatpush1.msra.mxu0 %v1118
    %3232 = vmatprep.subr.mxu0 0.0
    %3233 = vmatpush1.msra.mxu0 %v1117
    %3234 = vmatprep.subr.mxu0 0.0
    %3235 = vmatpush1.msra.mxu0 %v1116
    %3236 = vmatprep.subr.mxu0 0.0
    %3237 = vmatpush2.msra.mxu0 0.0
    %3238 = vmatprep.subr.mxu0 0.0
    %3239 = vmatpush2.msra.mxu0 0.0
    %3240 = vmatprep.subr.mxu0 0.0
    %3241 = vmatpush2.msra.mxu0 0.0
    %3242 = vmatprep.subr.mxu0 0.0
    %3243 = vmatpush2.msra.mxu0 0.0
    %3244 = vmatprep.subr.mxu0 0.0
    %3245 = vmatpush2.msra.mxu0 0.0
    %3246 = vmatprep.subr.mxu0 0.0
    %3247 = vmatpush2.msra.mxu0 0.0
    %3248 = vmatprep.subr.mxu0 0.0
    %3249 = vmatpush2.msra.mxu0 0.0
    %3250 = vmatprep.subr.mxu0 0.0
    %3251 = vmatpush2.msra.mxu0 0.0
    %3252 = vmatprep.subr.mxu0 0.0
    %3253 = vmatpush2.msra.mxu0 0.0
    %3254 = vmatprep.subr.mxu0 0.0
    %3255 = vmatpush2.msra.mxu0 0.0
    %3256 = vmatprep.subr.mxu0 0.0
    %3257 = vmatpush2.msra.mxu0 0.0
    %3258 = vmatprep.subr.mxu0 0.0
    %3259 = vmatpush2.msra.mxu0 0.0
    %3260 = vmatprep.subr.mxu0 0.0
    %3261 = vmatpush2.msra.mxu0 0.0
    %3262 = vmatprep.subr.mxu0 0.0
    %3263 = vmatpush2.msra.mxu0 0.0
    %3264 = vmatprep.subr.mxu0 0.0
    %3265 = vmatpush2.msra.mxu0 0.0
    %3266 = vmatprep.subr.mxu0 0.0
    %3267 = vmatpush2.msra.mxu0 0.0
    %3268 = vmatprep.mubr.f32.mxu0 0.0
    %3269 = vmatmul.mubr.f32.gmra.mxu0 %v3200
    %v3270 = vpop.f32.mrf.mxu0
    %v3271 = vadd.f32 0.0, %v3270
    %v3272 = vpop.f32.mrf.mxu0
    %3273 = vmatprep.mubr.f32.mxu0 0.0
    %3274 = vmatmul.mubr.f32.gmra.mxu0 %v3202
    %v3275 = vpop.f32.mrf.mxu0
    %v3276 = vadd.f32 0.0, %v3275
    %v3277 = vpop.f32.mrf.mxu0
    %3278 = vdwg.mxu0
    %3279 = vmatprep.subr.mxu0 0.0
    %3280 = vmatpush1.msra.mxu0 0.0
    %3281 = vmatprep.subr.mxu0 0.0
    %3282 = vmatpush1.msra.mxu0 0.0
    %3283 = vmatprep.subr.mxu0 0.0
    %3284 = vmatpush1.msra.mxu0 0.0
    %3285 = vmatprep.subr.mxu0 0.0
    %3286 = vmatpush1.msra.mxu0 0.0
    %3287 = vmatprep.subr.mxu0 0.0
    %3288 = vmatpush1.msra.mxu0 0.0
    %3289 = vmatprep.subr.mxu0 0.0
    %3290 = vmatpush1.msra.mxu0 0.0
    %3291 = vmatprep.subr.mxu0 0.0
    %3292 = vmatpush1.msra.mxu0 0.0
    %3293 = vmatprep.subr.mxu0 0.0
    %3294 = vmatpush1.msra.mxu0 0.0
    %3295 = vmatprep.subr.mxu0 0.0
    %3296 = vmatpush1.msra.mxu0 0.0
    %3297 = vmatprep.subr.mxu0 0.0
    %3298 = vmatpush1.msra.mxu0 0.0
    %3299 = vmatprep.subr.mxu0 0.0
    %3300 = vmatpush1.msra.mxu0 0.0
    %3301 = vmatprep.subr.mxu0 0.0
    %3302 = vmatpush1.msra.mxu0 0.0
    %3303 = vmatprep.subr.mxu0 0.0
    %3304 = vmatpush1.msra.mxu0 %v3197
    %3305 = vmatprep.subr.mxu0 0.0
    %3306 = vmatpush1.msra.mxu0 %v3192
    %3307 = vmatprep.subr.mxu0 0.0
    %3308 = vmatpush1.msra.mxu0 %v3187
    %3309 = vmatprep.subr.mxu0 0.0
    %3310 = vmatpush1.msra.mxu0 %v3182
    %3311 = vmatprep.subr.mxu0 0.0
    %3312 = vmatpush2.msra.mxu0 0.0
    %3313 = vmatprep.subr.mxu0 0.0
    %3314 = vmatpush2.msra.mxu0 0.0
    %3315 = vmatprep.subr.mxu0 0.0
    %3316 = vmatpush2.msra.mxu0 0.0
    %3317 = vmatprep.subr.mxu0 0.0
    %3318 = vmatpush2.msra.mxu0 0.0
    %3319 = vmatprep.subr.mxu0 0.0
    %3320 = vmatpush2.msra.mxu0 0.0
    %3321 = vmatprep.subr.mxu0 0.0
    %3322 = vmatpush2.msra.mxu0 0.0
    %3323 = vmatprep.subr.mxu0 0.0
    %3324 = vmatpush2.msra.mxu0 0.0
    %3325 = vmatprep.subr.mxu0 0.0
    %3326 = vmatpush2.msra.mxu0 0.0
    %3327 = vmatprep.subr.mxu0 0.0
    %3328 = vmatpush2.msra.mxu0 0.0
    %3329 = vmatprep.subr.mxu0 0.0
    %3330 = vmatpush2.msra.mxu0 0.0
    %3331 = vmatprep.subr.mxu0 0.0
    %3332 = vmatpush2.msra.mxu0 0.0
    %3333 = vmatprep.subr.mxu0 0.0
    %3334 = vmatpush2.msra.mxu0 0.0
    %3335 = vmatprep.subr.mxu0 0.0
    %3336 = vmatpush2.msra.mxu0 0.0
    %3337 = vmatprep.subr.mxu0 0.0
    %3338 = vmatpush2.msra.mxu0 0.0
    %3339 = vmatprep.subr.mxu0 0.0
    %3340 = vmatpush2.msra.mxu0 0.0
    %3341 = vmatprep.subr.mxu0 0.0
    %3342 = vmatpush2.msra.mxu0 0.0
    %3343 = vmatprep.mubr.f32.mxu0 0.0
    %3344 = vmatmul.mubr.f32.gmra.mxu0 %v2051
    %v3345 = vpop.f32.mrf.mxu0
    %v3346 = vadd.f32 %v3271, %v3345
    %v3347 = vpop.f32.mrf.mxu0
    %3348 = vmatprep.mubr.f32.mxu0 0.0
    %3349 = vmatmul.mubr.f32.gmra.mxu0 %v2054
    %v3350 = vpop.f32.mrf.mxu0
    %v3351 = vadd.f32 %v3276, %v3350
    %v3352 = vpop.f32.mrf.mxu0
    %3353 = vdwg.mxu0
    %v3354 = vadd.f32 %v3346, %v2135
    %v3355 = vadd.f32 %v3351, %v2135
    %v3356 = vmax.f32 %v3354, 0.0
    %v3357 = vmax.f32 %v3355, 0.0
    %v3359 = vsel %vm1228, %v3356, 0
    %v3362 = vsel %vm1228, %v3357, 0
    %3364 = vmatprep.subr.mxu0 0.0
    %3365 = vmatpush1.msra.mxu0 0.0
    %3366 = vmatprep.subr.mxu0 0.0
    %3367 = vmatpush1.msra.mxu0 0.0
    %3368 = vmatprep.subr.mxu0 0.0
    %3369 = vmatpush1.msra.mxu0 0.0
    %3370 = vmatprep.subr.mxu0 0.0
    %3371 = vmatpush1.msra.mxu0 0.0
    %3372 = vmatprep.subr.mxu0 0.0
    %3373 = vmatpush1.msra.mxu0 0.0
    %3374 = vmatprep.subr.mxu0 0.0
    %3375 = vmatpush1.msra.mxu0 0.0
    %3376 = vmatprep.subr.mxu0 0.0
    %3377 = vmatpush1.msra.mxu0 0.0
    %3378 = vmatprep.subr.mxu0 0.0
    %3379 = vmatpush1.msra.mxu0 0.0
    %3380 = vmatprep.subr.mxu0 0.0
    %3381 = vmatpush1.msra.mxu0 0.0
    %3382 = vmatprep.subr.mxu0 0.0
    %3383 = vmatpush1.msra.mxu0 0.0
    %3384 = vmatprep.subr.mxu0 0.0
    %3385 = vmatpush1.msra.mxu0 0.0
    %3386 = vmatprep.subr.mxu0 0.0
    %3387 = vmatpush1.msra.mxu0 0.0
    %3388 = vmatprep.subr.mxu0 0.0
    %3389 = vmatpush1.msra.mxu0 %v1124
    %3390 = vmatprep.subr.mxu0 0.0
    %3391 = vmatpush1.msra.mxu0 %v1123
    %3392 = vmatprep.subr.mxu0 0.0
    %3393 = vmatpush1.msra.mxu0 %v1122
    %3394 = vmatprep.subr.mxu0 0.0
    %3395 = vmatpush1.msra.mxu0 %v1121
    %3396 = vmatprep.subr.mxu0 0.0
    %3397 = vmatpush2.msra.mxu0 0.0
    %3398 = vmatprep.subr.mxu0 0.0
    %3399 = vmatpush2.msra.mxu0 0.0
    %3400 = vmatprep.subr.mxu0 0.0
    %3401 = vmatpush2.msra.mxu0 0.0
    %3402 = vmatprep.subr.mxu0 0.0
    %3403 = vmatpush2.msra.mxu0 0.0
    %3404 = vmatprep.subr.mxu0 0.0
    %3405 = vmatpush2.msra.mxu0 0.0
    %3406 = vmatprep.subr.mxu0 0.0
    %3407 = vmatpush2.msra.mxu0 0.0
    %3408 = vmatprep.subr.mxu0 0.0
    %3409 = vmatpush2.msra.mxu0 0.0
    %3410 = vmatprep.subr.mxu0 0.0
    %3411 = vmatpush2.msra.mxu0 0.0
    %3412 = vmatprep.subr.mxu0 0.0
    %3413 = vmatpush2.msra.mxu0 0.0
    %3414 = vmatprep.subr.mxu0 0.0
    %3415 = vmatpush2.msra.mxu0 0.0
    %3416 = vmatprep.subr.mxu0 0.0
    %3417 = vmatpush2.msra.mxu0 0.0
    %3418 = vmatprep.subr.mxu0 0.0
    %3419 = vmatpush2.msra.mxu0 0.0
    %3420 = vmatprep.subr.mxu0 0.0
    %3421 = vmatpush2.msra.mxu0 0.0
    %3422 = vmatprep.subr.mxu0 0.0
    %3423 = vmatpush2.msra.mxu0 0.0
    %3424 = vmatprep.subr.mxu0 0.0
    %3425 = vmatpush2.msra.mxu0 0.0
    %3426 = vmatprep.subr.mxu0 0.0
    %3427 = vmatpush2.msra.mxu0 0.0
    %3428 = vmatprep.mubr.f32.mxu0 0.0
    %3429 = vmatmul.mubr.f32.gmra.mxu0 %v3359
    %v3430 = vpop.f32.mrf.mxu0
    %v3431 = vadd.f32 %v2145, %v3430
    %v3432 = vpop.f32.mrf.mxu0
    %3433 = vmatprep.mubr.f32.mxu0 0.0
    %3434 = vmatmul.mubr.f32.gmra.mxu0 %v3362
    %v3435 = vpop.f32.mrf.mxu0
    %v3436 = vadd.f32 %v2145, %v3435
    %v3437 = vpop.f32.mrf.mxu0
    %3438 = vdwg.mxu0
    %3439 = vmatprep.subr.mxu0 0.0
    %3440 = vmatpush1.msra.mxu0 0.0
    %3441 = vmatprep.subr.mxu0 0.0
    %3442 = vmatpush1.msra.mxu0 0.0
    %3443 = vmatprep.subr.mxu0 0.0
    %3444 = vmatpush1.msra.mxu0 0.0
    %3445 = vmatprep.subr.mxu0 0.0
    %3446 = vmatpush1.msra.mxu0 0.0
    %3447 = vmatprep.subr.mxu0 0.0
    %3448 = vmatpush1.msra.mxu0 0.0
    %3449 = vmatprep.subr.mxu0 0.0
    %3450 = vmatpush1.msra.mxu0 0.0
    %3451 = vmatprep.subr.mxu0 0.0
    %3452 = vmatpush1.msra.mxu0 0.0
    %3453 = vmatprep.subr.mxu0 0.0
    %3454 = vmatpush1.msra.mxu0 0.0
    %3455 = vmatprep.subr.mxu0 0.0
    %3456 = vmatpush1.msra.mxu0 0.0
    %3457 = vmatprep.subr.mxu0 0.0
    %3458 = vmatpush1.msra.mxu0 0.0
    %3459 = vmatprep.subr.mxu0 0.0
    %3460 = vmatpush1.msra.mxu0 0.0
    %3461 = vmatprep.subr.mxu0 0.0
    %3462 = vmatpush1.msra.mxu0 0.0
    %3463 = vmatprep.subr.mxu0 0.0
    %3464 = vmatpush1.msra.mxu0 %v1128
    %3465 = vmatprep.subr.mxu0 0.0
    %3466 = vmatpush1.msra.mxu0 %v1127
    %3467 = vmatprep.subr.mxu0 0.0
    %3468 = vmatpush1.msra.mxu0 %v1126
    %3469 = vmatprep.subr.mxu0 0.0
    %3470 = vmatpush1.msra.mxu0 %v1125
    %3471 = vmatprep.subr.mxu0 0.0
    %3472 = vmatpush2.msra.mxu0 0.0
    %3473 = vmatprep.subr.mxu0 0.0
    %3474 = vmatpush2.msra.mxu0 0.0
    %3475 = vmatprep.subr.mxu0 0.0
    %3476 = vmatpush2.msra.mxu0 0.0
    %3477 = vmatprep.subr.mxu0 0.0
    %3478 = vmatpush2.msra.mxu0 0.0
    %3479 = vmatprep.subr.mxu0 0.0
    %3480 = vmatpush2.msra.mxu0 0.0
    %3481 = vmatprep.subr.mxu0 0.0
    %3482 = vmatpush2.msra.mxu0 0.0
    %3483 = vmatprep.subr.mxu0 0.0
    %3484 = vmatpush2.msra.mxu0 0.0
    %3485 = vmatprep.subr.mxu0 0.0
    %3486 = vmatpush2.msra.mxu0 0.0
    %3487 = vmatprep.subr.mxu0 0.0
    %3488 = vmatpush2.msra.mxu0 0.0
    %3489 = vmatprep.subr.mxu0 0.0
    %3490 = vmatpush2.msra.mxu0 0.0
    %3491 = vmatprep.subr.mxu0 0.0
    %3492 = vmatpush2.msra.mxu0 0.0
    %3493 = vmatprep.subr.mxu0 0.0
    %3494 = vmatpush2.msra.mxu0 0.0
    %3495 = vmatprep.subr.mxu0 0.0
    %3496 = vmatpush2.msra.mxu0 0.0
    %3497 = vmatprep.subr.mxu0 0.0
    %3498 = vmatpush2.msra.mxu0 0.0
    %3499 = vmatprep.subr.mxu0 0.0
    %3500 = vmatpush2.msra.mxu0 0.0
    %3501 = vmatprep.subr.mxu0 0.0
    %3502 = vmatpush2.msra.mxu0 0.0
    %3503 = vmatprep.mubr.f32.mxu0 0.0
    %3504 = vmatmul.mubr.f32.gmra.mxu0 %v3200
    %v3505 = vpop.f32.mrf.mxu0
    %v3506 = vadd.f32 %v2232, %v3505
    %v3507 = vpop.f32.mrf.mxu0
    %3508 = vmatprep.mubr.f32.mxu0 0.0
    %3509 = vmatmul.mubr.f32.gmra.mxu0 %v3202
    %v3510 = vpop.f32.mrf.mxu0
    %v3511 = vadd.f32 %v2232, %v3510
    %v3512 = vpop.f32.mrf.mxu0
    %3513 = vdwg.mxu0
    %v3514 = vadd.f32 %v3431, %v3506
    %v3515 = vadd.f32 %v3436, %v3511
    %v3516 = vxor.u32 %v3514, 2147483648
    %v3517 = vxor.u32 %v3515, 2147483648
    %v3518 = vmul.f32 %v3516, 1.442695
    %v3519 = vpow.pop %v3518
    %v3520 = vmul.f32 %v3517, 1.442695
    %v3521 = vpow.pop %v3520
    %v3522 = vadd.f32 %v3519, 1.0
    %v3523 = vadd.f32 %v3521, 1.0
    %v3524 = vrcp.pop %v3522
    %v3525 = vmul.f32 1.0, %v3524
    %v3526 = vrcp.pop %v3523
    %v3527 = vmul.f32 1.0, %v3526
    %3530 = vrot.lane.b32.xlu0 %v3506, 64
    %v3531 = vpop.permute.xlu0 %3530
    %3532 = vrot.lane.b32.xlu0 %v3511, 64
    %v3533 = vpop.permute.xlu0 %3532
    %v3536 = vmul.f32 %v3525, %v3531
    %v3537 = vmul.f32 %v3527, %v3533
    %3540 = vrot.lane.b32.xlu0 %v3536, 64
    %v3541 = vpop.permute.xlu0 %3540
    %3542 = vrot.lane.b32.xlu0 %v3537, 64
    %v3543 = vpop.permute.xlu0 %3542
    %v3546 = vadd.f32 %v3431, %v3541
    %v3547 = vadd.f32 %v3436, %v3543
    %v3548 = vtanh.pop %v3546
    %v3549 = vtanh.pop %v3547
    %v3550 = vsub.f32 1.0, %v3525
    %v3551 = vsub.f32 1.0, %v3527
    %3554 = vrot.lane.b32.xlu0 %v3548, 96
    %v3555 = vpop.permute.xlu0 %3554
    %3556 = vrot.lane.b32.xlu0 %v3549, 96
    %v3557 = vpop.permute.xlu0 %3556
    %v3560 = vmul.f32 %v3550, %v3555
    %v3561 = vmul.f32 %v3551, %v3557
    %v3562 = vmul.f32 %v3525, %v2365
    %v3563 = vmul.f32 %v3527, %v2366
    %v3564 = vadd.f32 %v3560, %v3562
    %v3565 = vadd.f32 %v3561, %v3563
    %3568 = vrot.lane.b32.xlu0 %v3564, 96
    %v3569 = vpop.permute.xlu0 %3568
    %3570 = vrot.lane.b32.xlu0 %v3565, 96
    %v3571 = vpop.permute.xlu0 %3570
    %3574 = vmatprep.subr.mxu0 0.0
    %3575 = vmatpush1.msra.mxu0 0.0
    %3576 = vmatprep.subr.mxu0 0.0
    %3577 = vmatpush1.msra.mxu0 0.0
    %3578 = vmatprep.subr.mxu0 0.0
    %3579 = vmatpush1.msra.mxu0 0.0
    %3580 = vmatprep.subr.mxu0 0.0
    %3581 = vmatpush1.msra.mxu0 0.0
    %3582 = vmatprep.subr.mxu0 0.0
    %3583 = vmatpush1.msra.mxu0 0.0
    %3584 = vmatprep.subr.mxu0 0.0
    %3585 = vmatpush1.msra.mxu0 0.0
    %3586 = vmatprep.subr.mxu0 0.0
    %3587 = vmatpush1.msra.mxu0 0.0
    %3588 = vmatprep.subr.mxu0 0.0
    %3589 = vmatpush1.msra.mxu0 0.0
    %3590 = vmatprep.subr.mxu0 0.0
    %3591 = vmatpush1.msra.mxu0 0.0
    %3592 = vmatprep.subr.mxu0 0.0
    %3593 = vmatpush1.msra.mxu0 0.0
    %3594 = vmatprep.subr.mxu0 0.0
    %3595 = vmatpush1.msra.mxu0 0.0
    %3596 = vmatprep.subr.mxu0 0.0
    %3597 = vmatpush1.msra.mxu0 0.0
    %3598 = vmatprep.subr.mxu0 0.0
    %3599 = vmatpush1.msra.mxu0 0.0
    %3600 = vmatprep.subr.mxu0 0.0
    %3601 = vmatpush1.msra.mxu0 0.0
    %3602 = vmatprep.subr.mxu0 0.0
    %3603 = vmatpush1.msra.mxu0 %v3571
    %3604 = vmatprep.subr.mxu0 0.0
    %3605 = vmatpush1.msra.mxu0 %v3569
    %3606 = vmatprep.subr.mxu0 0.0
    %3607 = vmatpush2.msra.mxu0 0.0
    %3608 = vmatprep.subr.mxu0 0.0
    %3609 = vmatpush2.msra.mxu0 0.0
    %3610 = vmatprep.subr.mxu0 0.0
    %3611 = vmatpush2.msra.mxu0 0.0
    %3612 = vmatprep.subr.mxu0 0.0
    %3613 = vmatpush2.msra.mxu0 0.0
    %3614 = vmatprep.subr.mxu0 0.0
    %3615 = vmatpush2.msra.mxu0 0.0
    %3616 = vmatprep.subr.mxu0 0.0
    %3617 = vmatpush2.msra.mxu0 0.0
    %3618 = vmatprep.subr.mxu0 0.0
    %3619 = vmatpush2.msra.mxu0 0.0
    %3620 = vmatprep.subr.mxu0 0.0
    %3621 = vmatpush2.msra.mxu0 0.0
    %3622 = vmatprep.subr.mxu0 0.0
    %3623 = vmatpush2.msra.mxu0 0.0
    %3624 = vmatprep.subr.mxu0 0.0
    %3625 = vmatpush2.msra.mxu0 0.0
    %3626 = vmatprep.subr.mxu0 0.0
    %3627 = vmatpush2.msra.mxu0 0.0
    %3628 = vmatprep.subr.mxu0 0.0
    %3629 = vmatpush2.msra.mxu0 0.0
    %3630 = vmatprep.subr.mxu0 0.0
    %3631 = vmatpush2.msra.mxu0 0.0
    %3632 = vmatprep.subr.mxu0 0.0
    %3633 = vmatpush2.msra.mxu0 0.0
    %3634 = vmatprep.subr.mxu0 0.0
    %3635 = vmatpush2.msra.mxu0 0.0
    %3636 = vmatprep.subr.mxu0 0.0
    %3637 = vmatpush2.msra.mxu0 0.0
    %3638 = vmatprep.mubr.f32.mxu0 0.0
    %3639 = vmatmul.mubr.f32.gmra.mxu0 %v1132
    %v3640 = vpop.f32.mrf.mxu0
    %v3641 = vadd.f32 0.0, %v3640
    %v3642 = vpop.f32.mrf.mxu0
    %3643 = vmatprep.mubr.f32.mxu0 0.0
    %3644 = vmatmul.mubr.f32.gmra.mxu0 %v1135
    %v3645 = vpop.f32.mrf.mxu0
    %v3646 = vadd.f32 0.0, %v3645
    %v3647 = vpop.f32.mrf.mxu0
    %3648 = vmatprep.mubr.f32.mxu0 0.0
    %3649 = vmatmul.mubr.f32.gmra.mxu0 %v1138
    %v3650 = vpop.f32.mrf.mxu0
    %v3651 = vadd.f32 0.0, %v3650
    %v3652 = vpop.f32.mrf.mxu0
    %3653 = vmatprep.mubr.f32.mxu0 0.0
    %3654 = vmatmul.mubr.f32.gmra.mxu0 %v1141
    %v3655 = vpop.f32.mrf.mxu0
    %v3656 = vadd.f32 0.0, %v3655
    %v3657 = vpop.f32.mrf.mxu0
    %3658 = vdwg.mxu0
    %v3660 = vsel %vm1228, %v3641, 0
    %v3663 = vsel %vm1228, %v3646, 0
    %v3666 = vsel %vm1228, %v3651, 0
    %v3669 = vsel %vm1228, %v3656, 0
    %3671 = vmatprep.subr.mxu0 0.0
    %3672 = vmatpush1.msra.mxu0 0.0
    %3673 = vmatprep.subr.mxu0 0.0
    %3674 = vmatpush1.msra.mxu0 0.0
    %3675 = vmatprep.subr.mxu0 0.0
    %3676 = vmatpush1.msra.mxu0 0.0
    %3677 = vmatprep.subr.mxu0 0.0
    %3678 = vmatpush1.msra.mxu0 0.0
    %3679 = vmatprep.subr.mxu0 0.0
    %3680 = vmatpush1.msra.mxu0 0.0
    %3681 = vmatprep.subr.mxu0 0.0
    %3682 = vmatpush1.msra.mxu0 0.0
    %3683 = vmatprep.subr.mxu0 0.0
    %3684 = vmatpush1.msra.mxu0 0.0
    %3685 = vmatprep.subr.mxu0 0.0
    %3686 = vmatpush1.msra.mxu0 0.0
    %3687 = vmatprep.subr.mxu0 0.0
    %3688 = vmatpush1.msra.mxu0 0.0
    %3689 = vmatprep.subr.mxu0 0.0
    %3690 = vmatpush1.msra.mxu0 0.0
    %3691 = vmatprep.subr.mxu0 0.0
    %3692 = vmatpush1.msra.mxu0 0.0
    %3693 = vmatprep.subr.mxu0 0.0
    %3694 = vmatpush1.msra.mxu0 0.0
    %3695 = vmatprep.subr.mxu0 %v981
    %3696 = vmatpush1.msra.mxu0 %v980
    %3697 = vmatprep.subr.mxu0 %v973
    %3698 = vmatpush1.msra.mxu0 %v972
    %3699 = vmatprep.subr.mxu0 %v965
    %3700 = vmatpush1.msra.mxu0 %v964
    %3701 = vmatprep.subr.mxu0 %v957
    %3702 = vmatpush1.msra.mxu0 %v956
    %3703 = vmatprep.subr.mxu0 0.0
    %3704 = vmatpush2.msra.mxu0 0.0
    %3705 = vmatprep.subr.mxu0 0.0
    %3706 = vmatpush2.msra.mxu0 0.0
    %3707 = vmatprep.subr.mxu0 0.0
    %3708 = vmatpush2.msra.mxu0 0.0
    %3709 = vmatprep.subr.mxu0 0.0
    %3710 = vmatpush2.msra.mxu0 0.0
    %3711 = vmatprep.subr.mxu0 0.0
    %3712 = vmatpush2.msra.mxu0 0.0
    %3713 = vmatprep.subr.mxu0 0.0
    %3714 = vmatpush2.msra.mxu0 0.0
    %3715 = vmatprep.subr.mxu0 0.0
    %3716 = vmatpush2.msra.mxu0 0.0
    %3717 = vmatprep.subr.mxu0 0.0
    %3718 = vmatpush2.msra.mxu0 0.0
    %3719 = vmatprep.subr.mxu0 0.0
    %3720 = vmatpush2.msra.mxu0 0.0
    %3721 = vmatprep.subr.mxu0 0.0
    %3722 = vmatpush2.msra.mxu0 0.0
    %3723 = vmatprep.subr.mxu0 0.0
    %3724 = vmatpush2.msra.mxu0 0.0
    %3725 = vmatprep.subr.mxu0 0.0
    %3726 = vmatpush2.msra.mxu0 0.0
    %3727 = vmatprep.subr.mxu0 0.0
    %3728 = vmatpush2.msra.mxu0 0.0
    %3729 = vmatprep.subr.mxu0 0.0
    %3730 = vmatpush2.msra.mxu0 0.0
    %3731 = vmatprep.subr.mxu0 0.0
    %3732 = vmatpush2.msra.mxu0 0.0
    %3733 = vmatprep.subr.mxu0 0.0
    %3734 = vmatpush2.msra.mxu0 0.0
    %3735 = vmatprep.mubr.f32.mxu0 0.0
    %3736 = vmatmul.mubr.f32.gmra.mxu0 %v3660
    %v3737 = vpop.f32.mrf.mxu0
    %v3738 = vadd.f32 0.0, %v3737
    %v3739 = vpop.f32.mrf.mxu0
    %v3740 = vadd.f32 0.0, %v3739
    %3741 = vmatprep.mubr.f32.mxu0 0.0
    %3742 = vmatmul.mubr.f32.gmra.mxu0 %v3663
    %v3743 = vpop.f32.mrf.mxu0
    %v3744 = vadd.f32 0.0, %v3743
    %v3745 = vpop.f32.mrf.mxu0
    %v3746 = vadd.f32 0.0, %v3745
    %3747 = vmatprep.mubr.f32.mxu0 0.0
    %3748 = vmatmul.mubr.f32.gmra.mxu0 %v3666
    %v3749 = vpop.f32.mrf.mxu0
    %v3750 = vadd.f32 0.0, %v3749
    %v3751 = vpop.f32.mrf.mxu0
    %v3752 = vadd.f32 0.0, %v3751
    %3753 = vmatprep.mubr.f32.mxu0 0.0
    %3754 = vmatmul.mubr.f32.gmra.mxu0 %v3669
    %v3755 = vpop.f32.mrf.mxu0
    %v3756 = vadd.f32 0.0, %v3755
    %v3757 = vpop.f32.mrf.mxu0
    %v3758 = vadd.f32 0.0, %v3757
    %3759 = vdwg.mxu0
    %3760 = vmatprep.subr.mxu0 0.0
    %3761 = vmatpush1.msra.mxu0 0.0
    %3762 = vmatprep.subr.mxu0 0.0
    %3763 = vmatpush1.msra.mxu0 0.0
    %3764 = vmatprep.subr.mxu0 0.0
    %3765 = vmatpush1.msra.mxu0 0.0
    %3766 = vmatprep.subr.mxu0 0.0
    %3767 = vmatpush1.msra.mxu0 0.0
    %3768 = vmatprep.subr.mxu0 0.0
    %3769 = vmatpush1.msra.mxu0 0.0
    %3770 = vmatprep.subr.mxu0 0.0
    %3771 = vmatpush1.msra.mxu0 0.0
    %3772 = vmatprep.subr.mxu0 0.0
    %3773 = vmatpush1.msra.mxu0 0.0
    %3774 = vmatprep.subr.mxu0 0.0
    %3775 = vmatpush1.msra.mxu0 0.0
    %3776 = vmatprep.subr.mxu0 0.0
    %3777 = vmatpush1.msra.mxu0 0.0
    %3778 = vmatprep.subr.mxu0 0.0
    %3779 = vmatpush1.msra.mxu0 0.0
    %3780 = vmatprep.subr.mxu0 0.0
    %3781 = vmatpush1.msra.mxu0 0.0
    %3782 = vmatprep.subr.mxu0 0.0
    %3783 = vmatpush1.msra.mxu0 0.0
    %3784 = vmatprep.subr.mxu0 %v983
    %3785 = vmatpush1.msra.mxu0 %v982
    %3786 = vmatprep.subr.mxu0 %v975
    %3787 = vmatpush1.msra.mxu0 %v974
    %3788 = vmatprep.subr.mxu0 %v967
    %3789 = vmatpush1.msra.mxu0 %v966
    %3790 = vmatprep.subr.mxu0 %v959
    %3791 = vmatpush1.msra.mxu0 %v958
    %3792 = vmatprep.subr.mxu0 0.0
    %3793 = vmatpush2.msra.mxu0 0.0
    %3794 = vmatprep.subr.mxu0 0.0
    %3795 = vmatpush2.msra.mxu0 0.0
    %3796 = vmatprep.subr.mxu0 0.0
    %3797 = vmatpush2.msra.mxu0 0.0
    %3798 = vmatprep.subr.mxu0 0.0
    %3799 = vmatpush2.msra.mxu0 0.0
    %3800 = vmatprep.subr.mxu0 0.0
    %3801 = vmatpush2.msra.mxu0 0.0
    %3802 = vmatprep.subr.mxu0 0.0
    %3803 = vmatpush2.msra.mxu0 0.0
    %3804 = vmatprep.subr.mxu0 0.0
    %3805 = vmatpush2.msra.mxu0 0.0
    %3806 = vmatprep.subr.mxu0 0.0
    %3807 = vmatpush2.msra.mxu0 0.0
    %3808 = vmatprep.subr.mxu0 0.0
    %3809 = vmatpush2.msra.mxu0 0.0
    %3810 = vmatprep.subr.mxu0 0.0
    %3811 = vmatpush2.msra.mxu0 0.0
    %3812 = vmatprep.subr.mxu0 0.0
    %3813 = vmatpush2.msra.mxu0 0.0
    %3814 = vmatprep.subr.mxu0 0.0
    %3815 = vmatpush2.msra.mxu0 0.0
    %3816 = vmatprep.subr.mxu0 0.0
    %3817 = vmatpush2.msra.mxu0 0.0
    %3818 = vmatprep.subr.mxu0 0.0
    %3819 = vmatpush2.msra.mxu0 0.0
    %3820 = vmatprep.subr.mxu0 0.0
    %3821 = vmatpush2.msra.mxu0 0.0
    %3822 = vmatprep.subr.mxu0 0.0
    %3823 = vmatpush2.msra.mxu0 0.0
    %3824 = vmatprep.mubr.f32.mxu0 0.0
    %3825 = vmatmul.mubr.f32.gmra.mxu0 %v3660
    %v3826 = vpop.f32.mrf.mxu0
    %v3827 = vadd.f32 0.0, %v3826
    %v3828 = vpop.f32.mrf.mxu0
    %v3829 = vadd.f32 0.0, %v3828
    %3830 = vmatprep.mubr.f32.mxu0 0.0
    %3831 = vmatmul.mubr.f32.gmra.mxu0 %v3663
    %v3832 = vpop.f32.mrf.mxu0
    %v3833 = vadd.f32 0.0, %v3832
    %v3834 = vpop.f32.mrf.mxu0
    %v3835 = vadd.f32 0.0, %v3834
    %3836 = vmatprep.mubr.f32.mxu0 0.0
    %3837 = vmatmul.mubr.f32.gmra.mxu0 %v3666
    %v3838 = vpop.f32.mrf.mxu0
    %v3839 = vadd.f32 0.0, %v3838
    %v3840 = vpop.f32.mrf.mxu0
    %v3841 = vadd.f32 0.0, %v3840
    %3842 = vmatprep.mubr.f32.mxu0 0.0
    %3843 = vmatmul.mubr.f32.gmra.mxu0 %v3669
    %v3844 = vpop.f32.mrf.mxu0
    %v3845 = vadd.f32 0.0, %v3844
    %v3846 = vpop.f32.mrf.mxu0
    %v3847 = vadd.f32 0.0, %v3846
    %3848 = vdwg.mxu0
    %3849 = vmatprep.subr.mxu0 0.0
    %3850 = vmatpush1.msra.mxu0 0.0
    %3851 = vmatprep.subr.mxu0 0.0
    %3852 = vmatpush1.msra.mxu0 0.0
    %3853 = vmatprep.subr.mxu0 0.0
    %3854 = vmatpush1.msra.mxu0 0.0
    %3855 = vmatprep.subr.mxu0 0.0
    %3856 = vmatpush1.msra.mxu0 0.0
    %3857 = vmatprep.subr.mxu0 0.0
    %3858 = vmatpush1.msra.mxu0 0.0
    %3859 = vmatprep.subr.mxu0 0.0
    %3860 = vmatpush1.msra.mxu0 0.0
    %3861 = vmatprep.subr.mxu0 0.0
    %3862 = vmatpush1.msra.mxu0 0.0
    %3863 = vmatprep.subr.mxu0 0.0
    %3864 = vmatpush1.msra.mxu0 0.0
    %3865 = vmatprep.subr.mxu0 0.0
    %3866 = vmatpush1.msra.mxu0 0.0
    %3867 = vmatprep.subr.mxu0 0.0
    %3868 = vmatpush1.msra.mxu0 0.0
    %3869 = vmatprep.subr.mxu0 0.0
    %3870 = vmatpush1.msra.mxu0 0.0
    %3871 = vmatprep.subr.mxu0 0.0
    %3872 = vmatpush1.msra.mxu0 0.0
    %3873 = vmatprep.subr.mxu0 %v985
    %3874 = vmatpush1.msra.mxu0 %v984
    %3875 = vmatprep.subr.mxu0 %v977
    %3876 = vmatpush1.msra.mxu0 %v976
    %3877 = vmatprep.subr.mxu0 %v969
    %3878 = vmatpush1.msra.mxu0 %v968
    %3879 = vmatprep.subr.mxu0 %v961
    %3880 = vmatpush1.msra.mxu0 %v960
    %3881 = vmatprep.subr.mxu0 0.0
    %3882 = vmatpush2.msra.mxu0 0.0
    %3883 = vmatprep.subr.mxu0 0.0
    %3884 = vmatpush2.msra.mxu0 0.0
    %3885 = vmatprep.subr.mxu0 0.0
    %3886 = vmatpush2.msra.mxu0 0.0
    %3887 = vmatprep.subr.mxu0 0.0
    %3888 = vmatpush2.msra.mxu0 0.0
    %3889 = vmatprep.subr.mxu0 0.0
    %3890 = vmatpush2.msra.mxu0 0.0
    %3891 = vmatprep.subr.mxu0 0.0
    %3892 = vmatpush2.msra.mxu0 0.0
    %3893 = vmatprep.subr.mxu0 0.0
    %3894 = vmatpush2.msra.mxu0 0.0
    %3895 = vmatprep.subr.mxu0 0.0
    %3896 = vmatpush2.msra.mxu0 0.0
    %3897 = vmatprep.subr.mxu0 0.0
    %3898 = vmatpush2.msra.mxu0 0.0
    %3899 = vmatprep.subr.mxu0 0.0
    %3900 = vmatpush2.msra.mxu0 0.0
    %3901 = vmatprep.subr.mxu0 0.0
    %3902 = vmatpush2.msra.mxu0 0.0
    %3903 = vmatprep.subr.mxu0 0.0
    %3904 = vmatpush2.msra.mxu0 0.0
    %3905 = vmatprep.subr.mxu0 0.0
    %3906 = vmatpush2.msra.mxu0 0.0
    %3907 = vmatprep.subr.mxu0 0.0
    %3908 = vmatpush2.msra.mxu0 0.0
    %3909 = vmatprep.subr.mxu0 0.0
    %3910 = vmatpush2.msra.mxu0 0.0
    %3911 = vmatprep.subr.mxu0 0.0
    %3912 = vmatpush2.msra.mxu0 0.0
    %3913 = vmatprep.mubr.f32.mxu0 0.0
    %3914 = vmatmul.mubr.f32.gmra.mxu0 %v3660
    %v3915 = vpop.f32.mrf.mxu0
    %v3916 = vadd.f32 0.0, %v3915
    %v3917 = vpop.f32.mrf.mxu0
    %v3918 = vadd.f32 0.0, %v3917
    %3919 = vmatprep.mubr.f32.mxu0 0.0
    %3920 = vmatmul.mubr.f32.gmra.mxu0 %v3663
    %v3921 = vpop.f32.mrf.mxu0
    %v3922 = vadd.f32 0.0, %v3921
    %v3923 = vpop.f32.mrf.mxu0
    %v3924 = vadd.f32 0.0, %v3923
    %3925 = vmatprep.mubr.f32.mxu0 0.0
    %3926 = vmatmul.mubr.f32.gmra.mxu0 %v3666
    %v3927 = vpop.f32.mrf.mxu0
    %v3928 = vadd.f32 0.0, %v3927
    %v3929 = vpop.f32.mrf.mxu0
    %v3930 = vadd.f32 0.0, %v3929
    %3931 = vmatprep.mubr.f32.mxu0 0.0
    %3932 = vmatmul.mubr.f32.gmra.mxu0 %v3669
    %v3933 = vpop.f32.mrf.mxu0
    %v3934 = vadd.f32 0.0, %v3933
    %v3935 = vpop.f32.mrf.mxu0
    %v3936 = vadd.f32 0.0, %v3935
    %3937 = vdwg.mxu0
    %3938 = vmatprep.subr.mxu0 0.0
    %3939 = vmatpush1.msra.mxu0 0.0
    %3940 = vmatprep.subr.mxu0 0.0
    %3941 = vmatpush1.msra.mxu0 0.0
    %3942 = vmatprep.subr.mxu0 0.0
    %3943 = vmatpush1.msra.mxu0 0.0
    %3944 = vmatprep.subr.mxu0 0.0
    %3945 = vmatpush1.msra.mxu0 0.0
    %3946 = vmatprep.subr.mxu0 0.0
    %3947 = vmatpush1.msra.mxu0 0.0
    %3948 = vmatprep.subr.mxu0 0.0
    %3949 = vmatpush1.msra.mxu0 0.0
    %3950 = vmatprep.subr.mxu0 0.0
    %3951 = vmatpush1.msra.mxu0 0.0
    %3952 = vmatprep.subr.mxu0 0.0
    %3953 = vmatpush1.msra.mxu0 0.0
    %3954 = vmatprep.subr.mxu0 0.0
    %3955 = vmatpush1.msra.mxu0 0.0
    %3956 = vmatprep.subr.mxu0 0.0
    %3957 = vmatpush1.msra.mxu0 0.0
    %3958 = vmatprep.subr.mxu0 0.0
    %3959 = vmatpush1.msra.mxu0 0.0
    %3960 = vmatprep.subr.mxu0 0.0
    %3961 = vmatpush1.msra.mxu0 0.0
    %3962 = vmatprep.subr.mxu0 %v987
    %3963 = vmatpush1.msra.mxu0 %v986
    %3964 = vmatprep.subr.mxu0 %v979
    %3965 = vmatpush1.msra.mxu0 %v978
    %3966 = vmatprep.subr.mxu0 %v971
    %3967 = vmatpush1.msra.mxu0 %v970
    %3968 = vmatprep.subr.mxu0 %v963
    %3969 = vmatpush1.msra.mxu0 %v962
    %3970 = vmatprep.subr.mxu0 0.0
    %3971 = vmatpush2.msra.mxu0 0.0
    %3972 = vmatprep.subr.mxu0 0.0
    %3973 = vmatpush2.msra.mxu0 0.0
    %3974 = vmatprep.subr.mxu0 0.0
    %3975 = vmatpush2.msra.mxu0 0.0
    %3976 = vmatprep.subr.mxu0 0.0
    %3977 = vmatpush2.msra.mxu0 0.0
    %3978 = vmatprep.subr.mxu0 0.0
    %3979 = vmatpush2.msra.mxu0 0.0
    %3980 = vmatprep.subr.mxu0 0.0
    %3981 = vmatpush2.msra.mxu0 0.0
    %3982 = vmatprep.subr.mxu0 0.0
    %3983 = vmatpush2.msra.mxu0 0.0
    %3984 = vmatprep.subr.mxu0 0.0
    %3985 = vmatpush2.msra.mxu0 0.0
    %3986 = vmatprep.subr.mxu0 0.0
    %3987 = vmatpush2.msra.mxu0 0.0
    %3988 = vmatprep.subr.mxu0 0.0
    %3989 = vmatpush2.msra.mxu0 0.0
    %3990 = vmatprep.subr.mxu0 0.0
    %3991 = vmatpush2.msra.mxu0 0.0
    %3992 = vmatprep.subr.mxu0 0.0
    %3993 = vmatpush2.msra.mxu0 0.0
    %3994 = vmatprep.subr.mxu0 0.0
    %3995 = vmatpush2.msra.mxu0 0.0
    %3996 = vmatprep.subr.mxu0 0.0
    %3997 = vmatpush2.msra.mxu0 0.0
    %3998 = vmatprep.subr.mxu0 0.0
    %3999 = vmatpush2.msra.mxu0 0.0
    %4000 = vmatprep.subr.mxu0 0.0
    %4001 = vmatpush2.msra.mxu0 0.0
    %4002 = vmatprep.mubr.f32.mxu0 0.0
    %4003 = vmatmul.mubr.f32.gmra.mxu0 %v3660
    %v4004 = vpop.f32.mrf.mxu0
    %v4005 = vadd.f32 0.0, %v4004
    %v4006 = vpop.f32.mrf.mxu0
    %v4007 = vadd.f32 0.0, %v4006
    %4008 = vmatprep.mubr.f32.mxu0 0.0
    %4009 = vmatmul.mubr.f32.gmra.mxu0 %v3663
    %v4010 = vpop.f32.mrf.mxu0
    %v4011 = vadd.f32 0.0, %v4010
    %v4012 = vpop.f32.mrf.mxu0
    %v4013 = vadd.f32 0.0, %v4012
    %4014 = vmatprep.mubr.f32.mxu0 0.0
    %4015 = vmatmul.mubr.f32.gmra.mxu0 %v3666
    %v4016 = vpop.f32.mrf.mxu0
    %v4017 = vadd.f32 0.0, %v4016
    %v4018 = vpop.f32.mrf.mxu0
    %v4019 = vadd.f32 0.0, %v4018
    %4020 = vmatprep.mubr.f32.mxu0 0.0
    %4021 = vmatmul.mubr.f32.gmra.mxu0 %v3669
    %v4022 = vpop.f32.mrf.mxu0
    %v4023 = vadd.f32 0.0, %v4022
    %v4024 = vpop.f32.mrf.mxu0
    %v4025 = vadd.f32 0.0, %v4024
    %4026 = vdwg.mxu0
    %v4027 = vmul.f32 %v3738, %v667
    %v4028 = vmul.f32 %v3740, %v669
    %v4029 = vmul.f32 %v3827, %v756
    %v4030 = vmul.f32 %v3829, %v758
    %v4031 = vmul.f32 %v3916, %v845
    %v4032 = vmul.f32 %v3918, %v847
    %v4033 = vmul.f32 %v4005, %v934
    %v4034 = vmul.f32 %v4007, %v936
    %v4035 = vmul.f32 %v3744, %v673
    %v4036 = vmul.f32 %v3746, %v675
    %v4037 = vmul.f32 %v3833, %v762
    %v4038 = vmul.f32 %v3835, %v764
    %v4039 = vmul.f32 %v3922, %v851
    %v4040 = vmul.f32 %v3924, %v853
    %v4041 = vmul.f32 %v4011, %v940
    %v4042 = vmul.f32 %v4013, %v942
    %v4043 = vmul.f32 %v3750, %v679
    %v4044 = vmul.f32 %v3752, %v681
    %v4045 = vmul.f32 %v3839, %v768
    %v4046 = vmul.f32 %v3841, %v770
    %v4047 = vmul.f32 %v3928, %v857
    %v4048 = vmul.f32 %v3930, %v859
    %v4049 = vmul.f32 %v4017, %v946
    %v4050 = vmul.f32 %v4019, %v948
    %v4051 = vmul.f32 %v3756, %v685
    %v4052 = vmul.f32 %v3758, %v687
    %v4053 = vmul.f32 %v3845, %v774
    %v4054 = vmul.f32 %v3847, %v776
    %v4055 = vmul.f32 %v3934, %v863
    %v4056 = vmul.f32 %v3936, %v865
    %v4057 = vmul.f32 %v4023, %v952
    %v4058 = vmul.f32 %v4025, %v954
    %4059 = vmatprep.subr.mxu0 0.0
    %4060 = vmatpush1.msra.mxu0 %v1003
    %4061 = vmatprep.subr.mxu0 0.0
    %4062 = vmatpush1.msra.mxu0 %v1002
    %4063 = vmatprep.subr.mxu0 0.0
    %4064 = vmatpush1.msra.mxu0 %v1001
    %4065 = vmatprep.subr.mxu0 0.0
    %4066 = vmatpush1.msra.mxu0 %v1000
    %4067 = vmatprep.subr.mxu0 0.0
    %4068 = vmatpush1.msra.mxu0 %v999
    %4069 = vmatprep.subr.mxu0 0.0
    %4070 = vmatpush1.msra.mxu0 %v998
    %4071 = vmatprep.subr.mxu0 0.0
    %4072 = vmatpush1.msra.mxu0 %v997
    %4073 = vmatprep.subr.mxu0 0.0
    %4074 = vmatpush1.msra.mxu0 %v996
    %4075 = vmatprep.subr.mxu0 0.0
    %4076 = vmatpush1.msra.mxu0 %v995
    %4077 = vmatprep.subr.mxu0 0.0
    %4078 = vmatpush1.msra.mxu0 %v994
    %4079 = vmatprep.subr.mxu0 0.0
    %4080 = vmatpush1.msra.mxu0 %v993
    %4081 = vmatprep.subr.mxu0 0.0
    %4082 = vmatpush1.msra.mxu0 %v992
    %4083 = vmatprep.subr.mxu0 0.0
    %4084 = vmatpush1.msra.mxu0 %v991
    %4085 = vmatprep.subr.mxu0 0.0
    %4086 = vmatpush1.msra.mxu0 %v990
    %4087 = vmatprep.subr.mxu0 0.0
    %4088 = vmatpush1.msra.mxu0 %v989
    %4089 = vmatprep.subr.mxu0 0.0
    %4090 = vmatpush1.msra.mxu0 %v988
    %4091 = vmatprep.subr.mxu0 0.0
    %4092 = vmatpush2.msra.mxu0 %v1019
    %4093 = vmatprep.subr.mxu0 0.0
    %4094 = vmatpush2.msra.mxu0 %v1018
    %4095 = vmatprep.subr.mxu0 0.0
    %4096 = vmatpush2.msra.mxu0 %v1017
    %4097 = vmatprep.subr.mxu0 0.0
    %4098 = vmatpush2.msra.mxu0 %v1016
    %4099 = vmatprep.subr.mxu0 0.0
    %4100 = vmatpush2.msra.mxu0 %v1015
    %4101 = vmatprep.subr.mxu0 0.0
    %4102 = vmatpush2.msra.mxu0 %v1014
    %4103 = vmatprep.subr.mxu0 0.0
    %4104 = vmatpush2.msra.mxu0 %v1013
    %4105 = vmatprep.subr.mxu0 0.0
    %4106 = vmatpush2.msra.mxu0 %v1012
    %4107 = vmatprep.subr.mxu0 0.0
    %4108 = vmatpush2.msra.mxu0 %v1011
    %4109 = vmatprep.subr.mxu0 0.0
    %4110 = vmatpush2.msra.mxu0 %v1010
    %4111 = vmatprep.subr.mxu0 0.0
    %4112 = vmatpush2.msra.mxu0 %v1009
    %4113 = vmatprep.subr.mxu0 0.0
    %4114 = vmatpush2.msra.mxu0 %v1008
    %4115 = vmatprep.subr.mxu0 0.0
    %4116 = vmatpush2.msra.mxu0 %v1007
    %4117 = vmatprep.subr.mxu0 0.0
    %4118 = vmatpush2.msra.mxu0 %v1006
    %4119 = vmatprep.subr.mxu0 0.0
    %4120 = vmatpush2.msra.mxu0 %v1005
    %4121 = vmatprep.subr.mxu0 0.0
    %4122 = vmatpush2.msra.mxu0 %v1004
    %4123 = vmatprep.mubr.f32.mxu0 %v4028
    %4124 = vmatmul.mubr.f32.gmra.mxu0 %v4027
    %v4125 = vpop.f32.mrf.mxu0
    %v4126 = vadd.f32 0.0, %v4125
    %v4127 = vpop.f32.mrf.mxu0
    %4128 = vmatprep.mubr.f32.mxu0 %v4036
    %4129 = vmatmul.mubr.f32.gmra.mxu0 %v4035
    %v4130 = vpop.f32.mrf.mxu0
    %v4131 = vadd.f32 0.0, %v4130
    %v4132 = vpop.f32.mrf.mxu0
    %4133 = vmatprep.mubr.f32.mxu0 %v4044
    %4134 = vmatmul.mubr.f32.gmra.mxu0 %v4043
    %v4135 = vpop.f32.mrf.mxu0
    %v4136 = vadd.f32 0.0, %v4135
    %v4137 = vpop.f32.mrf.mxu0
    %4138 = vmatprep.mubr.f32.mxu0 %v4052
    %4139 = vmatmul.mubr.f32.gmra.mxu0 %v4051
    %v4140 = vpop.f32.mrf.mxu0
    %v4141 = vadd.f32 0.0, %v4140
    %v4142 = vpop.f32.mrf.mxu0
    %4143 = vdwg.mxu0
    %4144 = vmatprep.subr.mxu0 0.0
    %4145 = vmatpush1.msra.mxu0 %v1035
    %4146 = vmatprep.subr.mxu0 0.0
    %4147 = vmatpush1.msra.mxu0 %v1034
    %4148 = vmatprep.subr.mxu0 0.0
    %4149 = vmatpush1.msra.mxu0 %v1033
    %4150 = vmatprep.subr.mxu0 0.0
    %4151 = vmatpush1.msra.mxu0 %v1032
    %4152 = vmatprep.subr.mxu0 0.0
    %4153 = vmatpush1.msra.mxu0 %v1031
    %4154 = vmatprep.subr.mxu0 0.0
    %4155 = vmatpush1.msra.mxu0 %v1030
    %4156 = vmatprep.subr.mxu0 0.0
    %4157 = vmatpush1.msra.mxu0 %v1029
    %4158 = vmatprep.subr.mxu0 0.0
    %4159 = vmatpush1.msra.mxu0 %v1028
    %4160 = vmatprep.subr.mxu0 0.0
    %4161 = vmatpush1.msra.mxu0 %v1027
    %4162 = vmatprep.subr.mxu0 0.0
    %4163 = vmatpush1.msra.mxu0 %v1026
    %4164 = vmatprep.subr.mxu0 0.0
    %4165 = vmatpush1.msra.mxu0 %v1025
    %4166 = vmatprep.subr.mxu0 0.0
    %4167 = vmatpush1.msra.mxu0 %v1024
    %4168 = vmatprep.subr.mxu0 0.0
    %4169 = vmatpush1.msra.mxu0 %v1023
    %4170 = vmatprep.subr.mxu0 0.0
    %4171 = vmatpush1.msra.mxu0 %v1022
    %4172 = vmatprep.subr.mxu0 0.0
    %4173 = vmatpush1.msra.mxu0 %v1021
    %4174 = vmatprep.subr.mxu0 0.0
    %4175 = vmatpush1.msra.mxu0 %v1020
    %4176 = vmatprep.subr.mxu0 0.0
    %4177 = vmatpush2.msra.mxu0 %v1051
    %4178 = vmatprep.subr.mxu0 0.0
    %4179 = vmatpush2.msra.mxu0 %v1050
    %4180 = vmatprep.subr.mxu0 0.0
    %4181 = vmatpush2.msra.mxu0 %v1049
    %4182 = vmatprep.subr.mxu0 0.0
    %4183 = vmatpush2.msra.mxu0 %v1048
    %4184 = vmatprep.subr.mxu0 0.0
    %4185 = vmatpush2.msra.mxu0 %v1047
    %4186 = vmatprep.subr.mxu0 0.0
    %4187 = vmatpush2.msra.mxu0 %v1046
    %4188 = vmatprep.subr.mxu0 0.0
    %4189 = vmatpush2.msra.mxu0 %v1045
    %4190 = vmatprep.subr.mxu0 0.0
    %4191 = vmatpush2.msra.mxu0 %v1044
    %4192 = vmatprep.subr.mxu0 0.0
    %4193 = vmatpush2.msra.mxu0 %v1043
    %4194 = vmatprep.subr.mxu0 0.0
    %4195 = vmatpush2.msra.mxu0 %v1042
    %4196 = vmatprep.subr.mxu0 0.0
    %4197 = vmatpush2.msra.mxu0 %v1041
    %4198 = vmatprep.subr.mxu0 0.0
    %4199 = vmatpush2.msra.mxu0 %v1040
    %4200 = vmatprep.subr.mxu0 0.0
    %4201 = vmatpush2.msra.mxu0 %v1039
    %4202 = vmatprep.subr.mxu0 0.0
    %4203 = vmatpush2.msra.mxu0 %v1038
    %4204 = vmatprep.subr.mxu0 0.0
    %4205 = vmatpush2.msra.mxu0 %v1037
    %4206 = vmatprep.subr.mxu0 0.0
    %4207 = vmatpush2.msra.mxu0 %v1036
    %4208 = vmatprep.mubr.f32.mxu0 %v4030
    %4209 = vmatmul.mubr.f32.gmra.mxu0 %v4029
    %v4210 = vpop.f32.mrf.mxu0
    %v4211 = vadd.f32 %v4126, %v4210
    %v4212 = vpop.f32.mrf.mxu0
    %4213 = vmatprep.mubr.f32.mxu0 %v4038
    %4214 = vmatmul.mubr.f32.gmra.mxu0 %v4037
    %v4215 = vpop.f32.mrf.mxu0
    %v4216 = vadd.f32 %v4131, %v4215
    %v4217 = vpop.f32.mrf.mxu0
    %4218 = vmatprep.mubr.f32.mxu0 %v4046
    %4219 = vmatmul.mubr.f32.gmra.mxu0 %v4045
    %v4220 = vpop.f32.mrf.mxu0
    %v4221 = vadd.f32 %v4136, %v4220
    %v4222 = vpop.f32.mrf.mxu0
    %4223 = vmatprep.mubr.f32.mxu0 %v4054
    %4224 = vmatmul.mubr.f32.gmra.mxu0 %v4053
    %v4225 = vpop.f32.mrf.mxu0
    %v4226 = vadd.f32 %v4141, %v4225
    %v4227 = vpop.f32.mrf.mxu0
    %4228 = vdwg.mxu0
    %4229 = vmatprep.subr.mxu0 0.0
    %4230 = vmatpush1.msra.mxu0 %v1067
    %4231 = vmatprep.subr.mxu0 0.0
    %4232 = vmatpush1.msra.mxu0 %v1066
    %4233 = vmatprep.subr.mxu0 0.0
    %4234 = vmatpush1.msra.mxu0 %v1065
    %4235 = vmatprep.subr.mxu0 0.0
    %4236 = vmatpush1.msra.mxu0 %v1064
    %4237 = vmatprep.subr.mxu0 0.0
    %4238 = vmatpush1.msra.mxu0 %v1063
    %4239 = vmatprep.subr.mxu0 0.0
    %4240 = vmatpush1.msra.mxu0 %v1062
    %4241 = vmatprep.subr.mxu0 0.0
    %4242 = vmatpush1.msra.mxu0 %v1061
    %4243 = vmatprep.subr.mxu0 0.0
    %4244 = vmatpush1.msra.mxu0 %v1060
    %4245 = vmatprep.subr.mxu0 0.0
    %4246 = vmatpush1.msra.mxu0 %v1059
    %4247 = vmatprep.subr.mxu0 0.0
    %4248 = vmatpush1.msra.mxu0 %v1058
    %4249 = vmatprep.subr.mxu0 0.0
    %4250 = vmatpush1.msra.mxu0 %v1057
    %4251 = vmatprep.subr.mxu0 0.0
    %4252 = vmatpush1.msra.mxu0 %v1056
    %4253 = vmatprep.subr.mxu0 0.0
    %4254 = vmatpush1.msra.mxu0 %v1055
    %4255 = vmatprep.subr.mxu0 0.0
    %4256 = vmatpush1.msra.mxu0 %v1054
    %4257 = vmatprep.subr.mxu0 0.0
    %4258 = vmatpush1.msra.mxu0 %v1053
    %4259 = vmatprep.subr.mxu0 0.0
    %4260 = vmatpush1.msra.mxu0 %v1052
    %4261 = vmatprep.subr.mxu0 0.0
    %4262 = vmatpush2.msra.mxu0 %v1083
    %4263 = vmatprep.subr.mxu0 0.0
    %4264 = vmatpush2.msra.mxu0 %v1082
    %4265 = vmatprep.subr.mxu0 0.0
    %4266 = vmatpush2.msra.mxu0 %v1081
    %4267 = vmatprep.subr.mxu0 0.0
    %4268 = vmatpush2.msra.mxu0 %v1080
    %4269 = vmatprep.subr.mxu0 0.0
    %4270 = vmatpush2.msra.mxu0 %v1079
    %4271 = vmatprep.subr.mxu0 0.0
    %4272 = vmatpush2.msra.mxu0 %v1078
    %4273 = vmatprep.subr.mxu0 0.0
    %4274 = vmatpush2.msra.mxu0 %v1077
    %4275 = vmatprep.subr.mxu0 0.0
    %4276 = vmatpush2.msra.mxu0 %v1076
    %4277 = vmatprep.subr.mxu0 0.0
    %4278 = vmatpush2.msra.mxu0 %v1075
    %4279 = vmatprep.subr.mxu0 0.0
    %4280 = vmatpush2.msra.mxu0 %v1074
    %4281 = vmatprep.subr.mxu0 0.0
    %4282 = vmatpush2.msra.mxu0 %v1073
    %4283 = vmatprep.subr.mxu0 0.0
    %4284 = vmatpush2.msra.mxu0 %v1072
    %4285 = vmatprep.subr.mxu0 0.0
    %4286 = vmatpush2.msra.mxu0 %v1071
    %4287 = vmatprep.subr.mxu0 0.0
    %4288 = vmatpush2.msra.mxu0 %v1070
    %4289 = vmatprep.subr.mxu0 0.0
    %4290 = vmatpush2.msra.mxu0 %v1069
    %4291 = vmatprep.subr.mxu0 0.0
    %4292 = vmatpush2.msra.mxu0 %v1068
    %4293 = vmatprep.mubr.f32.mxu0 %v4032
    %4294 = vmatmul.mubr.f32.gmra.mxu0 %v4031
    %v4295 = vpop.f32.mrf.mxu0
    %v4296 = vadd.f32 %v4211, %v4295
    %v4297 = vpop.f32.mrf.mxu0
    %4298 = vmatprep.mubr.f32.mxu0 %v4040
    %4299 = vmatmul.mubr.f32.gmra.mxu0 %v4039
    %v4300 = vpop.f32.mrf.mxu0
    %v4301 = vadd.f32 %v4216, %v4300
    %v4302 = vpop.f32.mrf.mxu0
    %4303 = vmatprep.mubr.f32.mxu0 %v4048
    %4304 = vmatmul.mubr.f32.gmra.mxu0 %v4047
    %v4305 = vpop.f32.mrf.mxu0
    %v4306 = vadd.f32 %v4221, %v4305
    %v4307 = vpop.f32.mrf.mxu0
    %4308 = vmatprep.mubr.f32.mxu0 %v4056
    %4309 = vmatmul.mubr.f32.gmra.mxu0 %v4055
    %v4310 = vpop.f32.mrf.mxu0
    %v4311 = vadd.f32 %v4226, %v4310
    %v4312 = vpop.f32.mrf.mxu0
    %4313 = vdwg.mxu0
    %4314 = vmatprep.subr.mxu0 0.0
    %4315 = vmatpush1.msra.mxu0 %v1099
    %4316 = vmatprep.subr.mxu0 0.0
    %4317 = vmatpush1.msra.mxu0 %v1098
    %4318 = vmatprep.subr.mxu0 0.0
    %4319 = vmatpush1.msra.mxu0 %v1097
    %4320 = vmatprep.subr.mxu0 0.0
    %4321 = vmatpush1.msra.mxu0 %v1096
    %4322 = vmatprep.subr.mxu0 0.0
    %4323 = vmatpush1.msra.mxu0 %v1095
    %4324 = vmatprep.subr.mxu0 0.0
    %4325 = vmatpush1.msra.mxu0 %v1094
    %4326 = vmatprep.subr.mxu0 0.0
    %4327 = vmatpush1.msra.mxu0 %v1093
    %4328 = vmatprep.subr.mxu0 0.0
    %4329 = vmatpush1.msra.mxu0 %v1092
    %4330 = vmatprep.subr.mxu0 0.0
    %4331 = vmatpush1.msra.mxu0 %v1091
    %4332 = vmatprep.subr.mxu0 0.0
    %4333 = vmatpush1.msra.mxu0 %v1090
    %4334 = vmatprep.subr.mxu0 0.0
    %4335 = vmatpush1.msra.mxu0 %v1089
    %4336 = vmatprep.subr.mxu0 0.0
    %4337 = vmatpush1.msra.mxu0 %v1088
    %4338 = vmatprep.subr.mxu0 0.0
    %4339 = vmatpush1.msra.mxu0 %v1087
    %4340 = vmatprep.subr.mxu0 0.0
    %4341 = vmatpush1.msra.mxu0 %v1086
    %4342 = vmatprep.subr.mxu0 0.0
    %4343 = vmatpush1.msra.mxu0 %v1085
    %4344 = vmatprep.subr.mxu0 0.0
    %4345 = vmatpush1.msra.mxu0 %v1084
    %4346 = vmatprep.subr.mxu0 0.0
    %4347 = vmatpush2.msra.mxu0 %v1115
    %4348 = vmatprep.subr.mxu0 0.0
    %4349 = vmatpush2.msra.mxu0 %v1114
    %4350 = vmatprep.subr.mxu0 0.0
    %4351 = vmatpush2.msra.mxu0 %v1113
    %4352 = vmatprep.subr.mxu0 0.0
    %4353 = vmatpush2.msra.mxu0 %v1112
    %4354 = vmatprep.subr.mxu0 0.0
    %4355 = vmatpush2.msra.mxu0 %v1111
    %4356 = vmatprep.subr.mxu0 0.0
    %4357 = vmatpush2.msra.mxu0 %v1110
    %4358 = vmatprep.subr.mxu0 0.0
    %4359 = vmatpush2.msra.mxu0 %v1109
    %4360 = vmatprep.subr.mxu0 0.0
    %4361 = vmatpush2.msra.mxu0 %v1108
    %4362 = vmatprep.subr.mxu0 0.0
    %4363 = vmatpush2.msra.mxu0 %v1107
    %4364 = vmatprep.subr.mxu0 0.0
    %4365 = vmatpush2.msra.mxu0 %v1106
    %4366 = vmatprep.subr.mxu0 0.0
    %4367 = vmatpush2.msra.mxu0 %v1105
    %4368 = vmatprep.subr.mxu0 0.0
    %4369 = vmatpush2.msra.mxu0 %v1104
    %4370 = vmatprep.subr.mxu0 0.0
    %4371 = vmatpush2.msra.mxu0 %v1103
    %4372 = vmatprep.subr.mxu0 0.0
    %4373 = vmatpush2.msra.mxu0 %v1102
    %4374 = vmatprep.subr.mxu0 0.0
    %4375 = vmatpush2.msra.mxu0 %v1101
    %4376 = vmatprep.subr.mxu0 0.0
    %4377 = vmatpush2.msra.mxu0 %v1100
    %4378 = vmatprep.mubr.f32.mxu0 %v4034
    %4379 = vmatmul.mubr.f32.gmra.mxu0 %v4033
    %v4380 = vpop.f32.mrf.mxu0
    %v4381 = vadd.f32 %v4296, %v4380
    %v4382 = vpop.f32.mrf.mxu0
    %4383 = vmatprep.mubr.f32.mxu0 %v4042
    %4384 = vmatmul.mubr.f32.gmra.mxu0 %v4041
    %v4385 = vpop.f32.mrf.mxu0
    %v4386 = vadd.f32 %v4301, %v4385
    %v4387 = vpop.f32.mrf.mxu0
    %4388 = vmatprep.mubr.f32.mxu0 %v4050
    %4389 = vmatmul.mubr.f32.gmra.mxu0 %v4049
    %v4390 = vpop.f32.mrf.mxu0
    %v4391 = vadd.f32 %v4306, %v4390
    %v4392 = vpop.f32.mrf.mxu0
    %4393 = vmatprep.mubr.f32.mxu0 %v4058
    %4394 = vmatmul.mubr.f32.gmra.mxu0 %v4057
    %v4395 = vpop.f32.mrf.mxu0
    %v4396 = vadd.f32 %v4311, %v4395
    %v4397 = vpop.f32.mrf.mxu0
    %4398 = vdwg.mxu0
    %v4399 = vsel %vm1228, %v3569, 0
    %v4401 = vsel %vm1228, %v3571, 0
    %4403 = vmatprep.subr.mxu0 0.0
    %4404 = vmatpush1.msra.mxu0 0.0
    %4405 = vmatprep.subr.mxu0 0.0
    %4406 = vmatpush1.msra.mxu0 0.0
    %4407 = vmatprep.subr.mxu0 0.0
    %4408 = vmatpush1.msra.mxu0 0.0
    %4409 = vmatprep.subr.mxu0 0.0
    %4410 = vmatpush1.msra.mxu0 0.0
    %4411 = vmatprep.subr.mxu0 0.0
    %4412 = vmatpush1.msra.mxu0 0.0
    %4413 = vmatprep.subr.mxu0 0.0
    %4414 = vmatpush1.msra.mxu0 0.0
    %4415 = vmatprep.subr.mxu0 0.0
    %4416 = vmatpush1.msra.mxu0 0.0
    %4417 = vmatprep.subr.mxu0 0.0
    %4418 = vmatpush1.msra.mxu0 0.0
    %4419 = vmatprep.subr.mxu0 0.0
    %4420 = vmatpush1.msra.mxu0 0.0
    %4421 = vmatprep.subr.mxu0 0.0
    %4422 = vmatpush1.msra.mxu0 0.0
    %4423 = vmatprep.subr.mxu0 0.0
    %4424 = vmatpush1.msra.mxu0 0.0
    %4425 = vmatprep.subr.mxu0 0.0
    %4426 = vmatpush1.msra.mxu0 0.0
    %4427 = vmatprep.subr.mxu0 0.0
    %4428 = vmatpush1.msra.mxu0 %v1119
    %4429 = vmatprep.subr.mxu0 0.0
    %4430 = vmatpush1.msra.mxu0 %v1118
    %4431 = vmatprep.subr.mxu0 0.0
    %4432 = vmatpush1.msra.mxu0 %v1117
    %4433 = vmatprep.subr.mxu0 0.0
    %4434 = vmatpush1.msra.mxu0 %v1116
    %4435 = vmatprep.subr.mxu0 0.0
    %4436 = vmatpush2.msra.mxu0 0.0
    %4437 = vmatprep.subr.mxu0 0.0
    %4438 = vmatpush2.msra.mxu0 0.0
    %4439 = vmatprep.subr.mxu0 0.0
    %4440 = vmatpush2.msra.mxu0 0.0
    %4441 = vmatprep.subr.mxu0 0.0
    %4442 = vmatpush2.msra.mxu0 0.0
    %4443 = vmatprep.subr.mxu0 0.0
    %4444 = vmatpush2.msra.mxu0 0.0
    %4445 = vmatprep.subr.mxu0 0.0
    %4446 = vmatpush2.msra.mxu0 0.0
    %4447 = vmatprep.subr.mxu0 0.0
    %4448 = vmatpush2.msra.mxu0 0.0
    %4449 = vmatprep.subr.mxu0 0.0
    %4450 = vmatpush2.msra.mxu0 0.0
    %4451 = vmatprep.subr.mxu0 0.0
    %4452 = vmatpush2.msra.mxu0 0.0
    %4453 = vmatprep.subr.mxu0 0.0
    %4454 = vmatpush2.msra.mxu0 0.0
    %4455 = vmatprep.subr.mxu0 0.0
    %4456 = vmatpush2.msra.mxu0 0.0
    %4457 = vmatprep.subr.mxu0 0.0
    %4458 = vmatpush2.msra.mxu0 0.0
    %4459 = vmatprep.subr.mxu0 0.0
    %4460 = vmatpush2.msra.mxu0 0.0
    %4461 = vmatprep.subr.mxu0 0.0
    %4462 = vmatpush2.msra.mxu0 0.0
    %4463 = vmatprep.subr.mxu0 0.0
    %4464 = vmatpush2.msra.mxu0 0.0
    %4465 = vmatprep.subr.mxu0 0.0
    %4466 = vmatpush2.msra.mxu0 0.0
    %4467 = vmatprep.mubr.f32.mxu0 0.0
    %4468 = vmatmul.mubr.f32.gmra.mxu0 %v4399
    %v4469 = vpop.f32.mrf.mxu0
    %v4470 = vadd.f32 0.0, %v4469
    %v4471 = vpop.f32.mrf.mxu0
    %4472 = vmatprep.mubr.f32.mxu0 0.0
    %4473 = vmatmul.mubr.f32.gmra.mxu0 %v4401
    %v4474 = vpop.f32.mrf.mxu0
    %v4475 = vadd.f32 0.0, %v4474
    %v4476 = vpop.f32.mrf.mxu0
    %4477 = vdwg.mxu0
    %4478 = vmatprep.subr.mxu0 0.0
    %4479 = vmatpush1.msra.mxu0 0.0
    %4480 = vmatprep.subr.mxu0 0.0
    %4481 = vmatpush1.msra.mxu0 0.0
    %4482 = vmatprep.subr.mxu0 0.0
    %4483 = vmatpush1.msra.mxu0 0.0
    %4484 = vmatprep.subr.mxu0 0.0
    %4485 = vmatpush1.msra.mxu0 0.0
    %4486 = vmatprep.subr.mxu0 0.0
    %4487 = vmatpush1.msra.mxu0 0.0
    %4488 = vmatprep.subr.mxu0 0.0
    %4489 = vmatpush1.msra.mxu0 0.0
    %4490 = vmatprep.subr.mxu0 0.0
    %4491 = vmatpush1.msra.mxu0 0.0
    %4492 = vmatprep.subr.mxu0 0.0
    %4493 = vmatpush1.msra.mxu0 0.0
    %4494 = vmatprep.subr.mxu0 0.0
    %4495 = vmatpush1.msra.mxu0 0.0
    %4496 = vmatprep.subr.mxu0 0.0
    %4497 = vmatpush1.msra.mxu0 0.0
    %4498 = vmatprep.subr.mxu0 0.0
    %4499 = vmatpush1.msra.mxu0 0.0
    %4500 = vmatprep.subr.mxu0 0.0
    %4501 = vmatpush1.msra.mxu0 0.0
    %4502 = vmatprep.subr.mxu0 0.0
    %4503 = vmatpush1.msra.mxu0 %v4396
    %4504 = vmatprep.subr.mxu0 0.0
    %4505 = vmatpush1.msra.mxu0 %v4391
    %4506 = vmatprep.subr.mxu0 0.0
    %4507 = vmatpush1.msra.mxu0 %v4386
    %4508 = vmatprep.subr.mxu0 0.0
    %4509 = vmatpush1.msra.mxu0 %v4381
    %4510 = vmatprep.subr.mxu0 0.0
    %4511 = vmatpush2.msra.mxu0 0.0
    %4512 = vmatprep.subr.mxu0 0.0
    %4513 = vmatpush2.msra.mxu0 0.0
    %4514 = vmatprep.subr.mxu0 0.0
    %4515 = vmatpush2.msra.mxu0 0.0
    %4516 = vmatprep.subr.mxu0 0.0
    %4517 = vmatpush2.msra.mxu0 0.0
    %4518 = vmatprep.subr.mxu0 0.0
    %4519 = vmatpush2.msra.mxu0 0.0
    %4520 = vmatprep.subr.mxu0 0.0
    %4521 = vmatpush2.msra.mxu0 0.0
    %4522 = vmatprep.subr.mxu0 0.0
    %4523 = vmatpush2.msra.mxu0 0.0
    %4524 = vmatprep.subr.mxu0 0.0
    %4525 = vmatpush2.msra.mxu0 0.0
    %4526 = vmatprep.subr.mxu0 0.0
    %4527 = vmatpush2.msra.mxu0 0.0
    %4528 = vmatprep.subr.mxu0 0.0
    %4529 = vmatpush2.msra.mxu0 0.0
    %4530 = vmatprep.subr.mxu0 0.0
    %4531 = vmatpush2.msra.mxu0 0.0
    %4532 = vmatprep.subr.mxu0 0.0
    %4533 = vmatpush2.msra.mxu0 0.0
    %4534 = vmatprep.subr.mxu0 0.0
    %4535 = vmatpush2.msra.mxu0 0.0
    %4536 = vmatprep.subr.mxu0 0.0
    %4537 = vmatpush2.msra.mxu0 0.0
    %4538 = vmatprep.subr.mxu0 0.0
    %4539 = vmatpush2.msra.mxu0 0.0
    %4540 = vmatprep.subr.mxu0 0.0
    %4541 = vmatpush2.msra.mxu0 0.0
    %4542 = vmatprep.mubr.f32.mxu0 0.0
    %4543 = vmatmul.mubr.f32.gmra.mxu0 %v2051
    %v4544 = vpop.f32.mrf.mxu0
    %v4545 = vadd.f32 %v4470, %v4544
    %v4546 = vpop.f32.mrf.mxu0
    %4547 = vmatprep.mubr.f32.mxu0 0.0
    %4548 = vmatmul.mubr.f32.gmra.mxu0 %v2054
    %v4549 = vpop.f32.mrf.mxu0
    %v4550 = vadd.f32 %v4475, %v4549
    %v4551 = vpop.f32.mrf.mxu0
    %4552 = vdwg.mxu0
    %v4553 = vadd.f32 %v4545, %v2135
    %v4554 = vadd.f32 %v4550, %v2135
    %v4555 = vmax.f32 %v4553, 0.0
    %v4556 = vmax.f32 %v4554, 0.0
    %v4558 = vsel %vm1228, %v4555, 0
    %v4561 = vsel %vm1228, %v4556, 0
    %4563 = vmatprep.subr.mxu0 0.0
    %4564 = vmatpush1.msra.mxu0 0.0
    %4565 = vmatprep.subr.mxu0 0.0
    %4566 = vmatpush1.msra.mxu0 0.0
    %4567 = vmatprep.subr.mxu0 0.0
    %4568 = vmatpush1.msra.mxu0 0.0
    %4569 = vmatprep.subr.mxu0 0.0
    %4570 = vmatpush1.msra.mxu0 0.0
    %4571 = vmatprep.subr.mxu0 0.0
    %4572 = vmatpush1.msra.mxu0 0.0
    %4573 = vmatprep.subr.mxu0 0.0
    %4574 = vmatpush1.msra.mxu0 0.0
    %4575 = vmatprep.subr.mxu0 0.0
    %4576 = vmatpush1.msra.mxu0 0.0
    %4577 = vmatprep.subr.mxu0 0.0
    %4578 = vmatpush1.msra.mxu0 0.0
    %4579 = vmatprep.subr.mxu0 0.0
    %4580 = vmatpush1.msra.mxu0 0.0
    %4581 = vmatprep.subr.mxu0 0.0
    %4582 = vmatpush1.msra.mxu0 0.0
    %4583 = vmatprep.subr.mxu0 0.0
    %4584 = vmatpush1.msra.mxu0 0.0
    %4585 = vmatprep.subr.mxu0 0.0
    %4586 = vmatpush1.msra.mxu0 0.0
    %4587 = vmatprep.subr.mxu0 0.0
    %4588 = vmatpush1.msra.mxu0 %v1124
    %4589 = vmatprep.subr.mxu0 0.0
    %4590 = vmatpush1.msra.mxu0 %v1123
    %4591 = vmatprep.subr.mxu0 0.0
    %4592 = vmatpush1.msra.mxu0 %v1122
    %4593 = vmatprep.subr.mxu0 0.0
    %4594 = vmatpush1.msra.mxu0 %v1121
    %4595 = vmatprep.subr.mxu0 0.0
    %4596 = vmatpush2.msra.mxu0 0.0
    %4597 = vmatprep.subr.mxu0 0.0
    %4598 = vmatpush2.msra.mxu0 0.0
    %4599 = vmatprep.subr.mxu0 0.0
    %4600 = vmatpush2.msra.mxu0 0.0
    %4601 = vmatprep.subr.mxu0 0.0
    %4602 = vmatpush2.msra.mxu0 0.0
    %4603 = vmatprep.subr.mxu0 0.0
    %4604 = vmatpush2.msra.mxu0 0.0
    %4605 = vmatprep.subr.mxu0 0.0
    %4606 = vmatpush2.msra.mxu0 0.0
    %4607 = vmatprep.subr.mxu0 0.0
    %4608 = vmatpush2.msra.mxu0 0.0
    %4609 = vmatprep.subr.mxu0 0.0
    %4610 = vmatpush2.msra.mxu0 0.0
    %4611 = vmatprep.subr.mxu0 0.0
    %4612 = vmatpush2.msra.mxu0 0.0
    %4613 = vmatprep.subr.mxu0 0.0
    %4614 = vmatpush2.msra.mxu0 0.0
    %4615 = vmatprep.subr.mxu0 0.0
    %4616 = vmatpush2.msra.mxu0 0.0
    %4617 = vmatprep.subr.mxu0 0.0
    %4618 = vmatpush2.msra.mxu0 0.0
    %4619 = vmatprep.subr.mxu0 0.0
    %4620 = vmatpush2.msra.mxu0 0.0
    %4621 = vmatprep.subr.mxu0 0.0
    %4622 = vmatpush2.msra.mxu0 0.0
    %4623 = vmatprep.subr.mxu0 0.0
    %4624 = vmatpush2.msra.mxu0 0.0
    %4625 = vmatprep.subr.mxu0 0.0
    %4626 = vmatpush2.msra.mxu0 0.0
    %4627 = vmatprep.mubr.f32.mxu0 0.0
    %4628 = vmatmul.mubr.f32.gmra.mxu0 %v4558
    %v4629 = vpop.f32.mrf.mxu0
    %v4630 = vadd.f32 %v2145, %v4629
    %v4631 = vpop.f32.mrf.mxu0
    %4632 = vmatprep.mubr.f32.mxu0 0.0
    %4633 = vmatmul.mubr.f32.gmra.mxu0 %v4561
    %v4634 = vpop.f32.mrf.mxu0
    %v4635 = vadd.f32 %v2145, %v4634
    %v4636 = vpop.f32.mrf.mxu0
    %4637 = vdwg.mxu0
    %4638 = vmatprep.subr.mxu0 0.0
    %4639 = vmatpush1.msra.mxu0 0.0
    %4640 = vmatprep.subr.mxu0 0.0
    %4641 = vmatpush1.msra.mxu0 0.0
    %4642 = vmatprep.subr.mxu0 0.0
    %4643 = vmatpush1.msra.mxu0 0.0
    %4644 = vmatprep.subr.mxu0 0.0
    %4645 = vmatpush1.msra.mxu0 0.0
    %4646 = vmatprep.subr.mxu0 0.0
    %4647 = vmatpush1.msra.mxu0 0.0
    %4648 = vmatprep.subr.mxu0 0.0
    %4649 = vmatpush1.msra.mxu0 0.0
    %4650 = vmatprep.subr.mxu0 0.0
    %4651 = vmatpush1.msra.mxu0 0.0
    %4652 = vmatprep.subr.mxu0 0.0
    %4653 = vmatpush1.msra.mxu0 0.0
    %4654 = vmatprep.subr.mxu0 0.0
    %4655 = vmatpush1.msra.mxu0 0.0
    %4656 = vmatprep.subr.mxu0 0.0
    %4657 = vmatpush1.msra.mxu0 0.0
    %4658 = vmatprep.subr.mxu0 0.0
    %4659 = vmatpush1.msra.mxu0 0.0
    %4660 = vmatprep.subr.mxu0 0.0
    %4661 = vmatpush1.msra.mxu0 0.0
    %4662 = vmatprep.subr.mxu0 0.0
    %4663 = vmatpush1.msra.mxu0 %v1128
    %4664 = vmatprep.subr.mxu0 0.0
    %4665 = vmatpush1.msra.mxu0 %v1127
    %4666 = vmatprep.subr.mxu0 0.0
    %4667 = vmatpush1.msra.mxu0 %v1126
    %4668 = vmatprep.subr.mxu0 0.0
    %4669 = vmatpush1.msra.mxu0 %v1125
    %4670 = vmatprep.subr.mxu0 0.0
    %4671 = vmatpush2.msra.mxu0 0.0
    %4672 = vmatprep.subr.mxu0 0.0
    %4673 = vmatpush2.msra.mxu0 0.0
    %4674 = vmatprep.subr.mxu0 0.0
    %4675 = vmatpush2.msra.mxu0 0.0
    %4676 = vmatprep.subr.mxu0 0.0
    %4677 = vmatpush2.msra.mxu0 0.0
    %4678 = vmatprep.subr.mxu0 0.0
    %4679 = vmatpush2.msra.mxu0 0.0
    %4680 = vmatprep.subr.mxu0 0.0
    %4681 = vmatpush2.msra.mxu0 0.0
    %4682 = vmatprep.subr.mxu0 0.0
    %4683 = vmatpush2.msra.mxu0 0.0
    %4684 = vmatprep.subr.mxu0 0.0
    %4685 = vmatpush2.msra.mxu0 0.0
    %4686 = vmatprep.subr.mxu0 0.0
    %4687 = vmatpush2.msra.mxu0 0.0
    %4688 = vmatprep.subr.mxu0 0.0
    %4689 = vmatpush2.msra.mxu0 0.0
    %4690 = vmatprep.subr.mxu0 0.0
    %4691 = vmatpush2.msra.mxu0 0.0
    %4692 = vmatprep.subr.mxu0 0.0
    %4693 = vmatpush2.msra.mxu0 0.0
    %4694 = vmatprep.subr.mxu0 0.0
    %4695 = vmatpush2.msra.mxu0 0.0
    %4696 = vmatprep.subr.mxu0 0.0
    %4697 = vmatpush2.msra.mxu0 0.0
    %4698 = vmatprep.subr.mxu0 0.0
    %4699 = vmatpush2.msra.mxu0 0.0
    %4700 = vmatprep.subr.mxu0 0.0
    %4701 = vmatpush2.msra.mxu0 0.0
    %4702 = vmatprep.mubr.f32.mxu0 0.0
    %4703 = vmatmul.mubr.f32.gmra.mxu0 %v4399
    %v4704 = vpop.f32.mrf.mxu0
    %v4705 = vadd.f32 %v2232, %v4704
    %v4706 = vpop.f32.mrf.mxu0
    %4707 = vmatprep.mubr.f32.mxu0 0.0
    %4708 = vmatmul.mubr.f32.gmra.mxu0 %v4401
    %v4709 = vpop.f32.mrf.mxu0
    %v4710 = vadd.f32 %v2232, %v4709
    %v4711 = vpop.f32.mrf.mxu0
    %4712 = vdwg.mxu0
    %v4713 = vadd.f32 %v4630, %v4705
    %v4714 = vadd.f32 %v4635, %v4710
    %v4715 = vxor.u32 %v4713, 2147483648
    %v4716 = vxor.u32 %v4714, 2147483648
    %v4717 = vmul.f32 %v4715, 1.442695
    %v4718 = vpow.pop %v4717
    %v4719 = vmul.f32 %v4716, 1.442695
    %v4720 = vpow.pop %v4719
    %v4721 = vadd.f32 %v4718, 1.0
    %v4722 = vadd.f32 %v4720, 1.0
    %v4723 = vrcp.pop %v4721
    %v4724 = vmul.f32 1.0, %v4723
    %v4725 = vrcp.pop %v4722
    %v4726 = vmul.f32 1.0, %v4725
    %4729 = vrot.lane.b32.xlu0 %v4705, 64
    %v4730 = vpop.permute.xlu0 %4729
    %4731 = vrot.lane.b32.xlu0 %v4710, 64
    %v4732 = vpop.permute.xlu0 %4731
    %v4735 = vmul.f32 %v4724, %v4730
    %v4736 = vmul.f32 %v4726, %v4732
    %4739 = vrot.lane.b32.xlu0 %v4735, 64
    %v4740 = vpop.permute.xlu0 %4739
    %4741 = vrot.lane.b32.xlu0 %v4736, 64
    %v4742 = vpop.permute.xlu0 %4741
    %v4745 = vadd.f32 %v4630, %v4740
    %v4746 = vadd.f32 %v4635, %v4742
    %v4747 = vtanh.pop %v4745
    %v4748 = vtanh.pop %v4746
    %v4749 = vsub.f32 1.0, %v4724
    %v4750 = vsub.f32 1.0, %v4726
    %4753 = vrot.lane.b32.xlu0 %v4747, 96
    %v4754 = vpop.permute.xlu0 %4753
    %4755 = vrot.lane.b32.xlu0 %v4748, 96
    %v4756 = vpop.permute.xlu0 %4755
    %v4759 = vmul.f32 %v4749, %v4754
    %v4760 = vmul.f32 %v4750, %v4756
    %v4761 = vmul.f32 %v4724, %v3564
    %v4762 = vmul.f32 %v4726, %v3565
    %v4763 = vadd.f32 %v4759, %v4761
    %v4764 = vadd.f32 %v4760, %v4762
    %v4765 = vld [vmem:[%s4] sm:$0x1]
    %v4766 = vlaneseq
    %v4767 = vshrl.u32 %v4766, 7
    %v4768 = vsub.s32 0, %v4767
    %v4769 = vrot.slane %v4765, %v4768
    %vm4770 = vcmp.eq.s32.totalorder %v368, %v4769
    %v4771 = vld [vmem:[%s19] sm:$0xff]
    %v4772 = vld [vmem:[%s19 + $0x8] sm:$0xff]
    %v4773 = vld [vmem:[%s19 + $0x10] sm:$0xff]
    %v4774 = vld [vmem:[%s19 + $0x18] sm:$0xff]
    %v4775 = vld [vmem:[%s19 + $0x20] sm:$0xff]
    %v4776 = vld [vmem:[%s19 + $0x28] sm:$0xff]
    %v4777 = vld [vmem:[%s19 + $0x30] sm:$0xff]
    %v4778 = vld [vmem:[%s19 + $0x38] sm:$0xff]
    %v4779 = vld [vmem:[%s20] sm:$0xff]
    %v4780 = vld [vmem:[%s20 + $0x8] sm:$0xff]
    %v4781 = vld [vmem:[%s20 + $0x10] sm:$0xff]
    %v4782 = vld [vmem:[%s20 + $0x18] sm:$0xff]
    %v4783 = vld [vmem:[#allocation17] sm:$0x1]
    %v4784 = vld [vmem:[#allocation19] sm:$0x1]
    %v4785 = vadd.f32 %v4783, %v4784
    %v4787 = vsel %vm1228, 0.0, 0
    %4789 = vmatprep.subr.mxu0 0.0
    %4790 = vmatpush1.msra.mxu0 0.0
    %4791 = vmatprep.subr.mxu0 0.0
    %4792 = vmatpush1.msra.mxu0 0.0
    %4793 = vmatprep.subr.mxu0 0.0
    %4794 = vmatpush1.msra.mxu0 0.0
    %4795 = vmatprep.subr.mxu0 0.0
    %4796 = vmatpush1.msra.mxu0 0.0
    %4797 = vmatprep.subr.mxu0 0.0
    %4798 = vmatpush1.msra.mxu0 0.0
    %4799 = vmatprep.subr.mxu0 0.0
    %4800 = vmatpush1.msra.mxu0 0.0
    %4801 = vmatprep.subr.mxu0 0.0
    %4802 = vmatpush1.msra.mxu0 0.0
    %4803 = vmatprep.subr.mxu0 0.0
    %4804 = vmatpush1.msra.mxu0 0.0
    %4805 = vmatprep.subr.mxu0 0.0
    %4806 = vmatpush1.msra.mxu0 0.0
    %4807 = vmatprep.subr.mxu0 0.0
    %4808 = vmatpush1.msra.mxu0 0.0
    %4809 = vmatprep.subr.mxu0 0.0
    %4810 = vmatpush1.msra.mxu0 0.0
    %4811 = vmatprep.subr.mxu0 0.0
    %4812 = vmatpush1.msra.mxu0 0.0
    %4813 = vmatprep.subr.mxu0 0.0
    %4814 = vmatpush1.msra.mxu0 %v4782
    %4815 = vmatprep.subr.mxu0 0.0
    %4816 = vmatpush1.msra.mxu0 %v4781
    %4817 = vmatprep.subr.mxu0 0.0
    %4818 = vmatpush1.msra.mxu0 %v4780
    %4819 = vmatprep.subr.mxu0 0.0
    %4820 = vmatpush1.msra.mxu0 %v4779
    %4821 = vmatprep.subr.mxu0 0.0
    %4822 = vmatpush2.msra.mxu0 0.0
    %4823 = vmatprep.subr.mxu0 0.0
    %4824 = vmatpush2.msra.mxu0 0.0
    %4825 = vmatprep.subr.mxu0 0.0
    %4826 = vmatpush2.msra.mxu0 0.0
    %4827 = vmatprep.subr.mxu0 0.0
    %4828 = vmatpush2.msra.mxu0 0.0
    %4829 = vmatprep.subr.mxu0 0.0
    %4830 = vmatpush2.msra.mxu0 0.0
    %4831 = vmatprep.subr.mxu0 0.0
    %4832 = vmatpush2.msra.mxu0 0.0
    %4833 = vmatprep.subr.mxu0 0.0
    %4834 = vmatpush2.msra.mxu0 0.0
    %4835 = vmatprep.subr.mxu0 0.0
    %4836 = vmatpush2.msra.mxu0 0.0
    %4837 = vmatprep.subr.mxu0 0.0
    %4838 = vmatpush2.msra.mxu0 0.0
    %4839 = vmatprep.subr.mxu0 0.0
    %4840 = vmatpush2.msra.mxu0 0.0
    %4841 = vmatprep.subr.mxu0 0.0
    %4842 = vmatpush2.msra.mxu0 0.0
    %4843 = vmatprep.subr.mxu0 0.0
    %4844 = vmatpush2.msra.mxu0 0.0
    %4845 = vmatprep.subr.mxu0 0.0
    %4846 = vmatpush2.msra.mxu0 0.0
    %4847 = vmatprep.subr.mxu0 0.0
    %4848 = vmatpush2.msra.mxu0 0.0
    %4849 = vmatprep.subr.mxu0 0.0
    %4850 = vmatpush2.msra.mxu0 0.0
    %4851 = vmatprep.subr.mxu0 0.0
    %4852 = vmatpush2.msra.mxu0 0.0
    %4853 = vmatprep.mubr.f32.mxu0 0.0
    %4854 = vmatmul.mubr.f32.gmra.mxu0 %v4787
    %v4855 = vpop.f32.mrf.mxu0
    %v4856 = vadd.f32 0.0, %v4855
    %v4857 = vpop.f32.mrf.mxu0
    %4858 = vdwg.mxu0
    %vm4859 = vcmask 523264
    %v4860 = vsel %vm4859, 0.0, 0
    %4862 = vmatprep.subr.mxu0 0.0
    %4863 = vmatpush1.msra.mxu0 0.0
    %4864 = vmatprep.subr.mxu0 0.0
    %4865 = vmatpush1.msra.mxu0 0.0
    %4866 = vmatprep.subr.mxu0 0.0
    %4867 = vmatpush1.msra.mxu0 0.0
    %4868 = vmatprep.subr.mxu0 0.0
    %4869 = vmatpush1.msra.mxu0 0.0
    %4870 = vmatprep.subr.mxu0 0.0
    %4871 = vmatpush1.msra.mxu0 0.0
    %4872 = vmatprep.subr.mxu0 0.0
    %4873 = vmatpush1.msra.mxu0 0.0
    %4874 = vmatprep.subr.mxu0 0.0
    %4875 = vmatpush1.msra.mxu0 0.0
    %4876 = vmatprep.subr.mxu0 0.0
    %4877 = vmatpush1.msra.mxu0 0.0
    %4878 = vmatprep.subr.mxu0 0.0
    %4879 = vmatpush1.msra.mxu0 %v4778
    %4880 = vmatprep.subr.mxu0 0.0
    %4881 = vmatpush1.msra.mxu0 %v4777
    %4882 = vmatprep.subr.mxu0 0.0
    %4883 = vmatpush1.msra.mxu0 %v4776
    %4884 = vmatprep.subr.mxu0 0.0
    %4885 = vmatpush1.msra.mxu0 %v4775
    %4886 = vmatprep.subr.mxu0 0.0
    %4887 = vmatpush1.msra.mxu0 %v4774
    %4888 = vmatprep.subr.mxu0 0.0
    %4889 = vmatpush1.msra.mxu0 %v4773
    %4890 = vmatprep.subr.mxu0 0.0
    %4891 = vmatpush1.msra.mxu0 %v4772
    %4892 = vmatprep.subr.mxu0 0.0
    %4893 = vmatpush1.msra.mxu0 %v4771
    %4894 = vmatprep.subr.mxu0 0.0
    %4895 = vmatpush2.msra.mxu0 0.0
    %4896 = vmatprep.subr.mxu0 0.0
    %4897 = vmatpush2.msra.mxu0 0.0
    %4898 = vmatprep.subr.mxu0 0.0
    %4899 = vmatpush2.msra.mxu0 0.0
    %4900 = vmatprep.subr.mxu0 0.0
    %4901 = vmatpush2.msra.mxu0 0.0
    %4902 = vmatprep.subr.mxu0 0.0
    %4903 = vmatpush2.msra.mxu0 0.0
    %4904 = vmatprep.subr.mxu0 0.0
    %4905 = vmatpush2.msra.mxu0 0.0
    %4906 = vmatprep.subr.mxu0 0.0
    %4907 = vmatpush2.msra.mxu0 0.0
    %4908 = vmatprep.subr.mxu0 0.0
    %4909 = vmatpush2.msra.mxu0 0.0
    %4910 = vmatprep.subr.mxu0 0.0
    %4911 = vmatpush2.msra.mxu0 0.0
    %4912 = vmatprep.subr.mxu0 0.0
    %4913 = vmatpush2.msra.mxu0 0.0
    %4914 = vmatprep.subr.mxu0 0.0
    %4915 = vmatpush2.msra.mxu0 0.0
    %4916 = vmatprep.subr.mxu0 0.0
    %4917 = vmatpush2.msra.mxu0 0.0
    %4918 = vmatprep.subr.mxu0 0.0
    %4919 = vmatpush2.msra.mxu0 0.0
    %4920 = vmatprep.subr.mxu0 0.0
    %4921 = vmatpush2.msra.mxu0 0.0
    %4922 = vmatprep.subr.mxu0 0.0
    %4923 = vmatpush2.msra.mxu0 0.0
    %4924 = vmatprep.subr.mxu0 0.0
    %4925 = vmatpush2.msra.mxu0 0.0
    %4926 = vmatprep.mubr.f32.mxu0 0.0
    %4927 = vmatmul.mubr.f32.gmra.mxu0 %v4860
    %v4928 = vpop.f32.mrf.mxu0
    %v4929 = vadd.f32 %v4856, %v4928
    %v4930 = vpop.f32.mrf.mxu0
    %4931 = vdwg.mxu0
    %v4933 = vlaneseq
    %v4934 = vshrl.u32 %v4933, 7
    %v4935 = vsub.s32 0, %v4934
    %v4936 = vrot.slane %v4785, %v4935
    %v4938 = vadd.f32 %v4929, %v4936
    %v4939 = vxor.u32 %v4938, 2147483648
    %v4940 = vmul.f32 %v4939, 1.442695
    %v4941 = vpow.pop %v4940
    %v4942 = vadd.f32 %v4941, 1.0
    %v4943 = vrcp.pop %v4942
    %v4944 = vmul.f32 1.0, %v4943
    %v4945 = vtanh.pop %v4938
    %v4946 = vmul.f32 %v4944, 0.0
    %4948 = vrot.lane.b32.xlu0 %v4945, 64
    %v4949 = vpop.permute.xlu0 %4948
    %v4951 = vmul.f32 %v4944, %v4949
    %4953 = vrot.lane.b32.xlu0 %v4951, 32
    %v4954 = vpop.permute.xlu0 %4953
    %v4956 = vadd.f32 %v4946, %v4954
    %v4957 = vtanh.pop %v4956
    %4959 = vrot.lane.b32.xlu0 %v4957, 64
    %v4960 = vpop.permute.xlu0 %4959
    %v4962 = vmul.f32 %v4944, %v4960
    %4964 = vrot.lane.b32.xlu0 %v4962, 32
    %v4965 = vpop.permute.xlu0 %4964
    %4968 = vrot.lane.b32.xlu0 %v4763, 96
    %v4969 = vpop.permute.xlu0 %4968
    %4970 = vrot.lane.b32.xlu0 %v4764, 96
    %v4971 = vpop.permute.xlu0 %4970
    %v4972 = vsel %vm1228, %v4965, 0
    %v4974 = vsel %vm1228, %v4969, 0
    %v4976 = vsel %vm1228, %v4971, 0
    %4978 = vmatprep.subr.mxu0 0.0
    %4979 = vmatpush1.xpose.msra.mxu0 0.0
    %4980 = vmatprep.subr.mxu0 0.0
    %4981 = vmatpush1.xpose.msra.mxu0 0.0
    %4982 = vmatprep.subr.mxu0 0.0
    %4983 = vmatpush1.xpose.msra.mxu0 0.0
    %4984 = vmatprep.subr.mxu0 0.0
    %4985 = vmatpush1.xpose.msra.mxu0 0.0
    %4986 = vmatprep.subr.mxu0 0.0
    %4987 = vmatpush1.xpose.msra.mxu0 0.0
    %4988 = vmatprep.subr.mxu0 0.0
    %4989 = vmatpush1.xpose.msra.mxu0 0.0
    %4990 = vmatprep.subr.mxu0 0.0
    %4991 = vmatpush1.xpose.msra.mxu0 0.0
    %4992 = vmatprep.subr.mxu0 0.0
    %4993 = vmatpush1.xpose.msra.mxu0 0.0
    %4994 = vmatprep.subr.mxu0 0.0
    %4995 = vmatpush1.xpose.msra.mxu0 0.0
    %4996 = vmatprep.subr.mxu0 0.0
    %4997 = vmatpush1.xpose.msra.mxu0 0.0
    %4998 = vmatprep.subr.mxu0 0.0
    %4999 = vmatpush1.xpose.msra.mxu0 0.0
    %5000 = vmatprep.subr.mxu0 0.0
    %5001 = vmatpush1.xpose.msra.mxu0 0.0
    %5002 = vmatprep.subr.mxu0 0.0
    %5003 = vmatpush1.xpose.msra.mxu0 0.0
    %5004 = vmatprep.subr.mxu0 0.0
    %5005 = vmatpush1.xpose.msra.mxu0 0.0
    %5006 = vmatprep.subr.mxu0 0.0
    %5007 = vmatpush1.xpose.msra.mxu0 %v4976
    %5008 = vmatprep.subr.mxu0 0.0
    %5009 = vmatpush1.xpose.msra.mxu0 %v4974
    %5010 = vmatprep.subr.mxu0 0.0
    %5011 = vmatpush2.xpose.msra.mxu0 0.0
    %5012 = vmatprep.subr.mxu0 0.0
    %5013 = vmatpush2.xpose.msra.mxu0 0.0
    %5014 = vmatprep.subr.mxu0 0.0
    %5015 = vmatpush2.xpose.msra.mxu0 0.0
    %5016 = vmatprep.subr.mxu0 0.0
    %5017 = vmatpush2.xpose.msra.mxu0 0.0
    %5018 = vmatprep.subr.mxu0 0.0
    %5019 = vmatpush2.xpose.msra.mxu0 0.0
    %5020 = vmatprep.subr.mxu0 0.0
    %5021 = vmatpush2.xpose.msra.mxu0 0.0
    %5022 = vmatprep.subr.mxu0 0.0
    %5023 = vmatpush2.xpose.msra.mxu0 0.0
    %5024 = vmatprep.subr.mxu0 0.0
    %5025 = vmatpush2.xpose.msra.mxu0 0.0
    %5026 = vmatprep.subr.mxu0 0.0
    %5027 = vmatpush2.xpose.msra.mxu0 0.0
    %5028 = vmatprep.subr.mxu0 0.0
    %5029 = vmatpush2.xpose.msra.mxu0 0.0
    %5030 = vmatprep.subr.mxu0 0.0
    %5031 = vmatpush2.xpose.msra.mxu0 0.0
    %5032 = vmatprep.subr.mxu0 0.0
    %5033 = vmatpush2.xpose.msra.mxu0 0.0
    %5034 = vmatprep.subr.mxu0 0.0
    %5035 = vmatpush2.xpose.msra.mxu0 0.0
    %5036 = vmatprep.subr.mxu0 0.0
    %5037 = vmatpush2.xpose.msra.mxu0 0.0
    %5038 = vmatprep.subr.mxu0 0.0
    %5039 = vmatpush2.xpose.msra.mxu0 0.0
    %5040 = vmatprep.subr.mxu0 0.0
    %5041 = vmatpush2.xpose.msra.mxu0 0.0
    %5042 = vmatprep.mubr.f32.mxu0 0.0
    %5043 = vmatmul.mubr.f32.gmra.mxu0 %v4972
    %v5044 = vpop.f32.mrf.mxu0
    %v5045 = vadd.f32 0.0, %v5044
    %v5046 = vpop.f32.mrf.mxu0
    %5047 = vdwg.mxu0
    %v5048 = vsel %vm4770, %v5045, -1e+30
    %vm5049 = vcmask 123904
    %v5050 = vsel %vm5049, %v5048, -inf
    %5051 = vmax.xlane.f32.xlu0 %v5050
    %v5052 = vpop.xlane.xlu0 %5051
    %v5053 = vsub.f32 %v5048, %v5052
    %v5054 = vmul.f32 %v5053, 1.442695
    %v5055 = vpow.pop %v5054
    %v5056 = vsel %vm4770, %v5055, 0.0
    %v5057 = vsel %vm5049, %v5056, 0.0
    %5058 = vadd.xlane.f32.xlu0 %v5057
    %v5059 = vpop.xlane.xlu0 %5058
    %v5060 = vadd.f32 %v5059, 1e-16
    %v5061 = vrcp.pop %v5060
    %v5062 = vmul.f32 %v5056, %v5061
    %v5066 = vsel %vm252, %v5062, 0
    %5068 = vmatprep.subr.mxu0 0.0
    %5069 = vmatpush1.msra.mxu0 0.0
    %5070 = vmatprep.subr.mxu0 0.0
    %5071 = vmatpush1.msra.mxu0 0.0
    %5072 = vmatprep.subr.mxu0 0.0
    %5073 = vmatpush1.msra.mxu0 0.0
    %5074 = vmatprep.subr.mxu0 0.0
    %5075 = vmatpush1.msra.mxu0 0.0
    %5076 = vmatprep.subr.mxu0 0.0
    %5077 = vmatpush1.msra.mxu0 0.0
    %5078 = vmatprep.subr.mxu0 0.0
    %5079 = vmatpush1.msra.mxu0 0.0
    %5080 = vmatprep.subr.mxu0 0.0
    %5081 = vmatpush1.msra.mxu0 0.0
    %5082 = vmatprep.subr.mxu0 0.0
    %5083 = vmatpush1.msra.mxu0 0.0
    %5084 = vmatprep.subr.mxu0 0.0
    %5085 = vmatpush1.msra.mxu0 0.0
    %5086 = vmatprep.subr.mxu0 0.0
    %5087 = vmatpush1.msra.mxu0 0.0
    %5088 = vmatprep.subr.mxu0 0.0
    %5089 = vmatpush1.msra.mxu0 0.0
    %5090 = vmatprep.subr.mxu0 0.0
    %5091 = vmatpush1.msra.mxu0 0.0
    %5092 = vmatprep.subr.mxu0 0.0
    %5093 = vmatpush1.msra.mxu0 0.0
    %5094 = vmatprep.subr.mxu0 0.0
    %5095 = vmatpush1.msra.mxu0 0.0
    %5096 = vmatprep.subr.mxu0 0.0
    %5097 = vmatpush1.msra.mxu0 %v4971
    %5098 = vmatprep.subr.mxu0 0.0
    %5099 = vmatpush1.msra.mxu0 %v4969
    %5100 = vmatprep.subr.mxu0 0.0
    %5101 = vmatpush2.msra.mxu0 0.0
    %5102 = vmatprep.subr.mxu0 0.0
    %5103 = vmatpush2.msra.mxu0 0.0
    %5104 = vmatprep.subr.mxu0 0.0
    %5105 = vmatpush2.msra.mxu0 0.0
    %5106 = vmatprep.subr.mxu0 0.0
    %5107 = vmatpush2.msra.mxu0 0.0
    %5108 = vmatprep.subr.mxu0 0.0
    %5109 = vmatpush2.msra.mxu0 0.0
    %5110 = vmatprep.subr.mxu0 0.0
    %5111 = vmatpush2.msra.mxu0 0.0
    %5112 = vmatprep.subr.mxu0 0.0
    %5113 = vmatpush2.msra.mxu0 0.0
    %5114 = vmatprep.subr.mxu0 0.0
    %5115 = vmatpush2.msra.mxu0 0.0
    %5116 = vmatprep.subr.mxu0 0.0
    %5117 = vmatpush2.msra.mxu0 0.0
    %5118 = vmatprep.subr.mxu0 0.0
    %5119 = vmatpush2.msra.mxu0 0.0
    %5120 = vmatprep.subr.mxu0 0.0
    %5121 = vmatpush2.msra.mxu0 0.0
    %5122 = vmatprep.subr.mxu0 0.0
    %5123 = vmatpush2.msra.mxu0 0.0
    %5124 = vmatprep.subr.mxu0 0.0
    %5125 = vmatpush2.msra.mxu0 0.0
    %5126 = vmatprep.subr.mxu0 0.0
    %5127 = vmatpush2.msra.mxu0 0.0
    %5128 = vmatprep.subr.mxu0 0.0
    %5129 = vmatpush2.msra.mxu0 0.0
    %5130 = vmatprep.subr.mxu0 0.0
    %5131 = vmatpush2.msra.mxu0 0.0
    %5132 = vmatprep.mubr.f32.mxu0 0.0
    %5133 = vmatmul.mubr.f32.gmra.mxu0 %v5066
    %v5134 = vpop.f32.mrf.mxu0
    %v5135 = vadd.f32 0.0, %v5134
    %v5136 = vpop.f32.mrf.mxu0
    %5137 = vdwg.mxu0
    %5140 = vrot.lane.b32.xlu0 %v5135, 32
    %v5141 = vpop.permute.xlu0 %5140
    %v5143 = vsel %vm1228, %v4965, %v5141
    %5144 = vmatprep.subr.mxu0 0.0
    %5145 = vmatpush1.msra.mxu0 0.0
    %5146 = vmatprep.subr.mxu0 0.0
    %5147 = vmatpush1.msra.mxu0 0.0
    %5148 = vmatprep.subr.mxu0 0.0
    %5149 = vmatpush1.msra.mxu0 0.0
    %5150 = vmatprep.subr.mxu0 0.0
    %5151 = vmatpush1.msra.mxu0 0.0
    %5152 = vmatprep.subr.mxu0 0.0
    %5153 = vmatpush1.msra.mxu0 0.0
    %5154 = vmatprep.subr.mxu0 0.0
    %5155 = vmatpush1.msra.mxu0 0.0
    %5156 = vmatprep.subr.mxu0 0.0
    %5157 = vmatpush1.msra.mxu0 0.0
    %5158 = vmatprep.subr.mxu0 0.0
    %5159 = vmatpush1.msra.mxu0 0.0
    %5160 = vmatprep.subr.mxu0 0.0
    %5161 = vmatpush1.msra.mxu0 0.0
    %5162 = vmatprep.subr.mxu0 0.0
    %5163 = vmatpush1.msra.mxu0 0.0
    %5164 = vmatprep.subr.mxu0 0.0
    %5165 = vmatpush1.msra.mxu0 0.0
    %5166 = vmatprep.subr.mxu0 0.0
    %5167 = vmatpush1.msra.mxu0 0.0
    %5168 = vmatprep.subr.mxu0 0.0
    %5169 = vmatpush1.msra.mxu0 %v4782
    %5170 = vmatprep.subr.mxu0 0.0
    %5171 = vmatpush1.msra.mxu0 %v4781
    %5172 = vmatprep.subr.mxu0 0.0
    %5173 = vmatpush1.msra.mxu0 %v4780
    %5174 = vmatprep.subr.mxu0 0.0
    %5175 = vmatpush1.msra.mxu0 %v4779
    %5176 = vmatprep.subr.mxu0 0.0
    %5177 = vmatpush2.msra.mxu0 0.0
    %5178 = vmatprep.subr.mxu0 0.0
    %5179 = vmatpush2.msra.mxu0 0.0
    %5180 = vmatprep.subr.mxu0 0.0
    %5181 = vmatpush2.msra.mxu0 0.0
    %5182 = vmatprep.subr.mxu0 0.0
    %5183 = vmatpush2.msra.mxu0 0.0
    %5184 = vmatprep.subr.mxu0 0.0
    %5185 = vmatpush2.msra.mxu0 0.0
    %5186 = vmatprep.subr.mxu0 0.0
    %5187 = vmatpush2.msra.mxu0 0.0
    %5188 = vmatprep.subr.mxu0 0.0
    %5189 = vmatpush2.msra.mxu0 0.0
    %5190 = vmatprep.subr.mxu0 0.0
    %5191 = vmatpush2.msra.mxu0 0.0
    %5192 = vmatprep.subr.mxu0 0.0
    %5193 = vmatpush2.msra.mxu0 0.0
    %5194 = vmatprep.subr.mxu0 0.0
    %5195 = vmatpush2.msra.mxu0 0.0
    %5196 = vmatprep.subr.mxu0 0.0
    %5197 = vmatpush2.msra.mxu0 0.0
    %5198 = vmatprep.subr.mxu0 0.0
    %5199 = vmatpush2.msra.mxu0 0.0
    %5200 = vmatprep.subr.mxu0 0.0
    %5201 = vmatpush2.msra.mxu0 0.0
    %5202 = vmatprep.subr.mxu0 0.0
    %5203 = vmatpush2.msra.mxu0 0.0
    %5204 = vmatprep.subr.mxu0 0.0
    %5205 = vmatpush2.msra.mxu0 0.0
    %5206 = vmatprep.subr.mxu0 0.0
    %5207 = vmatpush2.msra.mxu0 0.0
    %5208 = vmatprep.mubr.f32.mxu0 0.0
    %5209 = vmatmul.mubr.f32.gmra.mxu0 %v4972
    %v5210 = vpop.f32.mrf.mxu0
    %v5211 = vadd.f32 0.0, %v5210
    %v5212 = vpop.f32.mrf.mxu0
    %5213 = vdwg.mxu0
    %v5215 = vsel %vm4859, %v5143, 0
    %5217 = vmatprep.subr.mxu0 0.0
    %5218 = vmatpush1.msra.mxu0 0.0
    %5219 = vmatprep.subr.mxu0 0.0
    %5220 = vmatpush1.msra.mxu0 0.0
    %5221 = vmatprep.subr.mxu0 0.0
    %5222 = vmatpush1.msra.mxu0 0.0
    %5223 = vmatprep.subr.mxu0 0.0
    %5224 = vmatpush1.msra.mxu0 0.0
    %5225 = vmatprep.subr.mxu0 0.0
    %5226 = vmatpush1.msra.mxu0 0.0
    %5227 = vmatprep.subr.mxu0 0.0
    %5228 = vmatpush1.msra.mxu0 0.0
    %5229 = vmatprep.subr.mxu0 0.0
    %5230 = vmatpush1.msra.mxu0 0.0
    %5231 = vmatprep.subr.mxu0 0.0
    %5232 = vmatpush1.msra.mxu0 0.0
    %5233 = vmatprep.subr.mxu0 0.0
    %5234 = vmatpush1.msra.mxu0 %v4778
    %5235 = vmatprep.subr.mxu0 0.0
    %5236 = vmatpush1.msra.mxu0 %v4777
    %5237 = vmatprep.subr.mxu0 0.0
    %5238 = vmatpush1.msra.mxu0 %v4776
    %5239 = vmatprep.subr.mxu0 0.0
    %5240 = vmatpush1.msra.mxu0 %v4775
    %5241 = vmatprep.subr.mxu0 0.0
    %5242 = vmatpush1.msra.mxu0 %v4774
    %5243 = vmatprep.subr.mxu0 0.0
    %5244 = vmatpush1.msra.mxu0 %v4773
    %5245 = vmatprep.subr.mxu0 0.0
    %5246 = vmatpush1.msra.mxu0 %v4772
    %5247 = vmatprep.subr.mxu0 0.0
    %5248 = vmatpush1.msra.mxu0 %v4771
    %5249 = vmatprep.subr.mxu0 0.0
    %5250 = vmatpush2.msra.mxu0 0.0
    %5251 = vmatprep.subr.mxu0 0.0
    %5252 = vmatpush2.msra.mxu0 0.0
    %5253 = vmatprep.subr.mxu0 0.0
    %5254 = vmatpush2.msra.mxu0 0.0
    %5255 = vmatprep.subr.mxu0 0.0
    %5256 = vmatpush2.msra.mxu0 0.0
    %5257 = vmatprep.subr.mxu0 0.0
    %5258 = vmatpush2.msra.mxu0 0.0
    %5259 = vmatprep.subr.mxu0 0.0
    %5260 = vmatpush2.msra.mxu0 0.0
    %5261 = vmatprep.subr.mxu0 0.0
    %5262 = vmatpush2.msra.mxu0 0.0
    %5263 = vmatprep.subr.mxu0 0.0
    %5264 = vmatpush2.msra.mxu0 0.0
    %5265 = vmatprep.subr.mxu0 0.0
    %5266 = vmatpush2.msra.mxu0 0.0
    %5267 = vmatprep.subr.mxu0 0.0
    %5268 = vmatpush2.msra.mxu0 0.0
    %5269 = vmatprep.subr.mxu0 0.0
    %5270 = vmatpush2.msra.mxu0 0.0
    %5271 = vmatprep.subr.mxu0 0.0
    %5272 = vmatpush2.msra.mxu0 0.0
    %5273 = vmatprep.subr.mxu0 0.0
    %5274 = vmatpush2.msra.mxu0 0.0
    %5275 = vmatprep.subr.mxu0 0.0
    %5276 = vmatpush2.msra.mxu0 0.0
    %5277 = vmatprep.subr.mxu0 0.0
    %5278 = vmatpush2.msra.mxu0 0.0
    %5279 = vmatprep.subr.mxu0 0.0
    %5280 = vmatpush2.msra.mxu0 0.0
    %5281 = vmatprep.mubr.f32.mxu0 0.0
    %5282 = vmatmul.mubr.f32.gmra.mxu0 %v5215
    %v5283 = vpop.f32.mrf.mxu0
    %v5284 = vadd.f32 %v5211, %v5283
    %v5285 = vpop.f32.mrf.mxu0
    %5286 = vdwg.mxu0
    %v5287 = vadd.f32 %v5284, %v4936
    %v5288 = vxor.u32 %v5287, 2147483648
    %v5289 = vmul.f32 %v5288, 1.442695
    %v5290 = vpow.pop %v5289
    %v5291 = vadd.f32 %v5290, 1.0
    %v5292 = vrcp.pop %v5291
    %v5293 = vmul.f32 1.0, %v5292
    %v5294 = vtanh.pop %v5287
    %v5295 = vmul.f32 %v5293, %v4956
    %5297 = vrot.lane.b32.xlu0 %v5294, 64
    %v5298 = vpop.permute.xlu0 %5297
    %v5300 = vmul.f32 %v5293, %v5298
    %5302 = vrot.lane.b32.xlu0 %v5300, 32
    %v5303 = vpop.permute.xlu0 %5302
    %v5305 = vadd.f32 %v5295, %v5303
    %v5306 = vtanh.pop %v5305
    %5308 = vrot.lane.b32.xlu0 %v5306, 64
    %v5309 = vpop.permute.xlu0 %5308
    %v5311 = vmul.f32 %v5293, %v5309
    %5313 = vrot.lane.b32.xlu0 %v5311, 32
    %v5314 = vpop.permute.xlu0 %5313
    %v5315 = vsel %vm1228, %v5314, 0
    %5317 = vmatprep.subr.mxu0 0.0
    %5318 = vmatpush1.xpose.msra.mxu0 0.0
    %5319 = vmatprep.subr.mxu0 0.0
    %5320 = vmatpush1.xpose.msra.mxu0 0.0
    %5321 = vmatprep.subr.mxu0 0.0
    %5322 = vmatpush1.xpose.msra.mxu0 0.0
    %5323 = vmatprep.subr.mxu0 0.0
    %5324 = vmatpush1.xpose.msra.mxu0 0.0
    %5325 = vmatprep.subr.mxu0 0.0
    %5326 = vmatpush1.xpose.msra.mxu0 0.0
    %5327 = vmatprep.subr.mxu0 0.0
    %5328 = vmatpush1.xpose.msra.mxu0 0.0
    %5329 = vmatprep.subr.mxu0 0.0
    %5330 = vmatpush1.xpose.msra.mxu0 0.0
    %5331 = vmatprep.subr.mxu0 0.0
    %5332 = vmatpush1.xpose.msra.mxu0 0.0
    %5333 = vmatprep.subr.mxu0 0.0
    %5334 = vmatpush1.xpose.msra.mxu0 0.0
    %5335 = vmatprep.subr.mxu0 0.0
    %5336 = vmatpush1.xpose.msra.mxu0 0.0
    %5337 = vmatprep.subr.mxu0 0.0
    %5338 = vmatpush1.xpose.msra.mxu0 0.0
    %5339 = vmatprep.subr.mxu0 0.0
    %5340 = vmatpush1.xpose.msra.mxu0 0.0
    %5341 = vmatprep.subr.mxu0 0.0
    %5342 = vmatpush1.xpose.msra.mxu0 0.0
    %5343 = vmatprep.subr.mxu0 0.0
    %5344 = vmatpush1.xpose.msra.mxu0 0.0
    %5345 = vmatprep.subr.mxu0 0.0
    %5346 = vmatpush1.xpose.msra.mxu0 %v4976
    %5347 = vmatprep.subr.mxu0 0.0
    %5348 = vmatpush1.xpose.msra.mxu0 %v4974
    %5349 = vmatprep.subr.mxu0 0.0
    %5350 = vmatpush2.xpose.msra.mxu0 0.0
    %5351 = vmatprep.subr.mxu0 0.0
    %5352 = vmatpush2.xpose.msra.mxu0 0.0
    %5353 = vmatprep.subr.mxu0 0.0
    %5354 = vmatpush2.xpose.msra.mxu0 0.0
    %5355 = vmatprep.subr.mxu0 0.0
    %5356 = vmatpush2.xpose.msra.mxu0 0.0
    %5357 = vmatprep.subr.mxu0 0.0
    %5358 = vmatpush2.xpose.msra.mxu0 0.0
    %5359 = vmatprep.subr.mxu0 0.0
    %5360 = vmatpush2.xpose.msra.mxu0 0.0
    %5361 = vmatprep.subr.mxu0 0.0
    %5362 = vmatpush2.xpose.msra.mxu0 0.0
    %5363 = vmatprep.subr.mxu0 0.0
    %5364 = vmatpush2.xpose.msra.mxu0 0.0
    %5365 = vmatprep.subr.mxu0 0.0
    %5366 = vmatpush2.xpose.msra.mxu0 0.0
    %5367 = vmatprep.subr.mxu0 0.0
    %5368 = vmatpush2.xpose.msra.mxu0 0.0
    %5369 = vmatprep.subr.mxu0 0.0
    %5370 = vmatpush2.xpose.msra.mxu0 0.0
    %5371 = vmatprep.subr.mxu0 0.0
    %5372 = vmatpush2.xpose.msra.mxu0 0.0
    %5373 = vmatprep.subr.mxu0 0.0
    %5374 = vmatpush2.xpose.msra.mxu0 0.0
    %5375 = vmatprep.subr.mxu0 0.0
    %5376 = vmatpush2.xpose.msra.mxu0 0.0
    %5377 = vmatprep.subr.mxu0 0.0
    %5378 = vmatpush2.xpose.msra.mxu0 0.0
    %5379 = vmatprep.subr.mxu0 0.0
    %5380 = vmatpush2.xpose.msra.mxu0 0.0
    %5381 = vmatprep.mubr.f32.mxu0 0.0
    %5382 = vmatmul.mubr.f32.gmra.mxu0 %v5315
    %v5383 = vpop.f32.mrf.mxu0
    %v5384 = vadd.f32 0.0, %v5383
    %v5385 = vpop.f32.mrf.mxu0
    %5386 = vdwg.mxu0
    %v5387 = vsel %vm4770, %v5384, -1e+30
    %v5388 = vsel %vm5049, %v5387, -inf
    %5389 = vmax.xlane.f32.xlu0 %v5388
    %v5390 = vpop.xlane.xlu0 %5389
    %v5391 = vsub.f32 %v5387, %v5390
    %v5392 = vmul.f32 %v5391, 1.442695
    %v5393 = vpow.pop %v5392
    %v5394 = vsel %vm4770, %v5393, 0.0
    %v5395 = vsel %vm5049, %v5394, 0.0
    %5396 = vadd.xlane.f32.xlu0 %v5395
    %v5397 = vpop.xlane.xlu0 %5396
    %v5398 = vadd.f32 %v5397, 1e-16
    %v5399 = vrcp.pop %v5398
    %v5400 = vmul.f32 %v5394, %v5399
    %v5402 = vsel %vm252, %v5400, 0
    %5404 = vmatprep.subr.mxu0 0.0
    %5405 = vmatpush1.msra.mxu0 0.0
    %5406 = vmatprep.subr.mxu0 0.0
    %5407 = vmatpush1.msra.mxu0 0.0
    %5408 = vmatprep.subr.mxu0 0.0
    %5409 = vmatpush1.msra.mxu0 0.0
    %5410 = vmatprep.subr.mxu0 0.0
    %5411 = vmatpush1.msra.mxu0 0.0
    %5412 = vmatprep.subr.mxu0 0.0
    %5413 = vmatpush1.msra.mxu0 0.0
    %5414 = vmatprep.subr.mxu0 0.0
    %5415 = vmatpush1.msra.mxu0 0.0
    %5416 = vmatprep.subr.mxu0 0.0
    %5417 = vmatpush1.msra.mxu0 0.0
    %5418 = vmatprep.subr.mxu0 0.0
    %5419 = vmatpush1.msra.mxu0 0.0
    %5420 = vmatprep.subr.mxu0 0.0
    %5421 = vmatpush1.msra.mxu0 0.0
    %5422 = vmatprep.subr.mxu0 0.0
    %5423 = vmatpush1.msra.mxu0 0.0
    %5424 = vmatprep.subr.mxu0 0.0
    %5425 = vmatpush1.msra.mxu0 0.0
    %5426 = vmatprep.subr.mxu0 0.0
    %5427 = vmatpush1.msra.mxu0 0.0
    %5428 = vmatprep.subr.mxu0 0.0
    %5429 = vmatpush1.msra.mxu0 0.0
    %5430 = vmatprep.subr.mxu0 0.0
    %5431 = vmatpush1.msra.mxu0 0.0
    %5432 = vmatprep.subr.mxu0 0.0
    %5433 = vmatpush1.msra.mxu0 %v4971
    %5434 = vmatprep.subr.mxu0 0.0
    %5435 = vmatpush1.msra.mxu0 %v4969
    %5436 = vmatprep.subr.mxu0 0.0
    %5437 = vmatpush2.msra.mxu0 0.0
    %5438 = vmatprep.subr.mxu0 0.0
    %5439 = vmatpush2.msra.mxu0 0.0
    %5440 = vmatprep.subr.mxu0 0.0
    %5441 = vmatpush2.msra.mxu0 0.0
    %5442 = vmatprep.subr.mxu0 0.0
    %5443 = vmatpush2.msra.mxu0 0.0
    %5444 = vmatprep.subr.mxu0 0.0
    %5445 = vmatpush2.msra.mxu0 0.0
    %5446 = vmatprep.subr.mxu0 0.0
    %5447 = vmatpush2.msra.mxu0 0.0
    %5448 = vmatprep.subr.mxu0 0.0
    %5449 = vmatpush2.msra.mxu0 0.0
    %5450 = vmatprep.subr.mxu0 0.0
    %5451 = vmatpush2.msra.mxu0 0.0
    %5452 = vmatprep.subr.mxu0 0.0
    %5453 = vmatpush2.msra.mxu0 0.0
    %5454 = vmatprep.subr.mxu0 0.0
    %5455 = vmatpush2.msra.mxu0 0.0
    %5456 = vmatprep.subr.mxu0 0.0
    %5457 = vmatpush2.msra.mxu0 0.0
    %5458 = vmatprep.subr.mxu0 0.0
    %5459 = vmatpush2.msra.mxu0 0.0
    %5460 = vmatprep.subr.mxu0 0.0
    %5461 = vmatpush2.msra.mxu0 0.0
    %5462 = vmatprep.subr.mxu0 0.0
    %5463 = vmatpush2.msra.mxu0 0.0
    %5464 = vmatprep.subr.mxu0 0.0
    %5465 = vmatpush2.msra.mxu0 0.0
    %5466 = vmatprep.subr.mxu0 0.0
    %5467 = vmatpush2.msra.mxu0 0.0
    %5468 = vmatprep.mubr.f32.mxu0 0.0
    %5469 = vmatmul.mubr.f32.gmra.mxu0 %v5402
    %v5470 = vpop.f32.mrf.mxu0
    %v5471 = vadd.f32 0.0, %v5470
    %v5472 = vpop.f32.mrf.mxu0
    %5473 = vdwg.mxu0
    %5476 = vrot.lane.b32.xlu0 %v5471, 32
    %v5477 = vpop.permute.xlu0 %5476
    %v5479 = vsel %vm1228, %v5314, %v5477
    %5480 = vmatprep.subr.mxu0 0.0
    %5481 = vmatpush1.msra.mxu0 0.0
    %5482 = vmatprep.subr.mxu0 0.0
    %5483 = vmatpush1.msra.mxu0 0.0
    %5484 = vmatprep.subr.mxu0 0.0
    %5485 = vmatpush1.msra.mxu0 0.0
    %5486 = vmatprep.subr.mxu0 0.0
    %5487 = vmatpush1.msra.mxu0 0.0
    %5488 = vmatprep.subr.mxu0 0.0
    %5489 = vmatpush1.msra.mxu0 0.0
    %5490 = vmatprep.subr.mxu0 0.0
    %5491 = vmatpush1.msra.mxu0 0.0
    %5492 = vmatprep.subr.mxu0 0.0
    %5493 = vmatpush1.msra.mxu0 0.0
    %5494 = vmatprep.subr.mxu0 0.0
    %5495 = vmatpush1.msra.mxu0 0.0
    %5496 = vmatprep.subr.mxu0 0.0
    %5497 = vmatpush1.msra.mxu0 0.0
    %5498 = vmatprep.subr.mxu0 0.0
    %5499 = vmatpush1.msra.mxu0 0.0
    %5500 = vmatprep.subr.mxu0 0.0
    %5501 = vmatpush1.msra.mxu0 0.0
    %5502 = vmatprep.subr.mxu0 0.0
    %5503 = vmatpush1.msra.mxu0 0.0
    %5504 = vmatprep.subr.mxu0 0.0
    %5505 = vmatpush1.msra.mxu0 %v4782
    %5506 = vmatprep.subr.mxu0 0.0
    %5507 = vmatpush1.msra.mxu0 %v4781
    %5508 = vmatprep.subr.mxu0 0.0
    %5509 = vmatpush1.msra.mxu0 %v4780
    %5510 = vmatprep.subr.mxu0 0.0
    %5511 = vmatpush1.msra.mxu0 %v4779
    %5512 = vmatprep.subr.mxu0 0.0
    %5513 = vmatpush2.msra.mxu0 0.0
    %5514 = vmatprep.subr.mxu0 0.0
    %5515 = vmatpush2.msra.mxu0 0.0
    %5516 = vmatprep.subr.mxu0 0.0
    %5517 = vmatpush2.msra.mxu0 0.0
    %5518 = vmatprep.subr.mxu0 0.0
    %5519 = vmatpush2.msra.mxu0 0.0
    %5520 = vmatprep.subr.mxu0 0.0
    %5521 = vmatpush2.msra.mxu0 0.0
    %5522 = vmatprep.subr.mxu0 0.0
    %5523 = vmatpush2.msra.mxu0 0.0
    %5524 = vmatprep.subr.mxu0 0.0
    %5525 = vmatpush2.msra.mxu0 0.0
    %5526 = vmatprep.subr.mxu0 0.0
    %5527 = vmatpush2.msra.mxu0 0.0
    %5528 = vmatprep.subr.mxu0 0.0
    %5529 = vmatpush2.msra.mxu0 0.0
    %5530 = vmatprep.subr.mxu0 0.0
    %5531 = vmatpush2.msra.mxu0 0.0
    %5532 = vmatprep.subr.mxu0 0.0
    %5533 = vmatpush2.msra.mxu0 0.0
    %5534 = vmatprep.subr.mxu0 0.0
    %5535 = vmatpush2.msra.mxu0 0.0
    %5536 = vmatprep.subr.mxu0 0.0
    %5537 = vmatpush2.msra.mxu0 0.0
    %5538 = vmatprep.subr.mxu0 0.0
    %5539 = vmatpush2.msra.mxu0 0.0
    %5540 = vmatprep.subr.mxu0 0.0
    %5541 = vmatpush2.msra.mxu0 0.0
    %5542 = vmatprep.subr.mxu0 0.0
    %5543 = vmatpush2.msra.mxu0 0.0
    %5544 = vmatprep.mubr.f32.mxu0 0.0
    %5545 = vmatmul.mubr.f32.gmra.mxu0 %v5315
    %v5546 = vpop.f32.mrf.mxu0
    %v5547 = vadd.f32 0.0, %v5546
    %v5548 = vpop.f32.mrf.mxu0
    %5549 = vdwg.mxu0
    %v5551 = vsel %vm4859, %v5479, 0
    %5553 = vmatprep.subr.mxu0 0.0
    %5554 = vmatpush1.msra.mxu0 0.0
    %5555 = vmatprep.subr.mxu0 0.0
    %5556 = vmatpush1.msra.mxu0 0.0
    %5557 = vmatprep.subr.mxu0 0.0
    %5558 = vmatpush1.msra.mxu0 0.0
    %5559 = vmatprep.subr.mxu0 0.0
    %5560 = vmatpush1.msra.mxu0 0.0
    %5561 = vmatprep.subr.mxu0 0.0
    %5562 = vmatpush1.msra.mxu0 0.0
    %5563 = vmatprep.subr.mxu0 0.0
    %5564 = vmatpush1.msra.mxu0 0.0
    %5565 = vmatprep.subr.mxu0 0.0
    %5566 = vmatpush1.msra.mxu0 0.0
    %5567 = vmatprep.subr.mxu0 0.0
    %5568 = vmatpush1.msra.mxu0 0.0
    %5569 = vmatprep.subr.mxu0 0.0
    %5570 = vmatpush1.msra.mxu0 %v4778
    %5571 = vmatprep.subr.mxu0 0.0
    %5572 = vmatpush1.msra.mxu0 %v4777
    %5573 = vmatprep.subr.mxu0 0.0
    %5574 = vmatpush1.msra.mxu0 %v4776
    %5575 = vmatprep.subr.mxu0 0.0
    %5576 = vmatpush1.msra.mxu0 %v4775
    %5577 = vmatprep.subr.mxu0 0.0
    %5578 = vmatpush1.msra.mxu0 %v4774
    %5579 = vmatprep.subr.mxu0 0.0
    %5580 = vmatpush1.msra.mxu0 %v4773
    %5581 = vmatprep.subr.mxu0 0.0
    %5582 = vmatpush1.msra.mxu0 %v4772
    %5583 = vmatprep.subr.mxu0 0.0
    %5584 = vmatpush1.msra.mxu0 %v4771
    %5585 = vmatprep.subr.mxu0 0.0
    %5586 = vmatpush2.msra.mxu0 0.0
    %5587 = vmatprep.subr.mxu0 0.0
    %5588 = vmatpush2.msra.mxu0 0.0
    %5589 = vmatprep.subr.mxu0 0.0
    %5590 = vmatpush2.msra.mxu0 0.0
    %5591 = vmatprep.subr.mxu0 0.0
    %5592 = vmatpush2.msra.mxu0 0.0
    %5593 = vmatprep.subr.mxu0 0.0
    %5594 = vmatpush2.msra.mxu0 0.0
    %5595 = vmatprep.subr.mxu0 0.0
    %5596 = vmatpush2.msra.mxu0 0.0
    %5597 = vmatprep.subr.mxu0 0.0
    %5598 = vmatpush2.msra.mxu0 0.0
    %5599 = vmatprep.subr.mxu0 0.0
    %5600 = vmatpush2.msra.mxu0 0.0
    %5601 = vmatprep.subr.mxu0 0.0
    %5602 = vmatpush2.msra.mxu0 0.0
    %5603 = vmatprep.subr.mxu0 0.0
    %5604 = vmatpush2.msra.mxu0 0.0
    %5605 = vmatprep.subr.mxu0 0.0
    %5606 = vmatpush2.msra.mxu0 0.0
    %5607 = vmatprep.subr.mxu0 0.0
    %5608 = vmatpush2.msra.mxu0 0.0
    %5609 = vmatprep.subr.mxu0 0.0
    %5610 = vmatpush2.msra.mxu0 0.0
    %5611 = vmatprep.subr.mxu0 0.0
    %5612 = vmatpush2.msra.mxu0 0.0
    %5613 = vmatprep.subr.mxu0 0.0
    %5614 = vmatpush2.msra.mxu0 0.0
    %5615 = vmatprep.subr.mxu0 0.0
    %5616 = vmatpush2.msra.mxu0 0.0
    %5617 = vmatprep.mubr.f32.mxu0 0.0
    %5618 = vmatmul.mubr.f32.gmra.mxu0 %v5551
    %v5619 = vpop.f32.mrf.mxu0
    %v5620 = vadd.f32 %v5547, %v5619
    %v5621 = vpop.f32.mrf.mxu0
    %5622 = vdwg.mxu0
    %v5623 = vadd.f32 %v5620, %v4936
    %v5624 = vxor.u32 %v5623, 2147483648
    %v5625 = vmul.f32 %v5624, 1.442695
    %v5626 = vpow.pop %v5625
    %v5627 = vadd.f32 %v5626, 1.0
    %v5628 = vrcp.pop %v5627
    %v5629 = vmul.f32 1.0, %v5628
    %v5630 = vtanh.pop %v5623
    %v5631 = vmul.f32 %v5629, %v5305
    %5633 = vrot.lane.b32.xlu0 %v5630, 64
    %v5634 = vpop.permute.xlu0 %5633
    %v5636 = vmul.f32 %v5629, %v5634
    %5638 = vrot.lane.b32.xlu0 %v5636, 32
    %v5639 = vpop.permute.xlu0 %5638
    %v5641 = vadd.f32 %v5631, %v5639
    %v5642 = vtanh.pop %v5641
    %5644 = vrot.lane.b32.xlu0 %v5642, 64
    %v5645 = vpop.permute.xlu0 %5644
    %v5647 = vmul.f32 %v5629, %v5645
    %5649 = vrot.lane.b32.xlu0 %v5647, 32
    %v5650 = vpop.permute.xlu0 %5649
    %v5651 = vsel %vm1228, %v5650, 0
    %5653 = vmatprep.subr.mxu0 0.0
    %5654 = vmatpush1.xpose.msra.mxu0 0.0
    %5655 = vmatprep.subr.mxu0 0.0
    %5656 = vmatpush1.xpose.msra.mxu0 0.0
    %5657 = vmatprep.subr.mxu0 0.0
    %5658 = vmatpush1.xpose.msra.mxu0 0.0
    %5659 = vmatprep.subr.mxu0 0.0
    %5660 = vmatpush1.xpose.msra.mxu0 0.0
    %5661 = vmatprep.subr.mxu0 0.0
    %5662 = vmatpush1.xpose.msra.mxu0 0.0
    %5663 = vmatprep.subr.mxu0 0.0
    %5664 = vmatpush1.xpose.msra.mxu0 0.0
    %5665 = vmatprep.subr.mxu0 0.0
    %5666 = vmatpush1.xpose.msra.mxu0 0.0
    %5667 = vmatprep.subr.mxu0 0.0
    %5668 = vmatpush1.xpose.msra.mxu0 0.0
    %5669 = vmatprep.subr.mxu0 0.0
    %5670 = vmatpush1.xpose.msra.mxu0 0.0
    %5671 = vmatprep.subr.mxu0 0.0
    %5672 = vmatpush1.xpose.msra.mxu0 0.0
    %5673 = vmatprep.subr.mxu0 0.0
    %5674 = vmatpush1.xpose.msra.mxu0 0.0
    %5675 = vmatprep.subr.mxu0 0.0
    %5676 = vmatpush1.xpose.msra.mxu0 0.0
    %5677 = vmatprep.subr.mxu0 0.0
    %5678 = vmatpush1.xpose.msra.mxu0 0.0
    %5679 = vmatprep.subr.mxu0 0.0
    %5680 = vmatpush1.xpose.msra.mxu0 0.0
    %5681 = vmatprep.subr.mxu0 0.0
    %5682 = vmatpush1.xpose.msra.mxu0 %v4976
    %5683 = vmatprep.subr.mxu0 0.0
    %5684 = vmatpush1.xpose.msra.mxu0 %v4974
    %5685 = vmatprep.subr.mxu0 0.0
    %5686 = vmatpush2.xpose.msra.mxu0 0.0
    %5687 = vmatprep.subr.mxu0 0.0
    %5688 = vmatpush2.xpose.msra.mxu0 0.0
    %5689 = vmatprep.subr.mxu0 0.0
    %5690 = vmatpush2.xpose.msra.mxu0 0.0
    %5691 = vmatprep.subr.mxu0 0.0
    %5692 = vmatpush2.xpose.msra.mxu0 0.0
    %5693 = vmatprep.subr.mxu0 0.0
    %5694 = vmatpush2.xpose.msra.mxu0 0.0
    %5695 = vmatprep.subr.mxu0 0.0
    %5696 = vmatpush2.xpose.msra.mxu0 0.0
    %5697 = vmatprep.subr.mxu0 0.0
    %5698 = vmatpush2.xpose.msra.mxu0 0.0
    %5699 = vmatprep.subr.mxu0 0.0
    %5700 = vmatpush2.xpose.msra.mxu0 0.0
    %5701 = vmatprep.subr.mxu0 0.0
    %5702 = vmatpush2.xpose.msra.mxu0 0.0
    %5703 = vmatprep.subr.mxu0 0.0
    %5704 = vmatpush2.xpose.msra.mxu0 0.0
    %5705 = vmatprep.subr.mxu0 0.0
    %5706 = vmatpush2.xpose.msra.mxu0 0.0
    %5707 = vmatprep.subr.mxu0 0.0
    %5708 = vmatpush2.xpose.msra.mxu0 0.0
    %5709 = vmatprep.subr.mxu0 0.0
    %5710 = vmatpush2.xpose.msra.mxu0 0.0
    %5711 = vmatprep.subr.mxu0 0.0
    %5712 = vmatpush2.xpose.msra.mxu0 0.0
    %5713 = vmatprep.subr.mxu0 0.0
    %5714 = vmatpush2.xpose.msra.mxu0 0.0
    %5715 = vmatprep.subr.mxu0 0.0
    %5716 = vmatpush2.xpose.msra.mxu0 0.0
    %5717 = vmatprep.mubr.f32.mxu0 0.0
    %5718 = vmatmul.mubr.f32.gmra.mxu0 %v5651
    %v5719 = vpop.f32.mrf.mxu0
    %v5720 = vadd.f32 0.0, %v5719
    %v5721 = vpop.f32.mrf.mxu0
    %5722 = vdwg.mxu0
    %v5723 = vsel %vm4770, %v5720, -1e+30
    %v5724 = vsel %vm5049, %v5723, -inf
    %5725 = vmax.xlane.f32.xlu0 %v5724
    %v5726 = vpop.xlane.xlu0 %5725
    %v5727 = vsub.f32 %v5723, %v5726
    %v5728 = vmul.f32 %v5727, 1.442695
    %v5729 = vpow.pop %v5728
    %v5730 = vsel %vm4770, %v5729, 0.0
    %v5731 = vsel %vm5049, %v5730, 0.0
    %5732 = vadd.xlane.f32.xlu0 %v5731
    %v5733 = vpop.xlane.xlu0 %5732
    %v5734 = vadd.f32 %v5733, 1e-16
    %v5735 = vrcp.pop %v5734
    %v5736 = vmul.f32 %v5730, %v5735
    %v5738 = vsel %vm252, %v5736, 0
    %5740 = vmatprep.subr.mxu0 0.0
    %5741 = vmatpush1.msra.mxu0 0.0
    %5742 = vmatprep.subr.mxu0 0.0
    %5743 = vmatpush1.msra.mxu0 0.0
    %5744 = vmatprep.subr.mxu0 0.0
    %5745 = vmatpush1.msra.mxu0 0.0
    %5746 = vmatprep.subr.mxu0 0.0
    %5747 = vmatpush1.msra.mxu0 0.0
    %5748 = vmatprep.subr.mxu0 0.0
    %5749 = vmatpush1.msra.mxu0 0.0
    %5750 = vmatprep.subr.mxu0 0.0
    %5751 = vmatpush1.msra.mxu0 0.0
    %5752 = vmatprep.subr.mxu0 0.0
    %5753 = vmatpush1.msra.mxu0 0.0
    %5754 = vmatprep.subr.mxu0 0.0
    %5755 = vmatpush1.msra.mxu0 0.0
    %5756 = vmatprep.subr.mxu0 0.0
    %5757 = vmatpush1.msra.mxu0 0.0
    %5758 = vmatprep.subr.mxu0 0.0
    %5759 = vmatpush1.msra.mxu0 0.0
    %5760 = vmatprep.subr.mxu0 0.0
    %5761 = vmatpush1.msra.mxu0 0.0
    %5762 = vmatprep.subr.mxu0 0.0
    %5763 = vmatpush1.msra.mxu0 0.0
    %5764 = vmatprep.subr.mxu0 0.0
    %5765 = vmatpush1.msra.mxu0 0.0
    %5766 = vmatprep.subr.mxu0 0.0
    %5767 = vmatpush1.msra.mxu0 0.0
    %5768 = vmatprep.subr.mxu0 0.0
    %5769 = vmatpush1.msra.mxu0 %v4971
    %5770 = vmatprep.subr.mxu0 0.0
    %5771 = vmatpush1.msra.mxu0 %v4969
    %5772 = vmatprep.subr.mxu0 0.0
    %5773 = vmatpush2.msra.mxu0 0.0
    %5774 = vmatprep.subr.mxu0 0.0
    %5775 = vmatpush2.msra.mxu0 0.0
    %5776 = vmatprep.subr.mxu0 0.0
    %5777 = vmatpush2.msra.mxu0 0.0
    %5778 = vmatprep.subr.mxu0 0.0
    %5779 = vmatpush2.msra.mxu0 0.0
    %5780 = vmatprep.subr.mxu0 0.0
    %5781 = vmatpush2.msra.mxu0 0.0
    %5782 = vmatprep.subr.mxu0 0.0
    %5783 = vmatpush2.msra.mxu0 0.0
    %5784 = vmatprep.subr.mxu0 0.0
    %5785 = vmatpush2.msra.mxu0 0.0
    %5786 = vmatprep.subr.mxu0 0.0
    %5787 = vmatpush2.msra.mxu0 0.0
    %5788 = vmatprep.subr.mxu0 0.0
    %5789 = vmatpush2.msra.mxu0 0.0
    %5790 = vmatprep.subr.mxu0 0.0
    %5791 = vmatpush2.msra.mxu0 0.0
    %5792 = vmatprep.subr.mxu0 0.0
    %5793 = vmatpush2.msra.mxu0 0.0
    %5794 = vmatprep.subr.mxu0 0.0
    %5795 = vmatpush2.msra.mxu0 0.0
    %5796 = vmatprep.subr.mxu0 0.0
    %5797 = vmatpush2.msra.mxu0 0.0
    %5798 = vmatprep.subr.mxu0 0.0
    %5799 = vmatpush2.msra.mxu0 0.0
    %5800 = vmatprep.subr.mxu0 0.0
    %5801 = vmatpush2.msra.mxu0 0.0
    %5802 = vmatprep.subr.mxu0 0.0
    %5803 = vmatpush2.msra.mxu0 0.0
    %5804 = vmatprep.mubr.f32.mxu0 0.0
    %5805 = vmatmul.mubr.f32.gmra.mxu0 %v5738
    %v5806 = vpop.f32.mrf.mxu0
    %v5807 = vadd.f32 0.0, %v5806
    %v5808 = vpop.f32.mrf.mxu0
    %5809 = vdwg.mxu0
    %5812 = vrot.lane.b32.xlu0 %v5807, 32
    %v5813 = vpop.permute.xlu0 %5812
    %v5815 = vsel %vm1228, %v5650, %v5813
    %v5816 = vld [vmem:[%s23] sm:$0xff]
    %v5817 = vld [vmem:[%s23 + $0x8] sm:$0xff]
    %v5818 = vld [vmem:[%s23 + $0x10] sm:$0xff]
    %v5819 = vld [vmem:[%s23 + $0x18] sm:$0xff]
    %v5820 = vld [vmem:[%s23 + $0x20] sm:$0xff]
    %v5821 = vld [vmem:[%s23 + $0x28] sm:$0xff]
    %v5822 = vld [vmem:[%s23 + $0x30] sm:$0xff]
    %v5823 = vld [vmem:[%s23 + $0x38] sm:$0xff]
    %v5824 = vld [vmem:[#allocation20] sm:$0x1]
    %v5826 = vlaneseq
    %v5827 = vshrl.u32 %v5826, 7
    %v5828 = vsub.s32 0, %v5827
    %v5829 = vrot.slane %v5824, %v5828
    %v5832 = vsel %vm4859, %v5815, 0
    %5834 = vmatprep.subr.mxu0 0.0
    %5835 = vmatpush1.msra.mxu0 0.0
    %5836 = vmatprep.subr.mxu0 0.0
    %5837 = vmatpush1.msra.mxu0 0.0
    %5838 = vmatprep.subr.mxu0 0.0
    %5839 = vmatpush1.msra.mxu0 0.0
    %5840 = vmatprep.subr.mxu0 0.0
    %5841 = vmatpush1.msra.mxu0 0.0
    %5842 = vmatprep.subr.mxu0 0.0
    %5843 = vmatpush1.msra.mxu0 0.0
    %5844 = vmatprep.subr.mxu0 0.0
    %5845 = vmatpush1.msra.mxu0 0.0
    %5846 = vmatprep.subr.mxu0 0.0
    %5847 = vmatpush1.msra.mxu0 0.0
    %5848 = vmatprep.subr.mxu0 0.0
    %5849 = vmatpush1.msra.mxu0 0.0
    %5850 = vmatprep.subr.mxu0 0.0
    %5851 = vmatpush1.msra.mxu0 %v5823
    %5852 = vmatprep.subr.mxu0 0.0
    %5853 = vmatpush1.msra.mxu0 %v5822
    %5854 = vmatprep.subr.mxu0 0.0
    %5855 = vmatpush1.msra.mxu0 %v5821
    %5856 = vmatprep.subr.mxu0 0.0
    %5857 = vmatpush1.msra.mxu0 %v5820
    %5858 = vmatprep.subr.mxu0 0.0
    %5859 = vmatpush1.msra.mxu0 %v5819
    %5860 = vmatprep.subr.mxu0 0.0
    %5861 = vmatpush1.msra.mxu0 %v5818
    %5862 = vmatprep.subr.mxu0 0.0
    %5863 = vmatpush1.msra.mxu0 %v5817
    %5864 = vmatprep.subr.mxu0 0.0
    %5865 = vmatpush1.msra.mxu0 %v5816
    %5866 = vmatprep.subr.mxu0 0.0
    %5867 = vmatpush2.msra.mxu0 0.0
    %5868 = vmatprep.subr.mxu0 0.0
    %5869 = vmatpush2.msra.mxu0 0.0
    %5870 = vmatprep.subr.mxu0 0.0
    %5871 = vmatpush2.msra.mxu0 0.0
    %5872 = vmatprep.subr.mxu0 0.0
    %5873 = vmatpush2.msra.mxu0 0.0
    %5874 = vmatprep.subr.mxu0 0.0
    %5875 = vmatpush2.msra.mxu0 0.0
    %5876 = vmatprep.subr.mxu0 0.0
    %5877 = vmatpush2.msra.mxu0 0.0
    %5878 = vmatprep.subr.mxu0 0.0
    %5879 = vmatpush2.msra.mxu0 0.0
    %5880 = vmatprep.subr.mxu0 0.0
    %5881 = vmatpush2.msra.mxu0 0.0
    %5882 = vmatprep.subr.mxu0 0.0
    %5883 = vmatpush2.msra.mxu0 0.0
    %5884 = vmatprep.subr.mxu0 0.0
    %5885 = vmatpush2.msra.mxu0 0.0
    %5886 = vmatprep.subr.mxu0 0.0
    %5887 = vmatpush2.msra.mxu0 0.0
    %5888 = vmatprep.subr.mxu0 0.0
    %5889 = vmatpush2.msra.mxu0 0.0
    %5890 = vmatprep.subr.mxu0 0.0
    %5891 = vmatpush2.msra.mxu0 0.0
    %5892 = vmatprep.subr.mxu0 0.0
    %5893 = vmatpush2.msra.mxu0 0.0
    %5894 = vmatprep.subr.mxu0 0.0
    %5895 = vmatpush2.msra.mxu0 0.0
    %5896 = vmatprep.subr.mxu0 0.0
    %5897 = vmatpush2.msra.mxu0 0.0
    %5898 = vmatprep.mubr.f32.mxu0 0.0
    %5899 = vmatmul.mubr.f32.gmra.mxu0 %v5832
    %v5900 = vpop.f32.mrf.mxu0
    %v5901 = vadd.f32 %v5829, %v5900
    %v5902 = vpop.f32.mrf.mxu0
    %5903 = vdwg.mxu0
    %v5904 = vmax.f32 %v5901, 0.0
    %v5905 = vld [vmem:[%s25] sm:$0xff]
    %v5906 = vld [vmem:[%s25 + $0x8] sm:$0xff]
    %v5907 = vld [vmem:[%s25 + $0x10] sm:$0xff]
    %v5908 = vld [vmem:[%s25 + $0x18] sm:$0xff]
    %v5909 = vld [vmem:[#allocation22] sm:$0x1]
    %v5911 = vlaneseq
    %v5912 = vshrl.u32 %v5911, 7
    %v5913 = vsub.s32 0, %v5912
    %v5914 = vrot.slane %v5909, %v5913
    %v5917 = vsel %vm1228, %v5904, 0
    %5919 = vmatprep.subr.mxu0 0.0
    %5920 = vmatpush1.msra.mxu0 0.0
    %5921 = vmatprep.subr.mxu0 0.0
    %5922 = vmatpush1.msra.mxu0 0.0
    %5923 = vmatprep.subr.mxu0 0.0
    %5924 = vmatpush1.msra.mxu0 0.0
    %5925 = vmatprep.subr.mxu0 0.0
    %5926 = vmatpush1.msra.mxu0 0.0
    %5927 = vmatprep.subr.mxu0 0.0
    %5928 = vmatpush1.msra.mxu0 0.0
    %5929 = vmatprep.subr.mxu0 0.0
    %5930 = vmatpush1.msra.mxu0 0.0
    %5931 = vmatprep.subr.mxu0 0.0
    %5932 = vmatpush1.msra.mxu0 0.0
    %5933 = vmatprep.subr.mxu0 0.0
    %5934 = vmatpush1.msra.mxu0 0.0
    %5935 = vmatprep.subr.mxu0 0.0
    %5936 = vmatpush1.msra.mxu0 0.0
    %5937 = vmatprep.subr.mxu0 0.0
    %5938 = vmatpush1.msra.mxu0 0.0
    %5939 = vmatprep.subr.mxu0 0.0
    %5940 = vmatpush1.msra.mxu0 0.0
    %5941 = vmatprep.subr.mxu0 0.0
    %5942 = vmatpush1.msra.mxu0 0.0
    %5943 = vmatprep.subr.mxu0 0.0
    %5944 = vmatpush1.msra.mxu0 %v5908
    %5945 = vmatprep.subr.mxu0 0.0
    %5946 = vmatpush1.msra.mxu0 %v5907
    %5947 = vmatprep.subr.mxu0 0.0
    %5948 = vmatpush1.msra.mxu0 %v5906
    %5949 = vmatprep.subr.mxu0 0.0
    %5950 = vmatpush1.msra.mxu0 %v5905
    %5951 = vmatprep.subr.mxu0 0.0
    %5952 = vmatpush2.msra.mxu0 0.0
    %5953 = vmatprep.subr.mxu0 0.0
    %5954 = vmatpush2.msra.mxu0 0.0
    %5955 = vmatprep.subr.mxu0 0.0
    %5956 = vmatpush2.msra.mxu0 0.0
    %5957 = vmatprep.subr.mxu0 0.0
    %5958 = vmatpush2.msra.mxu0 0.0
    %5959 = vmatprep.subr.mxu0 0.0
    %5960 = vmatpush2.msra.mxu0 0.0
    %5961 = vmatprep.subr.mxu0 0.0
    %5962 = vmatpush2.msra.mxu0 0.0
    %5963 = vmatprep.subr.mxu0 0.0
    %5964 = vmatpush2.msra.mxu0 0.0
    %5965 = vmatprep.subr.mxu0 0.0
    %5966 = vmatpush2.msra.mxu0 0.0
    %5967 = vmatprep.subr.mxu0 0.0
    %5968 = vmatpush2.msra.mxu0 0.0
    %5969 = vmatprep.subr.mxu0 0.0
    %5970 = vmatpush2.msra.mxu0 0.0
    %5971 = vmatprep.subr.mxu0 0.0
    %5972 = vmatpush2.msra.mxu0 0.0
    %5973 = vmatprep.subr.mxu0 0.0
    %5974 = vmatpush2.msra.mxu0 0.0
    %5975 = vmatprep.subr.mxu0 0.0
    %5976 = vmatpush2.msra.mxu0 0.0
    %5977 = vmatprep.subr.mxu0 0.0
    %5978 = vmatpush2.msra.mxu0 0.0
    %5979 = vmatprep.subr.mxu0 0.0
    %5980 = vmatpush2.msra.mxu0 0.0
    %5981 = vmatprep.subr.mxu0 0.0
    %5982 = vmatpush2.msra.mxu0 0.0
    %5983 = vmatprep.mubr.f32.mxu0 0.0
    %5984 = vmatmul.mubr.f32.gmra.mxu0 %v5917
    %v5985 = vpop.f32.mrf.mxu0
    %v5986 = vadd.f32 %v5914, %v5985
    %v5987 = vpop.f32.mrf.mxu0
    %5988 = vdwg.mxu0
    %vm5989 = vcmask 58368
    %5990 = vst.msk [vmem:[#allocation23] sm:$0x3] %vm5989, %v5986
    // Predicated region
    $region162: #{tpu_custom_call.1} parent=1 // pred_check
      _
    $region163: #{tpu_custom_call.1} parent=1 // pred_check_branch
      %5992 = sbr.rel (0) target = $region165
    $region164: #{tpu_custom_call.1} parent=1 // pred_region
      %s5994 = ssub.s32 32, 32
      %5995 = vsyncadd [#allocation4], %s5994
      %s5997 = sshll.u32 [#allocation23], 4
      %s5998 = int_to_ptr.vmem [resolvable:$true] %s5997
      %6000 = dma.vmem_to_hbm [thread:$0]  %s5998, 32, %s27, [#allocation4]
    $region165: #{tpu_custom_call.1} parent=1 // pred_fallthru
      _
    // Predicated region
    $region166: #{tpu_custom_call.1} parent=1 // pred_check
      _
    $region167: #{tpu_custom_call.1} parent=1 // pred_check_branch
      %6002 = sbr.rel (0) target = $region169
    $region168: #{tpu_custom_call.1} parent=1 // pred_region
      %6003 = dma.done [#allocation4], 32
    $region169: #{tpu_custom_call.1} parent=1 // pred_fallthru
      _
    %6004 = vsyncpa [#allocation3], 1
    %6005 = vsyncpa [#allocation6], 1
    %6006 = vsyncpa [#allocation9], 1
    %6007 = vsyncpa [#allocation12], 1
    %6008 = vsyncpa [#allocation15], 1
    %6009 = vsyncpa [#allocation18], 1
    %6010 = vsyncpa [#allocation21], 1
    %6011 = vsyncpa [#allocation4], 1

</llo_original>
